<compile_context>
chip_gen: v7x
topology: tpu7x:2x2x1
jax: 0.10.0
libtpu: 0.0.40
codegen_flags: <defaults>
</compile_context>

<pallas_src>
import functools

import jax
import jax.numpy as jnp
from jax import lax
from jax.experimental import pallas as pl
from jax.experimental.pallas import tpu as pltpu


# ----------------------------- conv 3x3 + relu -----------------------------
def conv3x3_relu_kernel(x_ref, w_ref, b_ref, o_ref, *, H, W, RT):
    # x_ref: (H+2, W, 3*Cin)  dx-interleaved, H-padded input for one batch element
    # w_ref: (3, 3*Cin, Cout) per-dy weights, rows ordered (dx, cin)
    # b_ref: (1, Cout) f32
    # o_ref: (H, W, Cout)
    k3 = x_ref.shape[-1]
    cout = o_ref.shape[-1]
    bias = b_ref[...]

    def row_tile(r, carry):
        r0 = pl.multiple_of(r * RT, RT)
        acc = None
        for dy in range(3):
            # Aligned slice (leading axis only) -> deep-K matmul on the MXU; the
            # three dx taps are already contiguous along the lane dim.
            patch = x_ref[pl.ds(r0 + dy, RT), :, :].reshape(RT * W, k3)
            part = jnp.dot(patch, w_ref[dy], preferred_element_type=jnp.float32)
            acc = part if acc is None else acc + part
        tile = jnp.maximum(acc + bias, 0.0)
        o_ref[pl.ds(r0, RT), :, :] = tile.reshape(RT, W, cout).astype(o_ref.dtype)
        return carry

    lax.fori_loop(0, H // RT, row_tile, 0)


def conv3x3_relu(x_nhwc, w, b, *, rt, out_dtype):
    # x_nhwc: (N, H, W, Cin) bf16; w: (3, 3, Cin, Cout) bf16; b: (Cout,) f32
    N, H, W_, cin = x_nhwc.shape
    cout = w.shape[-1]
    assert H % rt == 0
    xp = jnp.pad(x_nhwc, ((0, 0), (1, 1), (1, 1), (0, 0)))          # "same" padding
    # Interleave the three dx taps along the lane (channel) dim: (N, H+2, W, 3*Cin).
    xcat = jnp.concatenate([xp[:, :, dx:dx + W_, :] for dx in range(3)], axis=-1)
    wd = w.reshape(3, 3 * cin, cout)                 # rows ordered (dx, cin) per dy
    kernel = functools.partial(conv3x3_relu_kernel, H=H, W=W_, RT=rt)
    return pl.pallas_call(
        kernel,
        out_shape=jax.ShapeDtypeStruct((N, H, W_, cout), out_dtype),
        grid_spec=pltpu.PrefetchScalarGridSpec(
            num_scalar_prefetch=0,
            grid=(N,),
            in_specs=[
                pl.BlockSpec((None, H + 2, W_, 3 * cin), lambda n: (n, 0, 0, 0)),
                pl.BlockSpec((3, 3 * cin, cout), lambda n: (0, 0, 0)),
                pl.BlockSpec((1, cout), lambda n: (0, 0)),
            ],
            out_specs=pl.BlockSpec((None, H, W_, cout), lambda n: (n, 0, 0, 0)),
        ),
        compiler_params=pltpu.CompilerParams(
            dimension_semantics=("parallel",),
            vmem_limit_bytes=16 * 1024 * 1024,
        ),
    )(xcat, wd, b.reshape(1, cout))


# ------------------- fc1: int8-weight linear + relu (f32 acc) -------------------
def fc1_q8_kernel(x_ref, w_ref, s_ref, b_ref, o_ref, acc_ref, *, ck):
    # x_ref: (M, tk) bf16; w_ref: (tk, tn) int8; s_ref/b_ref: (1, tn) f32
    # o_ref: (M, tn) f32; acc_ref: (M, tn) f32 scratch, resident across the k axis.
    k = pl.program_id(1)

    @pl.when(k == 0)
    def _():
        acc_ref[...] = jnp.zeros_like(acc_ref)

    tk = w_ref.shape[0]

    def chunk(c, acc):
        off = pl.multiple_of(c * ck, ck)
        # Dequantize a bounded (ck, tn) chunk to bf16 (exact: values in [-127,127]);
        # the column scales are applied once on the f32 accumulator in the epilogue.
        w_bf16 = w_ref[pl.ds(off, ck), :].astype(jnp.bfloat16)
        return acc + jnp.dot(x_ref[:, pl.ds(off, ck)], w_bf16,
                             preferred_element_type=jnp.float32)

    acc_ref[...] += lax.fori_loop(0, tk // ck, chunk,
                                  jnp.zeros(acc_ref.shape, jnp.float32))

    @pl.when(k == pl.num_programs(1) - 1)
    def _():
        r = acc_ref[...] * s_ref[...] + b_ref[...]
        o_ref[...] = jnp.maximum(r, 0.0).astype(o_ref.dtype)


def fc1_q8(x, wq, scale, b, *, tk=32768, tn=256, ck=4096, vmem_mb=40):
    # x: (M, K) bf16; wq: (K, Nout) int8; scale/b: (Nout,) f32.
    M, K = x.shape
    Nout = wq.shape[1]
    assert K % tk == 0 and Nout % tn == 0 and tk % ck == 0
    kernel = functools.partial(fc1_q8_kernel, ck=ck)
    return pl.pallas_call(
        kernel,
        out_shape=jax.ShapeDtypeStruct((M, Nout), jnp.float32),
        grid_spec=pltpu.PrefetchScalarGridSpec(
            num_scalar_prefetch=0,
            grid=(Nout // tn, K // tk),          # (parallel Nout tiles, K reduction)
            in_specs=[
                pl.BlockSpec((M, tk), lambda j, k: (0, k)),
                pl.BlockSpec((tk, tn), lambda j, k: (k, j)),
                pl.BlockSpec((1, tn), lambda j, k: (0, j)),
                pl.BlockSpec((1, tn), lambda j, k: (0, j)),
            ],
            out_specs=pl.BlockSpec((M, tn), lambda j, k: (0, j)),
            scratch_shapes=[pltpu.VMEM((M, tn), jnp.float32)],
        ),
        compiler_params=pltpu.CompilerParams(
            dimension_semantics=("parallel", "arbitrary"),
            vmem_limit_bytes=vmem_mb * 1024 * 1024,
        ),
    )(x, wq, scale.reshape(1, Nout), b.reshape(1, Nout))


# --------------------------------- fc2 (small) ---------------------------------
def fc2_kernel(x_ref, w_ref, b_ref, o_ref):
    o_ref[...] = (jnp.dot(x_ref[...], w_ref[...],
                          preferred_element_type=jnp.float32)
                  + b_ref[...]).astype(o_ref.dtype)


def fc2(x, w, b):
    M = x.shape[0]
    Np = w.shape[1]
    return pl.pallas_call(
        fc2_kernel,
        out_shape=jax.ShapeDtypeStruct((M, Np), jnp.float32),
    )(x, w, b.reshape(1, Np))


# ----------------------------------- model -------------------------------------
def substance_detection_forward(x_nchw, params):
    x = jnp.transpose(x_nchw, (0, 2, 3, 1)).astype(jnp.bfloat16)   # NCHW -> NHWC bf16
    h1 = conv3x3_relu(x, params["w1"], params["b1"],
                      rt=8, out_dtype=jnp.bfloat16)                 # (N, 64, 64, 64)
    h2 = conv3x3_relu(h1, params["w2"], params["b2"],
                      rt=8, out_dtype=jnp.bfloat16)                 # (N, 64, 64, 128)
    N = h2.shape[0]
    # NHWC flatten: wfc1 rows were permuted once at init to match torch's (C,H,W)
    # flatten order, so no NCHW transpose round-trip is needed here.
    flat = h2.reshape(N, 64 * 64 * 128)                             # (N, 524288) bf16
    h3 = fc1_q8(flat, params["wfc1_q"], params["wfc1_scale"],
                params["bfc1"])                                     # (N, 512) f32
    out_p = fc2(h3, params["wfc2"], params["bfc2"])                 # (N, 128) f32
    return out_p[:, :10]                                            # (N, 10)


def init_params(key):
    # Deterministic PyTorch-style uniform(-1/sqrt(fan_in), 1/sqrt(fan_in)) init.
    ks = jax.random.split(key, 8)

    def uinit(k, shape, fan_in):
        bound = 1.0 / (fan_in ** 0.5)
        return jax.random.uniform(k, shape, jnp.float32, -bound, bound)

    C, Hs, Ws = 128, 64, 64
    K = C * Hs * Ws

    # fc1 weight created in torch layout (rows in (C,H,W) flatten order), then:
    #  * permuted once to (H,W,C) order so the NHWC conv2 output flattens directly,
    #  * quantized to int8 with per-output-column f32 scales (scales applied on the
    #    f32 accumulator in the kernel epilogue).
    wfc1_torch = uinit(ks[4], (K, 512), K)
    wfc1 = (wfc1_torch.reshape(C, Hs, Ws, 512)
            .transpose(1, 2, 0, 3)
            .reshape(K, 512))
    amax = jnp.max(jnp.abs(wfc1), axis=0, keepdims=True)            # (1, 512)
    wfc1_scale = jnp.maximum(amax, 1e-8) / 127.0
    wfc1_q = jnp.clip(jnp.round(wfc1 / wfc1_scale), -127, 127).astype(jnp.int8)

    # fc2 padded to 128 output lanes (zeros) so its kernel stores are lane-dense.
    wfc2 = uinit(ks[6], (512, 10), 512)
    bfc2 = uinit(ks[7], (10,), 512)
    wfc2_pad = jnp.zeros((512, 128), jnp.float32).at[:, :10].set(wfc2)
    bfc2_pad = jnp.zeros((128,), jnp.float32).at[:10].set(bfc2)

    return {
        # conv weights as (kh, kw, Cin, Cout), bf16 (f32 accumulation in-kernel)
        "w1": uinit(ks[0], (3, 3, 3, 64), 3 * 9).astype(jnp.bfloat16),
        "b1": uinit(ks[1], (64,), 3 * 9),
        "w2": uinit(ks[2], (3, 3, 64, 128), 64 * 9).astype(jnp.bfloat16),
        "b2": uinit(ks[3], (128,), 64 * 9),
        # fc1: int8 weights (NHWC-flatten row order) + per-column scales
        "wfc1_q": wfc1_q,
        "wfc1_scale": wfc1_scale.reshape((512,)),
        "bfc1": uinit(ks[5], (512,), K),
        # fc2: f32, padded to 128 cols
        "wfc2": wfc2_pad,
        "bfc2": bfc2_pad,
    }


if __name__ == "__main__":
    key = jax.random.PRNGKey(0)
    pkey, xkey = jax.random.split(key)
    params = init_params(pkey)
    # Spatial size 64 and Cin=3 are implied by fc1 = Linear(128*64*64, 512); batch=2.
    x = jax.random.normal(xkey, (2, 3, 64, 64), jnp.float32)
    fwd = jax.jit(substance_detection_forward)
    out = jax.block_until_ready(fwd(x, params))
    assert out.shape == (2, 10) and out.dtype == jnp.float32
    print("KERNEL_OK")
</pallas_src>

<mosaic_0001>
module attributes {stable_mosaic.version = 11 : i64} {
  func.func @conv3x3_relu_kernel(%arg0: i32, %arg1: memref<1x66x64x9xbf16, #tpu.memory_space<vmem>>, %arg2: memref<3x9x64xbf16, #tpu.memory_space<vmem>>, %arg3: memref<1x64xf32, #tpu.memory_space<vmem>>, %arg4: memref<1x64x64x64xbf16, #tpu.memory_space<vmem>>) attributes {dimension_semantics = [#tpu.dimension_semantics<parallel>], iteration_bounds = array<i64: 2>, scalar_prefetch = 0 : i64, scratch_operands = 0 : i64, tpu.core_type = #tpu.core_type<tc>, window_params = [{transform_indices = @transform_0, window_bounds = array<i64: 1, 66, 64, 9>}, {pipeline_mode = #tpu.pipeline_mode<synchronous>, transform_indices = @transform_1, window_bounds = array<i64: 3, 9, 64>}, {pipeline_mode = #tpu.pipeline_mode<synchronous>, transform_indices = @transform_2, window_bounds = array<i64: 1, 64>}, {transform_indices = @transform_3, window_bounds = array<i64: 1, 64, 64, 64>}]} {
    %c0 = arith.constant 0 : index
    %c0_0 = arith.constant 0 : index
    %0 = vector.load %arg3[%c0, %c0_0] : memref<1x64xf32, #tpu.memory_space<vmem>>, vector<1x64xf32>
    %c0_i32 = arith.constant 0 : i32
    %c8_i32 = arith.constant 8 : i32
    %1 = arith.addi %c0_i32, %c8_i32 : i32
    %c1_i32 = arith.constant 1 : i32
    scf.for %arg5 = %c0_i32 to %1 step %c1_i32  : i32 {
      %c8_i32_2 = arith.constant 8 : i32
      %2 = arith.muli %arg5, %c8_i32_2 : i32
      %3 = tpu.assume_multiple %2, 8 : i32
      %c0_i32_3 = arith.constant 0 : i32
      %4 = arith.addi %3, %c0_i32_3 : i32
      %c0_4 = arith.constant 0 : index
      %5 = arith.index_cast %4 : i32 to index
      %c0_5 = arith.constant 0 : index
      %c0_6 = arith.constant 0 : index
      %6 = vector.load %arg1[%c0_4, %5, %c0_5, %c0_6] : memref<1x66x64x9xbf16, #tpu.memory_space<vmem>>, vector<1x8x64x9xbf16>
      %7 = vector.shape_cast %6 : vector<1x8x64x9xbf16> to vector<8x64x9xbf16>
      %8 = vector.shape_cast %7 : vector<8x64x9xbf16> to vector<512x9xbf16>
      %c0_7 = arith.constant 0 : index
      %c0_8 = arith.constant 0 : index
      %c0_9 = arith.constant 0 : index
      %9 = vector.load %arg2[%c0_7, %c0_8, %c0_9] : memref<3x9x64xbf16, #tpu.memory_space<vmem>>, vector<1x9x64xbf16>
      %10 = vector.shape_cast %9 : vector<1x9x64xbf16> to vector<9x64xbf16>
      %cst = arith.constant dense<0.000000e+00> : vector<512x64xf32>
      %11 = tpu.matmul %8, %10, %cst {dimension_numbers = #tpu.dot_dimension_numbers<[1], [0], [0], [1], [0, 0, 1, 1], [], []>} : vector<512x9xbf16>, vector<9x64xbf16>, vector<512x64xf32> -> vector<512x64xf32>
      %c1_i32_10 = arith.constant 1 : i32
      %12 = arith.addi %3, %c1_i32_10 : i32
      %c0_11 = arith.constant 0 : index
      %13 = arith.index_cast %12 : i32 to index
      %c0_12 = arith.constant 0 : index
      %c0_13 = arith.constant 0 : index
      %14 = vector.load %arg1[%c0_11, %13, %c0_12, %c0_13] : memref<1x66x64x9xbf16, #tpu.memory_space<vmem>>, vector<1x8x64x9xbf16>
      %15 = vector.shape_cast %14 : vector<1x8x64x9xbf16> to vector<8x64x9xbf16>
      %16 = vector.shape_cast %15 : vector<8x64x9xbf16> to vector<512x9xbf16>
      %c1 = arith.constant 1 : index
      %c0_14 = arith.constant 0 : index
      %c0_15 = arith.constant 0 : index
      %17 = vector.load %arg2[%c1, %c0_14, %c0_15] : memref<3x9x64xbf16, #tpu.memory_space<vmem>>, vector<1x9x64xbf16>
      %18 = vector.shape_cast %17 : vector<1x9x64xbf16> to vector<9x64xbf16>
      %cst_16 = arith.constant dense<0.000000e+00> : vector<512x64xf32>
      %19 = tpu.matmul %16, %18, %cst_16 {dimension_numbers = #tpu.dot_dimension_numbers<[1], [0], [0], [1], [0, 0, 1, 1], [], []>} : vector<512x9xbf16>, vector<9x64xbf16>, vector<512x64xf32> -> vector<512x64xf32>
      %20 = arith.addf %11, %19 : vector<512x64xf32>
      %c2_i32 = arith.constant 2 : i32
      %21 = arith.addi %3, %c2_i32 : i32
      %c0_17 = arith.constant 0 : index
      %22 = arith.index_cast %21 : i32 to index
      %c0_18 = arith.constant 0 : index
      %c0_19 = arith.constant 0 : index
      %23 = vector.load %arg1[%c0_17, %22, %c0_18, %c0_19] : memref<1x66x64x9xbf16, #tpu.memory_space<vmem>>, vector<1x8x64x9xbf16>
      %24 = vector.shape_cast %23 : vector<1x8x64x9xbf16> to vector<8x64x9xbf16>
      %25 = vector.shape_cast %24 : vector<8x64x9xbf16> to vector<512x9xbf16>
      %c2 = arith.constant 2 : index
      %c0_20 = arith.constant 0 : index
      %c0_21 = arith.constant 0 : index
      %26 = vector.load %arg2[%c2, %c0_20, %c0_21] : memref<3x9x64xbf16, #tpu.memory_space<vmem>>, vector<1x9x64xbf16>
      %27 = vector.shape_cast %26 : vector<1x9x64xbf16> to vector<9x64xbf16>
      %cst_22 = arith.constant dense<0.000000e+00> : vector<512x64xf32>
      %28 = tpu.matmul %25, %27, %cst_22 {dimension_numbers = #tpu.dot_dimension_numbers<[1], [0], [0], [1], [0, 0, 1, 1], [], []>} : vector<512x9xbf16>, vector<9x64xbf16>, vector<512x64xf32> -> vector<512x64xf32>
      %29 = arith.addf %20, %28 : vector<512x64xf32>
      %30 = vector.broadcast %0 : vector<1x64xf32> to vector<512x64xf32>
      %31 = arith.addf %29, %30 : vector<512x64xf32>
      %cst_23 = arith.constant 0.000000e+00 : f32
      %32 = vector.broadcast %cst_23 : f32 to vector<512x64xf32>
      %33 = arith.maximumf %31, %32 : vector<512x64xf32>
      %34 = vector.shape_cast %33 : vector<512x64xf32> to vector<8x64x64xf32>
      %35 = arith.truncf %34 : vector<8x64x64xf32> to vector<8x64x64xbf16>
      %c0_24 = arith.constant 0 : index
      %36 = arith.index_cast %3 : i32 to index
      %c0_25 = arith.constant 0 : index
      %c0_26 = arith.constant 0 : index
      %37 = vector.load %arg4[%c0_24, %36, %c0_25, %c0_26] : memref<1x64x64x64xbf16, #tpu.memory_space<vmem>>, vector<1x8x64x64xbf16>
      %38 = vector.shape_cast %37 : vector<1x8x64x64xbf16> to vector<8x64x64xbf16>
      %39 = vector.shape_cast %35 : vector<8x64x64xbf16> to vector<1x8x64x64xbf16>
      tpu.vector_store %arg4[%c0_24, %36, %c0_25, %c0_26], %39 {strides = array<i32>} : memref<1x64x64x64xbf16, #tpu.memory_space<vmem>>, vector<1x8x64x64xbf16>,
    }
    %c8_i32_1 = arith.constant 8 : i32
    return
  }
  func.func @transform_0(%arg0: i32) -> (i32, i32, i32, i32) {
    %c0_i32 = arith.constant 0 : i32
    %c0_i32_0 = arith.constant 0 : i32
    %c0_i32_1 = arith.constant 0 : i32
    %c0_i32_2 = arith.constant 0 : i32
    return %arg0, %c0_i32, %c0_i32_0, %c0_i32_1 : i32, i32, i32, i32
  }
  func.func @transform_1(%arg0: i32) -> (i32, i32, i32) {
    %c0_i32 = arith.constant 0 : i32
    %c0_i32_0 = arith.constant 0 : i32
    %c0_i32_1 = arith.constant 0 : i32
    %c0_i32_2 = arith.constant 0 : i32
    return %c0_i32, %c0_i32_0, %c0_i32_1 : i32, i32, i32
  }
  func.func @transform_2(%arg0: i32) -> (i32, i32) {
    %c0_i32 = arith.constant 0 : i32
    %c0_i32_0 = arith.constant 0 : i32
    %c0_i32_1 = arith.constant 0 : i32
    return %c0_i32, %c0_i32_0 : i32, i32
  }
  func.func @transform_3(%arg0: i32) -> (i32, i32, i32, i32) {
    %c0_i32 = arith.constant 0 : i32
    %c0_i32_0 = arith.constant 0 : i32
    %c0_i32_1 = arith.constant 0 : i32
    %c0_i32_2 = arith.constant 0 : i32
    return %arg0, %c0_i32, %c0_i32_0, %c0_i32_1 : i32, i32, i32, i32
  }
}

module attributes {stable_mosaic.version = 11 : i64} {
  func.func @conv3x3_relu_kernel(%arg0: i32, %arg1: memref<1x66x64x192xbf16, #tpu.memory_space<vmem>>, %arg2: memref<3x192x128xbf16, #tpu.memory_space<vmem>>, %arg3: memref<1x128xf32, #tpu.memory_space<vmem>>, %arg4: memref<1x64x64x128xbf16, #tpu.memory_space<vmem>>) attributes {dimension_semantics = [#tpu.dimension_semantics<parallel>], iteration_bounds = array<i64: 2>, scalar_prefetch = 0 : i64, scratch_operands = 0 : i64, tpu.core_type = #tpu.core_type<tc>, window_params = [{transform_indices = @transform_0, window_bounds = array<i64: 1, 66, 64, 192>}, {pipeline_mode = #tpu.pipeline_mode<synchronous>, transform_indices = @transform_1, window_bounds = array<i64: 3, 192, 128>}, {pipeline_mode = #tpu.pipeline_mode<synchronous>, transform_indices = @transform_2, window_bounds = array<i64: 1, 128>}, {transform_indices = @transform_3, window_bounds = array<i64: 1, 64, 64, 128>}]} {
    %c0 = arith.constant 0 : index
    %c0_0 = arith.constant 0 : index
    %0 = vector.load %arg3[%c0, %c0_0] : memref<1x128xf32, #tpu.memory_space<vmem>>, vector<1x128xf32>
    %c0_i32 = arith.constant 0 : i32
    %c8_i32 = arith.constant 8 : i32
    %1 = arith.addi %c0_i32, %c8_i32 : i32
    %c1_i32 = arith.constant 1 : i32
    scf.for %arg5 = %c0_i32 to %1 step %c1_i32  : i32 {
      %c8_i32_2 = arith.constant 8 : i32
      %2 = arith.muli %arg5, %c8_i32_2 : i32
      %3 = tpu.assume_multiple %2, 8 : i32
      %c0_i32_3 = arith.constant 0 : i32
      %4 = arith.addi %3, %c0_i32_3 : i32
      %c0_4 = arith.constant 0 : index
      %5 = arith.index_cast %4 : i32 to index
      %c0_5 = arith.constant 0 : index
      %c0_6 = arith.constant 0 : index
      %6 = vector.load %arg1[%c0_4, %5, %c0_5, %c0_6] : memref<1x66x64x192xbf16, #tpu.memory_space<vmem>>, vector<1x8x64x192xbf16>
      %7 = vector.shape_cast %6 : vector<1x8x64x192xbf16> to vector<8x64x192xbf16>
      %8 = vector.shape_cast %7 : vector<8x64x192xbf16> to vector<512x192xbf16>
      %c0_7 = arith.constant 0 : index
      %c0_8 = arith.constant 0 : index
      %c0_9 = arith.constant 0 : index
      %9 = vector.load %arg2[%c0_7, %c0_8, %c0_9] : memref<3x192x128xbf16, #tpu.memory_space<vmem>>, vector<1x192x128xbf16>
      %10 = vector.shape_cast %9 : vector<1x192x128xbf16> to vector<192x128xbf16>
      %cst = arith.constant dense<0.000000e+00> : vector<512x128xf32>
      %11 = tpu.matmul %8, %10, %cst {dimension_numbers = #tpu.dot_dimension_numbers<[1], [0], [0], [1], [0, 0, 1, 1], [], []>} : vector<512x192xbf16>, vector<192x128xbf16>, vector<512x128xf32> -> vector<512x128xf32>
      %c1_i32_10 = arith.constant 1 : i32
      %12 = arith.addi %3, %c1_i32_10 : i32
      %c0_11 = arith.constant 0 : index
      %13 = arith.index_cast %12 : i32 to index
      %c0_12 = arith.constant 0 : index
      %c0_13 = arith.constant 0 : index
      %14 = vector.load %arg1[%c0_11, %13, %c0_12, %c0_13] : memref<1x66x64x192xbf16, #tpu.memory_space<vmem>>, vector<1x8x64x192xbf16>
      %15 = vector.shape_cast %14 : vector<1x8x64x192xbf16> to vector<8x64x192xbf16>
      %16 = vector.shape_cast %15 : vector<8x64x192xbf16> to vector<512x192xbf16>
      %c1 = arith.constant 1 : index
      %c0_14 = arith.constant 0 : index
      %c0_15 = arith.constant 0 : index
      %17 = vector.load %arg2[%c1, %c0_14, %c0_15] : memref<3x192x128xbf16, #tpu.memory_space<vmem>>, vector<1x192x128xbf16>
      %18 = vector.shape_cast %17 : vector<1x192x128xbf16> to vector<192x128xbf16>
      %cst_16 = arith.constant dense<0.000000e+00> : vector<512x128xf32>
      %19 = tpu.matmul %16, %18, %cst_16 {dimension_numbers = #tpu.dot_dimension_numbers<[1], [0], [0], [1], [0, 0, 1, 1], [], []>} : vector<512x192xbf16>, vector<192x128xbf16>, vector<512x128xf32> -> vector<512x128xf32>
      %20 = arith.addf %11, %19 : vector<512x128xf32>
      %c2_i32 = arith.constant 2 : i32
      %21 = arith.addi %3, %c2_i32 : i32
      %c0_17 = arith.constant 0 : index
      %22 = arith.index_cast %21 : i32 to index
      %c0_18 = arith.constant 0 : index
      %c0_19 = arith.constant 0 : index
      %23 = vector.load %arg1[%c0_17, %22, %c0_18, %c0_19] : memref<1x66x64x192xbf16, #tpu.memory_space<vmem>>, vector<1x8x64x192xbf16>
      %24 = vector.shape_cast %23 : vector<1x8x64x192xbf16> to vector<8x64x192xbf16>
      %25 = vector.shape_cast %24 : vector<8x64x192xbf16> to vector<512x192xbf16>
      %c2 = arith.constant 2 : index
      %c0_20 = arith.constant 0 : index
      %c0_21 = arith.constant 0 : index
      %26 = vector.load %arg2[%c2, %c0_20, %c0_21] : memref<3x192x128xbf16, #tpu.memory_space<vmem>>, vector<1x192x128xbf16>
      %27 = vector.shape_cast %26 : vector<1x192x128xbf16> to vector<192x128xbf16>
      %cst_22 = arith.constant dense<0.000000e+00> : vector<512x128xf32>
      %28 = tpu.matmul %25, %27, %cst_22 {dimension_numbers = #tpu.dot_dimension_numbers<[1], [0], [0], [1], [0, 0, 1, 1], [], []>} : vector<512x192xbf16>, vector<192x128xbf16>, vector<512x128xf32> -> vector<512x128xf32>
      %29 = arith.addf %20, %28 : vector<512x128xf32>
      %30 = vector.broadcast %0 : vector<1x128xf32> to vector<512x128xf32>
      %31 = arith.addf %29, %30 : vector<512x128xf32>
      %cst_23 = arith.constant 0.000000e+00 : f32
      %32 = vector.broadcast %cst_23 : f32 to vector<512x128xf32>
      %33 = arith.maximumf %31, %32 : vector<512x128xf32>
      %34 = vector.shape_cast %33 : vector<512x128xf32> to vector<8x64x128xf32>
      %35 = arith.truncf %34 : vector<8x64x128xf32> to vector<8x64x128xbf16>
      %c0_24 = arith.constant 0 : index
      %36 = arith.index_cast %3 : i32 to index
      %c0_25 = arith.constant 0 : index
      %c0_26 = arith.constant 0 : index
      %37 = vector.load %arg4[%c0_24, %36, %c0_25, %c0_26] : memref<1x64x64x128xbf16, #tpu.memory_space<vmem>>, vector<1x8x64x128xbf16>
      %38 = vector.shape_cast %37 : vector<1x8x64x128xbf16> to vector<8x64x128xbf16>
      %39 = vector.shape_cast %35 : vector<8x64x128xbf16> to vector<1x8x64x128xbf16>
      tpu.vector_store %arg4[%c0_24, %36, %c0_25, %c0_26], %39 {strides = array<i32>} : memref<1x64x64x128xbf16, #tpu.memory_space<vmem>>, vector<1x8x64x128xbf16>,
    }
    %c8_i32_1 = arith.constant 8 : i32
    return
  }
  func.func @transform_0(%arg0: i32) -> (i32, i32, i32, i32) {
    %c0_i32 = arith.constant 0 : i32
    %c0_i32_0 = arith.constant 0 : i32
    %c0_i32_1 = arith.constant 0 : i32
    %c0_i32_2 = arith.constant 0 : i32
    return %arg0, %c0_i32, %c0_i32_0, %c0_i32_1 : i32, i32, i32, i32
  }
  func.func @transform_1(%arg0: i32) -> (i32, i32, i32) {
    %c0_i32 = arith.constant 0 : i32
    %c0_i32_0 = arith.constant 0 : i32
    %c0_i32_1 = arith.constant 0 : i32
    %c0_i32_2 = arith.constant 0 : i32
    return %c0_i32, %c0_i32_0, %c0_i32_1 : i32, i32, i32
  }
  func.func @transform_2(%arg0: i32) -> (i32, i32) {
    %c0_i32 = arith.constant 0 : i32
    %c0_i32_0 = arith.constant 0 : i32
    %c0_i32_1 = arith.constant 0 : i32
    return %c0_i32, %c0_i32_0 : i32, i32
  }
  func.func @transform_3(%arg0: i32) -> (i32, i32, i32, i32) {
    %c0_i32 = arith.constant 0 : i32
    %c0_i32_0 = arith.constant 0 : i32
    %c0_i32_1 = arith.constant 0 : i32
    %c0_i32_2 = arith.constant 0 : i32
    return %arg0, %c0_i32, %c0_i32_0, %c0_i32_1 : i32, i32, i32, i32
  }
}

module attributes {stable_mosaic.version = 11 : i64} {
  func.func @fc1_q8_kernel(%arg0: i32, %arg1: i32, %arg2: memref<2x32768xbf16, #tpu.memory_space<vmem>>, %arg3: memref<32768x256xi8, #tpu.memory_space<vmem>>, %arg4: memref<1x256xf32, #tpu.memory_space<vmem>>, %arg5: memref<1x256xf32, #tpu.memory_space<vmem>>, %arg6: memref<2x256xf32, #tpu.memory_space<vmem>>, %arg7: memref<2x256xf32, #tpu.memory_space<vmem>>) attributes {dimension_semantics = [#tpu.dimension_semantics<parallel>, #tpu.dimension_semantics<arbitrary>], iteration_bounds = array<i64: 2, 16>, scalar_prefetch = 0 : i64, scratch_operands = 1 : i64, tpu.core_type = #tpu.core_type<tc>, window_params = [{transform_indices = @transform_0, window_bounds = array<i64: 2, 32768>}, {transform_indices = @transform_1, window_bounds = array<i64: 32768, 256>}, {transform_indices = @transform_2, window_bounds = array<i64: 1, 256>}, {transform_indices = @transform_3, window_bounds = array<i64: 1, 256>}, {transform_indices = @transform_4, window_bounds = array<i64: 2, 256>}]} {
    %c0_i32 = arith.constant 0 : i32
    %0 = arith.cmpi eq, %arg1, %c0_i32 : i32
    %1 = arith.extui %0 : i1 to i32
    %c0_i32_0 = arith.constant 0 : i32
    %2 = arith.cmpi ne, %1, %c0_i32_0 : i32
    scf.if %2 {
      %cst_7 = arith.constant 0.000000e+00 : f32
      %12 = vector.broadcast %cst_7 : f32 to vector<2x256xf32>
      %c0_8 = arith.constant 0 : index
      %c0_9 = arith.constant 0 : index
      %13 = vector.load %arg7[%c0_8, %c0_9] : memref<2x256xf32, #tpu.memory_space<vmem>>, vector<2x256xf32>
      tpu.vector_store %arg7[%c0_8, %c0_9], %12 {strides = array<i32>} : memref<2x256xf32, #tpu.memory_space<vmem>>, vector<2x256xf32>,
    } else {
    }
    %c0 = arith.constant 0 : index
    %c0_1 = arith.constant 0 : index
    %3 = vector.load %arg7[%c0, %c0_1] : memref<2x256xf32, #tpu.memory_space<vmem>>, vector<2x256xf32>
    %cst = arith.constant 0.000000e+00 : f32
    %4 = vector.broadcast %cst : f32 to vector<2x256xf32>
    %c0_i32_2 = arith.constant 0 : i32
    %c8_i32 = arith.constant 8 : i32
    %5 = arith.addi %c0_i32_2, %c8_i32 : i32
    %c1_i32 = arith.constant 1 : i32
    %6 = scf.for %arg8 = %c0_i32_2 to %5 step %c1_i32 iter_args(%arg9 = %4) -> (vector<2x256xf32>)  : i32 {
      %c4096_i32 = arith.constant 4096 : i32
      %12 = arith.muli %arg8, %c4096_i32 : i32
      %13 = tpu.assume_multiple %12, 4096 : i32
      %14 = arith.index_cast %13 : i32 to index
      %c0_7 = arith.constant 0 : index
      %15 = vector.load %arg3[%14, %c0_7] : memref<32768x256xi8, #tpu.memory_space<vmem>>, vector<4096x256xi8>
      %16 = arith.sitofp %15 : vector<4096x256xi8> to vector<4096x256xbf16>
      %c0_8 = arith.constant 0 : index
      %17 = arith.index_cast %13 : i32 to index
      %18 = vector.load %arg2[%c0_8, %17] : memref<2x32768xbf16, #tpu.memory_space<vmem>>, vector<2x4096xbf16>
      %cst_9 = arith.constant dense<0.000000e+00> : vector<2x256xf32>
      %19 = tpu.matmul %18, %16, %cst_9 {dimension_numbers = #tpu.dot_dimension_numbers<[1], [0], [0], [1], [0, 0, 1, 1], [], []>} : vector<2x4096xbf16>, vector<4096x256xbf16>, vector<2x256xf32> -> vector<2x256xf32>
      %20 = arith.addf %arg9, %19 : vector<2x256xf32>
      scf.yield %20 : vector<2x256xf32>
    }
    %c8_i32_3 = arith.constant 8 : i32
    %7 = arith.addf %3, %6 : vector<2x256xf32>
    %c0_4 = arith.constant 0 : index
    %c0_5 = arith.constant 0 : index
    %8 = vector.load %arg7[%c0_4, %c0_5] : memref<2x256xf32, #tpu.memory_space<vmem>>, vector<2x256xf32>
    tpu.vector_store %arg7[%c0_4, %c0_5], %7 {strides = array<i32>} : memref<2x256xf32, #tpu.memory_space<vmem>>, vector<2x256xf32>,
    %c15_i32 = arith.constant 15 : i32
    %9 = arith.cmpi eq, %arg1, %c15_i32 : i32
    %10 = arith.extui %9 : i1 to i32
    %c0_i32_6 = arith.constant 0 : i32
    %11 = arith.cmpi ne, %10, %c0_i32_6 : i32
    scf.if %11 {
      %c0_7 = arith.constant 0 : index
      %c0_8 = arith.constant 0 : index
      %12 = vector.load %arg7[%c0_7, %c0_8] : memref<2x256xf32, #tpu.memory_space<vmem>>, vector<2x256xf32>
      %c0_9 = arith.constant 0 : index
      %c0_10 = arith.constant 0 : index
      %13 = vector.load %arg4[%c0_9, %c0_10] : memref<1x256xf32, #tpu.memory_space<vmem>>, vector<1x256xf32>
      %14 = vector.broadcast %13 : vector<1x256xf32> to vector<2x256xf32>
      %15 = arith.mulf %12, %14 : vector<2x256xf32>
      %c0_11 = arith.constant 0 : index
      %c0_12 = arith.constant 0 : index
      %16 = vector.load %arg5[%c0_11, %c0_12] : memref<1x256xf32, #tpu.memory_space<vmem>>, vector<1x256xf32>
      %17 = vector.broadcast %16 : vector<1x256xf32> to vector<2x256xf32>
      %18 = arith.addf %15, %17 : vector<2x256xf32>
      %cst_13 = arith.constant 0.000000e+00 : f32
      %19 = vector.broadcast %cst_13 : f32 to vector<2x256xf32>
      %20 = arith.maximumf %18, %19 : vector<2x256xf32>
      %c0_14 = arith.constant 0 : index
      %c0_15 = arith.constant 0 : index
      %21 = vector.load %arg6[%c0_14, %c0_15] : memref<2x256xf32, #tpu.memory_space<vmem>>, vector<2x256xf32>
      tpu.vector_store %arg6[%c0_14, %c0_15], %20 {strides = array<i32>} : memref<2x256xf32, #tpu.memory_space<vmem>>, vector<2x256xf32>,
    } else {
    }
    return
  }
  func.func @transform_0(%arg0: i32, %arg1: i32) -> (i32, i32) {
    %c0_i32 = arith.constant 0 : i32
    %c0_i32_0 = arith.constant 0 : i32
    return %c0_i32, %arg1 : i32, i32
  }
  func.func @transform_1(%arg0: i32, %arg1: i32) -> (i32, i32) {
    %c0_i32 = arith.constant 0 : i32
    return %arg1, %arg0 : i32, i32
  }
  func.func @transform_2(%arg0: i32, %arg1: i32) -> (i32, i32) {
    %c0_i32 = arith.constant 0 : i32
    %c0_i32_0 = arith.constant 0 : i32
    return %c0_i32, %arg0 : i32, i32
  }
  func.func @transform_3(%arg0: i32, %arg1: i32) -> (i32, i32) {
    %c0_i32 = arith.constant 0 : i32
    %c0_i32_0 = arith.constant 0 : i32
    return %c0_i32, %arg0 : i32, i32
  }
  func.func @transform_4(%arg0: i32, %arg1: i32) -> (i32, i32) {
    %c0_i32 = arith.constant 0 : i32
    %c0_i32_0 = arith.constant 0 : i32
    return %c0_i32, %arg0 : i32, i32
  }
}

module attributes {stable_mosaic.version = 11 : i64} {
  func.func @fc2_kernel(%arg0: memref<2x512xf32, #tpu.memory_space<vmem>>, %arg1: memref<512x128xf32, #tpu.memory_space<vmem>>, %arg2: memref<1x128xf32, #tpu.memory_space<vmem>>, %arg3: memref<2x128xf32, #tpu.memory_space<vmem>>) attributes {dimension_semantics = [], scalar_prefetch = 0 : i64, scratch_operands = 0 : i64, tpu.core_type = #tpu.core_type<tc>} {
    %c0 = arith.constant 0 : index
    %c0_0 = arith.constant 0 : index
    %0 = vector.load %arg0[%c0, %c0_0] : memref<2x512xf32, #tpu.memory_space<vmem>>, vector<2x512xf32>
    %c0_1 = arith.constant 0 : index
    %c0_2 = arith.constant 0 : index
    %1 = vector.load %arg1[%c0_1, %c0_2] : memref<512x128xf32, #tpu.memory_space<vmem>>, vector<512x128xf32>
    %cst = arith.constant dense<0.000000e+00> : vector<2x128xf32>
    %2 = tpu.matmul %0, %1, %cst {dimension_numbers = #tpu.dot_dimension_numbers<[1], [0], [0], [1], [0, 0, 1, 1], [], []>} : vector<2x512xf32>, vector<512x128xf32>, vector<2x128xf32> -> vector<2x128xf32>
    %c0_3 = arith.constant 0 : index
    %c0_4 = arith.constant 0 : index
    %3 = vector.load %arg2[%c0_3, %c0_4] : memref<1x128xf32, #tpu.memory_space<vmem>>, vector<1x128xf32>
    %4 = vector.broadcast %3 : vector<1x128xf32> to vector<2x128xf32>
    %5 = arith.addf %2, %4 : vector<2x128xf32>
    %c0_5 = arith.constant 0 : index
    %c0_6 = arith.constant 0 : index
    %6 = vector.load %arg3[%c0_5, %c0_6] : memref<2x128xf32, #tpu.memory_space<vmem>>, vector<2x128xf32>
    tpu.vector_store %arg3[%c0_5, %c0_6], %5 {strides = array<i32>} : memref<2x128xf32, #tpu.memory_space<vmem>>, vector<2x128xf32>,
    return
  }
}

</mosaic_0001>

<llo_original>
// kernel: substance_detection_forward.4
$region0: #{substance_detection_forward.4}
  #allocation0 [shape = 'u32[]', space=smem, size = 0x4, offset = 0x4, fixed_abs, tag = 'smem constant byte address 0x4 - core index']
  #allocation1 [shape = 'u32[144,128]{1,0:T(1,128)}', space=vmem, size = 0x12000, scoped, tag = 'internal scratch']
  %s0 = inlined_call_operand.vmem [shape: bf16[2,66,64,9], index: 0, kind: input, shape index: {}]
  %s1 = inlined_call_operand.vmem [shape: bf16[3,9,64], index: 1, kind: input, shape index: {}]
  %s2 = inlined_call_operand.vmem [shape: f32[1,64], index: 2, kind: input, shape index: {}]
  %s3 = inlined_call_operand.vmem [shape: bf16[2,64,64,64], index: 3, kind: output, shape index: {}]
  %s4 = sld [smem:[#allocation0]]
  $region52: #{substance_detection_forward.4} parent=0
    _
  %s6 = ssub.s32 1, %s4
  %s7 = scalar_select 0, %s6, %s4
  loop: start=0, step=1, limit=4
  $region2: #{substance_detection_forward.4} parent=0 // loop_pre_header
    _
  $region3: #{substance_detection_forward.4} parent=0 // loop_header
    %s9 = sphi 0, %s13
    %p10 = scmp.ge.s32.totalorder %s9, 4
    %s19 = sphi 0, %s21
    %s22 = sphi 0, %s19
    %s23 = sphi 0, %s22
    %s39 = sphi 0, %s23
    %s43 = sphi 0, %s43
    %s45 = sphi 0, %s43
    %s46 = sphi 0, %s45
    %s60 = sphi 0, %s46
    %s64 = sphi 0, %s64
    %s66 = sphi 0, %s64
    %s67 = sphi 0, %s66
    %s81 = sphi 0, %s67
    %s87 = sphi 0, %s89
    %s90 = sphi 0, %s87
    %s91 = sphi 0, %s90
    %s107 = sphi 0, %s91
  $region4: #{substance_detection_forward.4} parent=0 // loop_header_branch
    %12 = sbr.rel (%p10) target = $region8
  $region5: #{substance_detection_forward.4} parent=0 // loop_body
    %s14 = ssub.s32 %s9, 1
    %s15 = ssub.s32 %s9, 2
    %s16 = sadd.s32 %s9, 1
    %s17 = ssub.s32 %s9, %s16
    %p18 = scmp.eq.s32.totalorder %s17, 0
    %s20 = sadd.s32 %s19, 1
    %s21 = scalar_select %p18, %s19, %s20
    %p24 = pneg %p18
    %p25 = scmp.eq.s32.totalorder %s9, 1
    %p26 = por %p24, %p25
    %p27 = scmp.ne.s32.totalorder %s19, %s22
    %p28 = scmp.eq.s32.totalorder %s9, 0
    %p29 = por %p27, %p28
    %p30 = scmp.ne.s32.totalorder %s19, %s22
    %p31 = scmp.eq.s32.totalorder %s14, 1
    %p32 = por %p30, %p31
    %p33 = scmp.ne.s32.totalorder %s22, %s23
    %p34 = scmp.eq.s32.totalorder %s14, 0
    %p35 = por %p33, %p34
    %p36 = scmp.ne.s32.totalorder %s22, %s23
    %p37 = scmp.eq.s32.totalorder %s15, 1
    %p38 = por %p36, %p37
    %p40 = scmp.ne.s32.totalorder %s23, %s39
    %p41 = scmp.eq.s32.totalorder %s15, 0
    %p42 = por %p40, %p41
    %s44 = sadd.s32 %s43, 1
    %p47 = scmp.eq.s32.totalorder %s9, 1
    %p48 = scmp.ne.s32.totalorder %s43, %s45
    %p49 = scmp.eq.s32.totalorder %s9, 0
    %p50 = por %p48, %p49
    %p51 = scmp.ne.s32.totalorder %s43, %s45
    %p52 = scmp.eq.s32.totalorder %s14, 1
    %p53 = por %p51, %p52
    %p54 = scmp.ne.s32.totalorder %s45, %s46
    %p55 = scmp.eq.s32.totalorder %s14, 0
    %p56 = por %p54, %p55
    %p57 = scmp.ne.s32.totalorder %s45, %s46
    %p58 = scmp.eq.s32.totalorder %s15, 1
    %p59 = por %p57, %p58
    %p61 = scmp.ne.s32.totalorder %s46, %s60
    %p62 = scmp.eq.s32.totalorder %s15, 0
    %p63 = por %p61, %p62
    %s65 = sadd.s32 %s64, 1
    %p68 = scmp.eq.s32.totalorder %s9, 1
    %p69 = scmp.ne.s32.totalorder %s64, %s66
    %p70 = scmp.eq.s32.totalorder %s9, 0
    %p71 = por %p69, %p70
    %p72 = scmp.ne.s32.totalorder %s64, %s66
    %p73 = scmp.eq.s32.totalorder %s14, 1
    %p74 = por %p72, %p73
    %p75 = scmp.ne.s32.totalorder %s66, %s67
    %p76 = scmp.eq.s32.totalorder %s14, 0
    %p77 = por %p75, %p76
    %p78 = scmp.ne.s32.totalorder %s66, %s67
    %p79 = scmp.eq.s32.totalorder %s15, 1
    %p80 = por %p78, %p79
    %p82 = scmp.ne.s32.totalorder %s67, %s81
    %p83 = scmp.eq.s32.totalorder %s15, 0
    %p84 = por %p82, %p83
    %s85 = ssub.s32 %s9, %s16
    %p86 = scmp.eq.s32.totalorder %s85, 0
    %s88 = sadd.s32 %s87, 1
    %s89 = scalar_select %p86, %s87, %s88
    %p92 = pneg %p86
    %p93 = scmp.eq.s32.totalorder %s9, 1
    %p94 = por %p92, %p93
    %p95 = scmp.ne.s32.totalorder %s87, %s90
    %p96 = scmp.eq.s32.totalorder %s9, 0
    %p97 = por %p95, %p96
    %p98 = scmp.ne.s32.totalorder %s87, %s90
    %p99 = scmp.eq.s32.totalorder %s14, 1
    %p100 = por %p98, %p99
    %p101 = scmp.ne.s32.totalorder %s90, %s91
    %p102 = scmp.eq.s32.totalorder %s14, 0
    %p103 = por %p101, %p102
    %p104 = scmp.ne.s32.totalorder %s90, %s91
    %p105 = scmp.eq.s32.totalorder %s15, 1
    %p106 = por %p104, %p105
    %p108 = scmp.ne.s32.totalorder %s91, %s107
    %p109 = scmp.eq.s32.totalorder %s15, 0
    %p110 = por %p108, %p109
    %p111 = scmp.le.s32.totalorder 1, %s9
    %p112 = scmp.lt.s32.totalorder %s9, 3
    %p113 = pnand %p111, %p112
    %p114 = pneg %p113
    // Predicated region
    $region9: #{substance_detection_forward.4} parent=5 // pred_check
      _
    $region10: #{substance_detection_forward.4} parent=5 // pred_check_branch
      %116 = sbr.rel (%p113) target = $region12
    $region11: #{substance_detection_forward.4} parent=5 // pred_region
      %s117 = ssub.s32 %s9, 1
      // Predicated region
      $region13: #{substance_detection_forward.4} parent=11 // pred_check
        %p118 = pneg %p56
      $region14: #{substance_detection_forward.4} parent=11 // pred_check_branch
        %120 = sbr.rel (%p118) target = $region16
      $region15: #{substance_detection_forward.4} parent=11 // pred_region
        _
      $region16: #{substance_detection_forward.4} parent=11 // pred_fallthru
        _
      // Predicated region
      $region17: #{substance_detection_forward.4} parent=11 // pred_check
        %p121 = pneg %p77
      $region18: #{substance_detection_forward.4} parent=11 // pred_check_branch
        %123 = sbr.rel (%p121) target = $region20
      $region19: #{substance_detection_forward.4} parent=11 // pred_region
        _
      $region20: #{substance_detection_forward.4} parent=11 // pred_fallthru
        _
    $region12: #{substance_detection_forward.4} parent=5 // pred_fallthru
      _
    %p124 = scmp.lt.s32.totalorder %s9, 2
    // Predicated region
    $region21: #{substance_detection_forward.4} parent=5 // pred_check
      %p125 = pneg %p124
    $region22: #{substance_detection_forward.4} parent=5 // pred_check_branch
      %127 = sbr.rel (%p125) target = $region24
    $region23: #{substance_detection_forward.4} parent=5 // pred_region
      // Predicated region
      $region25: #{substance_detection_forward.4} parent=23 // pred_check
        %p128 = pneg %p29
      $region26: #{substance_detection_forward.4} parent=23 // pred_check_branch
        %130 = sbr.rel (%p128) target = $region28
      $region27: #{substance_detection_forward.4} parent=23 // pred_region
        %p131 = scmp.lt.s32.totalorder %s9, 1
        %s132 = scalar_select %p131, %s9, 1
        %s133 = smul.addr %s132, 528
        %s134 = smul.addr %s133, 4
        %s135 = scalar_lea.vmem %s0, %s134
      $region28: #{substance_detection_forward.4} parent=23 // pred_fallthru
        _
    $region24: #{substance_detection_forward.4} parent=5 // pred_fallthru
      _
    %p136 = scmp.le.s32.totalorder 1, %s9
    %p137 = scmp.lt.s32.totalorder %s9, 3
    %p138 = pnand %p136, %p137
    %p139 = pneg %p138
    // Predicated region
    $region29: #{substance_detection_forward.4} parent=5 // pred_check
      _
    $region30: #{substance_detection_forward.4} parent=5 // pred_check_branch
      %141 = sbr.rel (%p138) target = $region32
    $region31: #{substance_detection_forward.4} parent=5 // pred_region
      %s142 = ssub.s32 %s9, 1
      %p143 = scmp.lt.s32.totalorder %s14, 1
      %s144 = scalar_select %p143, %s14, 1
      %s145 = smul.addr %s144, 528
      %s146 = smul.addr %s145, 4
      %s147 = scalar_lea.vmem %s0, %s146
      %p148 = pneg %p35
      %p149 = pneg %p32
      %p150 = pneg %p56
      %p151 = pneg %p53
      %p152 = pneg %p77
      %p153 = pneg %p74
      %p154 = pneg %p103
      %p155 = pneg %p100
      %p156 = scmp.lt.s32.totalorder %s14, 1
      %s157 = scalar_select %p156, %s14, 1
      %s158 = smul.addr %s157, 512
      %s159 = smul.addr %s158, 4
      %s160 = scalar_lea.vmem %s3, %s159
      %p161 = scmp.lt.s32.totalorder %s14, 1
      %s162 = scalar_select %p161, %s14, 1
      %s163 = smul.addr %s162, 528
      %s164 = smul.addr %s163, 4
      %s165 = scalar_lea.vmem %s0, %s164
      %p166 = scmp.lt.s32.totalorder %s14, 1
      %s167 = scalar_select %p166, %s14, 1
      %s168 = smul.addr %s167, 512
      %s169 = smul.addr %s168, 4
      %s170 = scalar_lea.vmem %s3, %s169
      %v172 = vld [vmem:[%s2] sm:$0x1]
      loop: start=0, step=1, limit=8
      $region33: #{substance_detection_forward.4} parent=31 // loop_pre_header
        _
      $region34: #{substance_detection_forward.4} parent=31 // loop_header
        %s174 = sphi 0, %s178
        %p175 = scmp.ge.s32.totalorder %s174, 8
      $region35: #{substance_detection_forward.4} parent=31 // loop_header_branch
        %177 = sbr.rel (%p175) target = $region39
      $region36: #{substance_detection_forward.4} parent=31 // loop_body
        %s179 = smul.u32 %s174, 8
        %s180 = smul.u32 %s179, 8
        %s181 = smul.addr %s180, 4
        %s182 = scalar_lea.vmem %s165, %s181
        %v183 = vld [vmem:[%s182] sm:$0xf]
        %v184 = vld [vmem:[%s182 + $0x4] sm:$0xf]
        %v185 = vld [vmem:[%s182 + $0x8] sm:$0xf]
        %v186 = vld [vmem:[%s182 + $0xc] sm:$0xf]
        %v187 = vld [vmem:[%s182 + $0x10] sm:$0xf]
        %v188 = vld [vmem:[%s182 + $0x14] sm:$0xf]
        %v189 = vld [vmem:[%s182 + $0x18] sm:$0xf]
        %v190 = vld [vmem:[%s182 + $0x1c] sm:$0xf]
        %v191 = vld [vmem:[%s182 + $0x20] sm:$0xf]
        %v192 = vld [vmem:[%s182 + $0x24] sm:$0xf]
        %v193 = vld [vmem:[%s182 + $0x28] sm:$0xf]
        %v194 = vld [vmem:[%s182 + $0x2c] sm:$0xf]
        %v195 = vld [vmem:[%s182 + $0x30] sm:$0xf]
        %v196 = vld [vmem:[%s182 + $0x34] sm:$0xf]
        %v197 = vld [vmem:[%s182 + $0x38] sm:$0xf]
        %v198 = vld [vmem:[%s182 + $0x3c] sm:$0xf]
        %v199 = vld [vmem:[%s182 + $0x40] sm:$0xf]
        %v200 = vld [vmem:[%s182 + $0x44] sm:$0xf]
        %v201 = vld [vmem:[%s182 + $0x48] sm:$0xf]
        %v202 = vld [vmem:[%s182 + $0x4c] sm:$0xf]
        %v203 = vld [vmem:[%s182 + $0x50] sm:$0xf]
        %v204 = vld [vmem:[%s182 + $0x54] sm:$0xf]
        %v205 = vld [vmem:[%s182 + $0x58] sm:$0xf]
        %v206 = vld [vmem:[%s182 + $0x5c] sm:$0xf]
        %v207 = vld [vmem:[%s182 + $0x60] sm:$0xf]
        %v208 = vld [vmem:[%s182 + $0x64] sm:$0xf]
        %v209 = vld [vmem:[%s182 + $0x68] sm:$0xf]
        %v210 = vld [vmem:[%s182 + $0x6c] sm:$0xf]
        %v211 = vld [vmem:[%s182 + $0x70] sm:$0xf]
        %v212 = vld [vmem:[%s182 + $0x74] sm:$0xf]
        %v213 = vld [vmem:[%s182 + $0x78] sm:$0xf]
        %v214 = vld [vmem:[%s182 + $0x7c] sm:$0xf]
        %v215 = vld [vmem:[%s182 + $0x80] sm:$0xf]
        %v216 = vld [vmem:[%s182 + $0x84] sm:$0xf]
        %v217 = vld [vmem:[%s182 + $0x88] sm:$0xf]
        %v218 = vld [vmem:[%s182 + $0x8c] sm:$0xf]
        %v219 = vld [vmem:[%s182 + $0x90] sm:$0xf]
        %v220 = vld [vmem:[%s182 + $0x94] sm:$0xf]
        %v221 = vld [vmem:[%s182 + $0x98] sm:$0xf]
        %v222 = vld [vmem:[%s182 + $0x9c] sm:$0xf]
        %v223 = vld [vmem:[%s182 + $0xa0] sm:$0xf]
        %v224 = vld [vmem:[%s182 + $0xa4] sm:$0xf]
        %v225 = vld [vmem:[%s182 + $0xa8] sm:$0xf]
        %v226 = vld [vmem:[%s182 + $0xac] sm:$0xf]
        %v227 = vld [vmem:[%s182 + $0xb0] sm:$0xf]
        %v228 = vld [vmem:[%s182 + $0xb4] sm:$0xf]
        %v229 = vld [vmem:[%s182 + $0xb8] sm:$0xf]
        %v230 = vld [vmem:[%s182 + $0xbc] sm:$0xf]
        %v231 = vld [vmem:[%s182 + $0xc0] sm:$0xf]
        %v232 = vld [vmem:[%s182 + $0xc4] sm:$0xf]
        %v233 = vld [vmem:[%s182 + $0xc8] sm:$0xf]
        %v234 = vld [vmem:[%s182 + $0xcc] sm:$0xf]
        %v235 = vld [vmem:[%s182 + $0xd0] sm:$0xf]
        %v236 = vld [vmem:[%s182 + $0xd4] sm:$0xf]
        %v237 = vld [vmem:[%s182 + $0xd8] sm:$0xf]
        %v238 = vld [vmem:[%s182 + $0xdc] sm:$0xf]
        %v239 = vld [vmem:[%s182 + $0xe0] sm:$0xf]
        %v240 = vld [vmem:[%s182 + $0xe4] sm:$0xf]
        %v241 = vld [vmem:[%s182 + $0xe8] sm:$0xf]
        %v242 = vld [vmem:[%s182 + $0xec] sm:$0xf]
        %v243 = vld [vmem:[%s182 + $0xf0] sm:$0xf]
        %v244 = vld [vmem:[%s182 + $0xf4] sm:$0xf]
        %v245 = vld [vmem:[%s182 + $0xf8] sm:$0xf]
        %v246 = vld [vmem:[%s182 + $0xfc] sm:$0xf]
        %v247 = vld [vmem:[%s1] sm:$0xf]
        %v248 = vld [vmem:[%s1 + $0x4] sm:$0x1]
        %s249 = sadd.s32 %s179, 1
        %s250 = smul.u32 %s249, 8
        %s251 = smul.addr %s250, 4
        %s252 = scalar_lea.vmem %s165, %s251
        %v253 = vld [vmem:[%s252] sm:$0xf]
        %v254 = vld [vmem:[%s252 + $0x4] sm:$0xf]
        %v255 = vld [vmem:[%s252 + $0x8] sm:$0xf]
        %v256 = vld [vmem:[%s252 + $0xc] sm:$0xf]
        %v257 = vld [vmem:[%s252 + $0x10] sm:$0xf]
        %v258 = vld [vmem:[%s252 + $0x14] sm:$0xf]
        %v259 = vld [vmem:[%s252 + $0x18] sm:$0xf]
        %v260 = vld [vmem:[%s252 + $0x1c] sm:$0xf]
        %v261 = vld [vmem:[%s252 + $0x20] sm:$0xf]
        %v262 = vld [vmem:[%s252 + $0x24] sm:$0xf]
        %v263 = vld [vmem:[%s252 + $0x28] sm:$0xf]
        %v264 = vld [vmem:[%s252 + $0x2c] sm:$0xf]
        %v265 = vld [vmem:[%s252 + $0x30] sm:$0xf]
        %v266 = vld [vmem:[%s252 + $0x34] sm:$0xf]
        %v267 = vld [vmem:[%s252 + $0x38] sm:$0xf]
        %v268 = vld [vmem:[%s252 + $0x3c] sm:$0xf]
        %v269 = vld [vmem:[%s252 + $0x40] sm:$0xf]
        %v270 = vld [vmem:[%s252 + $0x44] sm:$0xf]
        %v271 = vld [vmem:[%s252 + $0x48] sm:$0xf]
        %v272 = vld [vmem:[%s252 + $0x4c] sm:$0xf]
        %v273 = vld [vmem:[%s252 + $0x50] sm:$0xf]
        %v274 = vld [vmem:[%s252 + $0x54] sm:$0xf]
        %v275 = vld [vmem:[%s252 + $0x58] sm:$0xf]
        %v276 = vld [vmem:[%s252 + $0x5c] sm:$0xf]
        %v277 = vld [vmem:[%s252 + $0x60] sm:$0xf]
        %v278 = vld [vmem:[%s252 + $0x64] sm:$0xf]
        %v279 = vld [vmem:[%s252 + $0x68] sm:$0xf]
        %v280 = vld [vmem:[%s252 + $0x6c] sm:$0xf]
        %v281 = vld [vmem:[%s252 + $0x70] sm:$0xf]
        %v282 = vld [vmem:[%s252 + $0x74] sm:$0xf]
        %v283 = vld [vmem:[%s252 + $0x78] sm:$0xf]
        %v284 = vld [vmem:[%s252 + $0x7c] sm:$0xf]
        %v285 = vld [vmem:[%s252 + $0x80] sm:$0xf]
        %v286 = vld [vmem:[%s252 + $0x84] sm:$0xf]
        %v287 = vld [vmem:[%s252 + $0x88] sm:$0xf]
        %v288 = vld [vmem:[%s252 + $0x8c] sm:$0xf]
        %v289 = vld [vmem:[%s252 + $0x90] sm:$0xf]
        %v290 = vld [vmem:[%s252 + $0x94] sm:$0xf]
        %v291 = vld [vmem:[%s252 + $0x98] sm:$0xf]
        %v292 = vld [vmem:[%s252 + $0x9c] sm:$0xf]
        %v293 = vld [vmem:[%s252 + $0xa0] sm:$0xf]
        %v294 = vld [vmem:[%s252 + $0xa4] sm:$0xf]
        %v295 = vld [vmem:[%s252 + $0xa8] sm:$0xf]
        %v296 = vld [vmem:[%s252 + $0xac] sm:$0xf]
        %v297 = vld [vmem:[%s252 + $0xb0] sm:$0xf]
        %v298 = vld [vmem:[%s252 + $0xb4] sm:$0xf]
        %v299 = vld [vmem:[%s252 + $0xb8] sm:$0xf]
        %v300 = vld [vmem:[%s252 + $0xbc] sm:$0xf]
        %v301 = vld [vmem:[%s252 + $0xc0] sm:$0xf]
        %v302 = vld [vmem:[%s252 + $0xc4] sm:$0xf]
        %v303 = vld [vmem:[%s252 + $0xc8] sm:$0xf]
        %v304 = vld [vmem:[%s252 + $0xcc] sm:$0xf]
        %v305 = vld [vmem:[%s252 + $0xd0] sm:$0xf]
        %v306 = vld [vmem:[%s252 + $0xd4] sm:$0xf]
        %v307 = vld [vmem:[%s252 + $0xd8] sm:$0xf]
        %v308 = vld [vmem:[%s252 + $0xdc] sm:$0xf]
        %v309 = vld [vmem:[%s252 + $0xe0] sm:$0xf]
        %v310 = vld [vmem:[%s252 + $0xe4] sm:$0xf]
        %v311 = vld [vmem:[%s252 + $0xe8] sm:$0xf]
        %v312 = vld [vmem:[%s252 + $0xec] sm:$0xf]
        %v313 = vld [vmem:[%s252 + $0xf0] sm:$0xf]
        %v314 = vld [vmem:[%s252 + $0xf4] sm:$0xf]
        %v315 = vld [vmem:[%s252 + $0xf8] sm:$0xf]
        %v316 = vld [vmem:[%s252 + $0xfc] sm:$0xf]
        %s317 = scalar_lea.vmem %s1, 8
        %v318 = vld [vmem:[%s317] sm:$0xf]
        %v319 = vld [vmem:[%s317 + $0x4] sm:$0x1]
        %v384 = vunpack.c.l.b16 %v253
        %v385 = vunpack.c.l.b16 %v254
        %v386 = vunpack.c.l.b16 %v255
        %v387 = vunpack.c.l.b16 %v256
        %v388 = vunpack.c.l.b16 %v257
        %v389 = vunpack.c.l.b16 %v258
        %v390 = vunpack.c.l.b16 %v259
        %v391 = vunpack.c.l.b16 %v260
        %v392 = vunpack.c.l.b16 %v261
        %v393 = vunpack.c.l.b16 %v262
        %v394 = vunpack.c.l.b16 %v263
        %v395 = vunpack.c.l.b16 %v264
        %v396 = vunpack.c.l.b16 %v265
        %v397 = vunpack.c.l.b16 %v266
        %v398 = vunpack.c.l.b16 %v267
        %v399 = vunpack.c.l.b16 %v268
        %v400 = vunpack.c.l.b16 %v269
        %v401 = vunpack.c.l.b16 %v270
        %v402 = vunpack.c.l.b16 %v271
        %v403 = vunpack.c.l.b16 %v272
        %v404 = vunpack.c.l.b16 %v273
        %v405 = vunpack.c.l.b16 %v274
        %v406 = vunpack.c.l.b16 %v275
        %v407 = vunpack.c.l.b16 %v276
        %v408 = vunpack.c.l.b16 %v277
        %v409 = vunpack.c.l.b16 %v278
        %v410 = vunpack.c.l.b16 %v279
        %v411 = vunpack.c.l.b16 %v280
        %v412 = vunpack.c.l.b16 %v281
        %v413 = vunpack.c.l.b16 %v282
        %v414 = vunpack.c.l.b16 %v283
        %v415 = vunpack.c.l.b16 %v284
        %v416 = vunpack.c.l.b16 %v285
        %v417 = vunpack.c.l.b16 %v286
        %v418 = vunpack.c.l.b16 %v287
        %v419 = vunpack.c.l.b16 %v288
        %v420 = vunpack.c.l.b16 %v289
        %v421 = vunpack.c.l.b16 %v290
        %v422 = vunpack.c.l.b16 %v291
        %v423 = vunpack.c.l.b16 %v292
        %v424 = vunpack.c.l.b16 %v293
        %v425 = vunpack.c.l.b16 %v294
        %v426 = vunpack.c.l.b16 %v295
        %v427 = vunpack.c.l.b16 %v296
        %v428 = vunpack.c.l.b16 %v297
        %v429 = vunpack.c.l.b16 %v298
        %v430 = vunpack.c.l.b16 %v299
        %v431 = vunpack.c.l.b16 %v300
        %v432 = vunpack.c.l.b16 %v301
        %v433 = vunpack.c.l.b16 %v302
        %v434 = vunpack.c.l.b16 %v303
        %v435 = vunpack.c.l.b16 %v304
        %v436 = vunpack.c.l.b16 %v305
        %v437 = vunpack.c.l.b16 %v306
        %v438 = vunpack.c.l.b16 %v307
        %v439 = vunpack.c.l.b16 %v308
        %v440 = vunpack.c.l.b16 %v309
        %v441 = vunpack.c.l.b16 %v310
        %v442 = vunpack.c.l.b16 %v311
        %v443 = vunpack.c.l.b16 %v312
        %v444 = vunpack.c.l.b16 %v313
        %v445 = vunpack.c.l.b16 %v314
        %v446 = vunpack.c.l.b16 %v315
        %v447 = vunpack.c.l.b16 %v316
        %v448 = vpack.c.b16 %v385, %v384
        %v449 = vpack.c.b16 %v387, %v386
        %v450 = vpack.c.b16 %v389, %v388
        %v451 = vpack.c.b16 %v391, %v390
        %v452 = vpack.c.b16 %v393, %v392
        %v453 = vpack.c.b16 %v395, %v394
        %v454 = vpack.c.b16 %v397, %v396
        %v455 = vpack.c.b16 %v399, %v398
        %v456 = vpack.c.b16 %v401, %v400
        %v457 = vpack.c.b16 %v403, %v402
        %v458 = vpack.c.b16 %v405, %v404
        %v459 = vpack.c.b16 %v407, %v406
        %v460 = vpack.c.b16 %v409, %v408
        %v461 = vpack.c.b16 %v411, %v410
        %v462 = vpack.c.b16 %v413, %v412
        %v463 = vpack.c.b16 %v415, %v414
        %v464 = vpack.c.b16 %v417, %v416
        %v465 = vpack.c.b16 %v419, %v418
        %v466 = vpack.c.b16 %v421, %v420
        %v467 = vpack.c.b16 %v423, %v422
        %v468 = vpack.c.b16 %v425, %v424
        %v469 = vpack.c.b16 %v427, %v426
        %v470 = vpack.c.b16 %v429, %v428
        %v471 = vpack.c.b16 %v431, %v430
        %v472 = vpack.c.b16 %v433, %v432
        %v473 = vpack.c.b16 %v435, %v434
        %v474 = vpack.c.b16 %v437, %v436
        %v475 = vpack.c.b16 %v439, %v438
        %v476 = vpack.c.b16 %v441, %v440
        %v477 = vpack.c.b16 %v443, %v442
        %v478 = vpack.c.b16 %v445, %v444
        %v479 = vpack.c.b16 %v447, %v446
        %v482 = vunpack.c.l.b16 %v318
        %v483 = vunpack.c.l.b16 %v319
        %v484 = vpack.c.b16 %v483, %v482
        %vm485 = vcmask 72704
        %v487 = vsel %vm485, %v448, 0
        %v490 = vsel %vm485, %v449, 0
        %v493 = vsel %vm485, %v450, 0
        %v496 = vsel %vm485, %v451, 0
        %v499 = vsel %vm485, %v452, 0
        %v502 = vsel %vm485, %v453, 0
        %v505 = vsel %vm485, %v454, 0
        %v508 = vsel %vm485, %v455, 0
        %v511 = vsel %vm485, %v456, 0
        %v514 = vsel %vm485, %v457, 0
        %v517 = vsel %vm485, %v458, 0
        %v520 = vsel %vm485, %v459, 0
        %v523 = vsel %vm485, %v460, 0
        %v526 = vsel %vm485, %v461, 0
        %v529 = vsel %vm485, %v462, 0
        %v532 = vsel %vm485, %v463, 0
        %v535 = vsel %vm485, %v464, 0
        %v538 = vsel %vm485, %v465, 0
        %v541 = vsel %vm485, %v466, 0
        %v544 = vsel %vm485, %v467, 0
        %v547 = vsel %vm485, %v468, 0
        %v550 = vsel %vm485, %v469, 0
        %v553 = vsel %vm485, %v470, 0
        %v556 = vsel %vm485, %v471, 0
        %v559 = vsel %vm485, %v472, 0
        %v562 = vsel %vm485, %v473, 0
        %v565 = vsel %vm485, %v474, 0
        %v568 = vsel %vm485, %v475, 0
        %v571 = vsel %vm485, %v476, 0
        %v574 = vsel %vm485, %v477, 0
        %v577 = vsel %vm485, %v478, 0
        %v580 = vsel %vm485, %v479, 0
        %vm582 = vcmask 1043456
        %vm583 = vcmask 1044480
        %v584 = vsel %vm582, 4294967295, 65535
        %v585 = vsel %vm583, %v584, 0
        %v587 = vand.u32 %v484, %v585
        %589 = vmatprep.subr.bf16.mxu0 0
        %590 = vmatpush1.bf16.msra.mxu0 %v587
        %591 = vmatprep.subr.bf16.mxu0 0
        %592 = vmatpush1.bf16.msra.mxu0 0
        %593 = vmatprep.subr.bf16.mxu0 0
        %594 = vmatpush1.bf16.msra.mxu0 0
        %595 = vmatprep.subr.bf16.mxu0 0
        %596 = vmatpush1.bf16.msra.mxu0 0
        %597 = vmatprep.subr.bf16.mxu0 0
        %598 = vmatpush1.bf16.msra.mxu0 0
        %599 = vmatprep.subr.bf16.mxu0 0
        %600 = vmatpush1.bf16.msra.mxu0 0
        %601 = vmatprep.subr.bf16.mxu0 0
        %602 = vmatpush1.bf16.msra.mxu0 0
        %603 = vmatprep.subr.bf16.mxu0 0
        %604 = vmatpush1.bf16.msra.mxu0 0
        %605 = vmatprep.subr.bf16.mxu0 0
        %606 = vmatpush1.bf16.msra.mxu0 0
        %607 = vmatprep.subr.bf16.mxu0 0
        %608 = vmatpush1.bf16.msra.mxu0 0
        %609 = vmatprep.subr.bf16.mxu0 0
        %610 = vmatpush1.bf16.msra.mxu0 0
        %611 = vmatprep.subr.bf16.mxu0 0
        %612 = vmatpush1.bf16.msra.mxu0 0
        %613 = vmatprep.subr.bf16.mxu0 0
        %614 = vmatpush1.bf16.msra.mxu0 0
        %615 = vmatprep.subr.bf16.mxu0 0
        %616 = vmatpush1.bf16.msra.mxu0 0
        %617 = vmatprep.subr.bf16.mxu0 0
        %618 = vmatpush1.bf16.msra.mxu0 0
        %619 = vmatprep.subr.bf16.mxu0 0
        %620 = vmatpush1.bf16.msra.mxu0 0
        %621 = vmatprep.mubr.bf16.mxu0 0
        %622 = vmatmul.mubr.bf16.gmra.mrb[0].mxu0 %v487
        %v623 = vpop.f32.mrb[0].mxu0
        %v624 = vadd.f32 0.0, %v623
        %v625 = vpop.f32.mrb[0].mxu0
        %v626 = vpop.f32.mrb[0].mxu0
        %v627 = vadd.f32 0.0, %v626
        %v628 = vpop.f32.mrb[0].mxu0
        %629 = vmatprep.mubr.bf16.mxu0 0
        %630 = vmatmul.mubr.bf16.gmra.mrb[0].mxu0 %v490
        %v631 = vpop.f32.mrb[0].mxu0
        %v632 = vadd.f32 0.0, %v631
        %v633 = vpop.f32.mrb[0].mxu0
        %v634 = vpop.f32.mrb[0].mxu0
        %v635 = vadd.f32 0.0, %v634
        %v636 = vpop.f32.mrb[0].mxu0
        %637 = vmatprep.mubr.bf16.mxu0 0
        %638 = vmatmul.mubr.bf16.gmra.mrb[0].mxu0 %v493
        %v639 = vpop.f32.mrb[0].mxu0
        %v640 = vadd.f32 0.0, %v639
        %v641 = vpop.f32.mrb[0].mxu0
        %v642 = vpop.f32.mrb[0].mxu0
        %v643 = vadd.f32 0.0, %v642
        %v644 = vpop.f32.mrb[0].mxu0
        %645 = vmatprep.mubr.bf16.mxu0 0
        %646 = vmatmul.mubr.bf16.gmra.mrb[0].mxu0 %v496
        %v647 = vpop.f32.mrb[0].mxu0
        %v648 = vadd.f32 0.0, %v647
        %v649 = vpop.f32.mrb[0].mxu0
        %v650 = vpop.f32.mrb[0].mxu0
        %v651 = vadd.f32 0.0, %v650
        %v652 = vpop.f32.mrb[0].mxu0
        %653 = vmatprep.mubr.bf16.mxu0 0
        %654 = vmatmul.mubr.bf16.gmra.mrb[0].mxu0 %v499
        %v655 = vpop.f32.mrb[0].mxu0
        %v656 = vadd.f32 0.0, %v655
        %v657 = vpop.f32.mrb[0].mxu0
        %v658 = vpop.f32.mrb[0].mxu0
        %v659 = vadd.f32 0.0, %v658
        %v660 = vpop.f32.mrb[0].mxu0
        %661 = vmatprep.mubr.bf16.mxu0 0
        %662 = vmatmul.mubr.bf16.gmra.mrb[0].mxu0 %v502
        %v663 = vpop.f32.mrb[0].mxu0
        %v664 = vadd.f32 0.0, %v663
        %v665 = vpop.f32.mrb[0].mxu0
        %v666 = vpop.f32.mrb[0].mxu0
        %v667 = vadd.f32 0.0, %v666
        %v668 = vpop.f32.mrb[0].mxu0
        %669 = vmatprep.mubr.bf16.mxu0 0
        %670 = vmatmul.mubr.bf16.gmra.mrb[0].mxu0 %v505
        %v671 = vpop.f32.mrb[0].mxu0
        %v672 = vadd.f32 0.0, %v671
        %v673 = vpop.f32.mrb[0].mxu0
        %v674 = vpop.f32.mrb[0].mxu0
        %v675 = vadd.f32 0.0, %v674
        %v676 = vpop.f32.mrb[0].mxu0
        %677 = vmatprep.mubr.bf16.mxu0 0
        %678 = vmatmul.mubr.bf16.gmra.mrb[0].mxu0 %v508
        %v679 = vpop.f32.mrb[0].mxu0
        %v680 = vadd.f32 0.0, %v679
        %v681 = vpop.f32.mrb[0].mxu0
        %v682 = vpop.f32.mrb[0].mxu0
        %v683 = vadd.f32 0.0, %v682
        %v684 = vpop.f32.mrb[0].mxu0
        %685 = vmatprep.mubr.bf16.mxu0 0
        %686 = vmatmul.mubr.bf16.gmra.mrb[0].mxu0 %v511
        %v687 = vpop.f32.mrb[0].mxu0
        %v688 = vadd.f32 0.0, %v687
        %v689 = vpop.f32.mrb[0].mxu0
        %v690 = vpop.f32.mrb[0].mxu0
        %v691 = vadd.f32 0.0, %v690
        %v692 = vpop.f32.mrb[0].mxu0
        %693 = vmatprep.mubr.bf16.mxu0 0
        %694 = vmatmul.mubr.bf16.gmra.mrb[0].mxu0 %v514
        %v695 = vpop.f32.mrb[0].mxu0
        %v696 = vadd.f32 0.0, %v695
        %v697 = vpop.f32.mrb[0].mxu0
        %v698 = vpop.f32.mrb[0].mxu0
        %v699 = vadd.f32 0.0, %v698
        %v700 = vpop.f32.mrb[0].mxu0
        %701 = vmatprep.mubr.bf16.mxu0 0
        %702 = vmatmul.mubr.bf16.gmra.mrb[0].mxu0 %v517
        %v703 = vpop.f32.mrb[0].mxu0
        %v704 = vadd.f32 0.0, %v703
        %v705 = vpop.f32.mrb[0].mxu0
        %v706 = vpop.f32.mrb[0].mxu0
        %v707 = vadd.f32 0.0, %v706
        %v708 = vpop.f32.mrb[0].mxu0
        %709 = vmatprep.mubr.bf16.mxu0 0
        %710 = vmatmul.mubr.bf16.gmra.mrb[0].mxu0 %v520
        %v711 = vpop.f32.mrb[0].mxu0
        %v712 = vadd.f32 0.0, %v711
        %v713 = vpop.f32.mrb[0].mxu0
        %v714 = vpop.f32.mrb[0].mxu0
        %v715 = vadd.f32 0.0, %v714
        %v716 = vpop.f32.mrb[0].mxu0
        %717 = vmatprep.mubr.bf16.mxu0 0
        %718 = vmatmul.mubr.bf16.gmra.mrb[0].mxu0 %v523
        %v719 = vpop.f32.mrb[0].mxu0
        %v720 = vadd.f32 0.0, %v719
        %v721 = vpop.f32.mrb[0].mxu0
        %v722 = vpop.f32.mrb[0].mxu0
        %v723 = vadd.f32 0.0, %v722
        %v724 = vpop.f32.mrb[0].mxu0
        %725 = vmatprep.mubr.bf16.mxu0 0
        %726 = vmatmul.mubr.bf16.gmra.mrb[0].mxu0 %v526
        %v727 = vpop.f32.mrb[0].mxu0
        %v728 = vadd.f32 0.0, %v727
        %v729 = vpop.f32.mrb[0].mxu0
        %v730 = vpop.f32.mrb[0].mxu0
        %v731 = vadd.f32 0.0, %v730
        %v732 = vpop.f32.mrb[0].mxu0
        %733 = vmatprep.mubr.bf16.mxu0 0
        %734 = vmatmul.mubr.bf16.gmra.mrb[0].mxu0 %v529
        %v735 = vpop.f32.mrb[0].mxu0
        %v736 = vadd.f32 0.0, %v735
        %v737 = vpop.f32.mrb[0].mxu0
        %v738 = vpop.f32.mrb[0].mxu0
        %v739 = vadd.f32 0.0, %v738
        %v740 = vpop.f32.mrb[0].mxu0
        %741 = vmatprep.mubr.bf16.mxu0 0
        %742 = vmatmul.mubr.bf16.gmra.mrb[0].mxu0 %v532
        %v743 = vpop.f32.mrb[0].mxu0
        %v744 = vadd.f32 0.0, %v743
        %v745 = vpop.f32.mrb[0].mxu0
        %v746 = vpop.f32.mrb[0].mxu0
        %v747 = vadd.f32 0.0, %v746
        %v748 = vpop.f32.mrb[0].mxu0
        %749 = vmatprep.mubr.bf16.mxu0 0
        %750 = vmatmul.mubr.bf16.gmra.mrb[0].mxu0 %v535
        %v751 = vpop.f32.mrb[0].mxu0
        %v752 = vadd.f32 0.0, %v751
        %v753 = vpop.f32.mrb[0].mxu0
        %v754 = vpop.f32.mrb[0].mxu0
        %v755 = vadd.f32 0.0, %v754
        %v756 = vpop.f32.mrb[0].mxu0
        %757 = vmatprep.mubr.bf16.mxu0 0
        %758 = vmatmul.mubr.bf16.gmra.mrb[0].mxu0 %v538
        %v759 = vpop.f32.mrb[0].mxu0
        %v760 = vadd.f32 0.0, %v759
        %v761 = vpop.f32.mrb[0].mxu0
        %v762 = vpop.f32.mrb[0].mxu0
        %v763 = vadd.f32 0.0, %v762
        %v764 = vpop.f32.mrb[0].mxu0
        %765 = vmatprep.mubr.bf16.mxu0 0
        %766 = vmatmul.mubr.bf16.gmra.mrb[0].mxu0 %v541
        %v767 = vpop.f32.mrb[0].mxu0
        %v768 = vadd.f32 0.0, %v767
        %v769 = vpop.f32.mrb[0].mxu0
        %v770 = vpop.f32.mrb[0].mxu0
        %v771 = vadd.f32 0.0, %v770
        %v772 = vpop.f32.mrb[0].mxu0
        %773 = vmatprep.mubr.bf16.mxu0 0
        %774 = vmatmul.mubr.bf16.gmra.mrb[0].mxu0 %v544
        %v775 = vpop.f32.mrb[0].mxu0
        %v776 = vadd.f32 0.0, %v775
        %v777 = vpop.f32.mrb[0].mxu0
        %v778 = vpop.f32.mrb[0].mxu0
        %v779 = vadd.f32 0.0, %v778
        %v780 = vpop.f32.mrb[0].mxu0
        %781 = vmatprep.mubr.bf16.mxu0 0
        %782 = vmatmul.mubr.bf16.gmra.mrb[0].mxu0 %v547
        %v783 = vpop.f32.mrb[0].mxu0
        %v784 = vadd.f32 0.0, %v783
        %v785 = vpop.f32.mrb[0].mxu0
        %v786 = vpop.f32.mrb[0].mxu0
        %v787 = vadd.f32 0.0, %v786
        %v788 = vpop.f32.mrb[0].mxu0
        %789 = vmatprep.mubr.bf16.mxu0 0
        %790 = vmatmul.mubr.bf16.gmra.mrb[0].mxu0 %v550
        %v791 = vpop.f32.mrb[0].mxu0
        %v792 = vadd.f32 0.0, %v791
        %v793 = vpop.f32.mrb[0].mxu0
        %v794 = vpop.f32.mrb[0].mxu0
        %v795 = vadd.f32 0.0, %v794
        %v796 = vpop.f32.mrb[0].mxu0
        %797 = vmatprep.mubr.bf16.mxu0 0
        %798 = vmatmul.mubr.bf16.gmra.mrb[0].mxu0 %v553
        %v799 = vpop.f32.mrb[0].mxu0
        %v800 = vadd.f32 0.0, %v799
        %v801 = vpop.f32.mrb[0].mxu0
        %v802 = vpop.f32.mrb[0].mxu0
        %v803 = vadd.f32 0.0, %v802
        %v804 = vpop.f32.mrb[0].mxu0
        %805 = vmatprep.mubr.bf16.mxu0 0
        %806 = vmatmul.mubr.bf16.gmra.mrb[0].mxu0 %v556
        %v807 = vpop.f32.mrb[0].mxu0
        %v808 = vadd.f32 0.0, %v807
        %v809 = vpop.f32.mrb[0].mxu0
        %v810 = vpop.f32.mrb[0].mxu0
        %v811 = vadd.f32 0.0, %v810
        %v812 = vpop.f32.mrb[0].mxu0
        %813 = vmatprep.mubr.bf16.mxu0 0
        %814 = vmatmul.mubr.bf16.gmra.mrb[0].mxu0 %v559
        %v815 = vpop.f32.mrb[0].mxu0
        %v816 = vadd.f32 0.0, %v815
        %v817 = vpop.f32.mrb[0].mxu0
        %v818 = vpop.f32.mrb[0].mxu0
        %v819 = vadd.f32 0.0, %v818
        %v820 = vpop.f32.mrb[0].mxu0
        %821 = vmatprep.mubr.bf16.mxu0 0
        %822 = vmatmul.mubr.bf16.gmra.mrb[0].mxu0 %v562
        %v823 = vpop.f32.mrb[0].mxu0
        %v824 = vadd.f32 0.0, %v823
        %v825 = vpop.f32.mrb[0].mxu0
        %v826 = vpop.f32.mrb[0].mxu0
        %v827 = vadd.f32 0.0, %v826
        %v828 = vpop.f32.mrb[0].mxu0
        %829 = vmatprep.mubr.bf16.mxu0 0
        %830 = vmatmul.mubr.bf16.gmra.mrb[0].mxu0 %v565
        %v831 = vpop.f32.mrb[0].mxu0
        %v832 = vadd.f32 0.0, %v831
        %v833 = vpop.f32.mrb[0].mxu0
        %v834 = vpop.f32.mrb[0].mxu0
        %v835 = vadd.f32 0.0, %v834
        %v836 = vpop.f32.mrb[0].mxu0
        %837 = vmatprep.mubr.bf16.mxu0 0
        %838 = vmatmul.mubr.bf16.gmra.mrb[0].mxu0 %v568
        %v839 = vpop.f32.mrb[0].mxu0
        %v840 = vadd.f32 0.0, %v839
        %v841 = vpop.f32.mrb[0].mxu0
        %v842 = vpop.f32.mrb[0].mxu0
        %v843 = vadd.f32 0.0, %v842
        %v844 = vpop.f32.mrb[0].mxu0
        %845 = vmatprep.mubr.bf16.mxu0 0
        %846 = vmatmul.mubr.bf16.gmra.mrb[0].mxu0 %v571
        %v847 = vpop.f32.mrb[0].mxu0
        %v848 = vadd.f32 0.0, %v847
        %v849 = vpop.f32.mrb[0].mxu0
        %v850 = vpop.f32.mrb[0].mxu0
        %v851 = vadd.f32 0.0, %v850
        %v852 = vpop.f32.mrb[0].mxu0
        %853 = vmatprep.mubr.bf16.mxu0 0
        %854 = vmatmul.mubr.bf16.gmra.mrb[0].mxu0 %v574
        %v855 = vpop.f32.mrb[0].mxu0
        %v856 = vadd.f32 0.0, %v855
        %v857 = vpop.f32.mrb[0].mxu0
        %v858 = vpop.f32.mrb[0].mxu0
        %v859 = vadd.f32 0.0, %v858
        %v860 = vpop.f32.mrb[0].mxu0
        %861 = vmatprep.mubr.bf16.mxu0 0
        %862 = vmatmul.mubr.bf16.gmra.mrb[0].mxu0 %v577
        %v863 = vpop.f32.mrb[0].mxu0
        %v864 = vadd.f32 0.0, %v863
        %v865 = vpop.f32.mrb[0].mxu0
        %v866 = vpop.f32.mrb[0].mxu0
        %v867 = vadd.f32 0.0, %v866
        %v868 = vpop.f32.mrb[0].mxu0
        %869 = vmatprep.mubr.bf16.mxu0 0
        %870 = vmatmul.mubr.bf16.gmra.mrb[0].mxu0 %v580
        %v871 = vpop.f32.mrb[0].mxu0
        %v872 = vadd.f32 0.0, %v871
        %v873 = vpop.f32.mrb[0].mxu0
        %v874 = vpop.f32.mrb[0].mxu0
        %v875 = vadd.f32 0.0, %v874
        %v876 = vpop.f32.mrb[0].mxu0
        %877 = vdwg.mxu0
        %v942 = vunpack.c.l.b16 %v183
        %v943 = vunpack.c.l.b16 %v184
        %v944 = vunpack.c.l.b16 %v185
        %v945 = vunpack.c.l.b16 %v186
        %v946 = vunpack.c.l.b16 %v187
        %v947 = vunpack.c.l.b16 %v188
        %v948 = vunpack.c.l.b16 %v189
        %v949 = vunpack.c.l.b16 %v190
        %v950 = vunpack.c.l.b16 %v191
        %v951 = vunpack.c.l.b16 %v192
        %v952 = vunpack.c.l.b16 %v193
        %v953 = vunpack.c.l.b16 %v194
        %v954 = vunpack.c.l.b16 %v195
        %v955 = vunpack.c.l.b16 %v196
        %v956 = vunpack.c.l.b16 %v197
        %v957 = vunpack.c.l.b16 %v198
        %v958 = vunpack.c.l.b16 %v199
        %v959 = vunpack.c.l.b16 %v200
        %v960 = vunpack.c.l.b16 %v201
        %v961 = vunpack.c.l.b16 %v202
        %v962 = vunpack.c.l.b16 %v203
        %v963 = vunpack.c.l.b16 %v204
        %v964 = vunpack.c.l.b16 %v205
        %v965 = vunpack.c.l.b16 %v206
        %v966 = vunpack.c.l.b16 %v207
        %v967 = vunpack.c.l.b16 %v208
        %v968 = vunpack.c.l.b16 %v209
        %v969 = vunpack.c.l.b16 %v210
        %v970 = vunpack.c.l.b16 %v211
        %v971 = vunpack.c.l.b16 %v212
        %v972 = vunpack.c.l.b16 %v213
        %v973 = vunpack.c.l.b16 %v214
        %v974 = vunpack.c.l.b16 %v215
        %v975 = vunpack.c.l.b16 %v216
        %v976 = vunpack.c.l.b16 %v217
        %v977 = vunpack.c.l.b16 %v218
        %v978 = vunpack.c.l.b16 %v219
        %v979 = vunpack.c.l.b16 %v220
        %v980 = vunpack.c.l.b16 %v221
        %v981 = vunpack.c.l.b16 %v222
        %v982 = vunpack.c.l.b16 %v223
        %v983 = vunpack.c.l.b16 %v224
        %v984 = vunpack.c.l.b16 %v225
        %v985 = vunpack.c.l.b16 %v226
        %v986 = vunpack.c.l.b16 %v227
        %v987 = vunpack.c.l.b16 %v228
        %v988 = vunpack.c.l.b16 %v229
        %v989 = vunpack.c.l.b16 %v230
        %v990 = vunpack.c.l.b16 %v231
        %v991 = vunpack.c.l.b16 %v232
        %v992 = vunpack.c.l.b16 %v233
        %v993 = vunpack.c.l.b16 %v234
        %v994 = vunpack.c.l.b16 %v235
        %v995 = vunpack.c.l.b16 %v236
        %v996 = vunpack.c.l.b16 %v237
        %v997 = vunpack.c.l.b16 %v238
        %v998 = vunpack.c.l.b16 %v239
        %v999 = vunpack.c.l.b16 %v240
        %v1000 = vunpack.c.l.b16 %v241
        %v1001 = vunpack.c.l.b16 %v242
        %v1002 = vunpack.c.l.b16 %v243
        %v1003 = vunpack.c.l.b16 %v244
        %v1004 = vunpack.c.l.b16 %v245
        %v1005 = vunpack.c.l.b16 %v246
        %v1006 = vpack.c.b16 %v943, %v942
        %v1007 = vpack.c.b16 %v945, %v944
        %v1008 = vpack.c.b16 %v947, %v946
        %v1009 = vpack.c.b16 %v949, %v948
        %v1010 = vpack.c.b16 %v951, %v950
        %v1011 = vpack.c.b16 %v953, %v952
        %v1012 = vpack.c.b16 %v955, %v954
        %v1013 = vpack.c.b16 %v957, %v956
        %v1014 = vpack.c.b16 %v959, %v958
        %v1015 = vpack.c.b16 %v961, %v960
        %v1016 = vpack.c.b16 %v963, %v962
        %v1017 = vpack.c.b16 %v965, %v964
        %v1018 = vpack.c.b16 %v967, %v966
        %v1019 = vpack.c.b16 %v969, %v968
        %v1020 = vpack.c.b16 %v971, %v970
        %v1021 = vpack.c.b16 %v973, %v972
        %v1022 = vpack.c.b16 %v975, %v974
        %v1023 = vpack.c.b16 %v977, %v976
        %v1024 = vpack.c.b16 %v979, %v978
        %v1025 = vpack.c.b16 %v981, %v980
        %v1026 = vpack.c.b16 %v983, %v982
        %v1027 = vpack.c.b16 %v985, %v984
        %v1028 = vpack.c.b16 %v987, %v986
        %v1029 = vpack.c.b16 %v989, %v988
        %v1030 = vpack.c.b16 %v991, %v990
        %v1031 = vpack.c.b16 %v993, %v992
        %v1032 = vpack.c.b16 %v995, %v994
        %v1033 = vpack.c.b16 %v997, %v996
        %v1034 = vpack.c.b16 %v999, %v998
        %v1035 = vpack.c.b16 %v1001, %v1000
        %v1036 = vpack.c.b16 %v1003, %v1002
        %v1037 = vpack.c.b16 %v1005, %v1004
        %v1040 = vunpack.c.l.b16 %v247
        %v1041 = vunpack.c.l.b16 %v248
        %v1042 = vpack.c.b16 %v1041, %v1040
        %v1044 = vsel %vm485, %v1006, 0
        %v1047 = vsel %vm485, %v1007, 0
        %v1050 = vsel %vm485, %v1008, 0
        %v1053 = vsel %vm485, %v1009, 0
        %v1056 = vsel %vm485, %v1010, 0
        %v1059 = vsel %vm485, %v1011, 0
        %v1062 = vsel %vm485, %v1012, 0
        %v1065 = vsel %vm485, %v1013, 0
        %v1068 = vsel %vm485, %v1014, 0
        %v1071 = vsel %vm485, %v1015, 0
        %v1074 = vsel %vm485, %v1016, 0
        %v1077 = vsel %vm485, %v1017, 0
        %v1080 = vsel %vm485, %v1018, 0
        %v1083 = vsel %vm485, %v1019, 0
        %v1086 = vsel %vm485, %v1020, 0
        %v1089 = vsel %vm485, %v1021, 0
        %v1092 = vsel %vm485, %v1022, 0
        %v1095 = vsel %vm485, %v1023, 0
        %v1098 = vsel %vm485, %v1024, 0
        %v1101 = vsel %vm485, %v1025, 0
        %v1104 = vsel %vm485, %v1026, 0
        %v1107 = vsel %vm485, %v1027, 0
        %v1110 = vsel %vm485, %v1028, 0
        %v1113 = vsel %vm485, %v1029, 0
        %v1116 = vsel %vm485, %v1030, 0
        %v1119 = vsel %vm485, %v1031, 0
        %v1122 = vsel %vm485, %v1032, 0
        %v1125 = vsel %vm485, %v1033, 0
        %v1128 = vsel %vm485, %v1034, 0
        %v1131 = vsel %vm485, %v1035, 0
        %v1134 = vsel %vm485, %v1036, 0
        %v1137 = vsel %vm485, %v1037, 0
        %v1140 = vand.u32 %v1042, %v585
        %1142 = vmatprep.subr.bf16.mxu0 0
        %1143 = vmatpush1.bf16.msra.mxu0 %v1140
        %1144 = vmatprep.subr.bf16.mxu0 0
        %1145 = vmatpush1.bf16.msra.mxu0 0
        %1146 = vmatprep.subr.bf16.mxu0 0
        %1147 = vmatpush1.bf16.msra.mxu0 0
        %1148 = vmatprep.subr.bf16.mxu0 0
        %1149 = vmatpush1.bf16.msra.mxu0 0
        %1150 = vmatprep.subr.bf16.mxu0 0
        %1151 = vmatpush1.bf16.msra.mxu0 0
        %1152 = vmatprep.subr.bf16.mxu0 0
        %1153 = vmatpush1.bf16.msra.mxu0 0
        %1154 = vmatprep.subr.bf16.mxu0 0
        %1155 = vmatpush1.bf16.msra.mxu0 0
        %1156 = vmatprep.subr.bf16.mxu0 0
        %1157 = vmatpush1.bf16.msra.mxu0 0
        %1158 = vmatprep.subr.bf16.mxu0 0
        %1159 = vmatpush1.bf16.msra.mxu0 0
        %1160 = vmatprep.subr.bf16.mxu0 0
        %1161 = vmatpush1.bf16.msra.mxu0 0
        %1162 = vmatprep.subr.bf16.mxu0 0
        %1163 = vmatpush1.bf16.msra.mxu0 0
        %1164 = vmatprep.subr.bf16.mxu0 0
        %1165 = vmatpush1.bf16.msra.mxu0 0
        %1166 = vmatprep.subr.bf16.mxu0 0
        %1167 = vmatpush1.bf16.msra.mxu0 0
        %1168 = vmatprep.subr.bf16.mxu0 0
        %1169 = vmatpush1.bf16.msra.mxu0 0
        %1170 = vmatprep.subr.bf16.mxu0 0
        %1171 = vmatpush1.bf16.msra.mxu0 0
        %1172 = vmatprep.subr.bf16.mxu0 0
        %1173 = vmatpush1.bf16.msra.mxu0 0
        %1174 = vmatprep.mubr.bf16.mxu0 0
        %1175 = vmatmul.mubr.bf16.gmra.mrb[0].mxu0 %v1044
        %v1176 = vpop.f32.mrb[0].mxu0
        %v1177 = vadd.f32 %v624, %v1176
        %v1178 = vpop.f32.mrb[0].mxu0
        %v1179 = vpop.f32.mrb[0].mxu0
        %v1180 = vadd.f32 %v627, %v1179
        %v1181 = vpop.f32.mrb[0].mxu0
        %1182 = vmatprep.mubr.bf16.mxu0 0
        %1183 = vmatmul.mubr.bf16.gmra.mrb[0].mxu0 %v1047
        %v1184 = vpop.f32.mrb[0].mxu0
        %v1185 = vadd.f32 %v632, %v1184
        %v1186 = vpop.f32.mrb[0].mxu0
        %v1187 = vpop.f32.mrb[0].mxu0
        %v1188 = vadd.f32 %v635, %v1187
        %v1189 = vpop.f32.mrb[0].mxu0
        %1190 = vmatprep.mubr.bf16.mxu0 0
        %1191 = vmatmul.mubr.bf16.gmra.mrb[0].mxu0 %v1050
        %v1192 = vpop.f32.mrb[0].mxu0
        %v1193 = vadd.f32 %v640, %v1192
        %v1194 = vpop.f32.mrb[0].mxu0
        %v1195 = vpop.f32.mrb[0].mxu0
        %v1196 = vadd.f32 %v643, %v1195
        %v1197 = vpop.f32.mrb[0].mxu0
        %1198 = vmatprep.mubr.bf16.mxu0 0
        %1199 = vmatmul.mubr.bf16.gmra.mrb[0].mxu0 %v1053
        %v1200 = vpop.f32.mrb[0].mxu0
        %v1201 = vadd.f32 %v648, %v1200
        %v1202 = vpop.f32.mrb[0].mxu0
        %v1203 = vpop.f32.mrb[0].mxu0
        %v1204 = vadd.f32 %v651, %v1203
        %v1205 = vpop.f32.mrb[0].mxu0
        %1206 = vmatprep.mubr.bf16.mxu0 0
        %1207 = vmatmul.mubr.bf16.gmra.mrb[0].mxu0 %v1056
        %v1208 = vpop.f32.mrb[0].mxu0
        %v1209 = vadd.f32 %v656, %v1208
        %v1210 = vpop.f32.mrb[0].mxu0
        %v1211 = vpop.f32.mrb[0].mxu0
        %v1212 = vadd.f32 %v659, %v1211
        %v1213 = vpop.f32.mrb[0].mxu0
        %1214 = vmatprep.mubr.bf16.mxu0 0
        %1215 = vmatmul.mubr.bf16.gmra.mrb[0].mxu0 %v1059
        %v1216 = vpop.f32.mrb[0].mxu0
        %v1217 = vadd.f32 %v664, %v1216
        %v1218 = vpop.f32.mrb[0].mxu0
        %v1219 = vpop.f32.mrb[0].mxu0
        %v1220 = vadd.f32 %v667, %v1219
        %v1221 = vpop.f32.mrb[0].mxu0
        %1222 = vmatprep.mubr.bf16.mxu0 0
        %1223 = vmatmul.mubr.bf16.gmra.mrb[0].mxu0 %v1062
        %v1224 = vpop.f32.mrb[0].mxu0
        %v1225 = vadd.f32 %v672, %v1224
        %v1226 = vpop.f32.mrb[0].mxu0
        %v1227 = vpop.f32.mrb[0].mxu0
        %v1228 = vadd.f32 %v675, %v1227
        %v1229 = vpop.f32.mrb[0].mxu0
        %1230 = vmatprep.mubr.bf16.mxu0 0
        %1231 = vmatmul.mubr.bf16.gmra.mrb[0].mxu0 %v1065
        %v1232 = vpop.f32.mrb[0].mxu0
        %v1233 = vadd.f32 %v680, %v1232
        %v1234 = vpop.f32.mrb[0].mxu0
        %v1235 = vpop.f32.mrb[0].mxu0
        %v1236 = vadd.f32 %v683, %v1235
        %v1237 = vpop.f32.mrb[0].mxu0
        %1238 = vmatprep.mubr.bf16.mxu0 0
        %1239 = vmatmul.mubr.bf16.gmra.mrb[0].mxu0 %v1068
        %v1240 = vpop.f32.mrb[0].mxu0
        %v1241 = vadd.f32 %v688, %v1240
        %v1242 = vpop.f32.mrb[0].mxu0
        %v1243 = vpop.f32.mrb[0].mxu0
        %v1244 = vadd.f32 %v691, %v1243
        %v1245 = vpop.f32.mrb[0].mxu0
        %1246 = vmatprep.mubr.bf16.mxu0 0
        %1247 = vmatmul.mubr.bf16.gmra.mrb[0].mxu0 %v1071
        %v1248 = vpop.f32.mrb[0].mxu0
        %v1249 = vadd.f32 %v696, %v1248
        %v1250 = vpop.f32.mrb[0].mxu0
        %v1251 = vpop.f32.mrb[0].mxu0
        %v1252 = vadd.f32 %v699, %v1251
        %v1253 = vpop.f32.mrb[0].mxu0
        %1254 = vmatprep.mubr.bf16.mxu0 0
        %1255 = vmatmul.mubr.bf16.gmra.mrb[0].mxu0 %v1074
        %v1256 = vpop.f32.mrb[0].mxu0
        %v1257 = vadd.f32 %v704, %v1256
        %v1258 = vpop.f32.mrb[0].mxu0
        %v1259 = vpop.f32.mrb[0].mxu0
        %v1260 = vadd.f32 %v707, %v1259
        %v1261 = vpop.f32.mrb[0].mxu0
        %1262 = vmatprep.mubr.bf16.mxu0 0
        %1263 = vmatmul.mubr.bf16.gmra.mrb[0].mxu0 %v1077
        %v1264 = vpop.f32.mrb[0].mxu0
        %v1265 = vadd.f32 %v712, %v1264
        %v1266 = vpop.f32.mrb[0].mxu0
        %v1267 = vpop.f32.mrb[0].mxu0
        %v1268 = vadd.f32 %v715, %v1267
        %v1269 = vpop.f32.mrb[0].mxu0
        %1270 = vmatprep.mubr.bf16.mxu0 0
        %1271 = vmatmul.mubr.bf16.gmra.mrb[0].mxu0 %v1080
        %v1272 = vpop.f32.mrb[0].mxu0
        %v1273 = vadd.f32 %v720, %v1272
        %v1274 = vpop.f32.mrb[0].mxu0
        %v1275 = vpop.f32.mrb[0].mxu0
        %v1276 = vadd.f32 %v723, %v1275
        %v1277 = vpop.f32.mrb[0].mxu0
        %1278 = vmatprep.mubr.bf16.mxu0 0
        %1279 = vmatmul.mubr.bf16.gmra.mrb[0].mxu0 %v1083
        %v1280 = vpop.f32.mrb[0].mxu0
        %v1281 = vadd.f32 %v728, %v1280
        %v1282 = vpop.f32.mrb[0].mxu0
        %v1283 = vpop.f32.mrb[0].mxu0
        %v1284 = vadd.f32 %v731, %v1283
        %v1285 = vpop.f32.mrb[0].mxu0
        %1286 = vmatprep.mubr.bf16.mxu0 0
        %1287 = vmatmul.mubr.bf16.gmra.mrb[0].mxu0 %v1086
        %v1288 = vpop.f32.mrb[0].mxu0
        %v1289 = vadd.f32 %v736, %v1288
        %v1290 = vpop.f32.mrb[0].mxu0
        %v1291 = vpop.f32.mrb[0].mxu0
        %v1292 = vadd.f32 %v739, %v1291
        %v1293 = vpop.f32.mrb[0].mxu0
        %1294 = vmatprep.mubr.bf16.mxu0 0
        %1295 = vmatmul.mubr.bf16.gmra.mrb[0].mxu0 %v1089
        %v1296 = vpop.f32.mrb[0].mxu0
        %v1297 = vadd.f32 %v744, %v1296
        %v1298 = vpop.f32.mrb[0].mxu0
        %v1299 = vpop.f32.mrb[0].mxu0
        %v1300 = vadd.f32 %v747, %v1299
        %v1301 = vpop.f32.mrb[0].mxu0
        %1302 = vmatprep.mubr.bf16.mxu0 0
        %1303 = vmatmul.mubr.bf16.gmra.mrb[0].mxu0 %v1092
        %v1304 = vpop.f32.mrb[0].mxu0
        %v1305 = vadd.f32 %v752, %v1304
        %v1306 = vpop.f32.mrb[0].mxu0
        %v1307 = vpop.f32.mrb[0].mxu0
        %v1308 = vadd.f32 %v755, %v1307
        %v1309 = vpop.f32.mrb[0].mxu0
        %1310 = vmatprep.mubr.bf16.mxu0 0
        %1311 = vmatmul.mubr.bf16.gmra.mrb[0].mxu0 %v1095
        %v1312 = vpop.f32.mrb[0].mxu0
        %v1313 = vadd.f32 %v760, %v1312
        %v1314 = vpop.f32.mrb[0].mxu0
        %v1315 = vpop.f32.mrb[0].mxu0
        %v1316 = vadd.f32 %v763, %v1315
        %v1317 = vpop.f32.mrb[0].mxu0
        %1318 = vmatprep.mubr.bf16.mxu0 0
        %1319 = vmatmul.mubr.bf16.gmra.mrb[0].mxu0 %v1098
        %v1320 = vpop.f32.mrb[0].mxu0
        %v1321 = vadd.f32 %v768, %v1320
        %v1322 = vpop.f32.mrb[0].mxu0
        %v1323 = vpop.f32.mrb[0].mxu0
        %v1324 = vadd.f32 %v771, %v1323
        %v1325 = vpop.f32.mrb[0].mxu0
        %1326 = vmatprep.mubr.bf16.mxu0 0
        %1327 = vmatmul.mubr.bf16.gmra.mrb[0].mxu0 %v1101
        %v1328 = vpop.f32.mrb[0].mxu0
        %v1329 = vadd.f32 %v776, %v1328
        %v1330 = vpop.f32.mrb[0].mxu0
        %v1331 = vpop.f32.mrb[0].mxu0
        %v1332 = vadd.f32 %v779, %v1331
        %v1333 = vpop.f32.mrb[0].mxu0
        %1334 = vmatprep.mubr.bf16.mxu0 0
        %1335 = vmatmul.mubr.bf16.gmra.mrb[0].mxu0 %v1104
        %v1336 = vpop.f32.mrb[0].mxu0
        %v1337 = vadd.f32 %v784, %v1336
        %v1338 = vpop.f32.mrb[0].mxu0
        %v1339 = vpop.f32.mrb[0].mxu0
        %v1340 = vadd.f32 %v787, %v1339
        %v1341 = vpop.f32.mrb[0].mxu0
        %1342 = vmatprep.mubr.bf16.mxu0 0
        %1343 = vmatmul.mubr.bf16.gmra.mrb[0].mxu0 %v1107
        %v1344 = vpop.f32.mrb[0].mxu0
        %v1345 = vadd.f32 %v792, %v1344
        %v1346 = vpop.f32.mrb[0].mxu0
        %v1347 = vpop.f32.mrb[0].mxu0
        %v1348 = vadd.f32 %v795, %v1347
        %v1349 = vpop.f32.mrb[0].mxu0
        %1350 = vmatprep.mubr.bf16.mxu0 0
        %1351 = vmatmul.mubr.bf16.gmra.mrb[0].mxu0 %v1110
        %v1352 = vpop.f32.mrb[0].mxu0
        %v1353 = vadd.f32 %v800, %v1352
        %v1354 = vpop.f32.mrb[0].mxu0
        %v1355 = vpop.f32.mrb[0].mxu0
        %v1356 = vadd.f32 %v803, %v1355
        %v1357 = vpop.f32.mrb[0].mxu0
        %1358 = vmatprep.mubr.bf16.mxu0 0
        %1359 = vmatmul.mubr.bf16.gmra.mrb[0].mxu0 %v1113
        %v1360 = vpop.f32.mrb[0].mxu0
        %v1361 = vadd.f32 %v808, %v1360
        %v1362 = vpop.f32.mrb[0].mxu0
        %v1363 = vpop.f32.mrb[0].mxu0
        %v1364 = vadd.f32 %v811, %v1363
        %v1365 = vpop.f32.mrb[0].mxu0
        %1366 = vmatprep.mubr.bf16.mxu0 0
        %1367 = vmatmul.mubr.bf16.gmra.mrb[0].mxu0 %v1116
        %v1368 = vpop.f32.mrb[0].mxu0
        %v1369 = vadd.f32 %v816, %v1368
        %v1370 = vpop.f32.mrb[0].mxu0
        %v1371 = vpop.f32.mrb[0].mxu0
        %v1372 = vadd.f32 %v819, %v1371
        %v1373 = vpop.f32.mrb[0].mxu0
        %1374 = vmatprep.mubr.bf16.mxu0 0
        %1375 = vmatmul.mubr.bf16.gmra.mrb[0].mxu0 %v1119
        %v1376 = vpop.f32.mrb[0].mxu0
        %v1377 = vadd.f32 %v824, %v1376
        %v1378 = vpop.f32.mrb[0].mxu0
        %v1379 = vpop.f32.mrb[0].mxu0
        %v1380 = vadd.f32 %v827, %v1379
        %v1381 = vpop.f32.mrb[0].mxu0
        %1382 = vmatprep.mubr.bf16.mxu0 0
        %1383 = vmatmul.mubr.bf16.gmra.mrb[0].mxu0 %v1122
        %v1384 = vpop.f32.mrb[0].mxu0
        %v1385 = vadd.f32 %v832, %v1384
        %v1386 = vpop.f32.mrb[0].mxu0
        %v1387 = vpop.f32.mrb[0].mxu0
        %v1388 = vadd.f32 %v835, %v1387
        %v1389 = vpop.f32.mrb[0].mxu0
        %1390 = vmatprep.mubr.bf16.mxu0 0
        %1391 = vmatmul.mubr.bf16.gmra.mrb[0].mxu0 %v1125
        %v1392 = vpop.f32.mrb[0].mxu0
        %v1393 = vadd.f32 %v840, %v1392
        %v1394 = vpop.f32.mrb[0].mxu0
        %v1395 = vpop.f32.mrb[0].mxu0
        %v1396 = vadd.f32 %v843, %v1395
        %v1397 = vpop.f32.mrb[0].mxu0
        %1398 = vmatprep.mubr.bf16.mxu0 0
        %1399 = vmatmul.mubr.bf16.gmra.mrb[0].mxu0 %v1128
        %v1400 = vpop.f32.mrb[0].mxu0
        %v1401 = vadd.f32 %v848, %v1400
        %v1402 = vpop.f32.mrb[0].mxu0
        %v1403 = vpop.f32.mrb[0].mxu0
        %v1404 = vadd.f32 %v851, %v1403
        %v1405 = vpop.f32.mrb[0].mxu0
        %1406 = vmatprep.mubr.bf16.mxu0 0
        %1407 = vmatmul.mubr.bf16.gmra.mrb[0].mxu0 %v1131
        %v1408 = vpop.f32.mrb[0].mxu0
        %v1409 = vadd.f32 %v856, %v1408
        %v1410 = vpop.f32.mrb[0].mxu0
        %v1411 = vpop.f32.mrb[0].mxu0
        %v1412 = vadd.f32 %v859, %v1411
        %v1413 = vpop.f32.mrb[0].mxu0
        %1414 = vmatprep.mubr.bf16.mxu0 0
        %1415 = vmatmul.mubr.bf16.gmra.mrb[0].mxu0 %v1134
        %v1416 = vpop.f32.mrb[0].mxu0
        %v1417 = vadd.f32 %v864, %v1416
        %v1418 = vpop.f32.mrb[0].mxu0
        %v1419 = vpop.f32.mrb[0].mxu0
        %v1420 = vadd.f32 %v867, %v1419
        %v1421 = vpop.f32.mrb[0].mxu0
        %1422 = vmatprep.mubr.bf16.mxu0 0
        %1423 = vmatmul.mubr.bf16.gmra.mrb[0].mxu0 %v1137
        %v1424 = vpop.f32.mrb[0].mxu0
        %v1425 = vadd.f32 %v872, %v1424
        %v1426 = vpop.f32.mrb[0].mxu0
        %v1427 = vpop.f32.mrb[0].mxu0
        %v1428 = vadd.f32 %v875, %v1427
        %v1429 = vpop.f32.mrb[0].mxu0
        %1430 = vdwg.mxu0
        %s1431 = sadd.s32 %s179, 2
        %s1432 = smul.u32 %s1431, 8
        %s1433 = smul.addr %s1432, 4
        %s1434 = scalar_lea.vmem %s165, %s1433
        %v1435 = vld [vmem:[%s1434] sm:$0xf]
        %v1436 = vld [vmem:[%s1434 + $0x4] sm:$0xf]
        %v1437 = vld [vmem:[%s1434 + $0x8] sm:$0xf]
        %v1438 = vld [vmem:[%s1434 + $0xc] sm:$0xf]
        %v1439 = vld [vmem:[%s1434 + $0x10] sm:$0xf]
        %v1440 = vld [vmem:[%s1434 + $0x14] sm:$0xf]
        %v1441 = vld [vmem:[%s1434 + $0x18] sm:$0xf]
        %v1442 = vld [vmem:[%s1434 + $0x1c] sm:$0xf]
        %v1443 = vld [vmem:[%s1434 + $0x20] sm:$0xf]
        %v1444 = vld [vmem:[%s1434 + $0x24] sm:$0xf]
        %v1445 = vld [vmem:[%s1434 + $0x28] sm:$0xf]
        %v1446 = vld [vmem:[%s1434 + $0x2c] sm:$0xf]
        %v1447 = vld [vmem:[%s1434 + $0x30] sm:$0xf]
        %v1448 = vld [vmem:[%s1434 + $0x34] sm:$0xf]
        %v1449 = vld [vmem:[%s1434 + $0x38] sm:$0xf]
        %v1450 = vld [vmem:[%s1434 + $0x3c] sm:$0xf]
        %v1451 = vld [vmem:[%s1434 + $0x40] sm:$0xf]
        %v1452 = vld [vmem:[%s1434 + $0x44] sm:$0xf]
        %v1453 = vld [vmem:[%s1434 + $0x48] sm:$0xf]
        %v1454 = vld [vmem:[%s1434 + $0x4c] sm:$0xf]
        %v1455 = vld [vmem:[%s1434 + $0x50] sm:$0xf]
        %v1456 = vld [vmem:[%s1434 + $0x54] sm:$0xf]
        %v1457 = vld [vmem:[%s1434 + $0x58] sm:$0xf]
        %v1458 = vld [vmem:[%s1434 + $0x5c] sm:$0xf]
        %v1459 = vld [vmem:[%s1434 + $0x60] sm:$0xf]
        %v1460 = vld [vmem:[%s1434 + $0x64] sm:$0xf]
        %v1461 = vld [vmem:[%s1434 + $0x68] sm:$0xf]
        %v1462 = vld [vmem:[%s1434 + $0x6c] sm:$0xf]
        %v1463 = vld [vmem:[%s1434 + $0x70] sm:$0xf]
        %v1464 = vld [vmem:[%s1434 + $0x74] sm:$0xf]
        %v1465 = vld [vmem:[%s1434 + $0x78] sm:$0xf]
        %v1466 = vld [vmem:[%s1434 + $0x7c] sm:$0xf]
        %v1467 = vld [vmem:[%s1434 + $0x80] sm:$0xf]
        %v1468 = vld [vmem:[%s1434 + $0x84] sm:$0xf]
        %v1469 = vld [vmem:[%s1434 + $0x88] sm:$0xf]
        %v1470 = vld [vmem:[%s1434 + $0x8c] sm:$0xf]
        %v1471 = vld [vmem:[%s1434 + $0x90] sm:$0xf]
        %v1472 = vld [vmem:[%s1434 + $0x94] sm:$0xf]
        %v1473 = vld [vmem:[%s1434 + $0x98] sm:$0xf]
        %v1474 = vld [vmem:[%s1434 + $0x9c] sm:$0xf]
        %v1475 = vld [vmem:[%s1434 + $0xa0] sm:$0xf]
        %v1476 = vld [vmem:[%s1434 + $0xa4] sm:$0xf]
        %v1477 = vld [vmem:[%s1434 + $0xa8] sm:$0xf]
        %v1478 = vld [vmem:[%s1434 + $0xac] sm:$0xf]
        %v1479 = vld [vmem:[%s1434 + $0xb0] sm:$0xf]
        %v1480 = vld [vmem:[%s1434 + $0xb4] sm:$0xf]
        %v1481 = vld [vmem:[%s1434 + $0xb8] sm:$0xf]
        %v1482 = vld [vmem:[%s1434 + $0xbc] sm:$0xf]
        %v1483 = vld [vmem:[%s1434 + $0xc0] sm:$0xf]
        %v1484 = vld [vmem:[%s1434 + $0xc4] sm:$0xf]
        %v1485 = vld [vmem:[%s1434 + $0xc8] sm:$0xf]
        %v1486 = vld [vmem:[%s1434 + $0xcc] sm:$0xf]
        %v1487 = vld [vmem:[%s1434 + $0xd0] sm:$0xf]
        %v1488 = vld [vmem:[%s1434 + $0xd4] sm:$0xf]
        %v1489 = vld [vmem:[%s1434 + $0xd8] sm:$0xf]
        %v1490 = vld [vmem:[%s1434 + $0xdc] sm:$0xf]
        %v1491 = vld [vmem:[%s1434 + $0xe0] sm:$0xf]
        %v1492 = vld [vmem:[%s1434 + $0xe4] sm:$0xf]
        %v1493 = vld [vmem:[%s1434 + $0xe8] sm:$0xf]
        %v1494 = vld [vmem:[%s1434 + $0xec] sm:$0xf]
        %v1495 = vld [vmem:[%s1434 + $0xf0] sm:$0xf]
        %v1496 = vld [vmem:[%s1434 + $0xf4] sm:$0xf]
        %v1497 = vld [vmem:[%s1434 + $0xf8] sm:$0xf]
        %v1498 = vld [vmem:[%s1434 + $0xfc] sm:$0xf]
        %s1499 = scalar_lea.vmem %s1, 16
        %v1500 = vld [vmem:[%s1499] sm:$0xf]
        %v1501 = vld [vmem:[%s1499 + $0x4] sm:$0x1]
        %v1566 = vunpack.c.l.b16 %v1435
        %v1567 = vunpack.c.l.b16 %v1436
        %v1568 = vunpack.c.l.b16 %v1437
        %v1569 = vunpack.c.l.b16 %v1438
        %v1570 = vunpack.c.l.b16 %v1439
        %v1571 = vunpack.c.l.b16 %v1440
        %v1572 = vunpack.c.l.b16 %v1441
        %v1573 = vunpack.c.l.b16 %v1442
        %v1574 = vunpack.c.l.b16 %v1443
        %v1575 = vunpack.c.l.b16 %v1444
        %v1576 = vunpack.c.l.b16 %v1445
        %v1577 = vunpack.c.l.b16 %v1446
        %v1578 = vunpack.c.l.b16 %v1447
        %v1579 = vunpack.c.l.b16 %v1448
        %v1580 = vunpack.c.l.b16 %v1449
        %v1581 = vunpack.c.l.b16 %v1450
        %v1582 = vunpack.c.l.b16 %v1451
        %v1583 = vunpack.c.l.b16 %v1452
        %v1584 = vunpack.c.l.b16 %v1453
        %v1585 = vunpack.c.l.b16 %v1454
        %v1586 = vunpack.c.l.b16 %v1455
        %v1587 = vunpack.c.l.b16 %v1456
        %v1588 = vunpack.c.l.b16 %v1457
        %v1589 = vunpack.c.l.b16 %v1458
        %v1590 = vunpack.c.l.b16 %v1459
        %v1591 = vunpack.c.l.b16 %v1460
        %v1592 = vunpack.c.l.b16 %v1461
        %v1593 = vunpack.c.l.b16 %v1462
        %v1594 = vunpack.c.l.b16 %v1463
        %v1595 = vunpack.c.l.b16 %v1464
        %v1596 = vunpack.c.l.b16 %v1465
        %v1597 = vunpack.c.l.b16 %v1466
        %v1598 = vunpack.c.l.b16 %v1467
        %v1599 = vunpack.c.l.b16 %v1468
        %v1600 = vunpack.c.l.b16 %v1469
        %v1601 = vunpack.c.l.b16 %v1470
        %v1602 = vunpack.c.l.b16 %v1471
        %v1603 = vunpack.c.l.b16 %v1472
        %v1604 = vunpack.c.l.b16 %v1473
        %v1605 = vunpack.c.l.b16 %v1474
        %v1606 = vunpack.c.l.b16 %v1475
        %v1607 = vunpack.c.l.b16 %v1476
        %v1608 = vunpack.c.l.b16 %v1477
        %v1609 = vunpack.c.l.b16 %v1478
        %v1610 = vunpack.c.l.b16 %v1479
        %v1611 = vunpack.c.l.b16 %v1480
        %v1612 = vunpack.c.l.b16 %v1481
        %v1613 = vunpack.c.l.b16 %v1482
        %v1614 = vunpack.c.l.b16 %v1483
        %v1615 = vunpack.c.l.b16 %v1484
        %v1616 = vunpack.c.l.b16 %v1485
        %v1617 = vunpack.c.l.b16 %v1486
        %v1618 = vunpack.c.l.b16 %v1487
        %v1619 = vunpack.c.l.b16 %v1488
        %v1620 = vunpack.c.l.b16 %v1489
        %v1621 = vunpack.c.l.b16 %v1490
        %v1622 = vunpack.c.l.b16 %v1491
        %v1623 = vunpack.c.l.b16 %v1492
        %v1624 = vunpack.c.l.b16 %v1493
        %v1625 = vunpack.c.l.b16 %v1494
        %v1626 = vunpack.c.l.b16 %v1495
        %v1627 = vunpack.c.l.b16 %v1496
        %v1628 = vunpack.c.l.b16 %v1497
        %v1629 = vunpack.c.l.b16 %v1498
        %v1630 = vpack.c.b16 %v1567, %v1566
        %v1631 = vpack.c.b16 %v1569, %v1568
        %v1632 = vpack.c.b16 %v1571, %v1570
        %v1633 = vpack.c.b16 %v1573, %v1572
        %v1634 = vpack.c.b16 %v1575, %v1574
        %v1635 = vpack.c.b16 %v1577, %v1576
        %v1636 = vpack.c.b16 %v1579, %v1578
        %v1637 = vpack.c.b16 %v1581, %v1580
        %v1638 = vpack.c.b16 %v1583, %v1582
        %v1639 = vpack.c.b16 %v1585, %v1584
        %v1640 = vpack.c.b16 %v1587, %v1586
        %v1641 = vpack.c.b16 %v1589, %v1588
        %v1642 = vpack.c.b16 %v1591, %v1590
        %v1643 = vpack.c.b16 %v1593, %v1592
        %v1644 = vpack.c.b16 %v1595, %v1594
        %v1645 = vpack.c.b16 %v1597, %v1596
        %v1646 = vpack.c.b16 %v1599, %v1598
        %v1647 = vpack.c.b16 %v1601, %v1600
        %v1648 = vpack.c.b16 %v1603, %v1602
        %v1649 = vpack.c.b16 %v1605, %v1604
        %v1650 = vpack.c.b16 %v1607, %v1606
        %v1651 = vpack.c.b16 %v1609, %v1608
        %v1652 = vpack.c.b16 %v1611, %v1610
        %v1653 = vpack.c.b16 %v1613, %v1612
        %v1654 = vpack.c.b16 %v1615, %v1614
        %v1655 = vpack.c.b16 %v1617, %v1616
        %v1656 = vpack.c.b16 %v1619, %v1618
        %v1657 = vpack.c.b16 %v1621, %v1620
        %v1658 = vpack.c.b16 %v1623, %v1622
        %v1659 = vpack.c.b16 %v1625, %v1624
        %v1660 = vpack.c.b16 %v1627, %v1626
        %v1661 = vpack.c.b16 %v1629, %v1628
        %v1664 = vunpack.c.l.b16 %v1500
        %v1665 = vunpack.c.l.b16 %v1501
        %v1666 = vpack.c.b16 %v1665, %v1664
        %v1668 = vsel %vm485, %v1630, 0
        %v1671 = vsel %vm485, %v1631, 0
        %v1674 = vsel %vm485, %v1632, 0
        %v1677 = vsel %vm485, %v1633, 0
        %v1680 = vsel %vm485, %v1634, 0
        %v1683 = vsel %vm485, %v1635, 0
        %v1686 = vsel %vm485, %v1636, 0
        %v1689 = vsel %vm485, %v1637, 0
        %v1692 = vsel %vm485, %v1638, 0
        %v1695 = vsel %vm485, %v1639, 0
        %v1698 = vsel %vm485, %v1640, 0
        %v1701 = vsel %vm485, %v1641, 0
        %v1704 = vsel %vm485, %v1642, 0
        %v1707 = vsel %vm485, %v1643, 0
        %v1710 = vsel %vm485, %v1644, 0
        %v1713 = vsel %vm485, %v1645, 0
        %v1716 = vsel %vm485, %v1646, 0
        %v1719 = vsel %vm485, %v1647, 0
        %v1722 = vsel %vm485, %v1648, 0
        %v1725 = vsel %vm485, %v1649, 0
        %v1728 = vsel %vm485, %v1650, 0
        %v1731 = vsel %vm485, %v1651, 0
        %v1734 = vsel %vm485, %v1652, 0
        %v1737 = vsel %vm485, %v1653, 0
        %v1740 = vsel %vm485, %v1654, 0
        %v1743 = vsel %vm485, %v1655, 0
        %v1746 = vsel %vm485, %v1656, 0
        %v1749 = vsel %vm485, %v1657, 0
        %v1752 = vsel %vm485, %v1658, 0
        %v1755 = vsel %vm485, %v1659, 0
        %v1758 = vsel %vm485, %v1660, 0
        %v1761 = vsel %vm485, %v1661, 0
        %v1764 = vand.u32 %v1666, %v585
        %1766 = vmatprep.subr.bf16.mxu0 0
        %1767 = vmatpush1.bf16.msra.mxu0 %v1764
        %1768 = vmatprep.subr.bf16.mxu0 0
        %1769 = vmatpush1.bf16.msra.mxu0 0
        %1770 = vmatprep.subr.bf16.mxu0 0
        %1771 = vmatpush1.bf16.msra.mxu0 0
        %1772 = vmatprep.subr.bf16.mxu0 0
        %1773 = vmatpush1.bf16.msra.mxu0 0
        %1774 = vmatprep.subr.bf16.mxu0 0
        %1775 = vmatpush1.bf16.msra.mxu0 0
        %1776 = vmatprep.subr.bf16.mxu0 0
        %1777 = vmatpush1.bf16.msra.mxu0 0
        %1778 = vmatprep.subr.bf16.mxu0 0
        %1779 = vmatpush1.bf16.msra.mxu0 0
        %1780 = vmatprep.subr.bf16.mxu0 0
        %1781 = vmatpush1.bf16.msra.mxu0 0
        %1782 = vmatprep.subr.bf16.mxu0 0
        %1783 = vmatpush1.bf16.msra.mxu0 0
        %1784 = vmatprep.subr.bf16.mxu0 0
        %1785 = vmatpush1.bf16.msra.mxu0 0
        %1786 = vmatprep.subr.bf16.mxu0 0
        %1787 = vmatpush1.bf16.msra.mxu0 0
        %1788 = vmatprep.subr.bf16.mxu0 0
        %1789 = vmatpush1.bf16.msra.mxu0 0
        %1790 = vmatprep.subr.bf16.mxu0 0
        %1791 = vmatpush1.bf16.msra.mxu0 0
        %1792 = vmatprep.subr.bf16.mxu0 0
        %1793 = vmatpush1.bf16.msra.mxu0 0
        %1794 = vmatprep.subr.bf16.mxu0 0
        %1795 = vmatpush1.bf16.msra.mxu0 0
        %1796 = vmatprep.subr.bf16.mxu0 0
        %1797 = vmatpush1.bf16.msra.mxu0 0
        %1798 = vmatprep.mubr.bf16.mxu0 0
        %1799 = vmatmul.mubr.bf16.gmra.mrb[0].mxu0 %v1668
        %v1800 = vpop.f32.mrb[0].mxu0
        %v1801 = vadd.f32 0.0, %v1800
        %v1802 = vpop.f32.mrb[0].mxu0
        %v1803 = vpop.f32.mrb[0].mxu0
        %v1804 = vadd.f32 0.0, %v1803
        %v1805 = vpop.f32.mrb[0].mxu0
        %1806 = vmatprep.mubr.bf16.mxu0 0
        %1807 = vmatmul.mubr.bf16.gmra.mrb[0].mxu0 %v1671
        %v1808 = vpop.f32.mrb[0].mxu0
        %v1809 = vadd.f32 0.0, %v1808
        %v1810 = vpop.f32.mrb[0].mxu0
        %v1811 = vpop.f32.mrb[0].mxu0
        %v1812 = vadd.f32 0.0, %v1811
        %v1813 = vpop.f32.mrb[0].mxu0
        %1814 = vmatprep.mubr.bf16.mxu0 0
        %1815 = vmatmul.mubr.bf16.gmra.mrb[0].mxu0 %v1674
        %v1816 = vpop.f32.mrb[0].mxu0
        %v1817 = vadd.f32 0.0, %v1816
        %v1818 = vpop.f32.mrb[0].mxu0
        %v1819 = vpop.f32.mrb[0].mxu0
        %v1820 = vadd.f32 0.0, %v1819
        %v1821 = vpop.f32.mrb[0].mxu0
        %1822 = vmatprep.mubr.bf16.mxu0 0
        %1823 = vmatmul.mubr.bf16.gmra.mrb[0].mxu0 %v1677
        %v1824 = vpop.f32.mrb[0].mxu0
        %v1825 = vadd.f32 0.0, %v1824
        %v1826 = vpop.f32.mrb[0].mxu0
        %v1827 = vpop.f32.mrb[0].mxu0
        %v1828 = vadd.f32 0.0, %v1827
        %v1829 = vpop.f32.mrb[0].mxu0
        %1830 = vmatprep.mubr.bf16.mxu0 0
        %1831 = vmatmul.mubr.bf16.gmra.mrb[0].mxu0 %v1680
        %v1832 = vpop.f32.mrb[0].mxu0
        %v1833 = vadd.f32 0.0, %v1832
        %v1834 = vpop.f32.mrb[0].mxu0
        %v1835 = vpop.f32.mrb[0].mxu0
        %v1836 = vadd.f32 0.0, %v1835
        %v1837 = vpop.f32.mrb[0].mxu0
        %1838 = vmatprep.mubr.bf16.mxu0 0
        %1839 = vmatmul.mubr.bf16.gmra.mrb[0].mxu0 %v1683
        %v1840 = vpop.f32.mrb[0].mxu0
        %v1841 = vadd.f32 0.0, %v1840
        %v1842 = vpop.f32.mrb[0].mxu0
        %v1843 = vpop.f32.mrb[0].mxu0
        %v1844 = vadd.f32 0.0, %v1843
        %v1845 = vpop.f32.mrb[0].mxu0
        %1846 = vmatprep.mubr.bf16.mxu0 0
        %1847 = vmatmul.mubr.bf16.gmra.mrb[0].mxu0 %v1686
        %v1848 = vpop.f32.mrb[0].mxu0
        %v1849 = vadd.f32 0.0, %v1848
        %v1850 = vpop.f32.mrb[0].mxu0
        %v1851 = vpop.f32.mrb[0].mxu0
        %v1852 = vadd.f32 0.0, %v1851
        %v1853 = vpop.f32.mrb[0].mxu0
        %1854 = vmatprep.mubr.bf16.mxu0 0
        %1855 = vmatmul.mubr.bf16.gmra.mrb[0].mxu0 %v1689
        %v1856 = vpop.f32.mrb[0].mxu0
        %v1857 = vadd.f32 0.0, %v1856
        %v1858 = vpop.f32.mrb[0].mxu0
        %v1859 = vpop.f32.mrb[0].mxu0
        %v1860 = vadd.f32 0.0, %v1859
        %v1861 = vpop.f32.mrb[0].mxu0
        %1862 = vmatprep.mubr.bf16.mxu0 0
        %1863 = vmatmul.mubr.bf16.gmra.mrb[0].mxu0 %v1692
        %v1864 = vpop.f32.mrb[0].mxu0
        %v1865 = vadd.f32 0.0, %v1864
        %v1866 = vpop.f32.mrb[0].mxu0
        %v1867 = vpop.f32.mrb[0].mxu0
        %v1868 = vadd.f32 0.0, %v1867
        %v1869 = vpop.f32.mrb[0].mxu0
        %1870 = vmatprep.mubr.bf16.mxu0 0
        %1871 = vmatmul.mubr.bf16.gmra.mrb[0].mxu0 %v1695
        %v1872 = vpop.f32.mrb[0].mxu0
        %v1873 = vadd.f32 0.0, %v1872
        %v1874 = vpop.f32.mrb[0].mxu0
        %v1875 = vpop.f32.mrb[0].mxu0
        %v1876 = vadd.f32 0.0, %v1875
        %v1877 = vpop.f32.mrb[0].mxu0
        %1878 = vmatprep.mubr.bf16.mxu0 0
        %1879 = vmatmul.mubr.bf16.gmra.mrb[0].mxu0 %v1698
        %v1880 = vpop.f32.mrb[0].mxu0
        %v1881 = vadd.f32 0.0, %v1880
        %v1882 = vpop.f32.mrb[0].mxu0
        %v1883 = vpop.f32.mrb[0].mxu0
        %v1884 = vadd.f32 0.0, %v1883
        %v1885 = vpop.f32.mrb[0].mxu0
        %1886 = vmatprep.mubr.bf16.mxu0 0
        %1887 = vmatmul.mubr.bf16.gmra.mrb[0].mxu0 %v1701
        %v1888 = vpop.f32.mrb[0].mxu0
        %v1889 = vadd.f32 0.0, %v1888
        %v1890 = vpop.f32.mrb[0].mxu0
        %v1891 = vpop.f32.mrb[0].mxu0
        %v1892 = vadd.f32 0.0, %v1891
        %v1893 = vpop.f32.mrb[0].mxu0
        %1894 = vmatprep.mubr.bf16.mxu0 0
        %1895 = vmatmul.mubr.bf16.gmra.mrb[0].mxu0 %v1704
        %v1896 = vpop.f32.mrb[0].mxu0
        %v1897 = vadd.f32 0.0, %v1896
        %v1898 = vpop.f32.mrb[0].mxu0
        %v1899 = vpop.f32.mrb[0].mxu0
        %v1900 = vadd.f32 0.0, %v1899
        %v1901 = vpop.f32.mrb[0].mxu0
        %1902 = vmatprep.mubr.bf16.mxu0 0
        %1903 = vmatmul.mubr.bf16.gmra.mrb[0].mxu0 %v1707
        %v1904 = vpop.f32.mrb[0].mxu0
        %v1905 = vadd.f32 0.0, %v1904
        %v1906 = vpop.f32.mrb[0].mxu0
        %v1907 = vpop.f32.mrb[0].mxu0
        %v1908 = vadd.f32 0.0, %v1907
        %v1909 = vpop.f32.mrb[0].mxu0
        %1910 = vmatprep.mubr.bf16.mxu0 0
        %1911 = vmatmul.mubr.bf16.gmra.mrb[0].mxu0 %v1710
        %v1912 = vpop.f32.mrb[0].mxu0
        %v1913 = vadd.f32 0.0, %v1912
        %v1914 = vpop.f32.mrb[0].mxu0
        %v1915 = vpop.f32.mrb[0].mxu0
        %v1916 = vadd.f32 0.0, %v1915
        %v1917 = vpop.f32.mrb[0].mxu0
        %1918 = vmatprep.mubr.bf16.mxu0 0
        %1919 = vmatmul.mubr.bf16.gmra.mrb[0].mxu0 %v1713
        %v1920 = vpop.f32.mrb[0].mxu0
        %v1921 = vadd.f32 0.0, %v1920
        %v1922 = vpop.f32.mrb[0].mxu0
        %v1923 = vpop.f32.mrb[0].mxu0
        %v1924 = vadd.f32 0.0, %v1923
        %v1925 = vpop.f32.mrb[0].mxu0
        %1926 = vmatprep.mubr.bf16.mxu0 0
        %1927 = vmatmul.mubr.bf16.gmra.mrb[0].mxu0 %v1716
        %v1928 = vpop.f32.mrb[0].mxu0
        %v1929 = vadd.f32 0.0, %v1928
        %v1930 = vpop.f32.mrb[0].mxu0
        %v1931 = vpop.f32.mrb[0].mxu0
        %v1932 = vadd.f32 0.0, %v1931
        %v1933 = vpop.f32.mrb[0].mxu0
        %1934 = vmatprep.mubr.bf16.mxu0 0
        %1935 = vmatmul.mubr.bf16.gmra.mrb[0].mxu0 %v1719
        %v1936 = vpop.f32.mrb[0].mxu0
        %v1937 = vadd.f32 0.0, %v1936
        %v1938 = vpop.f32.mrb[0].mxu0
        %v1939 = vpop.f32.mrb[0].mxu0
        %v1940 = vadd.f32 0.0, %v1939
        %v1941 = vpop.f32.mrb[0].mxu0
        %1942 = vmatprep.mubr.bf16.mxu0 0
        %1943 = vmatmul.mubr.bf16.gmra.mrb[0].mxu0 %v1722
        %v1944 = vpop.f32.mrb[0].mxu0
        %v1945 = vadd.f32 0.0, %v1944
        %v1946 = vpop.f32.mrb[0].mxu0
        %v1947 = vpop.f32.mrb[0].mxu0
        %v1948 = vadd.f32 0.0, %v1947
        %v1949 = vpop.f32.mrb[0].mxu0
        %1950 = vmatprep.mubr.bf16.mxu0 0
        %1951 = vmatmul.mubr.bf16.gmra.mrb[0].mxu0 %v1725
        %v1952 = vpop.f32.mrb[0].mxu0
        %v1953 = vadd.f32 0.0, %v1952
        %v1954 = vpop.f32.mrb[0].mxu0
        %v1955 = vpop.f32.mrb[0].mxu0
        %v1956 = vadd.f32 0.0, %v1955
        %v1957 = vpop.f32.mrb[0].mxu0
        %1958 = vmatprep.mubr.bf16.mxu0 0
        %1959 = vmatmul.mubr.bf16.gmra.mrb[0].mxu0 %v1728
        %v1960 = vpop.f32.mrb[0].mxu0
        %v1961 = vadd.f32 0.0, %v1960
        %v1962 = vpop.f32.mrb[0].mxu0
        %v1963 = vpop.f32.mrb[0].mxu0
        %v1964 = vadd.f32 0.0, %v1963
        %v1965 = vpop.f32.mrb[0].mxu0
        %1966 = vmatprep.mubr.bf16.mxu0 0
        %1967 = vmatmul.mubr.bf16.gmra.mrb[0].mxu0 %v1731
        %v1968 = vpop.f32.mrb[0].mxu0
        %v1969 = vadd.f32 0.0, %v1968
        %v1970 = vpop.f32.mrb[0].mxu0
        %v1971 = vpop.f32.mrb[0].mxu0
        %v1972 = vadd.f32 0.0, %v1971
        %v1973 = vpop.f32.mrb[0].mxu0
        %1974 = vmatprep.mubr.bf16.mxu0 0
        %1975 = vmatmul.mubr.bf16.gmra.mrb[0].mxu0 %v1734
        %v1976 = vpop.f32.mrb[0].mxu0
        %v1977 = vadd.f32 0.0, %v1976
        %v1978 = vpop.f32.mrb[0].mxu0
        %v1979 = vpop.f32.mrb[0].mxu0
        %v1980 = vadd.f32 0.0, %v1979
        %v1981 = vpop.f32.mrb[0].mxu0
        %1982 = vmatprep.mubr.bf16.mxu0 0
        %1983 = vmatmul.mubr.bf16.gmra.mrb[0].mxu0 %v1737
        %v1984 = vpop.f32.mrb[0].mxu0
        %v1985 = vadd.f32 0.0, %v1984
        %v1986 = vpop.f32.mrb[0].mxu0
        %v1987 = vpop.f32.mrb[0].mxu0
        %v1988 = vadd.f32 0.0, %v1987
        %v1989 = vpop.f32.mrb[0].mxu0
        %1990 = vmatprep.mubr.bf16.mxu0 0
        %1991 = vmatmul.mubr.bf16.gmra.mrb[0].mxu0 %v1740
        %v1992 = vpop.f32.mrb[0].mxu0
        %v1993 = vadd.f32 0.0, %v1992
        %v1994 = vpop.f32.mrb[0].mxu0
        %v1995 = vpop.f32.mrb[0].mxu0
        %v1996 = vadd.f32 0.0, %v1995
        %v1997 = vpop.f32.mrb[0].mxu0
        %1998 = vmatprep.mubr.bf16.mxu0 0
        %1999 = vmatmul.mubr.bf16.gmra.mrb[0].mxu0 %v1743
        %v2000 = vpop.f32.mrb[0].mxu0
        %v2001 = vadd.f32 0.0, %v2000
        %v2002 = vpop.f32.mrb[0].mxu0
        %v2003 = vpop.f32.mrb[0].mxu0
        %v2004 = vadd.f32 0.0, %v2003
        %v2005 = vpop.f32.mrb[0].mxu0
        %2006 = vmatprep.mubr.bf16.mxu0 0
        %2007 = vmatmul.mubr.bf16.gmra.mrb[0].mxu0 %v1746
        %v2008 = vpop.f32.mrb[0].mxu0
        %v2009 = vadd.f32 0.0, %v2008
        %v2010 = vpop.f32.mrb[0].mxu0
        %v2011 = vpop.f32.mrb[0].mxu0
        %v2012 = vadd.f32 0.0, %v2011
        %v2013 = vpop.f32.mrb[0].mxu0
        %2014 = vmatprep.mubr.bf16.mxu0 0
        %2015 = vmatmul.mubr.bf16.gmra.mrb[0].mxu0 %v1749
        %v2016 = vpop.f32.mrb[0].mxu0
        %v2017 = vadd.f32 0.0, %v2016
        %v2018 = vpop.f32.mrb[0].mxu0
        %v2019 = vpop.f32.mrb[0].mxu0
        %v2020 = vadd.f32 0.0, %v2019
        %v2021 = vpop.f32.mrb[0].mxu0
        %2022 = vmatprep.mubr.bf16.mxu0 0
        %2023 = vmatmul.mubr.bf16.gmra.mrb[0].mxu0 %v1752
        %v2024 = vpop.f32.mrb[0].mxu0
        %v2025 = vadd.f32 0.0, %v2024
        %v2026 = vpop.f32.mrb[0].mxu0
        %v2027 = vpop.f32.mrb[0].mxu0
        %v2028 = vadd.f32 0.0, %v2027
        %v2029 = vpop.f32.mrb[0].mxu0
        %2030 = vmatprep.mubr.bf16.mxu0 0
        %2031 = vmatmul.mubr.bf16.gmra.mrb[0].mxu0 %v1755
        %v2032 = vpop.f32.mrb[0].mxu0
        %v2033 = vadd.f32 0.0, %v2032
        %v2034 = vpop.f32.mrb[0].mxu0
        %v2035 = vpop.f32.mrb[0].mxu0
        %v2036 = vadd.f32 0.0, %v2035
        %v2037 = vpop.f32.mrb[0].mxu0
        %2038 = vmatprep.mubr.bf16.mxu0 0
        %2039 = vmatmul.mubr.bf16.gmra.mrb[0].mxu0 %v1758
        %v2040 = vpop.f32.mrb[0].mxu0
        %v2041 = vadd.f32 0.0, %v2040
        %v2042 = vpop.f32.mrb[0].mxu0
        %v2043 = vpop.f32.mrb[0].mxu0
        %v2044 = vadd.f32 0.0, %v2043
        %v2045 = vpop.f32.mrb[0].mxu0
        %2046 = vmatprep.mubr.bf16.mxu0 0
        %2047 = vmatmul.mubr.bf16.gmra.mrb[0].mxu0 %v1761
        %v2048 = vpop.f32.mrb[0].mxu0
        %v2049 = vadd.f32 0.0, %v2048
        %v2050 = vpop.f32.mrb[0].mxu0
        %v2051 = vpop.f32.mrb[0].mxu0
        %v2052 = vadd.f32 0.0, %v2051
        %v2053 = vpop.f32.mrb[0].mxu0
        %2054 = vdwg.mxu0
        %v2055 = vadd.f32 %v1177, %v1801
        %v2056 = vadd.f32 %v1180, %v1804
        %v2057 = vadd.f32 %v1185, %v1809
        %v2058 = vadd.f32 %v1188, %v1812
        %v2059 = vadd.f32 %v1193, %v1817
        %v2060 = vadd.f32 %v1196, %v1820
        %v2061 = vadd.f32 %v1201, %v1825
        %v2062 = vadd.f32 %v1204, %v1828
        %v2063 = vadd.f32 %v1209, %v1833
        %v2064 = vadd.f32 %v1212, %v1836
        %v2065 = vadd.f32 %v1217, %v1841
        %v2066 = vadd.f32 %v1220, %v1844
        %v2067 = vadd.f32 %v1225, %v1849
        %v2068 = vadd.f32 %v1228, %v1852
        %v2069 = vadd.f32 %v1233, %v1857
        %v2070 = vadd.f32 %v1236, %v1860
        %v2071 = vadd.f32 %v1241, %v1865
        %v2072 = vadd.f32 %v1244, %v1868
        %v2073 = vadd.f32 %v1249, %v1873
        %v2074 = vadd.f32 %v1252, %v1876
        %v2075 = vadd.f32 %v1257, %v1881
        %v2076 = vadd.f32 %v1260, %v1884
        %v2077 = vadd.f32 %v1265, %v1889
        %v2078 = vadd.f32 %v1268, %v1892
        %v2079 = vadd.f32 %v1273, %v1897
        %v2080 = vadd.f32 %v1276, %v1900
        %v2081 = vadd.f32 %v1281, %v1905
        %v2082 = vadd.f32 %v1284, %v1908
        %v2083 = vadd.f32 %v1289, %v1913
        %v2084 = vadd.f32 %v1292, %v1916
        %v2085 = vadd.f32 %v1297, %v1921
        %v2086 = vadd.f32 %v1300, %v1924
        %v2087 = vadd.f32 %v1305, %v1929
        %v2088 = vadd.f32 %v1308, %v1932
        %v2089 = vadd.f32 %v1313, %v1937
        %v2090 = vadd.f32 %v1316, %v1940
        %v2091 = vadd.f32 %v1321, %v1945
        %v2092 = vadd.f32 %v1324, %v1948
        %v2093 = vadd.f32 %v1329, %v1953
        %v2094 = vadd.f32 %v1332, %v1956
        %v2095 = vadd.f32 %v1337, %v1961
        %v2096 = vadd.f32 %v1340, %v1964
        %v2097 = vadd.f32 %v1345, %v1969
        %v2098 = vadd.f32 %v1348, %v1972
        %v2099 = vadd.f32 %v1353, %v1977
        %v2100 = vadd.f32 %v1356, %v1980
        %v2101 = vadd.f32 %v1361, %v1985
        %v2102 = vadd.f32 %v1364, %v1988
        %v2103 = vadd.f32 %v1369, %v1993
        %v2104 = vadd.f32 %v1372, %v1996
        %v2105 = vadd.f32 %v1377, %v2001
        %v2106 = vadd.f32 %v1380, %v2004
        %v2107 = vadd.f32 %v1385, %v2009
        %v2108 = vadd.f32 %v1388, %v2012
        %v2109 = vadd.f32 %v1393, %v2017
        %v2110 = vadd.f32 %v1396, %v2020
        %v2111 = vadd.f32 %v1401, %v2025
        %v2112 = vadd.f32 %v1404, %v2028
        %v2113 = vadd.f32 %v1409, %v2033
        %v2114 = vadd.f32 %v1412, %v2036
        %v2115 = vadd.f32 %v1417, %v2041
        %v2116 = vadd.f32 %v1420, %v2044
        %v2117 = vadd.f32 %v1425, %v2049
        %v2118 = vadd.f32 %v1428, %v2052
        %v2120 = vlaneseq
        %v2121 = vshrl.u32 %v2120, 7
        %v2122 = vsub.s32 0, %v2121
        %v2123 = vrot.slane %v172, %v2122
        %v2125 = vadd.f32 %v2055, %v2123
        %v2126 = vadd.f32 %v2056, %v2123
        %v2127 = vadd.f32 %v2057, %v2123
        %v2128 = vadd.f32 %v2058, %v2123
        %v2129 = vadd.f32 %v2059, %v2123
        %v2130 = vadd.f32 %v2060, %v2123
        %v2131 = vadd.f32 %v2061, %v2123
        %v2132 = vadd.f32 %v2062, %v2123
        %v2133 = vadd.f32 %v2063, %v2123
        %v2134 = vadd.f32 %v2064, %v2123
        %v2135 = vadd.f32 %v2065, %v2123
        %v2136 = vadd.f32 %v2066, %v2123
        %v2137 = vadd.f32 %v2067, %v2123
        %v2138 = vadd.f32 %v2068, %v2123
        %v2139 = vadd.f32 %v2069, %v2123
        %v2140 = vadd.f32 %v2070, %v2123
        %v2141 = vadd.f32 %v2071, %v2123
        %v2142 = vadd.f32 %v2072, %v2123
        %v2143 = vadd.f32 %v2073, %v2123
        %v2144 = vadd.f32 %v2074, %v2123
        %v2145 = vadd.f32 %v2075, %v2123
        %v2146 = vadd.f32 %v2076, %v2123
        %v2147 = vadd.f32 %v2077, %v2123
        %v2148 = vadd.f32 %v2078, %v2123
        %v2149 = vadd.f32 %v2079, %v2123
        %v2150 = vadd.f32 %v2080, %v2123
        %v2151 = vadd.f32 %v2081, %v2123
        %v2152 = vadd.f32 %v2082, %v2123
        %v2153 = vadd.f32 %v2083, %v2123
        %v2154 = vadd.f32 %v2084, %v2123
        %v2155 = vadd.f32 %v2085, %v2123
        %v2156 = vadd.f32 %v2086, %v2123
        %v2157 = vadd.f32 %v2087, %v2123
        %v2158 = vadd.f32 %v2088, %v2123
        %v2159 = vadd.f32 %v2089, %v2123
        %v2160 = vadd.f32 %v2090, %v2123
        %v2161 = vadd.f32 %v2091, %v2123
        %v2162 = vadd.f32 %v2092, %v2123
        %v2163 = vadd.f32 %v2093, %v2123
        %v2164 = vadd.f32 %v2094, %v2123
        %v2165 = vadd.f32 %v2095, %v2123
        %v2166 = vadd.f32 %v2096, %v2123
        %v2167 = vadd.f32 %v2097, %v2123
        %v2168 = vadd.f32 %v2098, %v2123
        %v2169 = vadd.f32 %v2099, %v2123
        %v2170 = vadd.f32 %v2100, %v2123
        %v2171 = vadd.f32 %v2101, %v2123
        %v2172 = vadd.f32 %v2102, %v2123
        %v2173 = vadd.f32 %v2103, %v2123
        %v2174 = vadd.f32 %v2104, %v2123
        %v2175 = vadd.f32 %v2105, %v2123
        %v2176 = vadd.f32 %v2106, %v2123
        %v2177 = vadd.f32 %v2107, %v2123
        %v2178 = vadd.f32 %v2108, %v2123
        %v2179 = vadd.f32 %v2109, %v2123
        %v2180 = vadd.f32 %v2110, %v2123
        %v2181 = vadd.f32 %v2111, %v2123
        %v2182 = vadd.f32 %v2112, %v2123
        %v2183 = vadd.f32 %v2113, %v2123
        %v2184 = vadd.f32 %v2114, %v2123
        %v2185 = vadd.f32 %v2115, %v2123
        %v2186 = vadd.f32 %v2116, %v2123
        %v2187 = vadd.f32 %v2117, %v2123
        %v2188 = vadd.f32 %v2118, %v2123
        %v2189 = vmax.f32 %v2125, 0.0
        %v2190 = vmax.f32 %v2126, 0.0
        %v2191 = vmax.f32 %v2127, 0.0
        %v2192 = vmax.f32 %v2128, 0.0
        %v2193 = vmax.f32 %v2129, 0.0
        %v2194 = vmax.f32 %v2130, 0.0
        %v2195 = vmax.f32 %v2131, 0.0
        %v2196 = vmax.f32 %v2132, 0.0
        %v2197 = vmax.f32 %v2133, 0.0
        %v2198 = vmax.f32 %v2134, 0.0
        %v2199 = vmax.f32 %v2135, 0.0
        %v2200 = vmax.f32 %v2136, 0.0
        %v2201 = vmax.f32 %v2137, 0.0
        %v2202 = vmax.f32 %v2138, 0.0
        %v2203 = vmax.f32 %v2139, 0.0
        %v2204 = vmax.f32 %v2140, 0.0
        %v2205 = vmax.f32 %v2141, 0.0
        %v2206 = vmax.f32 %v2142, 0.0
        %v2207 = vmax.f32 %v2143, 0.0
        %v2208 = vmax.f32 %v2144, 0.0
        %v2209 = vmax.f32 %v2145, 0.0
        %v2210 = vmax.f32 %v2146, 0.0
        %v2211 = vmax.f32 %v2147, 0.0
        %v2212 = vmax.f32 %v2148, 0.0
        %v2213 = vmax.f32 %v2149, 0.0
        %v2214 = vmax.f32 %v2150, 0.0
        %v2215 = vmax.f32 %v2151, 0.0
        %v2216 = vmax.f32 %v2152, 0.0
        %v2217 = vmax.f32 %v2153, 0.0
        %v2218 = vmax.f32 %v2154, 0.0
        %v2219 = vmax.f32 %v2155, 0.0
        %v2220 = vmax.f32 %v2156, 0.0
        %v2221 = vmax.f32 %v2157, 0.0
        %v2222 = vmax.f32 %v2158, 0.0
        %v2223 = vmax.f32 %v2159, 0.0
        %v2224 = vmax.f32 %v2160, 0.0
        %v2225 = vmax.f32 %v2161, 0.0
        %v2226 = vmax.f32 %v2162, 0.0
        %v2227 = vmax.f32 %v2163, 0.0
        %v2228 = vmax.f32 %v2164, 0.0
        %v2229 = vmax.f32 %v2165, 0.0
        %v2230 = vmax.f32 %v2166, 0.0
        %v2231 = vmax.f32 %v2167, 0.0
        %v2232 = vmax.f32 %v2168, 0.0
        %v2233 = vmax.f32 %v2169, 0.0
        %v2234 = vmax.f32 %v2170, 0.0
        %v2235 = vmax.f32 %v2171, 0.0
        %v2236 = vmax.f32 %v2172, 0.0
        %v2237 = vmax.f32 %v2173, 0.0
        %v2238 = vmax.f32 %v2174, 0.0
        %v2239 = vmax.f32 %v2175, 0.0
        %v2240 = vmax.f32 %v2176, 0.0
        %v2241 = vmax.f32 %v2177, 0.0
        %v2242 = vmax.f32 %v2178, 0.0
        %v2243 = vmax.f32 %v2179, 0.0
        %v2244 = vmax.f32 %v2180, 0.0
        %v2245 = vmax.f32 %v2181, 0.0
        %v2246 = vmax.f32 %v2182, 0.0
        %v2247 = vmax.f32 %v2183, 0.0
        %v2248 = vmax.f32 %v2184, 0.0
        %v2249 = vmax.f32 %v2185, 0.0
        %v2250 = vmax.f32 %v2186, 0.0
        %v2251 = vmax.f32 %v2187, 0.0
        %v2252 = vmax.f32 %v2188, 0.0
        %v2253 = vpack.c.bf16 %v2190, %v2189
        %v2254 = vpack.c.bf16 %v2192, %v2191
        %v2255 = vpack.c.bf16 %v2194, %v2193
        %v2256 = vpack.c.bf16 %v2196, %v2195
        %v2257 = vpack.c.bf16 %v2198, %v2197
        %v2258 = vpack.c.bf16 %v2200, %v2199
        %v2259 = vpack.c.bf16 %v2202, %v2201
        %v2260 = vpack.c.bf16 %v2204, %v2203
        %v2261 = vpack.c.bf16 %v2206, %v2205
        %v2262 = vpack.c.bf16 %v2208, %v2207
        %v2263 = vpack.c.bf16 %v2210, %v2209
        %v2264 = vpack.c.bf16 %v2212, %v2211
        %v2265 = vpack.c.bf16 %v2214, %v2213
        %v2266 = vpack.c.bf16 %v2216, %v2215
        %v2267 = vpack.c.bf16 %v2218, %v2217
        %v2268 = vpack.c.bf16 %v2220, %v2219
        %v2269 = vpack.c.bf16 %v2222, %v2221
        %v2270 = vpack.c.bf16 %v2224, %v2223
        %v2271 = vpack.c.bf16 %v2226, %v2225
        %v2272 = vpack.c.bf16 %v2228, %v2227
        %v2273 = vpack.c.bf16 %v2230, %v2229
        %v2274 = vpack.c.bf16 %v2232, %v2231
        %v2275 = vpack.c.bf16 %v2234, %v2233
        %v2276 = vpack.c.bf16 %v2236, %v2235
        %v2277 = vpack.c.bf16 %v2238, %v2237
        %v2278 = vpack.c.bf16 %v2240, %v2239
        %v2279 = vpack.c.bf16 %v2242, %v2241
        %v2280 = vpack.c.bf16 %v2244, %v2243
        %v2281 = vpack.c.bf16 %v2246, %v2245
        %v2282 = vpack.c.bf16 %v2248, %v2247
        %v2283 = vpack.c.bf16 %v2250, %v2249
        %v2284 = vpack.c.bf16 %v2252, %v2251
        %v2317 = vunpack.c.l.b16 %v2253
        %v2318 = vunpack.c.h.b16 %v2253
        %v2319 = vunpack.c.l.b16 %v2254
        %v2320 = vunpack.c.h.b16 %v2254
        %v2321 = vunpack.c.l.b16 %v2255
        %v2322 = vunpack.c.h.b16 %v2255
        %v2323 = vunpack.c.l.b16 %v2256
        %v2324 = vunpack.c.h.b16 %v2256
        %v2325 = vunpack.c.l.b16 %v2257
        %v2326 = vunpack.c.h.b16 %v2257
        %v2327 = vunpack.c.l.b16 %v2258
        %v2328 = vunpack.c.h.b16 %v2258
        %v2329 = vunpack.c.l.b16 %v2259
        %v2330 = vunpack.c.h.b16 %v2259
        %v2331 = vunpack.c.l.b16 %v2260
        %v2332 = vunpack.c.h.b16 %v2260
        %v2333 = vunpack.c.l.b16 %v2261
        %v2334 = vunpack.c.h.b16 %v2261
        %v2335 = vunpack.c.l.b16 %v2262
        %v2336 = vunpack.c.h.b16 %v2262
        %v2337 = vunpack.c.l.b16 %v2263
        %v2338 = vunpack.c.h.b16 %v2263
        %v2339 = vunpack.c.l.b16 %v2264
        %v2340 = vunpack.c.h.b16 %v2264
        %v2341 = vunpack.c.l.b16 %v2265
        %v2342 = vunpack.c.h.b16 %v2265
        %v2343 = vunpack.c.l.b16 %v2266
        %v2344 = vunpack.c.h.b16 %v2266
        %v2345 = vunpack.c.l.b16 %v2267
        %v2346 = vunpack.c.h.b16 %v2267
        %v2347 = vunpack.c.l.b16 %v2268
        %v2348 = vunpack.c.h.b16 %v2268
        %v2349 = vunpack.c.l.b16 %v2269
        %v2350 = vunpack.c.h.b16 %v2269
        %v2351 = vunpack.c.l.b16 %v2270
        %v2352 = vunpack.c.h.b16 %v2270
        %v2353 = vunpack.c.l.b16 %v2271
        %v2354 = vunpack.c.h.b16 %v2271
        %v2355 = vunpack.c.l.b16 %v2272
        %v2356 = vunpack.c.h.b16 %v2272
        %v2357 = vunpack.c.l.b16 %v2273
        %v2358 = vunpack.c.h.b16 %v2273
        %v2359 = vunpack.c.l.b16 %v2274
        %v2360 = vunpack.c.h.b16 %v2274
        %v2361 = vunpack.c.l.b16 %v2275
        %v2362 = vunpack.c.h.b16 %v2275
        %v2363 = vunpack.c.l.b16 %v2276
        %v2364 = vunpack.c.h.b16 %v2276
        %v2365 = vunpack.c.l.b16 %v2277
        %v2366 = vunpack.c.h.b16 %v2277
        %v2367 = vunpack.c.l.b16 %v2278
        %v2368 = vunpack.c.h.b16 %v2278
        %v2369 = vunpack.c.l.b16 %v2279
        %v2370 = vunpack.c.h.b16 %v2279
        %v2371 = vunpack.c.l.b16 %v2280
        %v2372 = vunpack.c.h.b16 %v2280
        %v2373 = vunpack.c.l.b16 %v2281
        %v2374 = vunpack.c.h.b16 %v2281
        %v2375 = vunpack.c.l.b16 %v2282
        %v2376 = vunpack.c.h.b16 %v2282
        %v2377 = vunpack.c.l.b16 %v2283
        %v2378 = vunpack.c.h.b16 %v2283
        %v2379 = vunpack.c.l.b16 %v2284
        %v2380 = vunpack.c.h.b16 %v2284
        %v2381 = vpack.c.b16 %v2317, %v2317
        %v2382 = vpack.c.b16 %v2318, %v2318
        %v2383 = vpack.c.b16 %v2319, %v2319
        %v2384 = vpack.c.b16 %v2320, %v2320
        %v2385 = vpack.c.b16 %v2321, %v2321
        %v2386 = vpack.c.b16 %v2322, %v2322
        %v2387 = vpack.c.b16 %v2323, %v2323
        %v2388 = vpack.c.b16 %v2324, %v2324
        %v2389 = vpack.c.b16 %v2325, %v2325
        %v2390 = vpack.c.b16 %v2326, %v2326
        %v2391 = vpack.c.b16 %v2327, %v2327
        %v2392 = vpack.c.b16 %v2328, %v2328
        %v2393 = vpack.c.b16 %v2329, %v2329
        %v2394 = vpack.c.b16 %v2330, %v2330
        %v2395 = vpack.c.b16 %v2331, %v2331
        %v2396 = vpack.c.b16 %v2332, %v2332
        %v2397 = vpack.c.b16 %v2333, %v2333
        %v2398 = vpack.c.b16 %v2334, %v2334
        %v2399 = vpack.c.b16 %v2335, %v2335
        %v2400 = vpack.c.b16 %v2336, %v2336
        %v2401 = vpack.c.b16 %v2337, %v2337
        %v2402 = vpack.c.b16 %v2338, %v2338
        %v2403 = vpack.c.b16 %v2339, %v2339
        %v2404 = vpack.c.b16 %v2340, %v2340
        %v2405 = vpack.c.b16 %v2341, %v2341
        %v2406 = vpack.c.b16 %v2342, %v2342
        %v2407 = vpack.c.b16 %v2343, %v2343
        %v2408 = vpack.c.b16 %v2344, %v2344
        %v2409 = vpack.c.b16 %v2345, %v2345
        %v2410 = vpack.c.b16 %v2346, %v2346
        %v2411 = vpack.c.b16 %v2347, %v2347
        %v2412 = vpack.c.b16 %v2348, %v2348
        %v2413 = vpack.c.b16 %v2349, %v2349
        %v2414 = vpack.c.b16 %v2350, %v2350
        %v2415 = vpack.c.b16 %v2351, %v2351
        %v2416 = vpack.c.b16 %v2352, %v2352
        %v2417 = vpack.c.b16 %v2353, %v2353
        %v2418 = vpack.c.b16 %v2354, %v2354
        %v2419 = vpack.c.b16 %v2355, %v2355
        %v2420 = vpack.c.b16 %v2356, %v2356
        %v2421 = vpack.c.b16 %v2357, %v2357
        %v2422 = vpack.c.b16 %v2358, %v2358
        %v2423 = vpack.c.b16 %v2359, %v2359
        %v2424 = vpack.c.b16 %v2360, %v2360
        %v2425 = vpack.c.b16 %v2361, %v2361
        %v2426 = vpack.c.b16 %v2362, %v2362
        %v2427 = vpack.c.b16 %v2363, %v2363
        %v2428 = vpack.c.b16 %v2364, %v2364
        %v2429 = vpack.c.b16 %v2365, %v2365
        %v2430 = vpack.c.b16 %v2366, %v2366
        %v2431 = vpack.c.b16 %v2367, %v2367
        %v2432 = vpack.c.b16 %v2368, %v2368
        %v2433 = vpack.c.b16 %v2369, %v2369
        %v2434 = vpack.c.b16 %v2370, %v2370
        %v2435 = vpack.c.b16 %v2371, %v2371
        %v2436 = vpack.c.b16 %v2372, %v2372
        %v2437 = vpack.c.b16 %v2373, %v2373
        %v2438 = vpack.c.b16 %v2374, %v2374
        %v2439 = vpack.c.b16 %v2375, %v2375
        %v2440 = vpack.c.b16 %v2376, %v2376
        %v2441 = vpack.c.b16 %v2377, %v2377
        %v2442 = vpack.c.b16 %v2378, %v2378
        %v2443 = vpack.c.b16 %v2379, %v2379
        %v2444 = vpack.c.b16 %v2380, %v2380
        %s2509 = smul.addr %s180, 4
        %s2510 = scalar_lea.vmem %s170, %s2509
        %vm2511 = vcmask 519168
        %2512 = vst.msk [vmem:[%s2510] sm:$0xf] %vm2511, %v2381
        %2513 = vst.msk [vmem:[%s2510 + $0x4] sm:$0xf] %vm2511, %v2382
        %2514 = vst.msk [vmem:[%s2510 + $0x8] sm:$0xf] %vm2511, %v2383
        %2515 = vst.msk [vmem:[%s2510 + $0xc] sm:$0xf] %vm2511, %v2384
        %2516 = vst.msk [vmem:[%s2510 + $0x10] sm:$0xf] %vm2511, %v2385
        %2517 = vst.msk [vmem:[%s2510 + $0x14] sm:$0xf] %vm2511, %v2386
        %2518 = vst.msk [vmem:[%s2510 + $0x18] sm:$0xf] %vm2511, %v2387
        %2519 = vst.msk [vmem:[%s2510 + $0x1c] sm:$0xf] %vm2511, %v2388
        %2520 = vst.msk [vmem:[%s2510 + $0x20] sm:$0xf] %vm2511, %v2389
        %2521 = vst.msk [vmem:[%s2510 + $0x24] sm:$0xf] %vm2511, %v2390
        %2522 = vst.msk [vmem:[%s2510 + $0x28] sm:$0xf] %vm2511, %v2391
        %2523 = vst.msk [vmem:[%s2510 + $0x2c] sm:$0xf] %vm2511, %v2392
        %2524 = vst.msk [vmem:[%s2510 + $0x30] sm:$0xf] %vm2511, %v2393
        %2525 = vst.msk [vmem:[%s2510 + $0x34] sm:$0xf] %vm2511, %v2394
        %2526 = vst.msk [vmem:[%s2510 + $0x38] sm:$0xf] %vm2511, %v2395
        %2527 = vst.msk [vmem:[%s2510 + $0x3c] sm:$0xf] %vm2511, %v2396
        %2528 = vst.msk [vmem:[%s2510 + $0x40] sm:$0xf] %vm2511, %v2397
        %2529 = vst.msk [vmem:[%s2510 + $0x44] sm:$0xf] %vm2511, %v2398
        %2530 = vst.msk [vmem:[%s2510 + $0x48] sm:$0xf] %vm2511, %v2399
        %2531 = vst.msk [vmem:[%s2510 + $0x4c] sm:$0xf] %vm2511, %v2400
        %2532 = vst.msk [vmem:[%s2510 + $0x50] sm:$0xf] %vm2511, %v2401
        %2533 = vst.msk [vmem:[%s2510 + $0x54] sm:$0xf] %vm2511, %v2402
        %2534 = vst.msk [vmem:[%s2510 + $0x58] sm:$0xf] %vm2511, %v2403
        %2535 = vst.msk [vmem:[%s2510 + $0x5c] sm:$0xf] %vm2511, %v2404
        %2536 = vst.msk [vmem:[%s2510 + $0x60] sm:$0xf] %vm2511, %v2405
        %2537 = vst.msk [vmem:[%s2510 + $0x64] sm:$0xf] %vm2511, %v2406
        %2538 = vst.msk [vmem:[%s2510 + $0x68] sm:$0xf] %vm2511, %v2407
        %2539 = vst.msk [vmem:[%s2510 + $0x6c] sm:$0xf] %vm2511, %v2408
        %2540 = vst.msk [vmem:[%s2510 + $0x70] sm:$0xf] %vm2511, %v2409
        %2541 = vst.msk [vmem:[%s2510 + $0x74] sm:$0xf] %vm2511, %v2410
        %2542 = vst.msk [vmem:[%s2510 + $0x78] sm:$0xf] %vm2511, %v2411
        %2543 = vst.msk [vmem:[%s2510 + $0x7c] sm:$0xf] %vm2511, %v2412
        %2544 = vst.msk [vmem:[%s2510 + $0x80] sm:$0xf] %vm2511, %v2413
        %2545 = vst.msk [vmem:[%s2510 + $0x84] sm:$0xf] %vm2511, %v2414
        %2546 = vst.msk [vmem:[%s2510 + $0x88] sm:$0xf] %vm2511, %v2415
        %2547 = vst.msk [vmem:[%s2510 + $0x8c] sm:$0xf] %vm2511, %v2416
        %2548 = vst.msk [vmem:[%s2510 + $0x90] sm:$0xf] %vm2511, %v2417
        %2549 = vst.msk [vmem:[%s2510 + $0x94] sm:$0xf] %vm2511, %v2418
        %2550 = vst.msk [vmem:[%s2510 + $0x98] sm:$0xf] %vm2511, %v2419
        %2551 = vst.msk [vmem:[%s2510 + $0x9c] sm:$0xf] %vm2511, %v2420
        %2552 = vst.msk [vmem:[%s2510 + $0xa0] sm:$0xf] %vm2511, %v2421
        %2553 = vst.msk [vmem:[%s2510 + $0xa4] sm:$0xf] %vm2511, %v2422
        %2554 = vst.msk [vmem:[%s2510 + $0xa8] sm:$0xf] %vm2511, %v2423
        %2555 = vst.msk [vmem:[%s2510 + $0xac] sm:$0xf] %vm2511, %v2424
        %2556 = vst.msk [vmem:[%s2510 + $0xb0] sm:$0xf] %vm2511, %v2425
        %2557 = vst.msk [vmem:[%s2510 + $0xb4] sm:$0xf] %vm2511, %v2426
        %2558 = vst.msk [vmem:[%s2510 + $0xb8] sm:$0xf] %vm2511, %v2427
        %2559 = vst.msk [vmem:[%s2510 + $0xbc] sm:$0xf] %vm2511, %v2428
        %2560 = vst.msk [vmem:[%s2510 + $0xc0] sm:$0xf] %vm2511, %v2429
        %2561 = vst.msk [vmem:[%s2510 + $0xc4] sm:$0xf] %vm2511, %v2430
        %2562 = vst.msk [vmem:[%s2510 + $0xc8] sm:$0xf] %vm2511, %v2431
        %2563 = vst.msk [vmem:[%s2510 + $0xcc] sm:$0xf] %vm2511, %v2432
        %2564 = vst.msk [vmem:[%s2510 + $0xd0] sm:$0xf] %vm2511, %v2433
        %2565 = vst.msk [vmem:[%s2510 + $0xd4] sm:$0xf] %vm2511, %v2434
        %2566 = vst.msk [vmem:[%s2510 + $0xd8] sm:$0xf] %vm2511, %v2435
        %2567 = vst.msk [vmem:[%s2510 + $0xdc] sm:$0xf] %vm2511, %v2436
        %2568 = vst.msk [vmem:[%s2510 + $0xe0] sm:$0xf] %vm2511, %v2437
        %2569 = vst.msk [vmem:[%s2510 + $0xe4] sm:$0xf] %vm2511, %v2438
        %2570 = vst.msk [vmem:[%s2510 + $0xe8] sm:$0xf] %vm2511, %v2439
        %2571 = vst.msk [vmem:[%s2510 + $0xec] sm:$0xf] %vm2511, %v2440
        %2572 = vst.msk [vmem:[%s2510 + $0xf0] sm:$0xf] %vm2511, %v2441
        %2573 = vst.msk [vmem:[%s2510 + $0xf4] sm:$0xf] %vm2511, %v2442
        %2574 = vst.msk [vmem:[%s2510 + $0xf8] sm:$0xf] %vm2511, %v2443
        %2575 = vst.msk [vmem:[%s2510 + $0xfc] sm:$0xf] %vm2511, %v2444
      $region37: #{substance_detection_forward.4} parent=31 // loop_footer
        %s178 = sadd.s32 1, %s174
      $region38: #{substance_detection_forward.4} parent=31 // loop_footer_branch
        %173 = sbr.rel target = $region34
      $region39: #{substance_detection_forward.4} parent=31 // loop_exit
        _
      %p2576 = scmp.lt.s32.totalorder %s14, 1
      %s2577 = scalar_select %p2576, %s14, 1
      %s2578 = smul.addr %s2577, 512
      %s2579 = smul.addr %s2578, 4
      %s2580 = scalar_lea.vmem %s3, %s2579
      // Predicated region
      $region40: #{substance_detection_forward.4} parent=31 // pred_check
        %p2581 = pneg %p100
      $region41: #{substance_detection_forward.4} parent=31 // pred_check_branch
        %2583 = sbr.rel (%p2581) target = $region43
      $region42: #{substance_detection_forward.4} parent=31 // pred_region
        _
      $region43: #{substance_detection_forward.4} parent=31 // pred_fallthru
        _
    $region32: #{substance_detection_forward.4} parent=5 // pred_fallthru
      _
    %p2584 = scmp.le.s32.totalorder 2, %s9
    // Predicated region
    $region44: #{substance_detection_forward.4} parent=5 // pred_check
      %p2585 = pneg %p2584
    $region45: #{substance_detection_forward.4} parent=5 // pred_check_branch
      %2587 = sbr.rel (%p2585) target = $region47
    $region46: #{substance_detection_forward.4} parent=5 // pred_region
      %s2588 = ssub.s32 %s9, 2
      // Predicated region
      $region48: #{substance_detection_forward.4} parent=46 // pred_check
        %p2589 = pneg %p106
      $region49: #{substance_detection_forward.4} parent=46 // pred_check_branch
        %2591 = sbr.rel (%p2589) target = $region51
      $region50: #{substance_detection_forward.4} parent=46 // pred_region
        %p2592 = scmp.lt.s32.totalorder %s15, 1
        %s2593 = scalar_select %p2592, %s15, 1
        %s2594 = smul.addr %s2593, 512
        %s2595 = smul.addr %s2594, 4
        %s2596 = scalar_lea.vmem %s3, %s2595
      $region51: #{substance_detection_forward.4} parent=46 // pred_fallthru
        _
    $region47: #{substance_detection_forward.4} parent=5 // pred_fallthru
      _
  $region6: #{substance_detection_forward.4} parent=0 // loop_footer
    %s13 = sadd.s32 1, %s9
  $region7: #{substance_detection_forward.4} parent=0 // loop_footer_branch
    %8 = sbr.rel target = $region3
  $region8: #{substance_detection_forward.4} parent=0 // loop_exit
    _

// kernel: substance_detection_forward.5
$region0: #{substance_detection_forward.5}
  #allocation0 [shape = 'u32[]', space=smem, size = 0x4, offset = 0x4, fixed_abs, tag = 'smem constant byte address 0x4 - core index']
  #allocation1 [shape = 'u32[144,128]{1,0:T(1,128)}', space=vmem, size = 0x12000, scoped, tag = 'internal scratch']
  %s0 = inlined_call_operand.vmem [shape: bf16[2,66,64,192], index: 0, kind: input, shape index: {}]
  %s1 = inlined_call_operand.vmem [shape: bf16[3,192,128], index: 1, kind: input, shape index: {}]
  %s2 = inlined_call_operand.vmem [shape: f32[1,128], index: 2, kind: input, shape index: {}]
  %s3 = inlined_call_operand.vmem [shape: bf16[2,64,64,128], index: 3, kind: output, shape index: {}]
  %s4 = sld [smem:[#allocation0]]
  $region52: #{substance_detection_forward.5} parent=0
    _
  %s6 = ssub.s32 1, %s4
  %s7 = scalar_select 0, %s6, %s4
  loop: start=0, step=1, limit=4
  $region2: #{substance_detection_forward.5} parent=0 // loop_pre_header
    _
  $region3: #{substance_detection_forward.5} parent=0 // loop_header
    %s9 = sphi 0, %s13
    %p10 = scmp.ge.s32.totalorder %s9, 4
    %s19 = sphi 0, %s21
    %s22 = sphi 0, %s19
    %s23 = sphi 0, %s22
    %s39 = sphi 0, %s23
    %s43 = sphi 0, %s43
    %s45 = sphi 0, %s43
    %s46 = sphi 0, %s45
    %s60 = sphi 0, %s46
    %s64 = sphi 0, %s64
    %s66 = sphi 0, %s64
    %s67 = sphi 0, %s66
    %s81 = sphi 0, %s67
    %s87 = sphi 0, %s89
    %s90 = sphi 0, %s87
    %s91 = sphi 0, %s90
    %s107 = sphi 0, %s91
  $region4: #{substance_detection_forward.5} parent=0 // loop_header_branch
    %12 = sbr.rel (%p10) target = $region8
  $region5: #{substance_detection_forward.5} parent=0 // loop_body
    %s14 = ssub.s32 %s9, 1
    %s15 = ssub.s32 %s9, 2
    %s16 = sadd.s32 %s9, 1
    %s17 = ssub.s32 %s9, %s16
    %p18 = scmp.eq.s32.totalorder %s17, 0
    %s20 = sadd.s32 %s19, 1
    %s21 = scalar_select %p18, %s19, %s20
    %p24 = pneg %p18
    %p25 = scmp.eq.s32.totalorder %s9, 1
    %p26 = por %p24, %p25
    %p27 = scmp.ne.s32.totalorder %s19, %s22
    %p28 = scmp.eq.s32.totalorder %s9, 0
    %p29 = por %p27, %p28
    %p30 = scmp.ne.s32.totalorder %s19, %s22
    %p31 = scmp.eq.s32.totalorder %s14, 1
    %p32 = por %p30, %p31
    %p33 = scmp.ne.s32.totalorder %s22, %s23
    %p34 = scmp.eq.s32.totalorder %s14, 0
    %p35 = por %p33, %p34
    %p36 = scmp.ne.s32.totalorder %s22, %s23
    %p37 = scmp.eq.s32.totalorder %s15, 1
    %p38 = por %p36, %p37
    %p40 = scmp.ne.s32.totalorder %s23, %s39
    %p41 = scmp.eq.s32.totalorder %s15, 0
    %p42 = por %p40, %p41
    %s44 = sadd.s32 %s43, 1
    %p47 = scmp.eq.s32.totalorder %s9, 1
    %p48 = scmp.ne.s32.totalorder %s43, %s45
    %p49 = scmp.eq.s32.totalorder %s9, 0
    %p50 = por %p48, %p49
    %p51 = scmp.ne.s32.totalorder %s43, %s45
    %p52 = scmp.eq.s32.totalorder %s14, 1
    %p53 = por %p51, %p52
    %p54 = scmp.ne.s32.totalorder %s45, %s46
    %p55 = scmp.eq.s32.totalorder %s14, 0
    %p56 = por %p54, %p55
    %p57 = scmp.ne.s32.totalorder %s45, %s46
    %p58 = scmp.eq.s32.totalorder %s15, 1
    %p59 = por %p57, %p58
    %p61 = scmp.ne.s32.totalorder %s46, %s60
    %p62 = scmp.eq.s32.totalorder %s15, 0
    %p63 = por %p61, %p62
    %s65 = sadd.s32 %s64, 1
    %p68 = scmp.eq.s32.totalorder %s9, 1
    %p69 = scmp.ne.s32.totalorder %s64, %s66
    %p70 = scmp.eq.s32.totalorder %s9, 0
    %p71 = por %p69, %p70
    %p72 = scmp.ne.s32.totalorder %s64, %s66
    %p73 = scmp.eq.s32.totalorder %s14, 1
    %p74 = por %p72, %p73
    %p75 = scmp.ne.s32.totalorder %s66, %s67
    %p76 = scmp.eq.s32.totalorder %s14, 0
    %p77 = por %p75, %p76
    %p78 = scmp.ne.s32.totalorder %s66, %s67
    %p79 = scmp.eq.s32.totalorder %s15, 1
    %p80 = por %p78, %p79
    %p82 = scmp.ne.s32.totalorder %s67, %s81
    %p83 = scmp.eq.s32.totalorder %s15, 0
    %p84 = por %p82, %p83
    %s85 = ssub.s32 %s9, %s16
    %p86 = scmp.eq.s32.totalorder %s85, 0
    %s88 = sadd.s32 %s87, 1
    %s89 = scalar_select %p86, %s87, %s88
    %p92 = pneg %p86
    %p93 = scmp.eq.s32.totalorder %s9, 1
    %p94 = por %p92, %p93
    %p95 = scmp.ne.s32.totalorder %s87, %s90
    %p96 = scmp.eq.s32.totalorder %s9, 0
    %p97 = por %p95, %p96
    %p98 = scmp.ne.s32.totalorder %s87, %s90
    %p99 = scmp.eq.s32.totalorder %s14, 1
    %p100 = por %p98, %p99
    %p101 = scmp.ne.s32.totalorder %s90, %s91
    %p102 = scmp.eq.s32.totalorder %s14, 0
    %p103 = por %p101, %p102
    %p104 = scmp.ne.s32.totalorder %s90, %s91
    %p105 = scmp.eq.s32.totalorder %s15, 1
    %p106 = por %p104, %p105
    %p108 = scmp.ne.s32.totalorder %s91, %s107
    %p109 = scmp.eq.s32.totalorder %s15, 0
    %p110 = por %p108, %p109
    %p111 = scmp.le.s32.totalorder 1, %s9
    %p112 = scmp.lt.s32.totalorder %s9, 3
    %p113 = pnand %p111, %p112
    %p114 = pneg %p113
    // Predicated region
    $region9: #{substance_detection_forward.5} parent=5 // pred_check
      _
    $region10: #{substance_detection_forward.5} parent=5 // pred_check_branch
      %116 = sbr.rel (%p113) target = $region12
    $region11: #{substance_detection_forward.5} parent=5 // pred_region
      %s117 = ssub.s32 %s9, 1
      // Predicated region
      $region13: #{substance_detection_forward.5} parent=11 // pred_check
        %p118 = pneg %p56
      $region14: #{substance_detection_forward.5} parent=11 // pred_check_branch
        %120 = sbr.rel (%p118) target = $region16
      $region15: #{substance_detection_forward.5} parent=11 // pred_region
        _
      $region16: #{substance_detection_forward.5} parent=11 // pred_fallthru
        _
      // Predicated region
      $region17: #{substance_detection_forward.5} parent=11 // pred_check
        %p121 = pneg %p77
      $region18: #{substance_detection_forward.5} parent=11 // pred_check_branch
        %123 = sbr.rel (%p121) target = $region20
      $region19: #{substance_detection_forward.5} parent=11 // pred_region
        _
      $region20: #{substance_detection_forward.5} parent=11 // pred_fallthru
        _
    $region12: #{substance_detection_forward.5} parent=5 // pred_fallthru
      _
    %p124 = scmp.lt.s32.totalorder %s9, 2
    // Predicated region
    $region21: #{substance_detection_forward.5} parent=5 // pred_check
      %p125 = pneg %p124
    $region22: #{substance_detection_forward.5} parent=5 // pred_check_branch
      %127 = sbr.rel (%p125) target = $region24
    $region23: #{substance_detection_forward.5} parent=5 // pred_region
      // Predicated region
      $region25: #{substance_detection_forward.5} parent=23 // pred_check
        %p128 = pneg %p29
      $region26: #{substance_detection_forward.5} parent=23 // pred_check_branch
        %130 = sbr.rel (%p128) target = $region28
      $region27: #{substance_detection_forward.5} parent=23 // pred_region
        %p131 = scmp.lt.s32.totalorder %s9, 1
        %s132 = scalar_select %p131, %s9, 1
        %s133 = smul.addr %s132, 1056
        %s134 = smul.addr %s133, 4
        %s135 = scalar_lea.vmem %s0, %s134
      $region28: #{substance_detection_forward.5} parent=23 // pred_fallthru
        _
    $region24: #{substance_detection_forward.5} parent=5 // pred_fallthru
      _
    %p136 = scmp.le.s32.totalorder 1, %s9
    %p137 = scmp.lt.s32.totalorder %s9, 3
    %p138 = pnand %p136, %p137
    %p139 = pneg %p138
    // Predicated region
    $region29: #{substance_detection_forward.5} parent=5 // pred_check
      _
    $region30: #{substance_detection_forward.5} parent=5 // pred_check_branch
      %141 = sbr.rel (%p138) target = $region32
    $region31: #{substance_detection_forward.5} parent=5 // pred_region
      %s142 = ssub.s32 %s9, 1
      %p143 = scmp.lt.s32.totalorder %s14, 1
      %s144 = scalar_select %p143, %s14, 1
      %s145 = smul.addr %s144, 1056
      %s146 = smul.addr %s145, 4
      %s147 = scalar_lea.vmem %s0, %s146
      %p148 = pneg %p35
      %p149 = pneg %p32
      %p150 = pneg %p56
      %p151 = pneg %p53
      %p152 = pneg %p77
      %p153 = pneg %p74
      %p154 = pneg %p103
      %p155 = pneg %p100
      %p156 = scmp.lt.s32.totalorder %s14, 1
      %s157 = scalar_select %p156, %s14, 1
      %s158 = smul.addr %s157, 512
      %s159 = smul.addr %s158, 4
      %s160 = scalar_lea.vmem %s3, %s159
      %p161 = scmp.lt.s32.totalorder %s14, 1
      %s162 = scalar_select %p161, %s14, 1
      %s163 = smul.addr %s162, 1056
      %s164 = smul.addr %s163, 4
      %s165 = scalar_lea.vmem %s0, %s164
      %p166 = scmp.lt.s32.totalorder %s14, 1
      %s167 = scalar_select %p166, %s14, 1
      %s168 = smul.addr %s167, 512
      %s169 = smul.addr %s168, 4
      %s170 = scalar_lea.vmem %s3, %s169
      %v172 = vld [vmem:[%s2] sm:$0x1]
      loop: start=0, step=1, limit=8
      $region33: #{substance_detection_forward.5} parent=31 // loop_pre_header
        _
      $region34: #{substance_detection_forward.5} parent=31 // loop_header
        %s174 = sphi 0, %s178
        %p175 = scmp.ge.s32.totalorder %s174, 8
      $region35: #{substance_detection_forward.5} parent=31 // loop_header_branch
        %177 = sbr.rel (%p175) target = $region39
      $region36: #{substance_detection_forward.5} parent=31 // loop_body
        %s179 = smul.u32 %s174, 8
        %s180 = smul.u32 %s179, 16
        %s181 = smul.addr %s180, 4
        %s182 = scalar_lea.vmem %s165, %s181
        %v183 = vld [vmem:[%s182] sm:$0xff]
        %v184 = vld [vmem:[%s182 + $0x8] sm:$0xff]
        %v185 = vld [vmem:[%s182 + $0x10] sm:$0xff]
        %v186 = vld [vmem:[%s182 + $0x18] sm:$0xff]
        %v187 = vld [vmem:[%s182 + $0x20] sm:$0xff]
        %v188 = vld [vmem:[%s182 + $0x28] sm:$0xff]
        %v189 = vld [vmem:[%s182 + $0x30] sm:$0xff]
        %v190 = vld [vmem:[%s182 + $0x38] sm:$0xff]
        %v191 = vld [vmem:[%s182 + $0x40] sm:$0xff]
        %v192 = vld [vmem:[%s182 + $0x48] sm:$0xff]
        %v193 = vld [vmem:[%s182 + $0x50] sm:$0xff]
        %v194 = vld [vmem:[%s182 + $0x58] sm:$0xff]
        %v195 = vld [vmem:[%s182 + $0x60] sm:$0xff]
        %v196 = vld [vmem:[%s182 + $0x68] sm:$0xff]
        %v197 = vld [vmem:[%s182 + $0x70] sm:$0xff]
        %v198 = vld [vmem:[%s182 + $0x78] sm:$0xff]
        %v199 = vld [vmem:[%s182 + $0x80] sm:$0xff]
        %v200 = vld [vmem:[%s182 + $0x88] sm:$0xff]
        %v201 = vld [vmem:[%s182 + $0x90] sm:$0xff]
        %v202 = vld [vmem:[%s182 + $0x98] sm:$0xff]
        %v203 = vld [vmem:[%s182 + $0xa0] sm:$0xff]
        %v204 = vld [vmem:[%s182 + $0xa8] sm:$0xff]
        %v205 = vld [vmem:[%s182 + $0xb0] sm:$0xff]
        %v206 = vld [vmem:[%s182 + $0xb8] sm:$0xff]
        %v207 = vld [vmem:[%s182 + $0xc0] sm:$0xff]
        %v208 = vld [vmem:[%s182 + $0xc8] sm:$0xff]
        %v209 = vld [vmem:[%s182 + $0xd0] sm:$0xff]
        %v210 = vld [vmem:[%s182 + $0xd8] sm:$0xff]
        %v211 = vld [vmem:[%s182 + $0xe0] sm:$0xff]
        %v212 = vld [vmem:[%s182 + $0xe8] sm:$0xff]
        %v213 = vld [vmem:[%s182 + $0xf0] sm:$0xff]
        %v214 = vld [vmem:[%s182 + $0xf8] sm:$0xff]
        %v215 = vld [vmem:[%s182 + $0x100] sm:$0xff]
        %v216 = vld [vmem:[%s182 + $0x108] sm:$0xff]
        %v217 = vld [vmem:[%s182 + $0x110] sm:$0xff]
        %v218 = vld [vmem:[%s182 + $0x118] sm:$0xff]
        %v219 = vld [vmem:[%s182 + $0x120] sm:$0xff]
        %v220 = vld [vmem:[%s182 + $0x128] sm:$0xff]
        %v221 = vld [vmem:[%s182 + $0x130] sm:$0xff]
        %v222 = vld [vmem:[%s182 + $0x138] sm:$0xff]
        %v223 = vld [vmem:[%s182 + $0x140] sm:$0xff]
        %v224 = vld [vmem:[%s182 + $0x148] sm:$0xff]
        %v225 = vld [vmem:[%s182 + $0x150] sm:$0xff]
        %v226 = vld [vmem:[%s182 + $0x158] sm:$0xff]
        %v227 = vld [vmem:[%s182 + $0x160] sm:$0xff]
        %v228 = vld [vmem:[%s182 + $0x168] sm:$0xff]
        %v229 = vld [vmem:[%s182 + $0x170] sm:$0xff]
        %v230 = vld [vmem:[%s182 + $0x178] sm:$0xff]
        %v231 = vld [vmem:[%s182 + $0x180] sm:$0xff]
        %v232 = vld [vmem:[%s182 + $0x188] sm:$0xff]
        %v233 = vld [vmem:[%s182 + $0x190] sm:$0xff]
        %v234 = vld [vmem:[%s182 + $0x198] sm:$0xff]
        %v235 = vld [vmem:[%s182 + $0x1a0] sm:$0xff]
        %v236 = vld [vmem:[%s182 + $0x1a8] sm:$0xff]
        %v237 = vld [vmem:[%s182 + $0x1b0] sm:$0xff]
        %v238 = vld [vmem:[%s182 + $0x1b8] sm:$0xff]
        %v239 = vld [vmem:[%s182 + $0x1c0] sm:$0xff]
        %v240 = vld [vmem:[%s182 + $0x1c8] sm:$0xff]
        %v241 = vld [vmem:[%s182 + $0x1d0] sm:$0xff]
        %v242 = vld [vmem:[%s182 + $0x1d8] sm:$0xff]
        %v243 = vld [vmem:[%s182 + $0x1e0] sm:$0xff]
        %v244 = vld [vmem:[%s182 + $0x1e8] sm:$0xff]
        %v245 = vld [vmem:[%s182 + $0x1f0] sm:$0xff]
        %v246 = vld [vmem:[%s182 + $0x1f8] sm:$0xff]
        %v247 = vld [vmem:[%s1] sm:$0xf]
        %v248 = vld [vmem:[%s1 + $0x4] sm:$0xf]
        %v249 = vld [vmem:[%s1 + $0x8] sm:$0xf]
        %v250 = vld [vmem:[%s1 + $0xc] sm:$0xf]
        %v251 = vld [vmem:[%s1 + $0x10] sm:$0xf]
        %v252 = vld [vmem:[%s1 + $0x14] sm:$0xf]
        %v253 = vld [vmem:[%s1 + $0x18] sm:$0xf]
        %v254 = vld [vmem:[%s1 + $0x1c] sm:$0xf]
        %v255 = vld [vmem:[%s1 + $0x20] sm:$0xf]
        %v256 = vld [vmem:[%s1 + $0x24] sm:$0xf]
        %v257 = vld [vmem:[%s1 + $0x28] sm:$0xf]
        %v258 = vld [vmem:[%s1 + $0x2c] sm:$0xf]
        %v259 = vld [vmem:[%s1 + $0x30] sm:$0xf]
        %v260 = vld [vmem:[%s1 + $0x34] sm:$0xf]
        %v261 = vld [vmem:[%s1 + $0x38] sm:$0xf]
        %v262 = vld [vmem:[%s1 + $0x3c] sm:$0xf]
        %v263 = vld [vmem:[%s1 + $0x40] sm:$0xf]
        %v264 = vld [vmem:[%s1 + $0x44] sm:$0xf]
        %v265 = vld [vmem:[%s1 + $0x48] sm:$0xf]
        %v266 = vld [vmem:[%s1 + $0x4c] sm:$0xf]
        %v267 = vld [vmem:[%s1 + $0x50] sm:$0xf]
        %v268 = vld [vmem:[%s1 + $0x54] sm:$0xf]
        %v269 = vld [vmem:[%s1 + $0x58] sm:$0xf]
        %v270 = vld [vmem:[%s1 + $0x5c] sm:$0xf]
        %s271 = sadd.s32 %s179, 1
        %s272 = smul.u32 %s271, 16
        %s273 = smul.addr %s272, 4
        %s274 = scalar_lea.vmem %s165, %s273
        %v275 = vld [vmem:[%s274] sm:$0xff]
        %v276 = vld [vmem:[%s274 + $0x8] sm:$0xff]
        %v277 = vld [vmem:[%s274 + $0x10] sm:$0xff]
        %v278 = vld [vmem:[%s274 + $0x18] sm:$0xff]
        %v279 = vld [vmem:[%s274 + $0x20] sm:$0xff]
        %v280 = vld [vmem:[%s274 + $0x28] sm:$0xff]
        %v281 = vld [vmem:[%s274 + $0x30] sm:$0xff]
        %v282 = vld [vmem:[%s274 + $0x38] sm:$0xff]
        %v283 = vld [vmem:[%s274 + $0x40] sm:$0xff]
        %v284 = vld [vmem:[%s274 + $0x48] sm:$0xff]
        %v285 = vld [vmem:[%s274 + $0x50] sm:$0xff]
        %v286 = vld [vmem:[%s274 + $0x58] sm:$0xff]
        %v287 = vld [vmem:[%s274 + $0x60] sm:$0xff]
        %v288 = vld [vmem:[%s274 + $0x68] sm:$0xff]
        %v289 = vld [vmem:[%s274 + $0x70] sm:$0xff]
        %v290 = vld [vmem:[%s274 + $0x78] sm:$0xff]
        %v291 = vld [vmem:[%s274 + $0x80] sm:$0xff]
        %v292 = vld [vmem:[%s274 + $0x88] sm:$0xff]
        %v293 = vld [vmem:[%s274 + $0x90] sm:$0xff]
        %v294 = vld [vmem:[%s274 + $0x98] sm:$0xff]
        %v295 = vld [vmem:[%s274 + $0xa0] sm:$0xff]
        %v296 = vld [vmem:[%s274 + $0xa8] sm:$0xff]
        %v297 = vld [vmem:[%s274 + $0xb0] sm:$0xff]
        %v298 = vld [vmem:[%s274 + $0xb8] sm:$0xff]
        %v299 = vld [vmem:[%s274 + $0xc0] sm:$0xff]
        %v300 = vld [vmem:[%s274 + $0xc8] sm:$0xff]
        %v301 = vld [vmem:[%s274 + $0xd0] sm:$0xff]
        %v302 = vld [vmem:[%s274 + $0xd8] sm:$0xff]
        %v303 = vld [vmem:[%s274 + $0xe0] sm:$0xff]
        %v304 = vld [vmem:[%s274 + $0xe8] sm:$0xff]
        %v305 = vld [vmem:[%s274 + $0xf0] sm:$0xff]
        %v306 = vld [vmem:[%s274 + $0xf8] sm:$0xff]
        %v307 = vld [vmem:[%s274 + $0x100] sm:$0xff]
        %v308 = vld [vmem:[%s274 + $0x108] sm:$0xff]
        %v309 = vld [vmem:[%s274 + $0x110] sm:$0xff]
        %v310 = vld [vmem:[%s274 + $0x118] sm:$0xff]
        %v311 = vld [vmem:[%s274 + $0x120] sm:$0xff]
        %v312 = vld [vmem:[%s274 + $0x128] sm:$0xff]
        %v313 = vld [vmem:[%s274 + $0x130] sm:$0xff]
        %v314 = vld [vmem:[%s274 + $0x138] sm:$0xff]
        %v315 = vld [vmem:[%s274 + $0x140] sm:$0xff]
        %v316 = vld [vmem:[%s274 + $0x148] sm:$0xff]
        %v317 = vld [vmem:[%s274 + $0x150] sm:$0xff]
        %v318 = vld [vmem:[%s274 + $0x158] sm:$0xff]
        %v319 = vld [vmem:[%s274 + $0x160] sm:$0xff]
        %v320 = vld [vmem:[%s274 + $0x168] sm:$0xff]
        %v321 = vld [vmem:[%s274 + $0x170] sm:$0xff]
        %v322 = vld [vmem:[%s274 + $0x178] sm:$0xff]
        %v323 = vld [vmem:[%s274 + $0x180] sm:$0xff]
        %v324 = vld [vmem:[%s274 + $0x188] sm:$0xff]
        %v325 = vld [vmem:[%s274 + $0x190] sm:$0xff]
        %v326 = vld [vmem:[%s274 + $0x198] sm:$0xff]
        %v327 = vld [vmem:[%s274 + $0x1a0] sm:$0xff]
        %v328 = vld [vmem:[%s274 + $0x1a8] sm:$0xff]
        %v329 = vld [vmem:[%s274 + $0x1b0] sm:$0xff]
        %v330 = vld [vmem:[%s274 + $0x1b8] sm:$0xff]
        %v331 = vld [vmem:[%s274 + $0x1c0] sm:$0xff]
        %v332 = vld [vmem:[%s274 + $0x1c8] sm:$0xff]
        %v333 = vld [vmem:[%s274 + $0x1d0] sm:$0xff]
        %v334 = vld [vmem:[%s274 + $0x1d8] sm:$0xff]
        %v335 = vld [vmem:[%s274 + $0x1e0] sm:$0xff]
        %v336 = vld [vmem:[%s274 + $0x1e8] sm:$0xff]
        %v337 = vld [vmem:[%s274 + $0x1f0] sm:$0xff]
        %v338 = vld [vmem:[%s274 + $0x1f8] sm:$0xff]
        %s339 = scalar_lea.vmem %s1, 96
        %v340 = vld [vmem:[%s339] sm:$0xf]
        %v341 = vld [vmem:[%s339 + $0x4] sm:$0xf]
        %v342 = vld [vmem:[%s339 + $0x8] sm:$0xf]
        %v343 = vld [vmem:[%s339 + $0xc] sm:$0xf]
        %v344 = vld [vmem:[%s339 + $0x10] sm:$0xf]
        %v345 = vld [vmem:[%s339 + $0x14] sm:$0xf]
        %v346 = vld [vmem:[%s339 + $0x18] sm:$0xf]
        %v347 = vld [vmem:[%s339 + $0x1c] sm:$0xf]
        %v348 = vld [vmem:[%s339 + $0x20] sm:$0xf]
        %v349 = vld [vmem:[%s339 + $0x24] sm:$0xf]
        %v350 = vld [vmem:[%s339 + $0x28] sm:$0xf]
        %v351 = vld [vmem:[%s339 + $0x2c] sm:$0xf]
        %v352 = vld [vmem:[%s339 + $0x30] sm:$0xf]
        %v353 = vld [vmem:[%s339 + $0x34] sm:$0xf]
        %v354 = vld [vmem:[%s339 + $0x38] sm:$0xf]
        %v355 = vld [vmem:[%s339 + $0x3c] sm:$0xf]
        %v356 = vld [vmem:[%s339 + $0x40] sm:$0xf]
        %v357 = vld [vmem:[%s339 + $0x44] sm:$0xf]
        %v358 = vld [vmem:[%s339 + $0x48] sm:$0xf]
        %v359 = vld [vmem:[%s339 + $0x4c] sm:$0xf]
        %v360 = vld [vmem:[%s339 + $0x50] sm:$0xf]
        %v361 = vld [vmem:[%s339 + $0x54] sm:$0xf]
        %v362 = vld [vmem:[%s339 + $0x58] sm:$0xf]
        %v363 = vld [vmem:[%s339 + $0x5c] sm:$0xf]
        %v428 = vunpack.c.l.b16 %v275
        %v429 = vunpack.c.h.b16 %v275
        %v430 = vunpack.c.l.b16 %v276
        %v431 = vunpack.c.h.b16 %v276
        %v432 = vunpack.c.l.b16 %v277
        %v433 = vunpack.c.h.b16 %v277
        %v434 = vunpack.c.l.b16 %v278
        %v435 = vunpack.c.h.b16 %v278
        %v436 = vunpack.c.l.b16 %v279
        %v437 = vunpack.c.h.b16 %v279
        %v438 = vunpack.c.l.b16 %v280
        %v439 = vunpack.c.h.b16 %v280
        %v440 = vunpack.c.l.b16 %v281
        %v441 = vunpack.c.h.b16 %v281
        %v442 = vunpack.c.l.b16 %v282
        %v443 = vunpack.c.h.b16 %v282
        %v444 = vunpack.c.l.b16 %v283
        %v445 = vunpack.c.h.b16 %v283
        %v446 = vunpack.c.l.b16 %v284
        %v447 = vunpack.c.h.b16 %v284
        %v448 = vunpack.c.l.b16 %v285
        %v449 = vunpack.c.h.b16 %v285
        %v450 = vunpack.c.l.b16 %v286
        %v451 = vunpack.c.h.b16 %v286
        %v452 = vunpack.c.l.b16 %v287
        %v453 = vunpack.c.h.b16 %v287
        %v454 = vunpack.c.l.b16 %v288
        %v455 = vunpack.c.h.b16 %v288
        %v456 = vunpack.c.l.b16 %v289
        %v457 = vunpack.c.h.b16 %v289
        %v458 = vunpack.c.l.b16 %v290
        %v459 = vunpack.c.h.b16 %v290
        %v460 = vunpack.c.l.b16 %v291
        %v461 = vunpack.c.h.b16 %v291
        %v462 = vunpack.c.l.b16 %v292
        %v463 = vunpack.c.h.b16 %v292
        %v464 = vunpack.c.l.b16 %v293
        %v465 = vunpack.c.h.b16 %v293
        %v466 = vunpack.c.l.b16 %v294
        %v467 = vunpack.c.h.b16 %v294
        %v468 = vunpack.c.l.b16 %v295
        %v469 = vunpack.c.h.b16 %v295
        %v470 = vunpack.c.l.b16 %v296
        %v471 = vunpack.c.h.b16 %v296
        %v472 = vunpack.c.l.b16 %v297
        %v473 = vunpack.c.h.b16 %v297
        %v474 = vunpack.c.l.b16 %v298
        %v475 = vunpack.c.h.b16 %v298
        %v476 = vunpack.c.l.b16 %v299
        %v477 = vunpack.c.h.b16 %v299
        %v478 = vunpack.c.l.b16 %v300
        %v479 = vunpack.c.h.b16 %v300
        %v480 = vunpack.c.l.b16 %v301
        %v481 = vunpack.c.h.b16 %v301
        %v482 = vunpack.c.l.b16 %v302
        %v483 = vunpack.c.h.b16 %v302
        %v484 = vunpack.c.l.b16 %v303
        %v485 = vunpack.c.h.b16 %v303
        %v486 = vunpack.c.l.b16 %v304
        %v487 = vunpack.c.h.b16 %v304
        %v488 = vunpack.c.l.b16 %v305
        %v489 = vunpack.c.h.b16 %v305
        %v490 = vunpack.c.l.b16 %v306
        %v491 = vunpack.c.h.b16 %v306
        %v492 = vunpack.c.l.b16 %v307
        %v493 = vunpack.c.h.b16 %v307
        %v494 = vunpack.c.l.b16 %v308
        %v495 = vunpack.c.h.b16 %v308
        %v496 = vunpack.c.l.b16 %v309
        %v497 = vunpack.c.h.b16 %v309
        %v498 = vunpack.c.l.b16 %v310
        %v499 = vunpack.c.h.b16 %v310
        %v500 = vunpack.c.l.b16 %v311
        %v501 = vunpack.c.h.b16 %v311
        %v502 = vunpack.c.l.b16 %v312
        %v503 = vunpack.c.h.b16 %v312
        %v504 = vunpack.c.l.b16 %v313
        %v505 = vunpack.c.h.b16 %v313
        %v506 = vunpack.c.l.b16 %v314
        %v507 = vunpack.c.h.b16 %v314
        %v508 = vunpack.c.l.b16 %v315
        %v509 = vunpack.c.h.b16 %v315
        %v510 = vunpack.c.l.b16 %v316
        %v511 = vunpack.c.h.b16 %v316
        %v512 = vunpack.c.l.b16 %v317
        %v513 = vunpack.c.h.b16 %v317
        %v514 = vunpack.c.l.b16 %v318
        %v515 = vunpack.c.h.b16 %v318
        %v516 = vunpack.c.l.b16 %v319
        %v517 = vunpack.c.h.b16 %v319
        %v518 = vunpack.c.l.b16 %v320
        %v519 = vunpack.c.h.b16 %v320
        %v520 = vunpack.c.l.b16 %v321
        %v521 = vunpack.c.h.b16 %v321
        %v522 = vunpack.c.l.b16 %v322
        %v523 = vunpack.c.h.b16 %v322
        %v524 = vunpack.c.l.b16 %v323
        %v525 = vunpack.c.h.b16 %v323
        %v526 = vunpack.c.l.b16 %v324
        %v527 = vunpack.c.h.b16 %v324
        %v528 = vunpack.c.l.b16 %v325
        %v529 = vunpack.c.h.b16 %v325
        %v530 = vunpack.c.l.b16 %v326
        %v531 = vunpack.c.h.b16 %v326
        %v532 = vunpack.c.l.b16 %v327
        %v533 = vunpack.c.h.b16 %v327
        %v534 = vunpack.c.l.b16 %v328
        %v535 = vunpack.c.h.b16 %v328
        %v536 = vunpack.c.l.b16 %v329
        %v537 = vunpack.c.h.b16 %v329
        %v538 = vunpack.c.l.b16 %v330
        %v539 = vunpack.c.h.b16 %v330
        %v540 = vunpack.c.l.b16 %v331
        %v541 = vunpack.c.h.b16 %v331
        %v542 = vunpack.c.l.b16 %v332
        %v543 = vunpack.c.h.b16 %v332
        %v544 = vunpack.c.l.b16 %v333
        %v545 = vunpack.c.h.b16 %v333
        %v546 = vunpack.c.l.b16 %v334
        %v547 = vunpack.c.h.b16 %v334
        %v548 = vunpack.c.l.b16 %v335
        %v549 = vunpack.c.h.b16 %v335
        %v550 = vunpack.c.l.b16 %v336
        %v551 = vunpack.c.h.b16 %v336
        %v552 = vunpack.c.l.b16 %v337
        %v553 = vunpack.c.h.b16 %v337
        %v554 = vunpack.c.l.b16 %v338
        %v555 = vunpack.c.h.b16 %v338
        %v556 = vpack.c.b16 %v430, %v428
        %v557 = vpack.c.b16 %v431, %v429
        %v558 = vpack.c.b16 %v434, %v432
        %v559 = vpack.c.b16 %v435, %v433
        %v560 = vpack.c.b16 %v438, %v436
        %v561 = vpack.c.b16 %v439, %v437
        %v562 = vpack.c.b16 %v442, %v440
        %v563 = vpack.c.b16 %v443, %v441
        %v564 = vpack.c.b16 %v446, %v444
        %v565 = vpack.c.b16 %v447, %v445
        %v566 = vpack.c.b16 %v450, %v448
        %v567 = vpack.c.b16 %v451, %v449
        %v568 = vpack.c.b16 %v454, %v452
        %v569 = vpack.c.b16 %v455, %v453
        %v570 = vpack.c.b16 %v458, %v456
        %v571 = vpack.c.b16 %v459, %v457
        %v572 = vpack.c.b16 %v462, %v460
        %v573 = vpack.c.b16 %v463, %v461
        %v574 = vpack.c.b16 %v466, %v464
        %v575 = vpack.c.b16 %v467, %v465
        %v576 = vpack.c.b16 %v470, %v468
        %v577 = vpack.c.b16 %v471, %v469
        %v578 = vpack.c.b16 %v474, %v472
        %v579 = vpack.c.b16 %v475, %v473
        %v580 = vpack.c.b16 %v478, %v476
        %v581 = vpack.c.b16 %v479, %v477
        %v582 = vpack.c.b16 %v482, %v480
        %v583 = vpack.c.b16 %v483, %v481
        %v584 = vpack.c.b16 %v486, %v484
        %v585 = vpack.c.b16 %v487, %v485
        %v586 = vpack.c.b16 %v490, %v488
        %v587 = vpack.c.b16 %v491, %v489
        %v588 = vpack.c.b16 %v494, %v492
        %v589 = vpack.c.b16 %v495, %v493
        %v590 = vpack.c.b16 %v498, %v496
        %v591 = vpack.c.b16 %v499, %v497
        %v592 = vpack.c.b16 %v502, %v500
        %v593 = vpack.c.b16 %v503, %v501
        %v594 = vpack.c.b16 %v506, %v504
        %v595 = vpack.c.b16 %v507, %v505
        %v596 = vpack.c.b16 %v510, %v508
        %v597 = vpack.c.b16 %v511, %v509
        %v598 = vpack.c.b16 %v514, %v512
        %v599 = vpack.c.b16 %v515, %v513
        %v600 = vpack.c.b16 %v518, %v516
        %v601 = vpack.c.b16 %v519, %v517
        %v602 = vpack.c.b16 %v522, %v520
        %v603 = vpack.c.b16 %v523, %v521
        %v604 = vpack.c.b16 %v526, %v524
        %v605 = vpack.c.b16 %v527, %v525
        %v606 = vpack.c.b16 %v530, %v528
        %v607 = vpack.c.b16 %v531, %v529
        %v608 = vpack.c.b16 %v534, %v532
        %v609 = vpack.c.b16 %v535, %v533
        %v610 = vpack.c.b16 %v538, %v536
        %v611 = vpack.c.b16 %v539, %v537
        %v612 = vpack.c.b16 %v542, %v540
        %v613 = vpack.c.b16 %v543, %v541
        %v614 = vpack.c.b16 %v546, %v544
        %v615 = vpack.c.b16 %v547, %v545
        %v616 = vpack.c.b16 %v550, %v548
        %v617 = vpack.c.b16 %v551, %v549
        %v618 = vpack.c.b16 %v554, %v552
        %v619 = vpack.c.b16 %v555, %v553
        %v676 = vunpack.c.l.b16 %v340
        %v677 = vunpack.c.l.b16 %v341
        %v678 = vunpack.c.l.b16 %v342
        %v679 = vunpack.c.l.b16 %v343
        %v680 = vunpack.c.l.b16 %v344
        %v681 = vunpack.c.l.b16 %v345
        %v682 = vunpack.c.l.b16 %v346
        %v683 = vunpack.c.l.b16 %v347
        %v684 = vunpack.c.l.b16 %v348
        %v685 = vunpack.c.l.b16 %v349
        %v686 = vunpack.c.l.b16 %v350
        %v687 = vunpack.c.l.b16 %v351
        %v688 = vunpack.c.l.b16 %v352
        %v689 = vunpack.c.l.b16 %v353
        %v690 = vunpack.c.l.b16 %v354
        %v691 = vunpack.c.l.b16 %v355
        %v692 = vunpack.c.l.b16 %v356
        %v693 = vunpack.c.l.b16 %v357
        %v694 = vunpack.c.l.b16 %v358
        %v695 = vunpack.c.l.b16 %v359
        %v696 = vunpack.c.l.b16 %v360
        %v697 = vunpack.c.l.b16 %v361
        %v698 = vunpack.c.l.b16 %v362
        %v699 = vunpack.c.l.b16 %v363
        %v700 = vpack.c.b16 %v677, %v676
        %v701 = vpack.c.b16 %v679, %v678
        %v702 = vpack.c.b16 %v681, %v680
        %v703 = vpack.c.b16 %v683, %v682
        %v704 = vpack.c.b16 %v685, %v684
        %v705 = vpack.c.b16 %v687, %v686
        %v706 = vpack.c.b16 %v689, %v688
        %v707 = vpack.c.b16 %v691, %v690
        %v708 = vpack.c.b16 %v693, %v692
        %v709 = vpack.c.b16 %v695, %v694
        %v710 = vpack.c.b16 %v697, %v696
        %v711 = vpack.c.b16 %v699, %v698
        %vm724 = vcmask 523264
        %v726 = vsel %vm724, %v557, 0
        %v729 = vsel %vm724, %v559, 0
        %v732 = vsel %vm724, %v561, 0
        %v735 = vsel %vm724, %v563, 0
        %v738 = vsel %vm724, %v565, 0
        %v741 = vsel %vm724, %v567, 0
        %v744 = vsel %vm724, %v569, 0
        %v747 = vsel %vm724, %v571, 0
        %v750 = vsel %vm724, %v573, 0
        %v753 = vsel %vm724, %v575, 0
        %v756 = vsel %vm724, %v577, 0
        %v759 = vsel %vm724, %v579, 0
        %v762 = vsel %vm724, %v581, 0
        %v765 = vsel %vm724, %v583, 0
        %v768 = vsel %vm724, %v585, 0
        %v771 = vsel %vm724, %v587, 0
        %v774 = vsel %vm724, %v589, 0
        %v777 = vsel %vm724, %v591, 0
        %v780 = vsel %vm724, %v593, 0
        %v783 = vsel %vm724, %v595, 0
        %v786 = vsel %vm724, %v597, 0
        %v789 = vsel %vm724, %v599, 0
        %v792 = vsel %vm724, %v601, 0
        %v795 = vsel %vm724, %v603, 0
        %v798 = vsel %vm724, %v605, 0
        %v801 = vsel %vm724, %v607, 0
        %v804 = vsel %vm724, %v609, 0
        %v807 = vsel %vm724, %v611, 0
        %v810 = vsel %vm724, %v613, 0
        %v813 = vsel %vm724, %v615, 0
        %v816 = vsel %vm724, %v617, 0
        %v819 = vsel %vm724, %v619, 0
        %821 = vmatprep.subr.bf16.mxu0 0
        %822 = vmatpush1.bf16.msra.mxu0 %v700
        %823 = vmatprep.subr.bf16.mxu0 0
        %824 = vmatpush1.bf16.msra.mxu0 %v701
        %825 = vmatprep.subr.bf16.mxu0 0
        %826 = vmatpush1.bf16.msra.mxu0 %v702
        %827 = vmatprep.subr.bf16.mxu0 0
        %828 = vmatpush1.bf16.msra.mxu0 %v703
        %829 = vmatprep.subr.bf16.mxu0 0
        %830 = vmatpush1.bf16.msra.mxu0 %v704
        %831 = vmatprep.subr.bf16.mxu0 0
        %832 = vmatpush1.bf16.msra.mxu0 %v705
        %833 = vmatprep.subr.bf16.mxu0 0
        %834 = vmatpush1.bf16.msra.mxu0 %v706
        %835 = vmatprep.subr.bf16.mxu0 0
        %836 = vmatpush1.bf16.msra.mxu0 %v707
        %837 = vmatprep.subr.bf16.mxu0 0
        %838 = vmatpush1.bf16.msra.mxu0 %v708
        %839 = vmatprep.subr.bf16.mxu0 0
        %840 = vmatpush1.bf16.msra.mxu0 %v709
        %841 = vmatprep.subr.bf16.mxu0 0
        %842 = vmatpush1.bf16.msra.mxu0 %v710
        %843 = vmatprep.subr.bf16.mxu0 0
        %844 = vmatpush1.bf16.msra.mxu0 %v711
        %845 = vmatprep.subr.bf16.mxu0 0
        %846 = vmatpush1.bf16.msra.mxu0 0
        %847 = vmatprep.subr.bf16.mxu0 0
        %848 = vmatpush1.bf16.msra.mxu0 0
        %849 = vmatprep.subr.bf16.mxu0 0
        %850 = vmatpush1.bf16.msra.mxu0 0
        %851 = vmatprep.subr.bf16.mxu0 0
        %852 = vmatpush1.bf16.msra.mxu0 0
        %853 = vmatprep.mubr.bf16.mxu0 %v726
        %854 = vmatmul.mubr.bf16.gmra.mrb[0].mxu0 %v556
        %v855 = vpop.f32.mrb[0].mxu0
        %v856 = vadd.f32 0.0, %v855
        %v857 = vpop.f32.mrb[0].mxu0
        %v858 = vpop.f32.mrb[0].mxu0
        %v859 = vadd.f32 0.0, %v858
        %v860 = vpop.f32.mrb[0].mxu0
        %861 = vmatprep.mubr.bf16.mxu0 %v729
        %862 = vmatmul.mubr.bf16.gmra.mrb[0].mxu0 %v558
        %v863 = vpop.f32.mrb[0].mxu0
        %v864 = vadd.f32 0.0, %v863
        %v865 = vpop.f32.mrb[0].mxu0
        %v866 = vpop.f32.mrb[0].mxu0
        %v867 = vadd.f32 0.0, %v866
        %v868 = vpop.f32.mrb[0].mxu0
        %869 = vmatprep.mubr.bf16.mxu0 %v732
        %870 = vmatmul.mubr.bf16.gmra.mrb[0].mxu0 %v560
        %v871 = vpop.f32.mrb[0].mxu0
        %v872 = vadd.f32 0.0, %v871
        %v873 = vpop.f32.mrb[0].mxu0
        %v874 = vpop.f32.mrb[0].mxu0
        %v875 = vadd.f32 0.0, %v874
        %v876 = vpop.f32.mrb[0].mxu0
        %877 = vmatprep.mubr.bf16.mxu0 %v735
        %878 = vmatmul.mubr.bf16.gmra.mrb[0].mxu0 %v562
        %v879 = vpop.f32.mrb[0].mxu0
        %v880 = vadd.f32 0.0, %v879
        %v881 = vpop.f32.mrb[0].mxu0
        %v882 = vpop.f32.mrb[0].mxu0
        %v883 = vadd.f32 0.0, %v882
        %v884 = vpop.f32.mrb[0].mxu0
        %885 = vmatprep.mubr.bf16.mxu0 %v738
        %886 = vmatmul.mubr.bf16.gmra.mrb[0].mxu0 %v564
        %v887 = vpop.f32.mrb[0].mxu0
        %v888 = vadd.f32 0.0, %v887
        %v889 = vpop.f32.mrb[0].mxu0
        %v890 = vpop.f32.mrb[0].mxu0
        %v891 = vadd.f32 0.0, %v890
        %v892 = vpop.f32.mrb[0].mxu0
        %893 = vmatprep.mubr.bf16.mxu0 %v741
        %894 = vmatmul.mubr.bf16.gmra.mrb[0].mxu0 %v566
        %v895 = vpop.f32.mrb[0].mxu0
        %v896 = vadd.f32 0.0, %v895
        %v897 = vpop.f32.mrb[0].mxu0
        %v898 = vpop.f32.mrb[0].mxu0
        %v899 = vadd.f32 0.0, %v898
        %v900 = vpop.f32.mrb[0].mxu0
        %901 = vmatprep.mubr.bf16.mxu0 %v744
        %902 = vmatmul.mubr.bf16.gmra.mrb[0].mxu0 %v568
        %v903 = vpop.f32.mrb[0].mxu0
        %v904 = vadd.f32 0.0, %v903
        %v905 = vpop.f32.mrb[0].mxu0
        %v906 = vpop.f32.mrb[0].mxu0
        %v907 = vadd.f32 0.0, %v906
        %v908 = vpop.f32.mrb[0].mxu0
        %909 = vmatprep.mubr.bf16.mxu0 %v747
        %910 = vmatmul.mubr.bf16.gmra.mrb[0].mxu0 %v570
        %v911 = vpop.f32.mrb[0].mxu0
        %v912 = vadd.f32 0.0, %v911
        %v913 = vpop.f32.mrb[0].mxu0
        %v914 = vpop.f32.mrb[0].mxu0
        %v915 = vadd.f32 0.0, %v914
        %v916 = vpop.f32.mrb[0].mxu0
        %917 = vmatprep.mubr.bf16.mxu0 %v750
        %918 = vmatmul.mubr.bf16.gmra.mrb[0].mxu0 %v572
        %v919 = vpop.f32.mrb[0].mxu0
        %v920 = vadd.f32 0.0, %v919
        %v921 = vpop.f32.mrb[0].mxu0
        %v922 = vpop.f32.mrb[0].mxu0
        %v923 = vadd.f32 0.0, %v922
        %v924 = vpop.f32.mrb[0].mxu0
        %925 = vmatprep.mubr.bf16.mxu0 %v753
        %926 = vmatmul.mubr.bf16.gmra.mrb[0].mxu0 %v574
        %v927 = vpop.f32.mrb[0].mxu0
        %v928 = vadd.f32 0.0, %v927
        %v929 = vpop.f32.mrb[0].mxu0
        %v930 = vpop.f32.mrb[0].mxu0
        %v931 = vadd.f32 0.0, %v930
        %v932 = vpop.f32.mrb[0].mxu0
        %933 = vmatprep.mubr.bf16.mxu0 %v756
        %934 = vmatmul.mubr.bf16.gmra.mrb[0].mxu0 %v576
        %v935 = vpop.f32.mrb[0].mxu0
        %v936 = vadd.f32 0.0, %v935
        %v937 = vpop.f32.mrb[0].mxu0
        %v938 = vpop.f32.mrb[0].mxu0
        %v939 = vadd.f32 0.0, %v938
        %v940 = vpop.f32.mrb[0].mxu0
        %941 = vmatprep.mubr.bf16.mxu0 %v759
        %942 = vmatmul.mubr.bf16.gmra.mrb[0].mxu0 %v578
        %v943 = vpop.f32.mrb[0].mxu0
        %v944 = vadd.f32 0.0, %v943
        %v945 = vpop.f32.mrb[0].mxu0
        %v946 = vpop.f32.mrb[0].mxu0
        %v947 = vadd.f32 0.0, %v946
        %v948 = vpop.f32.mrb[0].mxu0
        %949 = vmatprep.mubr.bf16.mxu0 %v762
        %950 = vmatmul.mubr.bf16.gmra.mrb[0].mxu0 %v580
        %v951 = vpop.f32.mrb[0].mxu0
        %v952 = vadd.f32 0.0, %v951
        %v953 = vpop.f32.mrb[0].mxu0
        %v954 = vpop.f32.mrb[0].mxu0
        %v955 = vadd.f32 0.0, %v954
        %v956 = vpop.f32.mrb[0].mxu0
        %957 = vmatprep.mubr.bf16.mxu0 %v765
        %958 = vmatmul.mubr.bf16.gmra.mrb[0].mxu0 %v582
        %v959 = vpop.f32.mrb[0].mxu0
        %v960 = vadd.f32 0.0, %v959
        %v961 = vpop.f32.mrb[0].mxu0
        %v962 = vpop.f32.mrb[0].mxu0
        %v963 = vadd.f32 0.0, %v962
        %v964 = vpop.f32.mrb[0].mxu0
        %965 = vmatprep.mubr.bf16.mxu0 %v768
        %966 = vmatmul.mubr.bf16.gmra.mrb[0].mxu0 %v584
        %v967 = vpop.f32.mrb[0].mxu0
        %v968 = vadd.f32 0.0, %v967
        %v969 = vpop.f32.mrb[0].mxu0
        %v970 = vpop.f32.mrb[0].mxu0
        %v971 = vadd.f32 0.0, %v970
        %v972 = vpop.f32.mrb[0].mxu0
        %973 = vmatprep.mubr.bf16.mxu0 %v771
        %974 = vmatmul.mubr.bf16.gmra.mrb[0].mxu0 %v586
        %v975 = vpop.f32.mrb[0].mxu0
        %v976 = vadd.f32 0.0, %v975
        %v977 = vpop.f32.mrb[0].mxu0
        %v978 = vpop.f32.mrb[0].mxu0
        %v979 = vadd.f32 0.0, %v978
        %v980 = vpop.f32.mrb[0].mxu0
        %981 = vmatprep.mubr.bf16.mxu0 %v774
        %982 = vmatmul.mubr.bf16.gmra.mrb[0].mxu0 %v588
        %v983 = vpop.f32.mrb[0].mxu0
        %v984 = vadd.f32 0.0, %v983
        %v985 = vpop.f32.mrb[0].mxu0
        %v986 = vpop.f32.mrb[0].mxu0
        %v987 = vadd.f32 0.0, %v986
        %v988 = vpop.f32.mrb[0].mxu0
        %989 = vmatprep.mubr.bf16.mxu0 %v777
        %990 = vmatmul.mubr.bf16.gmra.mrb[0].mxu0 %v590
        %v991 = vpop.f32.mrb[0].mxu0
        %v992 = vadd.f32 0.0, %v991
        %v993 = vpop.f32.mrb[0].mxu0
        %v994 = vpop.f32.mrb[0].mxu0
        %v995 = vadd.f32 0.0, %v994
        %v996 = vpop.f32.mrb[0].mxu0
        %997 = vmatprep.mubr.bf16.mxu0 %v780
        %998 = vmatmul.mubr.bf16.gmra.mrb[0].mxu0 %v592
        %v999 = vpop.f32.mrb[0].mxu0
        %v1000 = vadd.f32 0.0, %v999
        %v1001 = vpop.f32.mrb[0].mxu0
        %v1002 = vpop.f32.mrb[0].mxu0
        %v1003 = vadd.f32 0.0, %v1002
        %v1004 = vpop.f32.mrb[0].mxu0
        %1005 = vmatprep.mubr.bf16.mxu0 %v783
        %1006 = vmatmul.mubr.bf16.gmra.mrb[0].mxu0 %v594
        %v1007 = vpop.f32.mrb[0].mxu0
        %v1008 = vadd.f32 0.0, %v1007
        %v1009 = vpop.f32.mrb[0].mxu0
        %v1010 = vpop.f32.mrb[0].mxu0
        %v1011 = vadd.f32 0.0, %v1010
        %v1012 = vpop.f32.mrb[0].mxu0
        %1013 = vmatprep.mubr.bf16.mxu0 %v786
        %1014 = vmatmul.mubr.bf16.gmra.mrb[0].mxu0 %v596
        %v1015 = vpop.f32.mrb[0].mxu0
        %v1016 = vadd.f32 0.0, %v1015
        %v1017 = vpop.f32.mrb[0].mxu0
        %v1018 = vpop.f32.mrb[0].mxu0
        %v1019 = vadd.f32 0.0, %v1018
        %v1020 = vpop.f32.mrb[0].mxu0
        %1021 = vmatprep.mubr.bf16.mxu0 %v789
        %1022 = vmatmul.mubr.bf16.gmra.mrb[0].mxu0 %v598
        %v1023 = vpop.f32.mrb[0].mxu0
        %v1024 = vadd.f32 0.0, %v1023
        %v1025 = vpop.f32.mrb[0].mxu0
        %v1026 = vpop.f32.mrb[0].mxu0
        %v1027 = vadd.f32 0.0, %v1026
        %v1028 = vpop.f32.mrb[0].mxu0
        %1029 = vmatprep.mubr.bf16.mxu0 %v792
        %1030 = vmatmul.mubr.bf16.gmra.mrb[0].mxu0 %v600
        %v1031 = vpop.f32.mrb[0].mxu0
        %v1032 = vadd.f32 0.0, %v1031
        %v1033 = vpop.f32.mrb[0].mxu0
        %v1034 = vpop.f32.mrb[0].mxu0
        %v1035 = vadd.f32 0.0, %v1034
        %v1036 = vpop.f32.mrb[0].mxu0
        %1037 = vmatprep.mubr.bf16.mxu0 %v795
        %1038 = vmatmul.mubr.bf16.gmra.mrb[0].mxu0 %v602
        %v1039 = vpop.f32.mrb[0].mxu0
        %v1040 = vadd.f32 0.0, %v1039
        %v1041 = vpop.f32.mrb[0].mxu0
        %v1042 = vpop.f32.mrb[0].mxu0
        %v1043 = vadd.f32 0.0, %v1042
        %v1044 = vpop.f32.mrb[0].mxu0
        %1045 = vmatprep.mubr.bf16.mxu0 %v798
        %1046 = vmatmul.mubr.bf16.gmra.mrb[0].mxu0 %v604
        %v1047 = vpop.f32.mrb[0].mxu0
        %v1048 = vadd.f32 0.0, %v1047
        %v1049 = vpop.f32.mrb[0].mxu0
        %v1050 = vpop.f32.mrb[0].mxu0
        %v1051 = vadd.f32 0.0, %v1050
        %v1052 = vpop.f32.mrb[0].mxu0
        %1053 = vmatprep.mubr.bf16.mxu0 %v801
        %1054 = vmatmul.mubr.bf16.gmra.mrb[0].mxu0 %v606
        %v1055 = vpop.f32.mrb[0].mxu0
        %v1056 = vadd.f32 0.0, %v1055
        %v1057 = vpop.f32.mrb[0].mxu0
        %v1058 = vpop.f32.mrb[0].mxu0
        %v1059 = vadd.f32 0.0, %v1058
        %v1060 = vpop.f32.mrb[0].mxu0
        %1061 = vmatprep.mubr.bf16.mxu0 %v804
        %1062 = vmatmul.mubr.bf16.gmra.mrb[0].mxu0 %v608
        %v1063 = vpop.f32.mrb[0].mxu0
        %v1064 = vadd.f32 0.0, %v1063
        %v1065 = vpop.f32.mrb[0].mxu0
        %v1066 = vpop.f32.mrb[0].mxu0
        %v1067 = vadd.f32 0.0, %v1066
        %v1068 = vpop.f32.mrb[0].mxu0
        %1069 = vmatprep.mubr.bf16.mxu0 %v807
        %1070 = vmatmul.mubr.bf16.gmra.mrb[0].mxu0 %v610
        %v1071 = vpop.f32.mrb[0].mxu0
        %v1072 = vadd.f32 0.0, %v1071
        %v1073 = vpop.f32.mrb[0].mxu0
        %v1074 = vpop.f32.mrb[0].mxu0
        %v1075 = vadd.f32 0.0, %v1074
        %v1076 = vpop.f32.mrb[0].mxu0
        %1077 = vmatprep.mubr.bf16.mxu0 %v810
        %1078 = vmatmul.mubr.bf16.gmra.mrb[0].mxu0 %v612
        %v1079 = vpop.f32.mrb[0].mxu0
        %v1080 = vadd.f32 0.0, %v1079
        %v1081 = vpop.f32.mrb[0].mxu0
        %v1082 = vpop.f32.mrb[0].mxu0
        %v1083 = vadd.f32 0.0, %v1082
        %v1084 = vpop.f32.mrb[0].mxu0
        %1085 = vmatprep.mubr.bf16.mxu0 %v813
        %1086 = vmatmul.mubr.bf16.gmra.mrb[0].mxu0 %v614
        %v1087 = vpop.f32.mrb[0].mxu0
        %v1088 = vadd.f32 0.0, %v1087
        %v1089 = vpop.f32.mrb[0].mxu0
        %v1090 = vpop.f32.mrb[0].mxu0
        %v1091 = vadd.f32 0.0, %v1090
        %v1092 = vpop.f32.mrb[0].mxu0
        %1093 = vmatprep.mubr.bf16.mxu0 %v816
        %1094 = vmatmul.mubr.bf16.gmra.mrb[0].mxu0 %v616
        %v1095 = vpop.f32.mrb[0].mxu0
        %v1096 = vadd.f32 0.0, %v1095
        %v1097 = vpop.f32.mrb[0].mxu0
        %v1098 = vpop.f32.mrb[0].mxu0
        %v1099 = vadd.f32 0.0, %v1098
        %v1100 = vpop.f32.mrb[0].mxu0
        %1101 = vmatprep.mubr.bf16.mxu0 %v819
        %1102 = vmatmul.mubr.bf16.gmra.mrb[0].mxu0 %v618
        %v1103 = vpop.f32.mrb[0].mxu0
        %v1104 = vadd.f32 0.0, %v1103
        %v1105 = vpop.f32.mrb[0].mxu0
        %v1106 = vpop.f32.mrb[0].mxu0
        %v1107 = vadd.f32 0.0, %v1106
        %v1108 = vpop.f32.mrb[0].mxu0
        %1109 = vdwg.mxu0
        %v1174 = vunpack.c.l.b16 %v183
        %v1175 = vunpack.c.h.b16 %v183
        %v1176 = vunpack.c.l.b16 %v184
        %v1177 = vunpack.c.h.b16 %v184
        %v1178 = vunpack.c.l.b16 %v185
        %v1179 = vunpack.c.h.b16 %v185
        %v1180 = vunpack.c.l.b16 %v186
        %v1181 = vunpack.c.h.b16 %v186
        %v1182 = vunpack.c.l.b16 %v187
        %v1183 = vunpack.c.h.b16 %v187
        %v1184 = vunpack.c.l.b16 %v188
        %v1185 = vunpack.c.h.b16 %v188
        %v1186 = vunpack.c.l.b16 %v189
        %v1187 = vunpack.c.h.b16 %v189
        %v1188 = vunpack.c.l.b16 %v190
        %v1189 = vunpack.c.h.b16 %v190
        %v1190 = vunpack.c.l.b16 %v191
        %v1191 = vunpack.c.h.b16 %v191
        %v1192 = vunpack.c.l.b16 %v192
        %v1193 = vunpack.c.h.b16 %v192
        %v1194 = vunpack.c.l.b16 %v193
        %v1195 = vunpack.c.h.b16 %v193
        %v1196 = vunpack.c.l.b16 %v194
        %v1197 = vunpack.c.h.b16 %v194
        %v1198 = vunpack.c.l.b16 %v195
        %v1199 = vunpack.c.h.b16 %v195
        %v1200 = vunpack.c.l.b16 %v196
        %v1201 = vunpack.c.h.b16 %v196
        %v1202 = vunpack.c.l.b16 %v197
        %v1203 = vunpack.c.h.b16 %v197
        %v1204 = vunpack.c.l.b16 %v198
        %v1205 = vunpack.c.h.b16 %v198
        %v1206 = vunpack.c.l.b16 %v199
        %v1207 = vunpack.c.h.b16 %v199
        %v1208 = vunpack.c.l.b16 %v200
        %v1209 = vunpack.c.h.b16 %v200
        %v1210 = vunpack.c.l.b16 %v201
        %v1211 = vunpack.c.h.b16 %v201
        %v1212 = vunpack.c.l.b16 %v202
        %v1213 = vunpack.c.h.b16 %v202
        %v1214 = vunpack.c.l.b16 %v203
        %v1215 = vunpack.c.h.b16 %v203
        %v1216 = vunpack.c.l.b16 %v204
        %v1217 = vunpack.c.h.b16 %v204
        %v1218 = vunpack.c.l.b16 %v205
        %v1219 = vunpack.c.h.b16 %v205
        %v1220 = vunpack.c.l.b16 %v206
        %v1221 = vunpack.c.h.b16 %v206
        %v1222 = vunpack.c.l.b16 %v207
        %v1223 = vunpack.c.h.b16 %v207
        %v1224 = vunpack.c.l.b16 %v208
        %v1225 = vunpack.c.h.b16 %v208
        %v1226 = vunpack.c.l.b16 %v209
        %v1227 = vunpack.c.h.b16 %v209
        %v1228 = vunpack.c.l.b16 %v210
        %v1229 = vunpack.c.h.b16 %v210
        %v1230 = vunpack.c.l.b16 %v211
        %v1231 = vunpack.c.h.b16 %v211
        %v1232 = vunpack.c.l.b16 %v212
        %v1233 = vunpack.c.h.b16 %v212
        %v1234 = vunpack.c.l.b16 %v213
        %v1235 = vunpack.c.h.b16 %v213
        %v1236 = vunpack.c.l.b16 %v214
        %v1237 = vunpack.c.h.b16 %v214
        %v1238 = vunpack.c.l.b16 %v215
        %v1239 = vunpack.c.h.b16 %v215
        %v1240 = vunpack.c.l.b16 %v216
        %v1241 = vunpack.c.h.b16 %v216
        %v1242 = vunpack.c.l.b16 %v217
        %v1243 = vunpack.c.h.b16 %v217
        %v1244 = vunpack.c.l.b16 %v218
        %v1245 = vunpack.c.h.b16 %v218
        %v1246 = vunpack.c.l.b16 %v219
        %v1247 = vunpack.c.h.b16 %v219
        %v1248 = vunpack.c.l.b16 %v220
        %v1249 = vunpack.c.h.b16 %v220
        %v1250 = vunpack.c.l.b16 %v221
        %v1251 = vunpack.c.h.b16 %v221
        %v1252 = vunpack.c.l.b16 %v222
        %v1253 = vunpack.c.h.b16 %v222
        %v1254 = vunpack.c.l.b16 %v223
        %v1255 = vunpack.c.h.b16 %v223
        %v1256 = vunpack.c.l.b16 %v224
        %v1257 = vunpack.c.h.b16 %v224
        %v1258 = vunpack.c.l.b16 %v225
        %v1259 = vunpack.c.h.b16 %v225
        %v1260 = vunpack.c.l.b16 %v226
        %v1261 = vunpack.c.h.b16 %v226
        %v1262 = vunpack.c.l.b16 %v227
        %v1263 = vunpack.c.h.b16 %v227
        %v1264 = vunpack.c.l.b16 %v228
        %v1265 = vunpack.c.h.b16 %v228
        %v1266 = vunpack.c.l.b16 %v229
        %v1267 = vunpack.c.h.b16 %v229
        %v1268 = vunpack.c.l.b16 %v230
        %v1269 = vunpack.c.h.b16 %v230
        %v1270 = vunpack.c.l.b16 %v231
        %v1271 = vunpack.c.h.b16 %v231
        %v1272 = vunpack.c.l.b16 %v232
        %v1273 = vunpack.c.h.b16 %v232
        %v1274 = vunpack.c.l.b16 %v233
        %v1275 = vunpack.c.h.b16 %v233
        %v1276 = vunpack.c.l.b16 %v234
        %v1277 = vunpack.c.h.b16 %v234
        %v1278 = vunpack.c.l.b16 %v235
        %v1279 = vunpack.c.h.b16 %v235
        %v1280 = vunpack.c.l.b16 %v236
        %v1281 = vunpack.c.h.b16 %v236
        %v1282 = vunpack.c.l.b16 %v237
        %v1283 = vunpack.c.h.b16 %v237
        %v1284 = vunpack.c.l.b16 %v238
        %v1285 = vunpack.c.h.b16 %v238
        %v1286 = vunpack.c.l.b16 %v239
        %v1287 = vunpack.c.h.b16 %v239
        %v1288 = vunpack.c.l.b16 %v240
        %v1289 = vunpack.c.h.b16 %v240
        %v1290 = vunpack.c.l.b16 %v241
        %v1291 = vunpack.c.h.b16 %v241
        %v1292 = vunpack.c.l.b16 %v242
        %v1293 = vunpack.c.h.b16 %v242
        %v1294 = vunpack.c.l.b16 %v243
        %v1295 = vunpack.c.h.b16 %v243
        %v1296 = vunpack.c.l.b16 %v244
        %v1297 = vunpack.c.h.b16 %v244
        %v1298 = vunpack.c.l.b16 %v245
        %v1299 = vunpack.c.h.b16 %v245
        %v1300 = vunpack.c.l.b16 %v246
        %v1301 = vunpack.c.h.b16 %v246
        %v1302 = vpack.c.b16 %v1176, %v1174
        %v1303 = vpack.c.b16 %v1177, %v1175
        %v1304 = vpack.c.b16 %v1180, %v1178
        %v1305 = vpack.c.b16 %v1181, %v1179
        %v1306 = vpack.c.b16 %v1184, %v1182
        %v1307 = vpack.c.b16 %v1185, %v1183
        %v1308 = vpack.c.b16 %v1188, %v1186
        %v1309 = vpack.c.b16 %v1189, %v1187
        %v1310 = vpack.c.b16 %v1192, %v1190
        %v1311 = vpack.c.b16 %v1193, %v1191
        %v1312 = vpack.c.b16 %v1196, %v1194
        %v1313 = vpack.c.b16 %v1197, %v1195
        %v1314 = vpack.c.b16 %v1200, %v1198
        %v1315 = vpack.c.b16 %v1201, %v1199
        %v1316 = vpack.c.b16 %v1204, %v1202
        %v1317 = vpack.c.b16 %v1205, %v1203
        %v1318 = vpack.c.b16 %v1208, %v1206
        %v1319 = vpack.c.b16 %v1209, %v1207
        %v1320 = vpack.c.b16 %v1212, %v1210
        %v1321 = vpack.c.b16 %v1213, %v1211
        %v1322 = vpack.c.b16 %v1216, %v1214
        %v1323 = vpack.c.b16 %v1217, %v1215
        %v1324 = vpack.c.b16 %v1220, %v1218
        %v1325 = vpack.c.b16 %v1221, %v1219
        %v1326 = vpack.c.b16 %v1224, %v1222
        %v1327 = vpack.c.b16 %v1225, %v1223
        %v1328 = vpack.c.b16 %v1228, %v1226
        %v1329 = vpack.c.b16 %v1229, %v1227
        %v1330 = vpack.c.b16 %v1232, %v1230
        %v1331 = vpack.c.b16 %v1233, %v1231
        %v1332 = vpack.c.b16 %v1236, %v1234
        %v1333 = vpack.c.b16 %v1237, %v1235
        %v1334 = vpack.c.b16 %v1240, %v1238
        %v1335 = vpack.c.b16 %v1241, %v1239
        %v1336 = vpack.c.b16 %v1244, %v1242
        %v1337 = vpack.c.b16 %v1245, %v1243
        %v1338 = vpack.c.b16 %v1248, %v1246
        %v1339 = vpack.c.b16 %v1249, %v1247
        %v1340 = vpack.c.b16 %v1252, %v1250
        %v1341 = vpack.c.b16 %v1253, %v1251
        %v1342 = vpack.c.b16 %v1256, %v1254
        %v1343 = vpack.c.b16 %v1257, %v1255
        %v1344 = vpack.c.b16 %v1260, %v1258
        %v1345 = vpack.c.b16 %v1261, %v1259
        %v1346 = vpack.c.b16 %v1264, %v1262
        %v1347 = vpack.c.b16 %v1265, %v1263
        %v1348 = vpack.c.b16 %v1268, %v1266
        %v1349 = vpack.c.b16 %v1269, %v1267
        %v1350 = vpack.c.b16 %v1272, %v1270
        %v1351 = vpack.c.b16 %v1273, %v1271
        %v1352 = vpack.c.b16 %v1276, %v1274
        %v1353 = vpack.c.b16 %v1277, %v1275
        %v1354 = vpack.c.b16 %v1280, %v1278
        %v1355 = vpack.c.b16 %v1281, %v1279
        %v1356 = vpack.c.b16 %v1284, %v1282
        %v1357 = vpack.c.b16 %v1285, %v1283
        %v1358 = vpack.c.b16 %v1288, %v1286
        %v1359 = vpack.c.b16 %v1289, %v1287
        %v1360 = vpack.c.b16 %v1292, %v1290
        %v1361 = vpack.c.b16 %v1293, %v1291
        %v1362 = vpack.c.b16 %v1296, %v1294
        %v1363 = vpack.c.b16 %v1297, %v1295
        %v1364 = vpack.c.b16 %v1300, %v1298
        %v1365 = vpack.c.b16 %v1301, %v1299
        %v1422 = vunpack.c.l.b16 %v247
        %v1423 = vunpack.c.l.b16 %v248
        %v1424 = vunpack.c.l.b16 %v249
        %v1425 = vunpack.c.l.b16 %v250
        %v1426 = vunpack.c.l.b16 %v251
        %v1427 = vunpack.c.l.b16 %v252
        %v1428 = vunpack.c.l.b16 %v253
        %v1429 = vunpack.c.l.b16 %v254
        %v1430 = vunpack.c.l.b16 %v255
        %v1431 = vunpack.c.l.b16 %v256
        %v1432 = vunpack.c.l.b16 %v257
        %v1433 = vunpack.c.l.b16 %v258
        %v1434 = vunpack.c.l.b16 %v259
        %v1435 = vunpack.c.l.b16 %v260
        %v1436 = vunpack.c.l.b16 %v261
        %v1437 = vunpack.c.l.b16 %v262
        %v1438 = vunpack.c.l.b16 %v263
        %v1439 = vunpack.c.l.b16 %v264
        %v1440 = vunpack.c.l.b16 %v265
        %v1441 = vunpack.c.l.b16 %v266
        %v1442 = vunpack.c.l.b16 %v267
        %v1443 = vunpack.c.l.b16 %v268
        %v1444 = vunpack.c.l.b16 %v269
        %v1445 = vunpack.c.l.b16 %v270
        %v1446 = vpack.c.b16 %v1423, %v1422
        %v1447 = vpack.c.b16 %v1425, %v1424
        %v1448 = vpack.c.b16 %v1427, %v1426
        %v1449 = vpack.c.b16 %v1429, %v1428
        %v1450 = vpack.c.b16 %v1431, %v1430
        %v1451 = vpack.c.b16 %v1433, %v1432
        %v1452 = vpack.c.b16 %v1435, %v1434
        %v1453 = vpack.c.b16 %v1437, %v1436
        %v1454 = vpack.c.b16 %v1439, %v1438
        %v1455 = vpack.c.b16 %v1441, %v1440
        %v1456 = vpack.c.b16 %v1443, %v1442
        %v1457 = vpack.c.b16 %v1445, %v1444
        %v1471 = vsel %vm724, %v1303, 0
        %v1474 = vsel %vm724, %v1305, 0
        %v1477 = vsel %vm724, %v1307, 0
        %v1480 = vsel %vm724, %v1309, 0
        %v1483 = vsel %vm724, %v1311, 0
        %v1486 = vsel %vm724, %v1313, 0
        %v1489 = vsel %vm724, %v1315, 0
        %v1492 = vsel %vm724, %v1317, 0
        %v1495 = vsel %vm724, %v1319, 0
        %v1498 = vsel %vm724, %v1321, 0
        %v1501 = vsel %vm724, %v1323, 0
        %v1504 = vsel %vm724, %v1325, 0
        %v1507 = vsel %vm724, %v1327, 0
        %v1510 = vsel %vm724, %v1329, 0
        %v1513 = vsel %vm724, %v1331, 0
        %v1516 = vsel %vm724, %v1333, 0
        %v1519 = vsel %vm724, %v1335, 0
        %v1522 = vsel %vm724, %v1337, 0
        %v1525 = vsel %vm724, %v1339, 0
        %v1528 = vsel %vm724, %v1341, 0
        %v1531 = vsel %vm724, %v1343, 0
        %v1534 = vsel %vm724, %v1345, 0
        %v1537 = vsel %vm724, %v1347, 0
        %v1540 = vsel %vm724, %v1349, 0
        %v1543 = vsel %vm724, %v1351, 0
        %v1546 = vsel %vm724, %v1353, 0
        %v1549 = vsel %vm724, %v1355, 0
        %v1552 = vsel %vm724, %v1357, 0
        %v1555 = vsel %vm724, %v1359, 0
        %v1558 = vsel %vm724, %v1361, 0
        %v1561 = vsel %vm724, %v1363, 0
        %v1564 = vsel %vm724, %v1365, 0
        %1566 = vmatprep.subr.bf16.mxu0 0
        %1567 = vmatpush1.bf16.msra.mxu0 %v1446
        %1568 = vmatprep.subr.bf16.mxu0 0
        %1569 = vmatpush1.bf16.msra.mxu0 %v1447
        %1570 = vmatprep.subr.bf16.mxu0 0
        %1571 = vmatpush1.bf16.msra.mxu0 %v1448
        %1572 = vmatprep.subr.bf16.mxu0 0
        %1573 = vmatpush1.bf16.msra.mxu0 %v1449
        %1574 = vmatprep.subr.bf16.mxu0 0
        %1575 = vmatpush1.bf16.msra.mxu0 %v1450
        %1576 = vmatprep.subr.bf16.mxu0 0
        %1577 = vmatpush1.bf16.msra.mxu0 %v1451
        %1578 = vmatprep.subr.bf16.mxu0 0
        %1579 = vmatpush1.bf16.msra.mxu0 %v1452
        %1580 = vmatprep.subr.bf16.mxu0 0
        %1581 = vmatpush1.bf16.msra.mxu0 %v1453
        %1582 = vmatprep.subr.bf16.mxu0 0
        %1583 = vmatpush1.bf16.msra.mxu0 %v1454
        %1584 = vmatprep.subr.bf16.mxu0 0
        %1585 = vmatpush1.bf16.msra.mxu0 %v1455
        %1586 = vmatprep.subr.bf16.mxu0 0
        %1587 = vmatpush1.bf16.msra.mxu0 %v1456
        %1588 = vmatprep.subr.bf16.mxu0 0
        %1589 = vmatpush1.bf16.msra.mxu0 %v1457
        %1590 = vmatprep.subr.bf16.mxu0 0
        %1591 = vmatpush1.bf16.msra.mxu0 0
        %1592 = vmatprep.subr.bf16.mxu0 0
        %1593 = vmatpush1.bf16.msra.mxu0 0
        %1594 = vmatprep.subr.bf16.mxu0 0
        %1595 = vmatpush1.bf16.msra.mxu0 0
        %1596 = vmatprep.subr.bf16.mxu0 0
        %1597 = vmatpush1.bf16.msra.mxu0 0
        %1598 = vmatprep.mubr.bf16.mxu0 %v1471
        %1599 = vmatmul.mubr.bf16.gmra.mrb[0].mxu0 %v1302
        %v1600 = vpop.f32.mrb[0].mxu0
        %v1601 = vadd.f32 %v856, %v1600
        %v1602 = vpop.f32.mrb[0].mxu0
        %v1603 = vpop.f32.mrb[0].mxu0
        %v1604 = vadd.f32 %v859, %v1603
        %v1605 = vpop.f32.mrb[0].mxu0
        %1606 = vmatprep.mubr.bf16.mxu0 %v1474
        %1607 = vmatmul.mubr.bf16.gmra.mrb[0].mxu0 %v1304
        %v1608 = vpop.f32.mrb[0].mxu0
        %v1609 = vadd.f32 %v864, %v1608
        %v1610 = vpop.f32.mrb[0].mxu0
        %v1611 = vpop.f32.mrb[0].mxu0
        %v1612 = vadd.f32 %v867, %v1611
        %v1613 = vpop.f32.mrb[0].mxu0
        %1614 = vmatprep.mubr.bf16.mxu0 %v1477
        %1615 = vmatmul.mubr.bf16.gmra.mrb[0].mxu0 %v1306
        %v1616 = vpop.f32.mrb[0].mxu0
        %v1617 = vadd.f32 %v872, %v1616
        %v1618 = vpop.f32.mrb[0].mxu0
        %v1619 = vpop.f32.mrb[0].mxu0
        %v1620 = vadd.f32 %v875, %v1619
        %v1621 = vpop.f32.mrb[0].mxu0
        %1622 = vmatprep.mubr.bf16.mxu0 %v1480
        %1623 = vmatmul.mubr.bf16.gmra.mrb[0].mxu0 %v1308
        %v1624 = vpop.f32.mrb[0].mxu0
        %v1625 = vadd.f32 %v880, %v1624
        %v1626 = vpop.f32.mrb[0].mxu0
        %v1627 = vpop.f32.mrb[0].mxu0
        %v1628 = vadd.f32 %v883, %v1627
        %v1629 = vpop.f32.mrb[0].mxu0
        %1630 = vmatprep.mubr.bf16.mxu0 %v1483
        %1631 = vmatmul.mubr.bf16.gmra.mrb[0].mxu0 %v1310
        %v1632 = vpop.f32.mrb[0].mxu0
        %v1633 = vadd.f32 %v888, %v1632
        %v1634 = vpop.f32.mrb[0].mxu0
        %v1635 = vpop.f32.mrb[0].mxu0
        %v1636 = vadd.f32 %v891, %v1635
        %v1637 = vpop.f32.mrb[0].mxu0
        %1638 = vmatprep.mubr.bf16.mxu0 %v1486
        %1639 = vmatmul.mubr.bf16.gmra.mrb[0].mxu0 %v1312
        %v1640 = vpop.f32.mrb[0].mxu0
        %v1641 = vadd.f32 %v896, %v1640
        %v1642 = vpop.f32.mrb[0].mxu0
        %v1643 = vpop.f32.mrb[0].mxu0
        %v1644 = vadd.f32 %v899, %v1643
        %v1645 = vpop.f32.mrb[0].mxu0
        %1646 = vmatprep.mubr.bf16.mxu0 %v1489
        %1647 = vmatmul.mubr.bf16.gmra.mrb[0].mxu0 %v1314
        %v1648 = vpop.f32.mrb[0].mxu0
        %v1649 = vadd.f32 %v904, %v1648
        %v1650 = vpop.f32.mrb[0].mxu0
        %v1651 = vpop.f32.mrb[0].mxu0
        %v1652 = vadd.f32 %v907, %v1651
        %v1653 = vpop.f32.mrb[0].mxu0
        %1654 = vmatprep.mubr.bf16.mxu0 %v1492
        %1655 = vmatmul.mubr.bf16.gmra.mrb[0].mxu0 %v1316
        %v1656 = vpop.f32.mrb[0].mxu0
        %v1657 = vadd.f32 %v912, %v1656
        %v1658 = vpop.f32.mrb[0].mxu0
        %v1659 = vpop.f32.mrb[0].mxu0
        %v1660 = vadd.f32 %v915, %v1659
        %v1661 = vpop.f32.mrb[0].mxu0
        %1662 = vmatprep.mubr.bf16.mxu0 %v1495
        %1663 = vmatmul.mubr.bf16.gmra.mrb[0].mxu0 %v1318
        %v1664 = vpop.f32.mrb[0].mxu0
        %v1665 = vadd.f32 %v920, %v1664
        %v1666 = vpop.f32.mrb[0].mxu0
        %v1667 = vpop.f32.mrb[0].mxu0
        %v1668 = vadd.f32 %v923, %v1667
        %v1669 = vpop.f32.mrb[0].mxu0
        %1670 = vmatprep.mubr.bf16.mxu0 %v1498
        %1671 = vmatmul.mubr.bf16.gmra.mrb[0].mxu0 %v1320
        %v1672 = vpop.f32.mrb[0].mxu0
        %v1673 = vadd.f32 %v928, %v1672
        %v1674 = vpop.f32.mrb[0].mxu0
        %v1675 = vpop.f32.mrb[0].mxu0
        %v1676 = vadd.f32 %v931, %v1675
        %v1677 = vpop.f32.mrb[0].mxu0
        %1678 = vmatprep.mubr.bf16.mxu0 %v1501
        %1679 = vmatmul.mubr.bf16.gmra.mrb[0].mxu0 %v1322
        %v1680 = vpop.f32.mrb[0].mxu0
        %v1681 = vadd.f32 %v936, %v1680
        %v1682 = vpop.f32.mrb[0].mxu0
        %v1683 = vpop.f32.mrb[0].mxu0
        %v1684 = vadd.f32 %v939, %v1683
        %v1685 = vpop.f32.mrb[0].mxu0
        %1686 = vmatprep.mubr.bf16.mxu0 %v1504
        %1687 = vmatmul.mubr.bf16.gmra.mrb[0].mxu0 %v1324
        %v1688 = vpop.f32.mrb[0].mxu0
        %v1689 = vadd.f32 %v944, %v1688
        %v1690 = vpop.f32.mrb[0].mxu0
        %v1691 = vpop.f32.mrb[0].mxu0
        %v1692 = vadd.f32 %v947, %v1691
        %v1693 = vpop.f32.mrb[0].mxu0
        %1694 = vmatprep.mubr.bf16.mxu0 %v1507
        %1695 = vmatmul.mubr.bf16.gmra.mrb[0].mxu0 %v1326
        %v1696 = vpop.f32.mrb[0].mxu0
        %v1697 = vadd.f32 %v952, %v1696
        %v1698 = vpop.f32.mrb[0].mxu0
        %v1699 = vpop.f32.mrb[0].mxu0
        %v1700 = vadd.f32 %v955, %v1699
        %v1701 = vpop.f32.mrb[0].mxu0
        %1702 = vmatprep.mubr.bf16.mxu0 %v1510
        %1703 = vmatmul.mubr.bf16.gmra.mrb[0].mxu0 %v1328
        %v1704 = vpop.f32.mrb[0].mxu0
        %v1705 = vadd.f32 %v960, %v1704
        %v1706 = vpop.f32.mrb[0].mxu0
        %v1707 = vpop.f32.mrb[0].mxu0
        %v1708 = vadd.f32 %v963, %v1707
        %v1709 = vpop.f32.mrb[0].mxu0
        %1710 = vmatprep.mubr.bf16.mxu0 %v1513
        %1711 = vmatmul.mubr.bf16.gmra.mrb[0].mxu0 %v1330
        %v1712 = vpop.f32.mrb[0].mxu0
        %v1713 = vadd.f32 %v968, %v1712
        %v1714 = vpop.f32.mrb[0].mxu0
        %v1715 = vpop.f32.mrb[0].mxu0
        %v1716 = vadd.f32 %v971, %v1715
        %v1717 = vpop.f32.mrb[0].mxu0
        %1718 = vmatprep.mubr.bf16.mxu0 %v1516
        %1719 = vmatmul.mubr.bf16.gmra.mrb[0].mxu0 %v1332
        %v1720 = vpop.f32.mrb[0].mxu0
        %v1721 = vadd.f32 %v976, %v1720
        %v1722 = vpop.f32.mrb[0].mxu0
        %v1723 = vpop.f32.mrb[0].mxu0
        %v1724 = vadd.f32 %v979, %v1723
        %v1725 = vpop.f32.mrb[0].mxu0
        %1726 = vmatprep.mubr.bf16.mxu0 %v1519
        %1727 = vmatmul.mubr.bf16.gmra.mrb[0].mxu0 %v1334
        %v1728 = vpop.f32.mrb[0].mxu0
        %v1729 = vadd.f32 %v984, %v1728
        %v1730 = vpop.f32.mrb[0].mxu0
        %v1731 = vpop.f32.mrb[0].mxu0
        %v1732 = vadd.f32 %v987, %v1731
        %v1733 = vpop.f32.mrb[0].mxu0
        %1734 = vmatprep.mubr.bf16.mxu0 %v1522
        %1735 = vmatmul.mubr.bf16.gmra.mrb[0].mxu0 %v1336
        %v1736 = vpop.f32.mrb[0].mxu0
        %v1737 = vadd.f32 %v992, %v1736
        %v1738 = vpop.f32.mrb[0].mxu0
        %v1739 = vpop.f32.mrb[0].mxu0
        %v1740 = vadd.f32 %v995, %v1739
        %v1741 = vpop.f32.mrb[0].mxu0
        %1742 = vmatprep.mubr.bf16.mxu0 %v1525
        %1743 = vmatmul.mubr.bf16.gmra.mrb[0].mxu0 %v1338
        %v1744 = vpop.f32.mrb[0].mxu0
        %v1745 = vadd.f32 %v1000, %v1744
        %v1746 = vpop.f32.mrb[0].mxu0
        %v1747 = vpop.f32.mrb[0].mxu0
        %v1748 = vadd.f32 %v1003, %v1747
        %v1749 = vpop.f32.mrb[0].mxu0
        %1750 = vmatprep.mubr.bf16.mxu0 %v1528
        %1751 = vmatmul.mubr.bf16.gmra.mrb[0].mxu0 %v1340
        %v1752 = vpop.f32.mrb[0].mxu0
        %v1753 = vadd.f32 %v1008, %v1752
        %v1754 = vpop.f32.mrb[0].mxu0
        %v1755 = vpop.f32.mrb[0].mxu0
        %v1756 = vadd.f32 %v1011, %v1755
        %v1757 = vpop.f32.mrb[0].mxu0
        %1758 = vmatprep.mubr.bf16.mxu0 %v1531
        %1759 = vmatmul.mubr.bf16.gmra.mrb[0].mxu0 %v1342
        %v1760 = vpop.f32.mrb[0].mxu0
        %v1761 = vadd.f32 %v1016, %v1760
        %v1762 = vpop.f32.mrb[0].mxu0
        %v1763 = vpop.f32.mrb[0].mxu0
        %v1764 = vadd.f32 %v1019, %v1763
        %v1765 = vpop.f32.mrb[0].mxu0
        %1766 = vmatprep.mubr.bf16.mxu0 %v1534
        %1767 = vmatmul.mubr.bf16.gmra.mrb[0].mxu0 %v1344
        %v1768 = vpop.f32.mrb[0].mxu0
        %v1769 = vadd.f32 %v1024, %v1768
        %v1770 = vpop.f32.mrb[0].mxu0
        %v1771 = vpop.f32.mrb[0].mxu0
        %v1772 = vadd.f32 %v1027, %v1771
        %v1773 = vpop.f32.mrb[0].mxu0
        %1774 = vmatprep.mubr.bf16.mxu0 %v1537
        %1775 = vmatmul.mubr.bf16.gmra.mrb[0].mxu0 %v1346
        %v1776 = vpop.f32.mrb[0].mxu0
        %v1777 = vadd.f32 %v1032, %v1776
        %v1778 = vpop.f32.mrb[0].mxu0
        %v1779 = vpop.f32.mrb[0].mxu0
        %v1780 = vadd.f32 %v1035, %v1779
        %v1781 = vpop.f32.mrb[0].mxu0
        %1782 = vmatprep.mubr.bf16.mxu0 %v1540
        %1783 = vmatmul.mubr.bf16.gmra.mrb[0].mxu0 %v1348
        %v1784 = vpop.f32.mrb[0].mxu0
        %v1785 = vadd.f32 %v1040, %v1784
        %v1786 = vpop.f32.mrb[0].mxu0
        %v1787 = vpop.f32.mrb[0].mxu0
        %v1788 = vadd.f32 %v1043, %v1787
        %v1789 = vpop.f32.mrb[0].mxu0
        %1790 = vmatprep.mubr.bf16.mxu0 %v1543
        %1791 = vmatmul.mubr.bf16.gmra.mrb[0].mxu0 %v1350
        %v1792 = vpop.f32.mrb[0].mxu0
        %v1793 = vadd.f32 %v1048, %v1792
        %v1794 = vpop.f32.mrb[0].mxu0
        %v1795 = vpop.f32.mrb[0].mxu0
        %v1796 = vadd.f32 %v1051, %v1795
        %v1797 = vpop.f32.mrb[0].mxu0
        %1798 = vmatprep.mubr.bf16.mxu0 %v1546
        %1799 = vmatmul.mubr.bf16.gmra.mrb[0].mxu0 %v1352
        %v1800 = vpop.f32.mrb[0].mxu0
        %v1801 = vadd.f32 %v1056, %v1800
        %v1802 = vpop.f32.mrb[0].mxu0
        %v1803 = vpop.f32.mrb[0].mxu0
        %v1804 = vadd.f32 %v1059, %v1803
        %v1805 = vpop.f32.mrb[0].mxu0
        %1806 = vmatprep.mubr.bf16.mxu0 %v1549
        %1807 = vmatmul.mubr.bf16.gmra.mrb[0].mxu0 %v1354
        %v1808 = vpop.f32.mrb[0].mxu0
        %v1809 = vadd.f32 %v1064, %v1808
        %v1810 = vpop.f32.mrb[0].mxu0
        %v1811 = vpop.f32.mrb[0].mxu0
        %v1812 = vadd.f32 %v1067, %v1811
        %v1813 = vpop.f32.mrb[0].mxu0
        %1814 = vmatprep.mubr.bf16.mxu0 %v1552
        %1815 = vmatmul.mubr.bf16.gmra.mrb[0].mxu0 %v1356
        %v1816 = vpop.f32.mrb[0].mxu0
        %v1817 = vadd.f32 %v1072, %v1816
        %v1818 = vpop.f32.mrb[0].mxu0
        %v1819 = vpop.f32.mrb[0].mxu0
        %v1820 = vadd.f32 %v1075, %v1819
        %v1821 = vpop.f32.mrb[0].mxu0
        %1822 = vmatprep.mubr.bf16.mxu0 %v1555
        %1823 = vmatmul.mubr.bf16.gmra.mrb[0].mxu0 %v1358
        %v1824 = vpop.f32.mrb[0].mxu0
        %v1825 = vadd.f32 %v1080, %v1824
        %v1826 = vpop.f32.mrb[0].mxu0
        %v1827 = vpop.f32.mrb[0].mxu0
        %v1828 = vadd.f32 %v1083, %v1827
        %v1829 = vpop.f32.mrb[0].mxu0
        %1830 = vmatprep.mubr.bf16.mxu0 %v1558
        %1831 = vmatmul.mubr.bf16.gmra.mrb[0].mxu0 %v1360
        %v1832 = vpop.f32.mrb[0].mxu0
        %v1833 = vadd.f32 %v1088, %v1832
        %v1834 = vpop.f32.mrb[0].mxu0
        %v1835 = vpop.f32.mrb[0].mxu0
        %v1836 = vadd.f32 %v1091, %v1835
        %v1837 = vpop.f32.mrb[0].mxu0
        %1838 = vmatprep.mubr.bf16.mxu0 %v1561
        %1839 = vmatmul.mubr.bf16.gmra.mrb[0].mxu0 %v1362
        %v1840 = vpop.f32.mrb[0].mxu0
        %v1841 = vadd.f32 %v1096, %v1840
        %v1842 = vpop.f32.mrb[0].mxu0
        %v1843 = vpop.f32.mrb[0].mxu0
        %v1844 = vadd.f32 %v1099, %v1843
        %v1845 = vpop.f32.mrb[0].mxu0
        %1846 = vmatprep.mubr.bf16.mxu0 %v1564
        %1847 = vmatmul.mubr.bf16.gmra.mrb[0].mxu0 %v1364
        %v1848 = vpop.f32.mrb[0].mxu0
        %v1849 = vadd.f32 %v1104, %v1848
        %v1850 = vpop.f32.mrb[0].mxu0
        %v1851 = vpop.f32.mrb[0].mxu0
        %v1852 = vadd.f32 %v1107, %v1851
        %v1853 = vpop.f32.mrb[0].mxu0
        %1854 = vdwg.mxu0
        %s1855 = sadd.s32 %s179, 2
        %s1856 = smul.u32 %s1855, 16
        %s1857 = smul.addr %s1856, 4
        %s1858 = scalar_lea.vmem %s165, %s1857
        %v1859 = vld [vmem:[%s1858] sm:$0xff]
        %v1860 = vld [vmem:[%s1858 + $0x8] sm:$0xff]
        %v1861 = vld [vmem:[%s1858 + $0x10] sm:$0xff]
        %v1862 = vld [vmem:[%s1858 + $0x18] sm:$0xff]
        %v1863 = vld [vmem:[%s1858 + $0x20] sm:$0xff]
        %v1864 = vld [vmem:[%s1858 + $0x28] sm:$0xff]
        %v1865 = vld [vmem:[%s1858 + $0x30] sm:$0xff]
        %v1866 = vld [vmem:[%s1858 + $0x38] sm:$0xff]
        %v1867 = vld [vmem:[%s1858 + $0x40] sm:$0xff]
        %v1868 = vld [vmem:[%s1858 + $0x48] sm:$0xff]
        %v1869 = vld [vmem:[%s1858 + $0x50] sm:$0xff]
        %v1870 = vld [vmem:[%s1858 + $0x58] sm:$0xff]
        %v1871 = vld [vmem:[%s1858 + $0x60] sm:$0xff]
        %v1872 = vld [vmem:[%s1858 + $0x68] sm:$0xff]
        %v1873 = vld [vmem:[%s1858 + $0x70] sm:$0xff]
        %v1874 = vld [vmem:[%s1858 + $0x78] sm:$0xff]
        %v1875 = vld [vmem:[%s1858 + $0x80] sm:$0xff]
        %v1876 = vld [vmem:[%s1858 + $0x88] sm:$0xff]
        %v1877 = vld [vmem:[%s1858 + $0x90] sm:$0xff]
        %v1878 = vld [vmem:[%s1858 + $0x98] sm:$0xff]
        %v1879 = vld [vmem:[%s1858 + $0xa0] sm:$0xff]
        %v1880 = vld [vmem:[%s1858 + $0xa8] sm:$0xff]
        %v1881 = vld [vmem:[%s1858 + $0xb0] sm:$0xff]
        %v1882 = vld [vmem:[%s1858 + $0xb8] sm:$0xff]
        %v1883 = vld [vmem:[%s1858 + $0xc0] sm:$0xff]
        %v1884 = vld [vmem:[%s1858 + $0xc8] sm:$0xff]
        %v1885 = vld [vmem:[%s1858 + $0xd0] sm:$0xff]
        %v1886 = vld [vmem:[%s1858 + $0xd8] sm:$0xff]
        %v1887 = vld [vmem:[%s1858 + $0xe0] sm:$0xff]
        %v1888 = vld [vmem:[%s1858 + $0xe8] sm:$0xff]
        %v1889 = vld [vmem:[%s1858 + $0xf0] sm:$0xff]
        %v1890 = vld [vmem:[%s1858 + $0xf8] sm:$0xff]
        %v1891 = vld [vmem:[%s1858 + $0x100] sm:$0xff]
        %v1892 = vld [vmem:[%s1858 + $0x108] sm:$0xff]
        %v1893 = vld [vmem:[%s1858 + $0x110] sm:$0xff]
        %v1894 = vld [vmem:[%s1858 + $0x118] sm:$0xff]
        %v1895 = vld [vmem:[%s1858 + $0x120] sm:$0xff]
        %v1896 = vld [vmem:[%s1858 + $0x128] sm:$0xff]
        %v1897 = vld [vmem:[%s1858 + $0x130] sm:$0xff]
        %v1898 = vld [vmem:[%s1858 + $0x138] sm:$0xff]
        %v1899 = vld [vmem:[%s1858 + $0x140] sm:$0xff]
        %v1900 = vld [vmem:[%s1858 + $0x148] sm:$0xff]
        %v1901 = vld [vmem:[%s1858 + $0x150] sm:$0xff]
        %v1902 = vld [vmem:[%s1858 + $0x158] sm:$0xff]
        %v1903 = vld [vmem:[%s1858 + $0x160] sm:$0xff]
        %v1904 = vld [vmem:[%s1858 + $0x168] sm:$0xff]
        %v1905 = vld [vmem:[%s1858 + $0x170] sm:$0xff]
        %v1906 = vld [vmem:[%s1858 + $0x178] sm:$0xff]
        %v1907 = vld [vmem:[%s1858 + $0x180] sm:$0xff]
        %v1908 = vld [vmem:[%s1858 + $0x188] sm:$0xff]
        %v1909 = vld [vmem:[%s1858 + $0x190] sm:$0xff]
        %v1910 = vld [vmem:[%s1858 + $0x198] sm:$0xff]
        %v1911 = vld [vmem:[%s1858 + $0x1a0] sm:$0xff]
        %v1912 = vld [vmem:[%s1858 + $0x1a8] sm:$0xff]
        %v1913 = vld [vmem:[%s1858 + $0x1b0] sm:$0xff]
        %v1914 = vld [vmem:[%s1858 + $0x1b8] sm:$0xff]
        %v1915 = vld [vmem:[%s1858 + $0x1c0] sm:$0xff]
        %v1916 = vld [vmem:[%s1858 + $0x1c8] sm:$0xff]
        %v1917 = vld [vmem:[%s1858 + $0x1d0] sm:$0xff]
        %v1918 = vld [vmem:[%s1858 + $0x1d8] sm:$0xff]
        %v1919 = vld [vmem:[%s1858 + $0x1e0] sm:$0xff]
        %v1920 = vld [vmem:[%s1858 + $0x1e8] sm:$0xff]
        %v1921 = vld [vmem:[%s1858 + $0x1f0] sm:$0xff]
        %v1922 = vld [vmem:[%s1858 + $0x1f8] sm:$0xff]
        %s1923 = scalar_lea.vmem %s1, 192
        %v1924 = vld [vmem:[%s1923] sm:$0xf]
        %v1925 = vld [vmem:[%s1923 + $0x4] sm:$0xf]
        %v1926 = vld [vmem:[%s1923 + $0x8] sm:$0xf]
        %v1927 = vld [vmem:[%s1923 + $0xc] sm:$0xf]
        %v1928 = vld [vmem:[%s1923 + $0x10] sm:$0xf]
        %v1929 = vld [vmem:[%s1923 + $0x14] sm:$0xf]
        %v1930 = vld [vmem:[%s1923 + $0x18] sm:$0xf]
        %v1931 = vld [vmem:[%s1923 + $0x1c] sm:$0xf]
        %v1932 = vld [vmem:[%s1923 + $0x20] sm:$0xf]
        %v1933 = vld [vmem:[%s1923 + $0x24] sm:$0xf]
        %v1934 = vld [vmem:[%s1923 + $0x28] sm:$0xf]
        %v1935 = vld [vmem:[%s1923 + $0x2c] sm:$0xf]
        %v1936 = vld [vmem:[%s1923 + $0x30] sm:$0xf]
        %v1937 = vld [vmem:[%s1923 + $0x34] sm:$0xf]
        %v1938 = vld [vmem:[%s1923 + $0x38] sm:$0xf]
        %v1939 = vld [vmem:[%s1923 + $0x3c] sm:$0xf]
        %v1940 = vld [vmem:[%s1923 + $0x40] sm:$0xf]
        %v1941 = vld [vmem:[%s1923 + $0x44] sm:$0xf]
        %v1942 = vld [vmem:[%s1923 + $0x48] sm:$0xf]
        %v1943 = vld [vmem:[%s1923 + $0x4c] sm:$0xf]
        %v1944 = vld [vmem:[%s1923 + $0x50] sm:$0xf]
        %v1945 = vld [vmem:[%s1923 + $0x54] sm:$0xf]
        %v1946 = vld [vmem:[%s1923 + $0x58] sm:$0xf]
        %v1947 = vld [vmem:[%s1923 + $0x5c] sm:$0xf]
        %v2012 = vunpack.c.l.b16 %v1859
        %v2013 = vunpack.c.h.b16 %v1859
        %v2014 = vunpack.c.l.b16 %v1860
        %v2015 = vunpack.c.h.b16 %v1860
        %v2016 = vunpack.c.l.b16 %v1861
        %v2017 = vunpack.c.h.b16 %v1861
        %v2018 = vunpack.c.l.b16 %v1862
        %v2019 = vunpack.c.h.b16 %v1862
        %v2020 = vunpack.c.l.b16 %v1863
        %v2021 = vunpack.c.h.b16 %v1863
        %v2022 = vunpack.c.l.b16 %v1864
        %v2023 = vunpack.c.h.b16 %v1864
        %v2024 = vunpack.c.l.b16 %v1865
        %v2025 = vunpack.c.h.b16 %v1865
        %v2026 = vunpack.c.l.b16 %v1866
        %v2027 = vunpack.c.h.b16 %v1866
        %v2028 = vunpack.c.l.b16 %v1867
        %v2029 = vunpack.c.h.b16 %v1867
        %v2030 = vunpack.c.l.b16 %v1868
        %v2031 = vunpack.c.h.b16 %v1868
        %v2032 = vunpack.c.l.b16 %v1869
        %v2033 = vunpack.c.h.b16 %v1869
        %v2034 = vunpack.c.l.b16 %v1870
        %v2035 = vunpack.c.h.b16 %v1870
        %v2036 = vunpack.c.l.b16 %v1871
        %v2037 = vunpack.c.h.b16 %v1871
        %v2038 = vunpack.c.l.b16 %v1872
        %v2039 = vunpack.c.h.b16 %v1872
        %v2040 = vunpack.c.l.b16 %v1873
        %v2041 = vunpack.c.h.b16 %v1873
        %v2042 = vunpack.c.l.b16 %v1874
        %v2043 = vunpack.c.h.b16 %v1874
        %v2044 = vunpack.c.l.b16 %v1875
        %v2045 = vunpack.c.h.b16 %v1875
        %v2046 = vunpack.c.l.b16 %v1876
        %v2047 = vunpack.c.h.b16 %v1876
        %v2048 = vunpack.c.l.b16 %v1877
        %v2049 = vunpack.c.h.b16 %v1877
        %v2050 = vunpack.c.l.b16 %v1878
        %v2051 = vunpack.c.h.b16 %v1878
        %v2052 = vunpack.c.l.b16 %v1879
        %v2053 = vunpack.c.h.b16 %v1879
        %v2054 = vunpack.c.l.b16 %v1880
        %v2055 = vunpack.c.h.b16 %v1880
        %v2056 = vunpack.c.l.b16 %v1881
        %v2057 = vunpack.c.h.b16 %v1881
        %v2058 = vunpack.c.l.b16 %v1882
        %v2059 = vunpack.c.h.b16 %v1882
        %v2060 = vunpack.c.l.b16 %v1883
        %v2061 = vunpack.c.h.b16 %v1883
        %v2062 = vunpack.c.l.b16 %v1884
        %v2063 = vunpack.c.h.b16 %v1884
        %v2064 = vunpack.c.l.b16 %v1885
        %v2065 = vunpack.c.h.b16 %v1885
        %v2066 = vunpack.c.l.b16 %v1886
        %v2067 = vunpack.c.h.b16 %v1886
        %v2068 = vunpack.c.l.b16 %v1887
        %v2069 = vunpack.c.h.b16 %v1887
        %v2070 = vunpack.c.l.b16 %v1888
        %v2071 = vunpack.c.h.b16 %v1888
        %v2072 = vunpack.c.l.b16 %v1889
        %v2073 = vunpack.c.h.b16 %v1889
        %v2074 = vunpack.c.l.b16 %v1890
        %v2075 = vunpack.c.h.b16 %v1890
        %v2076 = vunpack.c.l.b16 %v1891
        %v2077 = vunpack.c.h.b16 %v1891
        %v2078 = vunpack.c.l.b16 %v1892
        %v2079 = vunpack.c.h.b16 %v1892
        %v2080 = vunpack.c.l.b16 %v1893
        %v2081 = vunpack.c.h.b16 %v1893
        %v2082 = vunpack.c.l.b16 %v1894
        %v2083 = vunpack.c.h.b16 %v1894
        %v2084 = vunpack.c.l.b16 %v1895
        %v2085 = vunpack.c.h.b16 %v1895
        %v2086 = vunpack.c.l.b16 %v1896
        %v2087 = vunpack.c.h.b16 %v1896
        %v2088 = vunpack.c.l.b16 %v1897
        %v2089 = vunpack.c.h.b16 %v1897
        %v2090 = vunpack.c.l.b16 %v1898
        %v2091 = vunpack.c.h.b16 %v1898
        %v2092 = vunpack.c.l.b16 %v1899
        %v2093 = vunpack.c.h.b16 %v1899
        %v2094 = vunpack.c.l.b16 %v1900
        %v2095 = vunpack.c.h.b16 %v1900
        %v2096 = vunpack.c.l.b16 %v1901
        %v2097 = vunpack.c.h.b16 %v1901
        %v2098 = vunpack.c.l.b16 %v1902
        %v2099 = vunpack.c.h.b16 %v1902
        %v2100 = vunpack.c.l.b16 %v1903
        %v2101 = vunpack.c.h.b16 %v1903
        %v2102 = vunpack.c.l.b16 %v1904
        %v2103 = vunpack.c.h.b16 %v1904
        %v2104 = vunpack.c.l.b16 %v1905
        %v2105 = vunpack.c.h.b16 %v1905
        %v2106 = vunpack.c.l.b16 %v1906
        %v2107 = vunpack.c.h.b16 %v1906
        %v2108 = vunpack.c.l.b16 %v1907
        %v2109 = vunpack.c.h.b16 %v1907
        %v2110 = vunpack.c.l.b16 %v1908
        %v2111 = vunpack.c.h.b16 %v1908
        %v2112 = vunpack.c.l.b16 %v1909
        %v2113 = vunpack.c.h.b16 %v1909
        %v2114 = vunpack.c.l.b16 %v1910
        %v2115 = vunpack.c.h.b16 %v1910
        %v2116 = vunpack.c.l.b16 %v1911
        %v2117 = vunpack.c.h.b16 %v1911
        %v2118 = vunpack.c.l.b16 %v1912
        %v2119 = vunpack.c.h.b16 %v1912
        %v2120 = vunpack.c.l.b16 %v1913
        %v2121 = vunpack.c.h.b16 %v1913
        %v2122 = vunpack.c.l.b16 %v1914
        %v2123 = vunpack.c.h.b16 %v1914
        %v2124 = vunpack.c.l.b16 %v1915
        %v2125 = vunpack.c.h.b16 %v1915
        %v2126 = vunpack.c.l.b16 %v1916
        %v2127 = vunpack.c.h.b16 %v1916
        %v2128 = vunpack.c.l.b16 %v1917
        %v2129 = vunpack.c.h.b16 %v1917
        %v2130 = vunpack.c.l.b16 %v1918
        %v2131 = vunpack.c.h.b16 %v1918
        %v2132 = vunpack.c.l.b16 %v1919
        %v2133 = vunpack.c.h.b16 %v1919
        %v2134 = vunpack.c.l.b16 %v1920
        %v2135 = vunpack.c.h.b16 %v1920
        %v2136 = vunpack.c.l.b16 %v1921
        %v2137 = vunpack.c.h.b16 %v1921
        %v2138 = vunpack.c.l.b16 %v1922
        %v2139 = vunpack.c.h.b16 %v1922
        %v2140 = vpack.c.b16 %v2014, %v2012
        %v2141 = vpack.c.b16 %v2015, %v2013
        %v2142 = vpack.c.b16 %v2018, %v2016
        %v2143 = vpack.c.b16 %v2019, %v2017
        %v2144 = vpack.c.b16 %v2022, %v2020
        %v2145 = vpack.c.b16 %v2023, %v2021
        %v2146 = vpack.c.b16 %v2026, %v2024
        %v2147 = vpack.c.b16 %v2027, %v2025
        %v2148 = vpack.c.b16 %v2030, %v2028
        %v2149 = vpack.c.b16 %v2031, %v2029
        %v2150 = vpack.c.b16 %v2034, %v2032
        %v2151 = vpack.c.b16 %v2035, %v2033
        %v2152 = vpack.c.b16 %v2038, %v2036
        %v2153 = vpack.c.b16 %v2039, %v2037
        %v2154 = vpack.c.b16 %v2042, %v2040
        %v2155 = vpack.c.b16 %v2043, %v2041
        %v2156 = vpack.c.b16 %v2046, %v2044
        %v2157 = vpack.c.b16 %v2047, %v2045
        %v2158 = vpack.c.b16 %v2050, %v2048
        %v2159 = vpack.c.b16 %v2051, %v2049
        %v2160 = vpack.c.b16 %v2054, %v2052
        %v2161 = vpack.c.b16 %v2055, %v2053
        %v2162 = vpack.c.b16 %v2058, %v2056
        %v2163 = vpack.c.b16 %v2059, %v2057
        %v2164 = vpack.c.b16 %v2062, %v2060
        %v2165 = vpack.c.b16 %v2063, %v2061
        %v2166 = vpack.c.b16 %v2066, %v2064
        %v2167 = vpack.c.b16 %v2067, %v2065
        %v2168 = vpack.c.b16 %v2070, %v2068
        %v2169 = vpack.c.b16 %v2071, %v2069
        %v2170 = vpack.c.b16 %v2074, %v2072
        %v2171 = vpack.c.b16 %v2075, %v2073
        %v2172 = vpack.c.b16 %v2078, %v2076
        %v2173 = vpack.c.b16 %v2079, %v2077
        %v2174 = vpack.c.b16 %v2082, %v2080
        %v2175 = vpack.c.b16 %v2083, %v2081
        %v2176 = vpack.c.b16 %v2086, %v2084
        %v2177 = vpack.c.b16 %v2087, %v2085
        %v2178 = vpack.c.b16 %v2090, %v2088
        %v2179 = vpack.c.b16 %v2091, %v2089
        %v2180 = vpack.c.b16 %v2094, %v2092
        %v2181 = vpack.c.b16 %v2095, %v2093
        %v2182 = vpack.c.b16 %v2098, %v2096
        %v2183 = vpack.c.b16 %v2099, %v2097
        %v2184 = vpack.c.b16 %v2102, %v2100
        %v2185 = vpack.c.b16 %v2103, %v2101
        %v2186 = vpack.c.b16 %v2106, %v2104
        %v2187 = vpack.c.b16 %v2107, %v2105
        %v2188 = vpack.c.b16 %v2110, %v2108
        %v2189 = vpack.c.b16 %v2111, %v2109
        %v2190 = vpack.c.b16 %v2114, %v2112
        %v2191 = vpack.c.b16 %v2115, %v2113
        %v2192 = vpack.c.b16 %v2118, %v2116
        %v2193 = vpack.c.b16 %v2119, %v2117
        %v2194 = vpack.c.b16 %v2122, %v2120
        %v2195 = vpack.c.b16 %v2123, %v2121
        %v2196 = vpack.c.b16 %v2126, %v2124
        %v2197 = vpack.c.b16 %v2127, %v2125
        %v2198 = vpack.c.b16 %v2130, %v2128
        %v2199 = vpack.c.b16 %v2131, %v2129
        %v2200 = vpack.c.b16 %v2134, %v2132
        %v2201 = vpack.c.b16 %v2135, %v2133
        %v2202 = vpack.c.b16 %v2138, %v2136
        %v2203 = vpack.c.b16 %v2139, %v2137
        %v2260 = vunpack.c.l.b16 %v1924
        %v2261 = vunpack.c.l.b16 %v1925
        %v2262 = vunpack.c.l.b16 %v1926
        %v2263 = vunpack.c.l.b16 %v1927
        %v2264 = vunpack.c.l.b16 %v1928
        %v2265 = vunpack.c.l.b16 %v1929
        %v2266 = vunpack.c.l.b16 %v1930
        %v2267 = vunpack.c.l.b16 %v1931
        %v2268 = vunpack.c.l.b16 %v1932
        %v2269 = vunpack.c.l.b16 %v1933
        %v2270 = vunpack.c.l.b16 %v1934
        %v2271 = vunpack.c.l.b16 %v1935
        %v2272 = vunpack.c.l.b16 %v1936
        %v2273 = vunpack.c.l.b16 %v1937
        %v2274 = vunpack.c.l.b16 %v1938
        %v2275 = vunpack.c.l.b16 %v1939
        %v2276 = vunpack.c.l.b16 %v1940
        %v2277 = vunpack.c.l.b16 %v1941
        %v2278 = vunpack.c.l.b16 %v1942
        %v2279 = vunpack.c.l.b16 %v1943
        %v2280 = vunpack.c.l.b16 %v1944
        %v2281 = vunpack.c.l.b16 %v1945
        %v2282 = vunpack.c.l.b16 %v1946
        %v2283 = vunpack.c.l.b16 %v1947
        %v2284 = vpack.c.b16 %v2261, %v2260
        %v2285 = vpack.c.b16 %v2263, %v2262
        %v2286 = vpack.c.b16 %v2265, %v2264
        %v2287 = vpack.c.b16 %v2267, %v2266
        %v2288 = vpack.c.b16 %v2269, %v2268
        %v2289 = vpack.c.b16 %v2271, %v2270
        %v2290 = vpack.c.b16 %v2273, %v2272
        %v2291 = vpack.c.b16 %v2275, %v2274
        %v2292 = vpack.c.b16 %v2277, %v2276
        %v2293 = vpack.c.b16 %v2279, %v2278
        %v2294 = vpack.c.b16 %v2281, %v2280
        %v2295 = vpack.c.b16 %v2283, %v2282
        %v2309 = vsel %vm724, %v2141, 0
        %v2312 = vsel %vm724, %v2143, 0
        %v2315 = vsel %vm724, %v2145, 0
        %v2318 = vsel %vm724, %v2147, 0
        %v2321 = vsel %vm724, %v2149, 0
        %v2324 = vsel %vm724, %v2151, 0
        %v2327 = vsel %vm724, %v2153, 0
        %v2330 = vsel %vm724, %v2155, 0
        %v2333 = vsel %vm724, %v2157, 0
        %v2336 = vsel %vm724, %v2159, 0
        %v2339 = vsel %vm724, %v2161, 0
        %v2342 = vsel %vm724, %v2163, 0
        %v2345 = vsel %vm724, %v2165, 0
        %v2348 = vsel %vm724, %v2167, 0
        %v2351 = vsel %vm724, %v2169, 0
        %v2354 = vsel %vm724, %v2171, 0
        %v2357 = vsel %vm724, %v2173, 0
        %v2360 = vsel %vm724, %v2175, 0
        %v2363 = vsel %vm724, %v2177, 0
        %v2366 = vsel %vm724, %v2179, 0
        %v2369 = vsel %vm724, %v2181, 0
        %v2372 = vsel %vm724, %v2183, 0
        %v2375 = vsel %vm724, %v2185, 0
        %v2378 = vsel %vm724, %v2187, 0
        %v2381 = vsel %vm724, %v2189, 0
        %v2384 = vsel %vm724, %v2191, 0
        %v2387 = vsel %vm724, %v2193, 0
        %v2390 = vsel %vm724, %v2195, 0
        %v2393 = vsel %vm724, %v2197, 0
        %v2396 = vsel %vm724, %v2199, 0
        %v2399 = vsel %vm724, %v2201, 0
        %v2402 = vsel %vm724, %v2203, 0
        %2404 = vmatprep.subr.bf16.mxu0 0
        %2405 = vmatpush1.bf16.msra.mxu0 %v2284
        %2406 = vmatprep.subr.bf16.mxu0 0
        %2407 = vmatpush1.bf16.msra.mxu0 %v2285
        %2408 = vmatprep.subr.bf16.mxu0 0
        %2409 = vmatpush1.bf16.msra.mxu0 %v2286
        %2410 = vmatprep.subr.bf16.mxu0 0
        %2411 = vmatpush1.bf16.msra.mxu0 %v2287
        %2412 = vmatprep.subr.bf16.mxu0 0
        %2413 = vmatpush1.bf16.msra.mxu0 %v2288
        %2414 = vmatprep.subr.bf16.mxu0 0
        %2415 = vmatpush1.bf16.msra.mxu0 %v2289
        %2416 = vmatprep.subr.bf16.mxu0 0
        %2417 = vmatpush1.bf16.msra.mxu0 %v2290
        %2418 = vmatprep.subr.bf16.mxu0 0
        %2419 = vmatpush1.bf16.msra.mxu0 %v2291
        %2420 = vmatprep.subr.bf16.mxu0 0
        %2421 = vmatpush1.bf16.msra.mxu0 %v2292
        %2422 = vmatprep.subr.bf16.mxu0 0
        %2423 = vmatpush1.bf16.msra.mxu0 %v2293
        %2424 = vmatprep.subr.bf16.mxu0 0
        %2425 = vmatpush1.bf16.msra.mxu0 %v2294
        %2426 = vmatprep.subr.bf16.mxu0 0
        %2427 = vmatpush1.bf16.msra.mxu0 %v2295
        %2428 = vmatprep.subr.bf16.mxu0 0
        %2429 = vmatpush1.bf16.msra.mxu0 0
        %2430 = vmatprep.subr.bf16.mxu0 0
        %2431 = vmatpush1.bf16.msra.mxu0 0
        %2432 = vmatprep.subr.bf16.mxu0 0
        %2433 = vmatpush1.bf16.msra.mxu0 0
        %2434 = vmatprep.subr.bf16.mxu0 0
        %2435 = vmatpush1.bf16.msra.mxu0 0
        %2436 = vmatprep.mubr.bf16.mxu0 %v2309
        %2437 = vmatmul.mubr.bf16.gmra.mrb[0].mxu0 %v2140
        %v2438 = vpop.f32.mrb[0].mxu0
        %v2439 = vadd.f32 0.0, %v2438
        %v2440 = vpop.f32.mrb[0].mxu0
        %v2441 = vpop.f32.mrb[0].mxu0
        %v2442 = vadd.f32 0.0, %v2441
        %v2443 = vpop.f32.mrb[0].mxu0
        %2444 = vmatprep.mubr.bf16.mxu0 %v2312
        %2445 = vmatmul.mubr.bf16.gmra.mrb[0].mxu0 %v2142
        %v2446 = vpop.f32.mrb[0].mxu0
        %v2447 = vadd.f32 0.0, %v2446
        %v2448 = vpop.f32.mrb[0].mxu0
        %v2449 = vpop.f32.mrb[0].mxu0
        %v2450 = vadd.f32 0.0, %v2449
        %v2451 = vpop.f32.mrb[0].mxu0
        %2452 = vmatprep.mubr.bf16.mxu0 %v2315
        %2453 = vmatmul.mubr.bf16.gmra.mrb[0].mxu0 %v2144
        %v2454 = vpop.f32.mrb[0].mxu0
        %v2455 = vadd.f32 0.0, %v2454
        %v2456 = vpop.f32.mrb[0].mxu0
        %v2457 = vpop.f32.mrb[0].mxu0
        %v2458 = vadd.f32 0.0, %v2457
        %v2459 = vpop.f32.mrb[0].mxu0
        %2460 = vmatprep.mubr.bf16.mxu0 %v2318
        %2461 = vmatmul.mubr.bf16.gmra.mrb[0].mxu0 %v2146
        %v2462 = vpop.f32.mrb[0].mxu0
        %v2463 = vadd.f32 0.0, %v2462
        %v2464 = vpop.f32.mrb[0].mxu0
        %v2465 = vpop.f32.mrb[0].mxu0
        %v2466 = vadd.f32 0.0, %v2465
        %v2467 = vpop.f32.mrb[0].mxu0
        %2468 = vmatprep.mubr.bf16.mxu0 %v2321
        %2469 = vmatmul.mubr.bf16.gmra.mrb[0].mxu0 %v2148
        %v2470 = vpop.f32.mrb[0].mxu0
        %v2471 = vadd.f32 0.0, %v2470
        %v2472 = vpop.f32.mrb[0].mxu0
        %v2473 = vpop.f32.mrb[0].mxu0
        %v2474 = vadd.f32 0.0, %v2473
        %v2475 = vpop.f32.mrb[0].mxu0
        %2476 = vmatprep.mubr.bf16.mxu0 %v2324
        %2477 = vmatmul.mubr.bf16.gmra.mrb[0].mxu0 %v2150
        %v2478 = vpop.f32.mrb[0].mxu0
        %v2479 = vadd.f32 0.0, %v2478
        %v2480 = vpop.f32.mrb[0].mxu0
        %v2481 = vpop.f32.mrb[0].mxu0
        %v2482 = vadd.f32 0.0, %v2481
        %v2483 = vpop.f32.mrb[0].mxu0
        %2484 = vmatprep.mubr.bf16.mxu0 %v2327
        %2485 = vmatmul.mubr.bf16.gmra.mrb[0].mxu0 %v2152
        %v2486 = vpop.f32.mrb[0].mxu0
        %v2487 = vadd.f32 0.0, %v2486
        %v2488 = vpop.f32.mrb[0].mxu0
        %v2489 = vpop.f32.mrb[0].mxu0
        %v2490 = vadd.f32 0.0, %v2489
        %v2491 = vpop.f32.mrb[0].mxu0
        %2492 = vmatprep.mubr.bf16.mxu0 %v2330
        %2493 = vmatmul.mubr.bf16.gmra.mrb[0].mxu0 %v2154
        %v2494 = vpop.f32.mrb[0].mxu0
        %v2495 = vadd.f32 0.0, %v2494
        %v2496 = vpop.f32.mrb[0].mxu0
        %v2497 = vpop.f32.mrb[0].mxu0
        %v2498 = vadd.f32 0.0, %v2497
        %v2499 = vpop.f32.mrb[0].mxu0
        %2500 = vmatprep.mubr.bf16.mxu0 %v2333
        %2501 = vmatmul.mubr.bf16.gmra.mrb[0].mxu0 %v2156
        %v2502 = vpop.f32.mrb[0].mxu0
        %v2503 = vadd.f32 0.0, %v2502
        %v2504 = vpop.f32.mrb[0].mxu0
        %v2505 = vpop.f32.mrb[0].mxu0
        %v2506 = vadd.f32 0.0, %v2505
        %v2507 = vpop.f32.mrb[0].mxu0
        %2508 = vmatprep.mubr.bf16.mxu0 %v2336
        %2509 = vmatmul.mubr.bf16.gmra.mrb[0].mxu0 %v2158
        %v2510 = vpop.f32.mrb[0].mxu0
        %v2511 = vadd.f32 0.0, %v2510
        %v2512 = vpop.f32.mrb[0].mxu0
        %v2513 = vpop.f32.mrb[0].mxu0
        %v2514 = vadd.f32 0.0, %v2513
        %v2515 = vpop.f32.mrb[0].mxu0
        %2516 = vmatprep.mubr.bf16.mxu0 %v2339
        %2517 = vmatmul.mubr.bf16.gmra.mrb[0].mxu0 %v2160
        %v2518 = vpop.f32.mrb[0].mxu0
        %v2519 = vadd.f32 0.0, %v2518
        %v2520 = vpop.f32.mrb[0].mxu0
        %v2521 = vpop.f32.mrb[0].mxu0
        %v2522 = vadd.f32 0.0, %v2521
        %v2523 = vpop.f32.mrb[0].mxu0
        %2524 = vmatprep.mubr.bf16.mxu0 %v2342
        %2525 = vmatmul.mubr.bf16.gmra.mrb[0].mxu0 %v2162
        %v2526 = vpop.f32.mrb[0].mxu0
        %v2527 = vadd.f32 0.0, %v2526
        %v2528 = vpop.f32.mrb[0].mxu0
        %v2529 = vpop.f32.mrb[0].mxu0
        %v2530 = vadd.f32 0.0, %v2529
        %v2531 = vpop.f32.mrb[0].mxu0
        %2532 = vmatprep.mubr.bf16.mxu0 %v2345
        %2533 = vmatmul.mubr.bf16.gmra.mrb[0].mxu0 %v2164
        %v2534 = vpop.f32.mrb[0].mxu0
        %v2535 = vadd.f32 0.0, %v2534
        %v2536 = vpop.f32.mrb[0].mxu0
        %v2537 = vpop.f32.mrb[0].mxu0
        %v2538 = vadd.f32 0.0, %v2537
        %v2539 = vpop.f32.mrb[0].mxu0
        %2540 = vmatprep.mubr.bf16.mxu0 %v2348
        %2541 = vmatmul.mubr.bf16.gmra.mrb[0].mxu0 %v2166
        %v2542 = vpop.f32.mrb[0].mxu0
        %v2543 = vadd.f32 0.0, %v2542
        %v2544 = vpop.f32.mrb[0].mxu0
        %v2545 = vpop.f32.mrb[0].mxu0
        %v2546 = vadd.f32 0.0, %v2545
        %v2547 = vpop.f32.mrb[0].mxu0
        %2548 = vmatprep.mubr.bf16.mxu0 %v2351
        %2549 = vmatmul.mubr.bf16.gmra.mrb[0].mxu0 %v2168
        %v2550 = vpop.f32.mrb[0].mxu0
        %v2551 = vadd.f32 0.0, %v2550
        %v2552 = vpop.f32.mrb[0].mxu0
        %v2553 = vpop.f32.mrb[0].mxu0
        %v2554 = vadd.f32 0.0, %v2553
        %v2555 = vpop.f32.mrb[0].mxu0
        %2556 = vmatprep.mubr.bf16.mxu0 %v2354
        %2557 = vmatmul.mubr.bf16.gmra.mrb[0].mxu0 %v2170
        %v2558 = vpop.f32.mrb[0].mxu0
        %v2559 = vadd.f32 0.0, %v2558
        %v2560 = vpop.f32.mrb[0].mxu0
        %v2561 = vpop.f32.mrb[0].mxu0
        %v2562 = vadd.f32 0.0, %v2561
        %v2563 = vpop.f32.mrb[0].mxu0
        %2564 = vmatprep.mubr.bf16.mxu0 %v2357
        %2565 = vmatmul.mubr.bf16.gmra.mrb[0].mxu0 %v2172
        %v2566 = vpop.f32.mrb[0].mxu0
        %v2567 = vadd.f32 0.0, %v2566
        %v2568 = vpop.f32.mrb[0].mxu0
        %v2569 = vpop.f32.mrb[0].mxu0
        %v2570 = vadd.f32 0.0, %v2569
        %v2571 = vpop.f32.mrb[0].mxu0
        %2572 = vmatprep.mubr.bf16.mxu0 %v2360
        %2573 = vmatmul.mubr.bf16.gmra.mrb[0].mxu0 %v2174
        %v2574 = vpop.f32.mrb[0].mxu0
        %v2575 = vadd.f32 0.0, %v2574
        %v2576 = vpop.f32.mrb[0].mxu0
        %v2577 = vpop.f32.mrb[0].mxu0
        %v2578 = vadd.f32 0.0, %v2577
        %v2579 = vpop.f32.mrb[0].mxu0
        %2580 = vmatprep.mubr.bf16.mxu0 %v2363
        %2581 = vmatmul.mubr.bf16.gmra.mrb[0].mxu0 %v2176
        %v2582 = vpop.f32.mrb[0].mxu0
        %v2583 = vadd.f32 0.0, %v2582
        %v2584 = vpop.f32.mrb[0].mxu0
        %v2585 = vpop.f32.mrb[0].mxu0
        %v2586 = vadd.f32 0.0, %v2585
        %v2587 = vpop.f32.mrb[0].mxu0
        %2588 = vmatprep.mubr.bf16.mxu0 %v2366
        %2589 = vmatmul.mubr.bf16.gmra.mrb[0].mxu0 %v2178
        %v2590 = vpop.f32.mrb[0].mxu0
        %v2591 = vadd.f32 0.0, %v2590
        %v2592 = vpop.f32.mrb[0].mxu0
        %v2593 = vpop.f32.mrb[0].mxu0
        %v2594 = vadd.f32 0.0, %v2593
        %v2595 = vpop.f32.mrb[0].mxu0
        %2596 = vmatprep.mubr.bf16.mxu0 %v2369
        %2597 = vmatmul.mubr.bf16.gmra.mrb[0].mxu0 %v2180
        %v2598 = vpop.f32.mrb[0].mxu0
        %v2599 = vadd.f32 0.0, %v2598
        %v2600 = vpop.f32.mrb[0].mxu0
        %v2601 = vpop.f32.mrb[0].mxu0
        %v2602 = vadd.f32 0.0, %v2601
        %v2603 = vpop.f32.mrb[0].mxu0
        %2604 = vmatprep.mubr.bf16.mxu0 %v2372
        %2605 = vmatmul.mubr.bf16.gmra.mrb[0].mxu0 %v2182
        %v2606 = vpop.f32.mrb[0].mxu0
        %v2607 = vadd.f32 0.0, %v2606
        %v2608 = vpop.f32.mrb[0].mxu0
        %v2609 = vpop.f32.mrb[0].mxu0
        %v2610 = vadd.f32 0.0, %v2609
        %v2611 = vpop.f32.mrb[0].mxu0
        %2612 = vmatprep.mubr.bf16.mxu0 %v2375
        %2613 = vmatmul.mubr.bf16.gmra.mrb[0].mxu0 %v2184
        %v2614 = vpop.f32.mrb[0].mxu0
        %v2615 = vadd.f32 0.0, %v2614
        %v2616 = vpop.f32.mrb[0].mxu0
        %v2617 = vpop.f32.mrb[0].mxu0
        %v2618 = vadd.f32 0.0, %v2617
        %v2619 = vpop.f32.mrb[0].mxu0
        %2620 = vmatprep.mubr.bf16.mxu0 %v2378
        %2621 = vmatmul.mubr.bf16.gmra.mrb[0].mxu0 %v2186
        %v2622 = vpop.f32.mrb[0].mxu0
        %v2623 = vadd.f32 0.0, %v2622
        %v2624 = vpop.f32.mrb[0].mxu0
        %v2625 = vpop.f32.mrb[0].mxu0
        %v2626 = vadd.f32 0.0, %v2625
        %v2627 = vpop.f32.mrb[0].mxu0
        %2628 = vmatprep.mubr.bf16.mxu0 %v2381
        %2629 = vmatmul.mubr.bf16.gmra.mrb[0].mxu0 %v2188
        %v2630 = vpop.f32.mrb[0].mxu0
        %v2631 = vadd.f32 0.0, %v2630
        %v2632 = vpop.f32.mrb[0].mxu0
        %v2633 = vpop.f32.mrb[0].mxu0
        %v2634 = vadd.f32 0.0, %v2633
        %v2635 = vpop.f32.mrb[0].mxu0
        %2636 = vmatprep.mubr.bf16.mxu0 %v2384
        %2637 = vmatmul.mubr.bf16.gmra.mrb[0].mxu0 %v2190
        %v2638 = vpop.f32.mrb[0].mxu0
        %v2639 = vadd.f32 0.0, %v2638
        %v2640 = vpop.f32.mrb[0].mxu0
        %v2641 = vpop.f32.mrb[0].mxu0
        %v2642 = vadd.f32 0.0, %v2641
        %v2643 = vpop.f32.mrb[0].mxu0
        %2644 = vmatprep.mubr.bf16.mxu0 %v2387
        %2645 = vmatmul.mubr.bf16.gmra.mrb[0].mxu0 %v2192
        %v2646 = vpop.f32.mrb[0].mxu0
        %v2647 = vadd.f32 0.0, %v2646
        %v2648 = vpop.f32.mrb[0].mxu0
        %v2649 = vpop.f32.mrb[0].mxu0
        %v2650 = vadd.f32 0.0, %v2649
        %v2651 = vpop.f32.mrb[0].mxu0
        %2652 = vmatprep.mubr.bf16.mxu0 %v2390
        %2653 = vmatmul.mubr.bf16.gmra.mrb[0].mxu0 %v2194
        %v2654 = vpop.f32.mrb[0].mxu0
        %v2655 = vadd.f32 0.0, %v2654
        %v2656 = vpop.f32.mrb[0].mxu0
        %v2657 = vpop.f32.mrb[0].mxu0
        %v2658 = vadd.f32 0.0, %v2657
        %v2659 = vpop.f32.mrb[0].mxu0
        %2660 = vmatprep.mubr.bf16.mxu0 %v2393
        %2661 = vmatmul.mubr.bf16.gmra.mrb[0].mxu0 %v2196
        %v2662 = vpop.f32.mrb[0].mxu0
        %v2663 = vadd.f32 0.0, %v2662
        %v2664 = vpop.f32.mrb[0].mxu0
        %v2665 = vpop.f32.mrb[0].mxu0
        %v2666 = vadd.f32 0.0, %v2665
        %v2667 = vpop.f32.mrb[0].mxu0
        %2668 = vmatprep.mubr.bf16.mxu0 %v2396
        %2669 = vmatmul.mubr.bf16.gmra.mrb[0].mxu0 %v2198
        %v2670 = vpop.f32.mrb[0].mxu0
        %v2671 = vadd.f32 0.0, %v2670
        %v2672 = vpop.f32.mrb[0].mxu0
        %v2673 = vpop.f32.mrb[0].mxu0
        %v2674 = vadd.f32 0.0, %v2673
        %v2675 = vpop.f32.mrb[0].mxu0
        %2676 = vmatprep.mubr.bf16.mxu0 %v2399
        %2677 = vmatmul.mubr.bf16.gmra.mrb[0].mxu0 %v2200
        %v2678 = vpop.f32.mrb[0].mxu0
        %v2679 = vadd.f32 0.0, %v2678
        %v2680 = vpop.f32.mrb[0].mxu0
        %v2681 = vpop.f32.mrb[0].mxu0
        %v2682 = vadd.f32 0.0, %v2681
        %v2683 = vpop.f32.mrb[0].mxu0
        %2684 = vmatprep.mubr.bf16.mxu0 %v2402
        %2685 = vmatmul.mubr.bf16.gmra.mrb[0].mxu0 %v2202
        %v2686 = vpop.f32.mrb[0].mxu0
        %v2687 = vadd.f32 0.0, %v2686
        %v2688 = vpop.f32.mrb[0].mxu0
        %v2689 = vpop.f32.mrb[0].mxu0
        %v2690 = vadd.f32 0.0, %v2689
        %v2691 = vpop.f32.mrb[0].mxu0
        %2692 = vdwg.mxu0
        %v2693 = vadd.f32 %v1601, %v2439
        %v2694 = vadd.f32 %v1604, %v2442
        %v2695 = vadd.f32 %v1609, %v2447
        %v2696 = vadd.f32 %v1612, %v2450
        %v2697 = vadd.f32 %v1617, %v2455
        %v2698 = vadd.f32 %v1620, %v2458
        %v2699 = vadd.f32 %v1625, %v2463
        %v2700 = vadd.f32 %v1628, %v2466
        %v2701 = vadd.f32 %v1633, %v2471
        %v2702 = vadd.f32 %v1636, %v2474
        %v2703 = vadd.f32 %v1641, %v2479
        %v2704 = vadd.f32 %v1644, %v2482
        %v2705 = vadd.f32 %v1649, %v2487
        %v2706 = vadd.f32 %v1652, %v2490
        %v2707 = vadd.f32 %v1657, %v2495
        %v2708 = vadd.f32 %v1660, %v2498
        %v2709 = vadd.f32 %v1665, %v2503
        %v2710 = vadd.f32 %v1668, %v2506
        %v2711 = vadd.f32 %v1673, %v2511
        %v2712 = vadd.f32 %v1676, %v2514
        %v2713 = vadd.f32 %v1681, %v2519
        %v2714 = vadd.f32 %v1684, %v2522
        %v2715 = vadd.f32 %v1689, %v2527
        %v2716 = vadd.f32 %v1692, %v2530
        %v2717 = vadd.f32 %v1697, %v2535
        %v2718 = vadd.f32 %v1700, %v2538
        %v2719 = vadd.f32 %v1705, %v2543
        %v2720 = vadd.f32 %v1708, %v2546
        %v2721 = vadd.f32 %v1713, %v2551
        %v2722 = vadd.f32 %v1716, %v2554
        %v2723 = vadd.f32 %v1721, %v2559
        %v2724 = vadd.f32 %v1724, %v2562
        %v2725 = vadd.f32 %v1729, %v2567
        %v2726 = vadd.f32 %v1732, %v2570
        %v2727 = vadd.f32 %v1737, %v2575
        %v2728 = vadd.f32 %v1740, %v2578
        %v2729 = vadd.f32 %v1745, %v2583
        %v2730 = vadd.f32 %v1748, %v2586
        %v2731 = vadd.f32 %v1753, %v2591
        %v2732 = vadd.f32 %v1756, %v2594
        %v2733 = vadd.f32 %v1761, %v2599
        %v2734 = vadd.f32 %v1764, %v2602
        %v2735 = vadd.f32 %v1769, %v2607
        %v2736 = vadd.f32 %v1772, %v2610
        %v2737 = vadd.f32 %v1777, %v2615
        %v2738 = vadd.f32 %v1780, %v2618
        %v2739 = vadd.f32 %v1785, %v2623
        %v2740 = vadd.f32 %v1788, %v2626
        %v2741 = vadd.f32 %v1793, %v2631
        %v2742 = vadd.f32 %v1796, %v2634
        %v2743 = vadd.f32 %v1801, %v2639
        %v2744 = vadd.f32 %v1804, %v2642
        %v2745 = vadd.f32 %v1809, %v2647
        %v2746 = vadd.f32 %v1812, %v2650
        %v2747 = vadd.f32 %v1817, %v2655
        %v2748 = vadd.f32 %v1820, %v2658
        %v2749 = vadd.f32 %v1825, %v2663
        %v2750 = vadd.f32 %v1828, %v2666
        %v2751 = vadd.f32 %v1833, %v2671
        %v2752 = vadd.f32 %v1836, %v2674
        %v2753 = vadd.f32 %v1841, %v2679
        %v2754 = vadd.f32 %v1844, %v2682
        %v2755 = vadd.f32 %v1849, %v2687
        %v2756 = vadd.f32 %v1852, %v2690
        %v2758 = vlaneseq
        %v2759 = vshrl.u32 %v2758, 7
        %v2760 = vsub.s32 0, %v2759
        %v2761 = vrot.slane %v172, %v2760
        %v2763 = vadd.f32 %v2693, %v2761
        %v2764 = vadd.f32 %v2694, %v2761
        %v2765 = vadd.f32 %v2695, %v2761
        %v2766 = vadd.f32 %v2696, %v2761
        %v2767 = vadd.f32 %v2697, %v2761
        %v2768 = vadd.f32 %v2698, %v2761
        %v2769 = vadd.f32 %v2699, %v2761
        %v2770 = vadd.f32 %v2700, %v2761
        %v2771 = vadd.f32 %v2701, %v2761
        %v2772 = vadd.f32 %v2702, %v2761
        %v2773 = vadd.f32 %v2703, %v2761
        %v2774 = vadd.f32 %v2704, %v2761
        %v2775 = vadd.f32 %v2705, %v2761
        %v2776 = vadd.f32 %v2706, %v2761
        %v2777 = vadd.f32 %v2707, %v2761
        %v2778 = vadd.f32 %v2708, %v2761
        %v2779 = vadd.f32 %v2709, %v2761
        %v2780 = vadd.f32 %v2710, %v2761
        %v2781 = vadd.f32 %v2711, %v2761
        %v2782 = vadd.f32 %v2712, %v2761
        %v2783 = vadd.f32 %v2713, %v2761
        %v2784 = vadd.f32 %v2714, %v2761
        %v2785 = vadd.f32 %v2715, %v2761
        %v2786 = vadd.f32 %v2716, %v2761
        %v2787 = vadd.f32 %v2717, %v2761
        %v2788 = vadd.f32 %v2718, %v2761
        %v2789 = vadd.f32 %v2719, %v2761
        %v2790 = vadd.f32 %v2720, %v2761
        %v2791 = vadd.f32 %v2721, %v2761
        %v2792 = vadd.f32 %v2722, %v2761
        %v2793 = vadd.f32 %v2723, %v2761
        %v2794 = vadd.f32 %v2724, %v2761
        %v2795 = vadd.f32 %v2725, %v2761
        %v2796 = vadd.f32 %v2726, %v2761
        %v2797 = vadd.f32 %v2727, %v2761
        %v2798 = vadd.f32 %v2728, %v2761
        %v2799 = vadd.f32 %v2729, %v2761
        %v2800 = vadd.f32 %v2730, %v2761
        %v2801 = vadd.f32 %v2731, %v2761
        %v2802 = vadd.f32 %v2732, %v2761
        %v2803 = vadd.f32 %v2733, %v2761
        %v2804 = vadd.f32 %v2734, %v2761
        %v2805 = vadd.f32 %v2735, %v2761
        %v2806 = vadd.f32 %v2736, %v2761
        %v2807 = vadd.f32 %v2737, %v2761
        %v2808 = vadd.f32 %v2738, %v2761
        %v2809 = vadd.f32 %v2739, %v2761
        %v2810 = vadd.f32 %v2740, %v2761
        %v2811 = vadd.f32 %v2741, %v2761
        %v2812 = vadd.f32 %v2742, %v2761
        %v2813 = vadd.f32 %v2743, %v2761
        %v2814 = vadd.f32 %v2744, %v2761
        %v2815 = vadd.f32 %v2745, %v2761
        %v2816 = vadd.f32 %v2746, %v2761
        %v2817 = vadd.f32 %v2747, %v2761
        %v2818 = vadd.f32 %v2748, %v2761
        %v2819 = vadd.f32 %v2749, %v2761
        %v2820 = vadd.f32 %v2750, %v2761
        %v2821 = vadd.f32 %v2751, %v2761
        %v2822 = vadd.f32 %v2752, %v2761
        %v2823 = vadd.f32 %v2753, %v2761
        %v2824 = vadd.f32 %v2754, %v2761
        %v2825 = vadd.f32 %v2755, %v2761
        %v2826 = vadd.f32 %v2756, %v2761
        %v2827 = vmax.f32 %v2763, 0.0
        %v2828 = vmax.f32 %v2764, 0.0
        %v2829 = vmax.f32 %v2765, 0.0
        %v2830 = vmax.f32 %v2766, 0.0
        %v2831 = vmax.f32 %v2767, 0.0
        %v2832 = vmax.f32 %v2768, 0.0
        %v2833 = vmax.f32 %v2769, 0.0
        %v2834 = vmax.f32 %v2770, 0.0
        %v2835 = vmax.f32 %v2771, 0.0
        %v2836 = vmax.f32 %v2772, 0.0
        %v2837 = vmax.f32 %v2773, 0.0
        %v2838 = vmax.f32 %v2774, 0.0
        %v2839 = vmax.f32 %v2775, 0.0
        %v2840 = vmax.f32 %v2776, 0.0
        %v2841 = vmax.f32 %v2777, 0.0
        %v2842 = vmax.f32 %v2778, 0.0
        %v2843 = vmax.f32 %v2779, 0.0
        %v2844 = vmax.f32 %v2780, 0.0
        %v2845 = vmax.f32 %v2781, 0.0
        %v2846 = vmax.f32 %v2782, 0.0
        %v2847 = vmax.f32 %v2783, 0.0
        %v2848 = vmax.f32 %v2784, 0.0
        %v2849 = vmax.f32 %v2785, 0.0
        %v2850 = vmax.f32 %v2786, 0.0
        %v2851 = vmax.f32 %v2787, 0.0
        %v2852 = vmax.f32 %v2788, 0.0
        %v2853 = vmax.f32 %v2789, 0.0
        %v2854 = vmax.f32 %v2790, 0.0
        %v2855 = vmax.f32 %v2791, 0.0
        %v2856 = vmax.f32 %v2792, 0.0
        %v2857 = vmax.f32 %v2793, 0.0
        %v2858 = vmax.f32 %v2794, 0.0
        %v2859 = vmax.f32 %v2795, 0.0
        %v2860 = vmax.f32 %v2796, 0.0
        %v2861 = vmax.f32 %v2797, 0.0
        %v2862 = vmax.f32 %v2798, 0.0
        %v2863 = vmax.f32 %v2799, 0.0
        %v2864 = vmax.f32 %v2800, 0.0
        %v2865 = vmax.f32 %v2801, 0.0
        %v2866 = vmax.f32 %v2802, 0.0
        %v2867 = vmax.f32 %v2803, 0.0
        %v2868 = vmax.f32 %v2804, 0.0
        %v2869 = vmax.f32 %v2805, 0.0
        %v2870 = vmax.f32 %v2806, 0.0
        %v2871 = vmax.f32 %v2807, 0.0
        %v2872 = vmax.f32 %v2808, 0.0
        %v2873 = vmax.f32 %v2809, 0.0
        %v2874 = vmax.f32 %v2810, 0.0
        %v2875 = vmax.f32 %v2811, 0.0
        %v2876 = vmax.f32 %v2812, 0.0
        %v2877 = vmax.f32 %v2813, 0.0
        %v2878 = vmax.f32 %v2814, 0.0
        %v2879 = vmax.f32 %v2815, 0.0
        %v2880 = vmax.f32 %v2816, 0.0
        %v2881 = vmax.f32 %v2817, 0.0
        %v2882 = vmax.f32 %v2818, 0.0
        %v2883 = vmax.f32 %v2819, 0.0
        %v2884 = vmax.f32 %v2820, 0.0
        %v2885 = vmax.f32 %v2821, 0.0
        %v2886 = vmax.f32 %v2822, 0.0
        %v2887 = vmax.f32 %v2823, 0.0
        %v2888 = vmax.f32 %v2824, 0.0
        %v2889 = vmax.f32 %v2825, 0.0
        %v2890 = vmax.f32 %v2826, 0.0
        %v2891 = vpack.c.bf16 %v2828, %v2827
        %v2892 = vpack.c.bf16 %v2830, %v2829
        %v2893 = vpack.c.bf16 %v2832, %v2831
        %v2894 = vpack.c.bf16 %v2834, %v2833
        %v2895 = vpack.c.bf16 %v2836, %v2835
        %v2896 = vpack.c.bf16 %v2838, %v2837
        %v2897 = vpack.c.bf16 %v2840, %v2839
        %v2898 = vpack.c.bf16 %v2842, %v2841
        %v2899 = vpack.c.bf16 %v2844, %v2843
        %v2900 = vpack.c.bf16 %v2846, %v2845
        %v2901 = vpack.c.bf16 %v2848, %v2847
        %v2902 = vpack.c.bf16 %v2850, %v2849
        %v2903 = vpack.c.bf16 %v2852, %v2851
        %v2904 = vpack.c.bf16 %v2854, %v2853
        %v2905 = vpack.c.bf16 %v2856, %v2855
        %v2906 = vpack.c.bf16 %v2858, %v2857
        %v2907 = vpack.c.bf16 %v2860, %v2859
        %v2908 = vpack.c.bf16 %v2862, %v2861
        %v2909 = vpack.c.bf16 %v2864, %v2863
        %v2910 = vpack.c.bf16 %v2866, %v2865
        %v2911 = vpack.c.bf16 %v2868, %v2867
        %v2912 = vpack.c.bf16 %v2870, %v2869
        %v2913 = vpack.c.bf16 %v2872, %v2871
        %v2914 = vpack.c.bf16 %v2874, %v2873
        %v2915 = vpack.c.bf16 %v2876, %v2875
        %v2916 = vpack.c.bf16 %v2878, %v2877
        %v2917 = vpack.c.bf16 %v2880, %v2879
        %v2918 = vpack.c.bf16 %v2882, %v2881
        %v2919 = vpack.c.bf16 %v2884, %v2883
        %v2920 = vpack.c.bf16 %v2886, %v2885
        %v2921 = vpack.c.bf16 %v2888, %v2887
        %v2922 = vpack.c.bf16 %v2890, %v2889
        %v2955 = vunpack.c.l.b16 %v2891
        %v2956 = vunpack.c.h.b16 %v2891
        %v2957 = vunpack.c.l.b16 %v2892
        %v2958 = vunpack.c.h.b16 %v2892
        %v2959 = vunpack.c.l.b16 %v2893
        %v2960 = vunpack.c.h.b16 %v2893
        %v2961 = vunpack.c.l.b16 %v2894
        %v2962 = vunpack.c.h.b16 %v2894
        %v2963 = vunpack.c.l.b16 %v2895
        %v2964 = vunpack.c.h.b16 %v2895
        %v2965 = vunpack.c.l.b16 %v2896
        %v2966 = vunpack.c.h.b16 %v2896
        %v2967 = vunpack.c.l.b16 %v2897
        %v2968 = vunpack.c.h.b16 %v2897
        %v2969 = vunpack.c.l.b16 %v2898
        %v2970 = vunpack.c.h.b16 %v2898
        %v2971 = vunpack.c.l.b16 %v2899
        %v2972 = vunpack.c.h.b16 %v2899
        %v2973 = vunpack.c.l.b16 %v2900
        %v2974 = vunpack.c.h.b16 %v2900
        %v2975 = vunpack.c.l.b16 %v2901
        %v2976 = vunpack.c.h.b16 %v2901
        %v2977 = vunpack.c.l.b16 %v2902
        %v2978 = vunpack.c.h.b16 %v2902
        %v2979 = vunpack.c.l.b16 %v2903
        %v2980 = vunpack.c.h.b16 %v2903
        %v2981 = vunpack.c.l.b16 %v2904
        %v2982 = vunpack.c.h.b16 %v2904
        %v2983 = vunpack.c.l.b16 %v2905
        %v2984 = vunpack.c.h.b16 %v2905
        %v2985 = vunpack.c.l.b16 %v2906
        %v2986 = vunpack.c.h.b16 %v2906
        %v2987 = vunpack.c.l.b16 %v2907
        %v2988 = vunpack.c.h.b16 %v2907
        %v2989 = vunpack.c.l.b16 %v2908
        %v2990 = vunpack.c.h.b16 %v2908
        %v2991 = vunpack.c.l.b16 %v2909
        %v2992 = vunpack.c.h.b16 %v2909
        %v2993 = vunpack.c.l.b16 %v2910
        %v2994 = vunpack.c.h.b16 %v2910
        %v2995 = vunpack.c.l.b16 %v2911
        %v2996 = vunpack.c.h.b16 %v2911
        %v2997 = vunpack.c.l.b16 %v2912
        %v2998 = vunpack.c.h.b16 %v2912
        %v2999 = vunpack.c.l.b16 %v2913
        %v3000 = vunpack.c.h.b16 %v2913
        %v3001 = vunpack.c.l.b16 %v2914
        %v3002 = vunpack.c.h.b16 %v2914
        %v3003 = vunpack.c.l.b16 %v2915
        %v3004 = vunpack.c.h.b16 %v2915
        %v3005 = vunpack.c.l.b16 %v2916
        %v3006 = vunpack.c.h.b16 %v2916
        %v3007 = vunpack.c.l.b16 %v2917
        %v3008 = vunpack.c.h.b16 %v2917
        %v3009 = vunpack.c.l.b16 %v2918
        %v3010 = vunpack.c.h.b16 %v2918
        %v3011 = vunpack.c.l.b16 %v2919
        %v3012 = vunpack.c.h.b16 %v2919
        %v3013 = vunpack.c.l.b16 %v2920
        %v3014 = vunpack.c.h.b16 %v2920
        %v3015 = vunpack.c.l.b16 %v2921
        %v3016 = vunpack.c.h.b16 %v2921
        %v3017 = vunpack.c.l.b16 %v2922
        %v3018 = vunpack.c.h.b16 %v2922
        %v3019 = vpack.c.b16 %v2955, %v2955
        %v3020 = vpack.c.b16 %v2956, %v2956
        %v3021 = vpack.c.b16 %v2957, %v2957
        %v3022 = vpack.c.b16 %v2958, %v2958
        %v3023 = vpack.c.b16 %v2959, %v2959
        %v3024 = vpack.c.b16 %v2960, %v2960
        %v3025 = vpack.c.b16 %v2961, %v2961
        %v3026 = vpack.c.b16 %v2962, %v2962
        %v3027 = vpack.c.b16 %v2963, %v2963
        %v3028 = vpack.c.b16 %v2964, %v2964
        %v3029 = vpack.c.b16 %v2965, %v2965
        %v3030 = vpack.c.b16 %v2966, %v2966
        %v3031 = vpack.c.b16 %v2967, %v2967
        %v3032 = vpack.c.b16 %v2968, %v2968
        %v3033 = vpack.c.b16 %v2969, %v2969
        %v3034 = vpack.c.b16 %v2970, %v2970
        %v3035 = vpack.c.b16 %v2971, %v2971
        %v3036 = vpack.c.b16 %v2972, %v2972
        %v3037 = vpack.c.b16 %v2973, %v2973
        %v3038 = vpack.c.b16 %v2974, %v2974
        %v3039 = vpack.c.b16 %v2975, %v2975
        %v3040 = vpack.c.b16 %v2976, %v2976
        %v3041 = vpack.c.b16 %v2977, %v2977
        %v3042 = vpack.c.b16 %v2978, %v2978
        %v3043 = vpack.c.b16 %v2979, %v2979
        %v3044 = vpack.c.b16 %v2980, %v2980
        %v3045 = vpack.c.b16 %v2981, %v2981
        %v3046 = vpack.c.b16 %v2982, %v2982
        %v3047 = vpack.c.b16 %v2983, %v2983
        %v3048 = vpack.c.b16 %v2984, %v2984
        %v3049 = vpack.c.b16 %v2985, %v2985
        %v3050 = vpack.c.b16 %v2986, %v2986
        %v3051 = vpack.c.b16 %v2987, %v2987
        %v3052 = vpack.c.b16 %v2988, %v2988
        %v3053 = vpack.c.b16 %v2989, %v2989
        %v3054 = vpack.c.b16 %v2990, %v2990
        %v3055 = vpack.c.b16 %v2991, %v2991
        %v3056 = vpack.c.b16 %v2992, %v2992
        %v3057 = vpack.c.b16 %v2993, %v2993
        %v3058 = vpack.c.b16 %v2994, %v2994
        %v3059 = vpack.c.b16 %v2995, %v2995
        %v3060 = vpack.c.b16 %v2996, %v2996
        %v3061 = vpack.c.b16 %v2997, %v2997
        %v3062 = vpack.c.b16 %v2998, %v2998
        %v3063 = vpack.c.b16 %v2999, %v2999
        %v3064 = vpack.c.b16 %v3000, %v3000
        %v3065 = vpack.c.b16 %v3001, %v3001
        %v3066 = vpack.c.b16 %v3002, %v3002
        %v3067 = vpack.c.b16 %v3003, %v3003
        %v3068 = vpack.c.b16 %v3004, %v3004
        %v3069 = vpack.c.b16 %v3005, %v3005
        %v3070 = vpack.c.b16 %v3006, %v3006
        %v3071 = vpack.c.b16 %v3007, %v3007
        %v3072 = vpack.c.b16 %v3008, %v3008
        %v3073 = vpack.c.b16 %v3009, %v3009
        %v3074 = vpack.c.b16 %v3010, %v3010
        %v3075 = vpack.c.b16 %v3011, %v3011
        %v3076 = vpack.c.b16 %v3012, %v3012
        %v3077 = vpack.c.b16 %v3013, %v3013
        %v3078 = vpack.c.b16 %v3014, %v3014
        %v3079 = vpack.c.b16 %v3015, %v3015
        %v3080 = vpack.c.b16 %v3016, %v3016
        %v3081 = vpack.c.b16 %v3017, %v3017
        %v3082 = vpack.c.b16 %v3018, %v3018
        %s3147 = smul.u32 %s179, 8
        %s3148 = smul.addr %s3147, 4
        %s3149 = scalar_lea.vmem %s170, %s3148
        %3150 = vst [vmem:[%s3149] sm:$0xf] %v3019
        %3151 = vst [vmem:[%s3149 + $0x4] sm:$0xf] %v3020
        %3152 = vst [vmem:[%s3149 + $0x8] sm:$0xf] %v3021
        %3153 = vst [vmem:[%s3149 + $0xc] sm:$0xf] %v3022
        %3154 = vst [vmem:[%s3149 + $0x10] sm:$0xf] %v3023
        %3155 = vst [vmem:[%s3149 + $0x14] sm:$0xf] %v3024
        %3156 = vst [vmem:[%s3149 + $0x18] sm:$0xf] %v3025
        %3157 = vst [vmem:[%s3149 + $0x1c] sm:$0xf] %v3026
        %3158 = vst [vmem:[%s3149 + $0x20] sm:$0xf] %v3027
        %3159 = vst [vmem:[%s3149 + $0x24] sm:$0xf] %v3028
        %3160 = vst [vmem:[%s3149 + $0x28] sm:$0xf] %v3029
        %3161 = vst [vmem:[%s3149 + $0x2c] sm:$0xf] %v3030
        %3162 = vst [vmem:[%s3149 + $0x30] sm:$0xf] %v3031
        %3163 = vst [vmem:[%s3149 + $0x34] sm:$0xf] %v3032
        %3164 = vst [vmem:[%s3149 + $0x38] sm:$0xf] %v3033
        %3165 = vst [vmem:[%s3149 + $0x3c] sm:$0xf] %v3034
        %3166 = vst [vmem:[%s3149 + $0x40] sm:$0xf] %v3035
        %3167 = vst [vmem:[%s3149 + $0x44] sm:$0xf] %v3036
        %3168 = vst [vmem:[%s3149 + $0x48] sm:$0xf] %v3037
        %3169 = vst [vmem:[%s3149 + $0x4c] sm:$0xf] %v3038
        %3170 = vst [vmem:[%s3149 + $0x50] sm:$0xf] %v3039
        %3171 = vst [vmem:[%s3149 + $0x54] sm:$0xf] %v3040
        %3172 = vst [vmem:[%s3149 + $0x58] sm:$0xf] %v3041
        %3173 = vst [vmem:[%s3149 + $0x5c] sm:$0xf] %v3042
        %3174 = vst [vmem:[%s3149 + $0x60] sm:$0xf] %v3043
        %3175 = vst [vmem:[%s3149 + $0x64] sm:$0xf] %v3044
        %3176 = vst [vmem:[%s3149 + $0x68] sm:$0xf] %v3045
        %3177 = vst [vmem:[%s3149 + $0x6c] sm:$0xf] %v3046
        %3178 = vst [vmem:[%s3149 + $0x70] sm:$0xf] %v3047
        %3179 = vst [vmem:[%s3149 + $0x74] sm:$0xf] %v3048
        %3180 = vst [vmem:[%s3149 + $0x78] sm:$0xf] %v3049
        %3181 = vst [vmem:[%s3149 + $0x7c] sm:$0xf] %v3050
        %3182 = vst [vmem:[%s3149 + $0x80] sm:$0xf] %v3051
        %3183 = vst [vmem:[%s3149 + $0x84] sm:$0xf] %v3052
        %3184 = vst [vmem:[%s3149 + $0x88] sm:$0xf] %v3053
        %3185 = vst [vmem:[%s3149 + $0x8c] sm:$0xf] %v3054
        %3186 = vst [vmem:[%s3149 + $0x90] sm:$0xf] %v3055
        %3187 = vst [vmem:[%s3149 + $0x94] sm:$0xf] %v3056
        %3188 = vst [vmem:[%s3149 + $0x98] sm:$0xf] %v3057
        %3189 = vst [vmem:[%s3149 + $0x9c] sm:$0xf] %v3058
        %3190 = vst [vmem:[%s3149 + $0xa0] sm:$0xf] %v3059
        %3191 = vst [vmem:[%s3149 + $0xa4] sm:$0xf] %v3060
        %3192 = vst [vmem:[%s3149 + $0xa8] sm:$0xf] %v3061
        %3193 = vst [vmem:[%s3149 + $0xac] sm:$0xf] %v3062
        %3194 = vst [vmem:[%s3149 + $0xb0] sm:$0xf] %v3063
        %3195 = vst [vmem:[%s3149 + $0xb4] sm:$0xf] %v3064
        %3196 = vst [vmem:[%s3149 + $0xb8] sm:$0xf] %v3065
        %3197 = vst [vmem:[%s3149 + $0xbc] sm:$0xf] %v3066
        %3198 = vst [vmem:[%s3149 + $0xc0] sm:$0xf] %v3067
        %3199 = vst [vmem:[%s3149 + $0xc4] sm:$0xf] %v3068
        %3200 = vst [vmem:[%s3149 + $0xc8] sm:$0xf] %v3069
        %3201 = vst [vmem:[%s3149 + $0xcc] sm:$0xf] %v3070
        %3202 = vst [vmem:[%s3149 + $0xd0] sm:$0xf] %v3071
        %3203 = vst [vmem:[%s3149 + $0xd4] sm:$0xf] %v3072
        %3204 = vst [vmem:[%s3149 + $0xd8] sm:$0xf] %v3073
        %3205 = vst [vmem:[%s3149 + $0xdc] sm:$0xf] %v3074
        %3206 = vst [vmem:[%s3149 + $0xe0] sm:$0xf] %v3075
        %3207 = vst [vmem:[%s3149 + $0xe4] sm:$0xf] %v3076
        %3208 = vst [vmem:[%s3149 + $0xe8] sm:$0xf] %v3077
        %3209 = vst [vmem:[%s3149 + $0xec] sm:$0xf] %v3078
        %3210 = vst [vmem:[%s3149 + $0xf0] sm:$0xf] %v3079
        %3211 = vst [vmem:[%s3149 + $0xf4] sm:$0xf] %v3080
        %3212 = vst [vmem:[%s3149 + $0xf8] sm:$0xf] %v3081
        %3213 = vst [vmem:[%s3149 + $0xfc] sm:$0xf] %v3082
      $region37: #{substance_detection_forward.5} parent=31 // loop_footer
        %s178 = sadd.s32 1, %s174
      $region38: #{substance_detection_forward.5} parent=31 // loop_footer_branch
        %173 = sbr.rel target = $region34
      $region39: #{substance_detection_forward.5} parent=31 // loop_exit
        _
      %p3214 = scmp.lt.s32.totalorder %s14, 1
      %s3215 = scalar_select %p3214, %s14, 1
      %s3216 = smul.addr %s3215, 512
      %s3217 = smul.addr %s3216, 4
      %s3218 = scalar_lea.vmem %s3, %s3217
      // Predicated region
      $region40: #{substance_detection_forward.5} parent=31 // pred_check
        %p3219 = pneg %p100
      $region41: #{substance_detection_forward.5} parent=31 // pred_check_branch
        %3221 = sbr.rel (%p3219) target = $region43
      $region42: #{substance_detection_forward.5} parent=31 // pred_region
        _
      $region43: #{substance_detection_forward.5} parent=31 // pred_fallthru
        _
    $region32: #{substance_detection_forward.5} parent=5 // pred_fallthru
      _
    %p3222 = scmp.le.s32.totalorder 2, %s9
    // Predicated region
    $region44: #{substance_detection_forward.5} parent=5 // pred_check
      %p3223 = pneg %p3222
    $region45: #{substance_detection_forward.5} parent=5 // pred_check_branch
      %3225 = sbr.rel (%p3223) target = $region47
    $region46: #{substance_detection_forward.5} parent=5 // pred_region
      %s3226 = ssub.s32 %s9, 2
      // Predicated region
      $region48: #{substance_detection_forward.5} parent=46 // pred_check
        %p3227 = pneg %p106
      $region49: #{substance_detection_forward.5} parent=46 // pred_check_branch
        %3229 = sbr.rel (%p3227) target = $region51
      $region50: #{substance_detection_forward.5} parent=46 // pred_region
        %p3230 = scmp.lt.s32.totalorder %s15, 1
        %s3231 = scalar_select %p3230, %s15, 1
        %s3232 = smul.addr %s3231, 512
        %s3233 = smul.addr %s3232, 4
        %s3234 = scalar_lea.vmem %s3, %s3233
      $region51: #{substance_detection_forward.5} parent=46 // pred_fallthru
        _
    $region47: #{substance_detection_forward.5} parent=5 // pred_fallthru
      _
  $region6: #{substance_detection_forward.5} parent=0 // loop_footer
    %s13 = sadd.s32 1, %s9
  $region7: #{substance_detection_forward.5} parent=0 // loop_footer_branch
    %8 = sbr.rel target = $region3
  $region8: #{substance_detection_forward.5} parent=0 // loop_exit
    _

// kernel: substance_detection_forward.6
$region0: #{substance_detection_forward.6}
  #allocation0 [shape = 'u32[]', space=smem, size = 0x4, offset = 0x4, fixed_abs, tag = 'smem constant byte address 0x4 - core index']
  #allocation1 [shape = 'u32[144,128]{1,0:T(1,128)}', space=vmem, size = 0x12000, scoped, tag = 'internal scratch']
  #allocation2 [shape = 'f32[2,256]{1,0:T(2,128)}', space=vmem, size = 0x800, scoped, tag = 'scratch operand']
  %s0 = inlined_call_operand.vmem [shape: bf16[2,524288], index: 0, kind: input, shape index: {}]
  %s1 = inlined_call_operand.hbm [shape: s8[524288,512], index: 1, kind: input, shape index: {}]
  %s2 = inlined_call_operand.vmem [shape: f32[1,512], index: 2, kind: input, shape index: {}]
  %s3 = inlined_call_operand.vmem [shape: f32[1,512], index: 3, kind: input, shape index: {}]
  %s4 = inlined_call_operand.vmem [shape: f32[2,512], index: 4, kind: output, shape index: {}]
  %s5 = sld [smem:[#allocation0]]
  $region68: #{substance_detection_forward.6} parent=0
    _
  %s7 = ssub.s32 1, %s5
  %s8 = scalar_select 0, %s7, %s5
  $region1: #{substance_detection_forward.6} parent=0
    #allocation3 [shape = 'u8[16777216]{0}', space=vmem, size = 0x1000000, scoped, tag = 'input window, operand 1']
    #allocation4 [shape = 's32[2]{0}', space=sflag, size = 0x8, scoped, tag = 'scoped memory for substance_detection_forward.6']
    %9 = vsyncpa [#allocation4], 0
    %s10 = scalar_lea.sflag [#allocation4], 1
    %11 = vsyncpa %s10, 0
    loop: start=0, step=1, limit=34
    $region2: #{substance_detection_forward.6} parent=1 // loop_pre_header
      _
    $region3: #{substance_detection_forward.6} parent=1 // loop_header
      %s13 = sphi 0, %s17
      %p14 = scmp.ge.s32.totalorder %s13, 34
      %s20 = sphi 0, %s32
      %s21 = sphi 0, %s28
      %s22 = sphi 0, %s20
      %s23 = sphi 0, %s21
      %s24 = sphi 0, %s22
      %s25 = sphi 0, %s23
      %s35 = sphi 0, %s37
      %s38 = sphi 0, %s35
      %s39 = sphi 0, %s38
      %s55 = sphi 0, %s39
      %s63 = sphi 0, %s65
      %s66 = sphi 0, %s63
      %s67 = sphi 0, %s66
      %s83 = sphi 0, %s67
      %s89 = sphi 0, %s91
      %s92 = sphi 0, %s89
      %s93 = sphi 0, %s92
      %s109 = sphi 0, %s93
      %s115 = sphi 0, %s117
      %s118 = sphi 0, %s115
      %s119 = sphi 0, %s118
      %s135 = sphi 0, %s119
      %s141 = sphi 0, %s143
      %s144 = sphi 0, %s141
      %s145 = sphi 0, %s144
      %s161 = sphi 0, %s145
    $region4: #{substance_detection_forward.6} parent=1 // loop_header_branch
      %16 = sbr.rel (%p14) target = $region8
    $region5: #{substance_detection_forward.6} parent=1 // loop_body
      %s18 = ssub.s32 %s13, 1
      %s19 = ssub.s32 %s13, 2
      %s26 = sadd.s32 1, %s21
      %p27 = scmp.ge.s32.totalorder %s26, 16
      %s28 = scalar_select %p27, 0, %s26
      %s29 = sadd.s32 1, %s20
      %s30 = scalar_select %p27, %s29, %s20
      %p31 = scmp.ge.s32.totalorder %s30, 2
      %s32 = scalar_select %p31, 0, %s30
      %s33 = ssub.s32 %s21, %s28
      %p34 = scmp.eq.s32.totalorder %s33, 0
      %s36 = sadd.s32 %s35, 1
      %s37 = scalar_select %p34, %s35, %s36
      %p40 = pneg %p34
      %p41 = scmp.eq.s32.totalorder %s13, 31
      %p42 = por %p40, %p41
      %p43 = scmp.ne.s32.totalorder %s35, %s38
      %p44 = scmp.eq.s32.totalorder %s13, 0
      %p45 = por %p43, %p44
      %p46 = scmp.ne.s32.totalorder %s35, %s38
      %p47 = scmp.eq.s32.totalorder %s18, 31
      %p48 = por %p46, %p47
      %p49 = scmp.ne.s32.totalorder %s38, %s39
      %p50 = scmp.eq.s32.totalorder %s18, 0
      %p51 = por %p49, %p50
      %p52 = scmp.ne.s32.totalorder %s38, %s39
      %p53 = scmp.eq.s32.totalorder %s19, 31
      %p54 = por %p52, %p53
      %p56 = scmp.ne.s32.totalorder %s39, %s55
      %p57 = scmp.eq.s32.totalorder %s19, 0
      %p58 = por %p56, %p57
      %s59 = ssub.s32 %s21, %s28
      %s60 = ssub.s32 %s20, %s32
      %s61 = sor.u32 %s59, %s60
      %p62 = scmp.eq.s32.totalorder %s61, 0
      %s64 = sadd.s32 %s63, 1
      %s65 = scalar_select %p62, %s63, %s64
      %p68 = pneg %p62
      %p69 = scmp.eq.s32.totalorder %s13, 31
      %p70 = por %p68, %p69
      %p71 = scmp.ne.s32.totalorder %s63, %s66
      %p72 = scmp.eq.s32.totalorder %s13, 0
      %p73 = por %p71, %p72
      %p74 = scmp.ne.s32.totalorder %s63, %s66
      %p75 = scmp.eq.s32.totalorder %s18, 31
      %p76 = por %p74, %p75
      %p77 = scmp.ne.s32.totalorder %s66, %s67
      %p78 = scmp.eq.s32.totalorder %s18, 0
      %p79 = por %p77, %p78
      %p80 = scmp.ne.s32.totalorder %s66, %s67
      %p81 = scmp.eq.s32.totalorder %s19, 31
      %p82 = por %p80, %p81
      %p84 = scmp.ne.s32.totalorder %s67, %s83
      %p85 = scmp.eq.s32.totalorder %s19, 0
      %p86 = por %p84, %p85
      %s87 = ssub.s32 %s20, %s32
      %p88 = scmp.eq.s32.totalorder %s87, 0
      %s90 = sadd.s32 %s89, 1
      %s91 = scalar_select %p88, %s89, %s90
      %p94 = pneg %p88
      %p95 = scmp.eq.s32.totalorder %s13, 31
      %p96 = por %p94, %p95
      %p97 = scmp.ne.s32.totalorder %s89, %s92
      %p98 = scmp.eq.s32.totalorder %s13, 0
      %p99 = por %p97, %p98
      %p100 = scmp.ne.s32.totalorder %s89, %s92
      %p101 = scmp.eq.s32.totalorder %s18, 31
      %p102 = por %p100, %p101
      %p103 = scmp.ne.s32.totalorder %s92, %s93
      %p104 = scmp.eq.s32.totalorder %s18, 0
      %p105 = por %p103, %p104
      %p106 = scmp.ne.s32.totalorder %s92, %s93
      %p107 = scmp.eq.s32.totalorder %s19, 31
      %p108 = por %p106, %p107
      %p110 = scmp.ne.s32.totalorder %s93, %s109
      %p111 = scmp.eq.s32.totalorder %s19, 0
      %p112 = por %p110, %p111
      %s113 = ssub.s32 %s20, %s32
      %p114 = scmp.eq.s32.totalorder %s113, 0
      %s116 = sadd.s32 %s115, 1
      %s117 = scalar_select %p114, %s115, %s116
      %p120 = pneg %p114
      %p121 = scmp.eq.s32.totalorder %s13, 31
      %p122 = por %p120, %p121
      %p123 = scmp.ne.s32.totalorder %s115, %s118
      %p124 = scmp.eq.s32.totalorder %s13, 0
      %p125 = por %p123, %p124
      %p126 = scmp.ne.s32.totalorder %s115, %s118
      %p127 = scmp.eq.s32.totalorder %s18, 31
      %p128 = por %p126, %p127
      %p129 = scmp.ne.s32.totalorder %s118, %s119
      %p130 = scmp.eq.s32.totalorder %s18, 0
      %p131 = por %p129, %p130
      %p132 = scmp.ne.s32.totalorder %s118, %s119
      %p133 = scmp.eq.s32.totalorder %s19, 31
      %p134 = por %p132, %p133
      %p136 = scmp.ne.s32.totalorder %s119, %s135
      %p137 = scmp.eq.s32.totalorder %s19, 0
      %p138 = por %p136, %p137
      %s139 = ssub.s32 %s20, %s32
      %p140 = scmp.eq.s32.totalorder %s139, 0
      %s142 = sadd.s32 %s141, 1
      %s143 = scalar_select %p140, %s141, %s142
      %p146 = pneg %p140
      %p147 = scmp.eq.s32.totalorder %s13, 31
      %p148 = por %p146, %p147
      %p149 = scmp.ne.s32.totalorder %s141, %s144
      %p150 = scmp.eq.s32.totalorder %s13, 0
      %p151 = por %p149, %p150
      %p152 = scmp.ne.s32.totalorder %s141, %s144
      %p153 = scmp.eq.s32.totalorder %s18, 31
      %p154 = por %p152, %p153
      %p155 = scmp.ne.s32.totalorder %s144, %s145
      %p156 = scmp.eq.s32.totalorder %s18, 0
      %p157 = por %p155, %p156
      %p158 = scmp.ne.s32.totalorder %s144, %s145
      %p159 = scmp.eq.s32.totalorder %s19, 31
      %p160 = por %p158, %p159
      %p162 = scmp.ne.s32.totalorder %s145, %s161
      %p163 = scmp.eq.s32.totalorder %s19, 0
      %p164 = por %p162, %p163
      %p165 = scmp.le.s32.totalorder 1, %s13
      %p166 = scmp.lt.s32.totalorder %s13, 33
      %p167 = pnand %p165, %p166
      %p168 = pneg %p167
      // Predicated region
      $region9: #{substance_detection_forward.6} parent=5 // pred_check
        _
      $region10: #{substance_detection_forward.6} parent=5 // pred_check_branch
        %170 = sbr.rel (%p167) target = $region12
      $region11: #{substance_detection_forward.6} parent=5 // pred_region
        %s171 = ssub.s32 %s13, 1
      $region12: #{substance_detection_forward.6} parent=5 // pred_fallthru
        _
      %p172 = scmp.lt.s32.totalorder %s13, 32
      // Predicated region
      $region13: #{substance_detection_forward.6} parent=5 // pred_check
        %p173 = pneg %p172
      $region14: #{substance_detection_forward.6} parent=5 // pred_check_branch
        %175 = sbr.rel (%p173) target = $region16
      $region15: #{substance_detection_forward.6} parent=5 // pred_region
        // Predicated region
        $region17: #{substance_detection_forward.6} parent=15 // pred_check
          %p176 = pneg %p45
        $region18: #{substance_detection_forward.6} parent=15 // pred_check_branch
          %178 = sbr.rel (%p176) target = $region20
        $region19: #{substance_detection_forward.6} parent=15 // pred_region
          %s179 = smul.u32 256, %s21
          %p180 = scmp.lt.s32.totalorder %s179, 4095
          %s181 = scalar_select %p180, %s179, 4095
          %s182 = scalar_lea.vmem %s0, %s181
          %s183 = smul.u32 256, %s21
        $region20: #{substance_detection_forward.6} parent=15 // pred_fallthru
          _
        // Predicated region
        $region21: #{substance_detection_forward.6} parent=15 // pred_check
          %p184 = pneg %p73
        $region22: #{substance_detection_forward.6} parent=15 // pred_check_branch
          %186 = sbr.rel (%p184) target = $region24
        $region23: #{substance_detection_forward.6} parent=15 // pred_region
          %s187 = sand.u32 %s63, 1
          %s188 = scalar_lea.sflag [#allocation4], %s187
          %s189 = sand.u32 %s63, 1
          %s190 = smul.addr %s189, 16384
          %s191 = scalar_lea.vmem [#allocation3], %s190
          %s192 = smul.u32 1024, %s21
          %s193 = smul.u32 2, %s20
          %s195 = ssub.s32 262144, 262144
          %196 = vsyncadd %s188, %s195
          %s197 = smul.addr %s192, 4
          %s198 = sadd.s32 %s193, %s197
          %s199 = smul.addr %s198, 128
          %s200 = scalar_lea.hbm %s1, %s199
          %s201 = sshll.u32 %s191, 4
          %s202 = int_to_ptr.vmem [resolvable:$true] %s201
          %207 = dma.hbm_to_vmem [thread:$0]  %s200, 262144, %s202, %s188, 512, 256, 16
        $region24: #{substance_detection_forward.6} parent=15 // pred_fallthru
          _
        // Predicated region
        $region25: #{substance_detection_forward.6} parent=15 // pred_check
          %p208 = pneg %p99
        $region26: #{substance_detection_forward.6} parent=15 // pred_check_branch
          %210 = sbr.rel (%p208) target = $region28
        $region27: #{substance_detection_forward.6} parent=15 // pred_region
          %s211 = smul.u32 2, %s20
          %p212 = scmp.lt.s32.totalorder %s211, 3
          %s213 = scalar_select %p212, %s211, 3
          %s214 = scalar_lea.vmem %s2, %s213
          %s215 = smul.u32 2, %s20
        $region28: #{substance_detection_forward.6} parent=15 // pred_fallthru
          _
        // Predicated region
        $region29: #{substance_detection_forward.6} parent=15 // pred_check
          %p216 = pneg %p125
        $region30: #{substance_detection_forward.6} parent=15 // pred_check_branch
          %218 = sbr.rel (%p216) target = $region32
        $region31: #{substance_detection_forward.6} parent=15 // pred_region
          %s219 = smul.u32 2, %s20
          %p220 = scmp.lt.s32.totalorder %s219, 3
          %s221 = scalar_select %p220, %s219, 3
          %s222 = scalar_lea.vmem %s3, %s221
          %s223 = smul.u32 2, %s20
        $region32: #{substance_detection_forward.6} parent=15 // pred_fallthru
          _
      $region16: #{substance_detection_forward.6} parent=5 // pred_fallthru
        _
      %p224 = scmp.le.s32.totalorder 1, %s13
      %p225 = scmp.lt.s32.totalorder %s13, 33
      %p226 = pnand %p224, %p225
      %p227 = pneg %p226
      // Predicated region
      $region33: #{substance_detection_forward.6} parent=5 // pred_check
        _
      $region34: #{substance_detection_forward.6} parent=5 // pred_check_branch
        %229 = sbr.rel (%p226) target = $region36
      $region35: #{substance_detection_forward.6} parent=5 // pred_region
        %s230 = ssub.s32 %s13, 1
        %s231 = sand.u32 %s66, 1
        %s232 = scalar_lea.sflag [#allocation4], %s231
        %s233 = sand.u32 %s66, 1
        %s234 = smul.addr %s233, 16384
        %s235 = scalar_lea.vmem [#allocation3], %s234
        // Predicated region
        $region37: #{substance_detection_forward.6} parent=35 // pred_check
          %p236 = pneg %p79
        $region38: #{substance_detection_forward.6} parent=35 // pred_check_branch
          %238 = sbr.rel (%p236) target = $region40
        $region39: #{substance_detection_forward.6} parent=35 // pred_region
          %239 = dma.done %s232, 262144
        $region40: #{substance_detection_forward.6} parent=35 // pred_fallthru
          _
        %s240 = smul.u32 256, %s23
        %p241 = scmp.lt.s32.totalorder %s240, 4095
        %s242 = scalar_select %p241, %s240, 4095
        %s243 = scalar_lea.vmem %s0, %s242
        %p244 = pneg %p51
        %p245 = pneg %p48
        %s246 = sand.u32 %s66, 1
        %s247 = scalar_lea.sflag [#allocation4], %s246
        %s248 = sand.u32 %s66, 1
        %s249 = smul.addr %s248, 16384
        %s250 = scalar_lea.vmem [#allocation3], %s249
        %p251 = pneg %p79
        %p252 = pneg %p76
        %s253 = smul.u32 2, %s22
        %p254 = scmp.lt.s32.totalorder %s253, 3
        %s255 = scalar_select %p254, %s253, 3
        %s256 = scalar_lea.vmem %s2, %s255
        %p257 = pneg %p105
        %p258 = pneg %p102
        %s259 = smul.u32 2, %s22
        %p260 = scmp.lt.s32.totalorder %s259, 3
        %s261 = scalar_select %p260, %s259, 3
        %s262 = scalar_lea.vmem %s3, %s261
        %p263 = pneg %p131
        %p264 = pneg %p128
        %p265 = pneg %p157
        %p266 = pneg %p154
        %s267 = smul.u32 2, %s22
        %p268 = scmp.lt.s32.totalorder %s267, 3
        %s269 = scalar_select %p268, %s267, 3
        %s270 = smul.addr %s269, 2
        %s271 = scalar_lea.vmem %s4, %s270
        %s272 = smul.u32 256, %s23
        %p273 = scmp.lt.s32.totalorder %s272, 4095
        %s274 = scalar_select %p273, %s272, 4095
        %s275 = scalar_lea.vmem %s0, %s274
        %s276 = smul.u32 256, %s23
        %s277 = smul.u32 1024, %s23
        %s278 = smul.u32 2, %s22
        %s279 = smul.u32 2, %s22
        %p280 = scmp.lt.s32.totalorder %s279, 3
        %s281 = scalar_select %p280, %s279, 3
        %s282 = scalar_lea.vmem %s2, %s281
        %s283 = smul.u32 2, %s22
        %s284 = smul.u32 2, %s22
        %p285 = scmp.lt.s32.totalorder %s284, 3
        %s286 = scalar_select %p285, %s284, 3
        %s287 = scalar_lea.vmem %s3, %s286
        %s288 = smul.u32 2, %s22
        %s289 = smul.u32 2, %s22
        %p290 = scmp.lt.s32.totalorder %s289, 3
        %s291 = scalar_select %p290, %s289, 3
        %s292 = smul.addr %s291, 2
        %s293 = scalar_lea.vmem %s4, %s292
        %s294 = smul.u32 2, %s22
        %p295 = scmp.eq.s32.totalorder %s23, 0
        // Predicated region
        $region41: #{substance_detection_forward.6} parent=35 // pred_check
          %p296 = pneg %p295
        $region42: #{substance_detection_forward.6} parent=35 // pred_check_branch
          %298 = sbr.rel (%p296) target = $region44
        $region43: #{substance_detection_forward.6} parent=35 // pred_region
          %299 = vst [vmem:[#allocation2] sm:$0xf] 0.0
        $region44: #{substance_detection_forward.6} parent=35 // pred_fallthru
          _
        %v300 = vld [vmem:[#allocation2] sm:$0xf]
        loop: start=0, step=1, limit=8
        $region45: #{substance_detection_forward.6} parent=35 // loop_pre_header
          _
        $region46: #{substance_detection_forward.6} parent=35 // loop_header
          %s302 = sphi 0, %s306
          %p303 = scmp.ge.s32.totalorder %s302, 8
          %v307 = vphi 0.0, %v1978
          %v308 = vphi 0.0, %v1979
        $region47: #{substance_detection_forward.6} parent=35 // loop_header_branch
          %305 = sbr.rel (%p303) target = $region51
        $region48: #{substance_detection_forward.6} parent=35 // loop_body
          %s309 = smul.u32 %s302, 4096
          %s310 = sshra.s32 %s309, 5
          %s311 = sand.u32 %s309, 31
          %s312 = smul.u32 %s310, 2
          %s313 = smul.addr %s312, 8
          %s314 = scalar_lea.vmem %s235, %s313 [#allocation3]
          %v315 = vld [vmem:[%s314] sm:$0xff]
          %v316 = vld [vmem:[%s314 + $0x8] sm:$0xff]
          %v317 = vld [vmem:[%s314 + $0x10] sm:$0xff]
          %v318 = vld [vmem:[%s314 + $0x18] sm:$0xff]
          %v319 = vld [vmem:[%s314 + $0x20] sm:$0xff]
          %v320 = vld [vmem:[%s314 + $0x28] sm:$0xff]
          %v321 = vld [vmem:[%s314 + $0x30] sm:$0xff]
          %v322 = vld [vmem:[%s314 + $0x38] sm:$0xff]
          %v323 = vld [vmem:[%s314 + $0x40] sm:$0xff]
          %v324 = vld [vmem:[%s314 + $0x48] sm:$0xff]
          %v325 = vld [vmem:[%s314 + $0x50] sm:$0xff]
          %v326 = vld [vmem:[%s314 + $0x58] sm:$0xff]
          %v327 = vld [vmem:[%s314 + $0x60] sm:$0xff]
          %v328 = vld [vmem:[%s314 + $0x68] sm:$0xff]
          %v329 = vld [vmem:[%s314 + $0x70] sm:$0xff]
          %v330 = vld [vmem:[%s314 + $0x78] sm:$0xff]
          %v331 = vld [vmem:[%s314 + $0x80] sm:$0xff]
          %v332 = vld [vmem:[%s314 + $0x88] sm:$0xff]
          %v333 = vld [vmem:[%s314 + $0x90] sm:$0xff]
          %v334 = vld [vmem:[%s314 + $0x98] sm:$0xff]
          %v335 = vld [vmem:[%s314 + $0xa0] sm:$0xff]
          %v336 = vld [vmem:[%s314 + $0xa8] sm:$0xff]
          %v337 = vld [vmem:[%s314 + $0xb0] sm:$0xff]
          %v338 = vld [vmem:[%s314 + $0xb8] sm:$0xff]
          %v339 = vld [vmem:[%s314 + $0xc0] sm:$0xff]
          %v340 = vld [vmem:[%s314 + $0xc8] sm:$0xff]
          %v341 = vld [vmem:[%s314 + $0xd0] sm:$0xff]
          %v342 = vld [vmem:[%s314 + $0xd8] sm:$0xff]
          %v343 = vld [vmem:[%s314 + $0xe0] sm:$0xff]
          %v344 = vld [vmem:[%s314 + $0xe8] sm:$0xff]
          %v345 = vld [vmem:[%s314 + $0xf0] sm:$0xff]
          %v346 = vld [vmem:[%s314 + $0xf8] sm:$0xff]
          %v347 = vld [vmem:[%s314 + $0x100] sm:$0xff]
          %v348 = vld [vmem:[%s314 + $0x108] sm:$0xff]
          %v349 = vld [vmem:[%s314 + $0x110] sm:$0xff]
          %v350 = vld [vmem:[%s314 + $0x118] sm:$0xff]
          %v351 = vld [vmem:[%s314 + $0x120] sm:$0xff]
          %v352 = vld [vmem:[%s314 + $0x128] sm:$0xff]
          %v353 = vld [vmem:[%s314 + $0x130] sm:$0xff]
          %v354 = vld [vmem:[%s314 + $0x138] sm:$0xff]
          %v355 = vld [vmem:[%s314 + $0x140] sm:$0xff]
          %v356 = vld [vmem:[%s314 + $0x148] sm:$0xff]
          %v357 = vld [vmem:[%s314 + $0x150] sm:$0xff]
          %v358 = vld [vmem:[%s314 + $0x158] sm:$0xff]
          %v359 = vld [vmem:[%s314 + $0x160] sm:$0xff]
          %v360 = vld [vmem:[%s314 + $0x168] sm:$0xff]
          %v361 = vld [vmem:[%s314 + $0x170] sm:$0xff]
          %v362 = vld [vmem:[%s314 + $0x178] sm:$0xff]
          %v363 = vld [vmem:[%s314 + $0x180] sm:$0xff]
          %v364 = vld [vmem:[%s314 + $0x188] sm:$0xff]
          %v365 = vld [vmem:[%s314 + $0x190] sm:$0xff]
          %v366 = vld [vmem:[%s314 + $0x198] sm:$0xff]
          %v367 = vld [vmem:[%s314 + $0x1a0] sm:$0xff]
          %v368 = vld [vmem:[%s314 + $0x1a8] sm:$0xff]
          %v369 = vld [vmem:[%s314 + $0x1b0] sm:$0xff]
          %v370 = vld [vmem:[%s314 + $0x1b8] sm:$0xff]
          %v371 = vld [vmem:[%s314 + $0x1c0] sm:$0xff]
          %v372 = vld [vmem:[%s314 + $0x1c8] sm:$0xff]
          %v373 = vld [vmem:[%s314 + $0x1d0] sm:$0xff]
          %v374 = vld [vmem:[%s314 + $0x1d8] sm:$0xff]
          %v375 = vld [vmem:[%s314 + $0x1e0] sm:$0xff]
          %v376 = vld [vmem:[%s314 + $0x1e8] sm:$0xff]
          %v377 = vld [vmem:[%s314 + $0x1f0] sm:$0xff]
          %v378 = vld [vmem:[%s314 + $0x1f8] sm:$0xff]
          %v379 = vld [vmem:[%s314 + $0x200] sm:$0xff]
          %v380 = vld [vmem:[%s314 + $0x208] sm:$0xff]
          %v381 = vld [vmem:[%s314 + $0x210] sm:$0xff]
          %v382 = vld [vmem:[%s314 + $0x218] sm:$0xff]
          %v383 = vld [vmem:[%s314 + $0x220] sm:$0xff]
          %v384 = vld [vmem:[%s314 + $0x228] sm:$0xff]
          %v385 = vld [vmem:[%s314 + $0x230] sm:$0xff]
          %v386 = vld [vmem:[%s314 + $0x238] sm:$0xff]
          %v387 = vld [vmem:[%s314 + $0x240] sm:$0xff]
          %v388 = vld [vmem:[%s314 + $0x248] sm:$0xff]
          %v389 = vld [vmem:[%s314 + $0x250] sm:$0xff]
          %v390 = vld [vmem:[%s314 + $0x258] sm:$0xff]
          %v391 = vld [vmem:[%s314 + $0x260] sm:$0xff]
          %v392 = vld [vmem:[%s314 + $0x268] sm:$0xff]
          %v393 = vld [vmem:[%s314 + $0x270] sm:$0xff]
          %v394 = vld [vmem:[%s314 + $0x278] sm:$0xff]
          %v395 = vld [vmem:[%s314 + $0x280] sm:$0xff]
          %v396 = vld [vmem:[%s314 + $0x288] sm:$0xff]
          %v397 = vld [vmem:[%s314 + $0x290] sm:$0xff]
          %v398 = vld [vmem:[%s314 + $0x298] sm:$0xff]
          %v399 = vld [vmem:[%s314 + $0x2a0] sm:$0xff]
          %v400 = vld [vmem:[%s314 + $0x2a8] sm:$0xff]
          %v401 = vld [vmem:[%s314 + $0x2b0] sm:$0xff]
          %v402 = vld [vmem:[%s314 + $0x2b8] sm:$0xff]
          %v403 = vld [vmem:[%s314 + $0x2c0] sm:$0xff]
          %v404 = vld [vmem:[%s314 + $0x2c8] sm:$0xff]
          %v405 = vld [vmem:[%s314 + $0x2d0] sm:$0xff]
          %v406 = vld [vmem:[%s314 + $0x2d8] sm:$0xff]
          %v407 = vld [vmem:[%s314 + $0x2e0] sm:$0xff]
          %v408 = vld [vmem:[%s314 + $0x2e8] sm:$0xff]
          %v409 = vld [vmem:[%s314 + $0x2f0] sm:$0xff]
          %v410 = vld [vmem:[%s314 + $0x2f8] sm:$0xff]
          %v411 = vld [vmem:[%s314 + $0x300] sm:$0xff]
          %v412 = vld [vmem:[%s314 + $0x308] sm:$0xff]
          %v413 = vld [vmem:[%s314 + $0x310] sm:$0xff]
          %v414 = vld [vmem:[%s314 + $0x318] sm:$0xff]
          %v415 = vld [vmem:[%s314 + $0x320] sm:$0xff]
          %v416 = vld [vmem:[%s314 + $0x328] sm:$0xff]
          %v417 = vld [vmem:[%s314 + $0x330] sm:$0xff]
          %v418 = vld [vmem:[%s314 + $0x338] sm:$0xff]
          %v419 = vld [vmem:[%s314 + $0x340] sm:$0xff]
          %v420 = vld [vmem:[%s314 + $0x348] sm:$0xff]
          %v421 = vld [vmem:[%s314 + $0x350] sm:$0xff]
          %v422 = vld [vmem:[%s314 + $0x358] sm:$0xff]
          %v423 = vld [vmem:[%s314 + $0x360] sm:$0xff]
          %v424 = vld [vmem:[%s314 + $0x368] sm:$0xff]
          %v425 = vld [vmem:[%s314 + $0x370] sm:$0xff]
          %v426 = vld [vmem:[%s314 + $0x378] sm:$0xff]
          %v427 = vld [vmem:[%s314 + $0x380] sm:$0xff]
          %v428 = vld [vmem:[%s314 + $0x388] sm:$0xff]
          %v429 = vld [vmem:[%s314 + $0x390] sm:$0xff]
          %v430 = vld [vmem:[%s314 + $0x398] sm:$0xff]
          %v431 = vld [vmem:[%s314 + $0x3a0] sm:$0xff]
          %v432 = vld [vmem:[%s314 + $0x3a8] sm:$0xff]
          %v433 = vld [vmem:[%s314 + $0x3b0] sm:$0xff]
          %v434 = vld [vmem:[%s314 + $0x3b8] sm:$0xff]
          %v435 = vld [vmem:[%s314 + $0x3c0] sm:$0xff]
          %v436 = vld [vmem:[%s314 + $0x3c8] sm:$0xff]
          %v437 = vld [vmem:[%s314 + $0x3d0] sm:$0xff]
          %v438 = vld [vmem:[%s314 + $0x3d8] sm:$0xff]
          %v439 = vld [vmem:[%s314 + $0x3e0] sm:$0xff]
          %v440 = vld [vmem:[%s314 + $0x3e8] sm:$0xff]
          %v441 = vld [vmem:[%s314 + $0x3f0] sm:$0xff]
          %v442 = vld [vmem:[%s314 + $0x3f8] sm:$0xff]
          %v443 = vld [vmem:[%s314 + $0x400] sm:$0xff]
          %v444 = vld [vmem:[%s314 + $0x408] sm:$0xff]
          %v445 = vld [vmem:[%s314 + $0x410] sm:$0xff]
          %v446 = vld [vmem:[%s314 + $0x418] sm:$0xff]
          %v447 = vld [vmem:[%s314 + $0x420] sm:$0xff]
          %v448 = vld [vmem:[%s314 + $0x428] sm:$0xff]
          %v449 = vld [vmem:[%s314 + $0x430] sm:$0xff]
          %v450 = vld [vmem:[%s314 + $0x438] sm:$0xff]
          %v451 = vld [vmem:[%s314 + $0x440] sm:$0xff]
          %v452 = vld [vmem:[%s314 + $0x448] sm:$0xff]
          %v453 = vld [vmem:[%s314 + $0x450] sm:$0xff]
          %v454 = vld [vmem:[%s314 + $0x458] sm:$0xff]
          %v455 = vld [vmem:[%s314 + $0x460] sm:$0xff]
          %v456 = vld [vmem:[%s314 + $0x468] sm:$0xff]
          %v457 = vld [vmem:[%s314 + $0x470] sm:$0xff]
          %v458 = vld [vmem:[%s314 + $0x478] sm:$0xff]
          %v459 = vld [vmem:[%s314 + $0x480] sm:$0xff]
          %v460 = vld [vmem:[%s314 + $0x488] sm:$0xff]
          %v461 = vld [vmem:[%s314 + $0x490] sm:$0xff]
          %v462 = vld [vmem:[%s314 + $0x498] sm:$0xff]
          %v463 = vld [vmem:[%s314 + $0x4a0] sm:$0xff]
          %v464 = vld [vmem:[%s314 + $0x4a8] sm:$0xff]
          %v465 = vld [vmem:[%s314 + $0x4b0] sm:$0xff]
          %v466 = vld [vmem:[%s314 + $0x4b8] sm:$0xff]
          %v467 = vld [vmem:[%s314 + $0x4c0] sm:$0xff]
          %v468 = vld [vmem:[%s314 + $0x4c8] sm:$0xff]
          %v469 = vld [vmem:[%s314 + $0x4d0] sm:$0xff]
          %v470 = vld [vmem:[%s314 + $0x4d8] sm:$0xff]
          %v471 = vld [vmem:[%s314 + $0x4e0] sm:$0xff]
          %v472 = vld [vmem:[%s314 + $0x4e8] sm:$0xff]
          %v473 = vld [vmem:[%s314 + $0x4f0] sm:$0xff]
          %v474 = vld [vmem:[%s314 + $0x4f8] sm:$0xff]
          %v475 = vld [vmem:[%s314 + $0x500] sm:$0xff]
          %v476 = vld [vmem:[%s314 + $0x508] sm:$0xff]
          %v477 = vld [vmem:[%s314 + $0x510] sm:$0xff]
          %v478 = vld [vmem:[%s314 + $0x518] sm:$0xff]
          %v479 = vld [vmem:[%s314 + $0x520] sm:$0xff]
          %v480 = vld [vmem:[%s314 + $0x528] sm:$0xff]
          %v481 = vld [vmem:[%s314 + $0x530] sm:$0xff]
          %v482 = vld [vmem:[%s314 + $0x538] sm:$0xff]
          %v483 = vld [vmem:[%s314 + $0x540] sm:$0xff]
          %v484 = vld [vmem:[%s314 + $0x548] sm:$0xff]
          %v485 = vld [vmem:[%s314 + $0x550] sm:$0xff]
          %v486 = vld [vmem:[%s314 + $0x558] sm:$0xff]
          %v487 = vld [vmem:[%s314 + $0x560] sm:$0xff]
          %v488 = vld [vmem:[%s314 + $0x568] sm:$0xff]
          %v489 = vld [vmem:[%s314 + $0x570] sm:$0xff]
          %v490 = vld [vmem:[%s314 + $0x578] sm:$0xff]
          %v491 = vld [vmem:[%s314 + $0x580] sm:$0xff]
          %v492 = vld [vmem:[%s314 + $0x588] sm:$0xff]
          %v493 = vld [vmem:[%s314 + $0x590] sm:$0xff]
          %v494 = vld [vmem:[%s314 + $0x598] sm:$0xff]
          %v495 = vld [vmem:[%s314 + $0x5a0] sm:$0xff]
          %v496 = vld [vmem:[%s314 + $0x5a8] sm:$0xff]
          %v497 = vld [vmem:[%s314 + $0x5b0] sm:$0xff]
          %v498 = vld [vmem:[%s314 + $0x5b8] sm:$0xff]
          %v499 = vld [vmem:[%s314 + $0x5c0] sm:$0xff]
          %v500 = vld [vmem:[%s314 + $0x5c8] sm:$0xff]
          %v501 = vld [vmem:[%s314 + $0x5d0] sm:$0xff]
          %v502 = vld [vmem:[%s314 + $0x5d8] sm:$0xff]
          %v503 = vld [vmem:[%s314 + $0x5e0] sm:$0xff]
          %v504 = vld [vmem:[%s314 + $0x5e8] sm:$0xff]
          %v505 = vld [vmem:[%s314 + $0x5f0] sm:$0xff]
          %v506 = vld [vmem:[%s314 + $0x5f8] sm:$0xff]
          %v507 = vld [vmem:[%s314 + $0x600] sm:$0xff]
          %v508 = vld [vmem:[%s314 + $0x608] sm:$0xff]
          %v509 = vld [vmem:[%s314 + $0x610] sm:$0xff]
          %v510 = vld [vmem:[%s314 + $0x618] sm:$0xff]
          %v511 = vld [vmem:[%s314 + $0x620] sm:$0xff]
          %v512 = vld [vmem:[%s314 + $0x628] sm:$0xff]
          %v513 = vld [vmem:[%s314 + $0x630] sm:$0xff]
          %v514 = vld [vmem:[%s314 + $0x638] sm:$0xff]
          %v515 = vld [vmem:[%s314 + $0x640] sm:$0xff]
          %v516 = vld [vmem:[%s314 + $0x648] sm:$0xff]
          %v517 = vld [vmem:[%s314 + $0x650] sm:$0xff]
          %v518 = vld [vmem:[%s314 + $0x658] sm:$0xff]
          %v519 = vld [vmem:[%s314 + $0x660] sm:$0xff]
          %v520 = vld [vmem:[%s314 + $0x668] sm:$0xff]
          %v521 = vld [vmem:[%s314 + $0x670] sm:$0xff]
          %v522 = vld [vmem:[%s314 + $0x678] sm:$0xff]
          %v523 = vld [vmem:[%s314 + $0x680] sm:$0xff]
          %v524 = vld [vmem:[%s314 + $0x688] sm:$0xff]
          %v525 = vld [vmem:[%s314 + $0x690] sm:$0xff]
          %v526 = vld [vmem:[%s314 + $0x698] sm:$0xff]
          %v527 = vld [vmem:[%s314 + $0x6a0] sm:$0xff]
          %v528 = vld [vmem:[%s314 + $0x6a8] sm:$0xff]
          %v529 = vld [vmem:[%s314 + $0x6b0] sm:$0xff]
          %v530 = vld [vmem:[%s314 + $0x6b8] sm:$0xff]
          %v531 = vld [vmem:[%s314 + $0x6c0] sm:$0xff]
          %v532 = vld [vmem:[%s314 + $0x6c8] sm:$0xff]
          %v533 = vld [vmem:[%s314 + $0x6d0] sm:$0xff]
          %v534 = vld [vmem:[%s314 + $0x6d8] sm:$0xff]
          %v535 = vld [vmem:[%s314 + $0x6e0] sm:$0xff]
          %v536 = vld [vmem:[%s314 + $0x6e8] sm:$0xff]
          %v537 = vld [vmem:[%s314 + $0x6f0] sm:$0xff]
          %v538 = vld [vmem:[%s314 + $0x6f8] sm:$0xff]
          %v539 = vld [vmem:[%s314 + $0x700] sm:$0xff]
          %v540 = vld [vmem:[%s314 + $0x708] sm:$0xff]
          %v541 = vld [vmem:[%s314 + $0x710] sm:$0xff]
          %v542 = vld [vmem:[%s314 + $0x718] sm:$0xff]
          %v543 = vld [vmem:[%s314 + $0x720] sm:$0xff]
          %v544 = vld [vmem:[%s314 + $0x728] sm:$0xff]
          %v545 = vld [vmem:[%s314 + $0x730] sm:$0xff]
          %v546 = vld [vmem:[%s314 + $0x738] sm:$0xff]
          %v547 = vld [vmem:[%s314 + $0x740] sm:$0xff]
          %v548 = vld [vmem:[%s314 + $0x748] sm:$0xff]
          %v549 = vld [vmem:[%s314 + $0x750] sm:$0xff]
          %v550 = vld [vmem:[%s314 + $0x758] sm:$0xff]
          %v551 = vld [vmem:[%s314 + $0x760] sm:$0xff]
          %v552 = vld [vmem:[%s314 + $0x768] sm:$0xff]
          %v553 = vld [vmem:[%s314 + $0x770] sm:$0xff]
          %v554 = vld [vmem:[%s314 + $0x778] sm:$0xff]
          %v555 = vld [vmem:[%s314 + $0x780] sm:$0xff]
          %v556 = vld [vmem:[%s314 + $0x788] sm:$0xff]
          %v557 = vld [vmem:[%s314 + $0x790] sm:$0xff]
          %v558 = vld [vmem:[%s314 + $0x798] sm:$0xff]
          %v559 = vld [vmem:[%s314 + $0x7a0] sm:$0xff]
          %v560 = vld [vmem:[%s314 + $0x7a8] sm:$0xff]
          %v561 = vld [vmem:[%s314 + $0x7b0] sm:$0xff]
          %v562 = vld [vmem:[%s314 + $0x7b8] sm:$0xff]
          %v563 = vld [vmem:[%s314 + $0x7c0] sm:$0xff]
          %v564 = vld [vmem:[%s314 + $0x7c8] sm:$0xff]
          %v565 = vld [vmem:[%s314 + $0x7d0] sm:$0xff]
          %v566 = vld [vmem:[%s314 + $0x7d8] sm:$0xff]
          %v567 = vld [vmem:[%s314 + $0x7e0] sm:$0xff]
          %v568 = vld [vmem:[%s314 + $0x7e8] sm:$0xff]
          %v569 = vld [vmem:[%s314 + $0x7f0] sm:$0xff]
          %v570 = vld [vmem:[%s314 + $0x7f8] sm:$0xff]
          %v571 = vunpack.c.l.s8.bf16 %v315
          %v572 = vunpack.c.l.s8.bf16 %v316
          %v573 = vunpack.c.h.s8.bf16 %v315
          %v574 = vunpack.c.h.s8.bf16 %v316
          %v575 = vunpack.c.l.s8.bf16 %v317
          %v576 = vunpack.c.l.s8.bf16 %v318
          %v577 = vunpack.c.h.s8.bf16 %v317
          %v578 = vunpack.c.h.s8.bf16 %v318
          %v579 = vunpack.c.l.s8.bf16 %v319
          %v580 = vunpack.c.l.s8.bf16 %v320
          %v581 = vunpack.c.h.s8.bf16 %v319
          %v582 = vunpack.c.h.s8.bf16 %v320
          %v583 = vunpack.c.l.s8.bf16 %v321
          %v584 = vunpack.c.l.s8.bf16 %v322
          %v585 = vunpack.c.h.s8.bf16 %v321
          %v586 = vunpack.c.h.s8.bf16 %v322
          %v587 = vunpack.c.l.s8.bf16 %v323
          %v588 = vunpack.c.l.s8.bf16 %v324
          %v589 = vunpack.c.h.s8.bf16 %v323
          %v590 = vunpack.c.h.s8.bf16 %v324
          %v591 = vunpack.c.l.s8.bf16 %v325
          %v592 = vunpack.c.l.s8.bf16 %v326
          %v593 = vunpack.c.h.s8.bf16 %v325
          %v594 = vunpack.c.h.s8.bf16 %v326
          %v595 = vunpack.c.l.s8.bf16 %v327
          %v596 = vunpack.c.l.s8.bf16 %v328
          %v597 = vunpack.c.h.s8.bf16 %v327
          %v598 = vunpack.c.h.s8.bf16 %v328
          %v599 = vunpack.c.l.s8.bf16 %v329
          %v600 = vunpack.c.l.s8.bf16 %v330
          %v601 = vunpack.c.h.s8.bf16 %v329
          %v602 = vunpack.c.h.s8.bf16 %v330
          %v603 = vunpack.c.l.s8.bf16 %v331
          %v604 = vunpack.c.l.s8.bf16 %v332
          %v605 = vunpack.c.h.s8.bf16 %v331
          %v606 = vunpack.c.h.s8.bf16 %v332
          %v607 = vunpack.c.l.s8.bf16 %v333
          %v608 = vunpack.c.l.s8.bf16 %v334
          %v609 = vunpack.c.h.s8.bf16 %v333
          %v610 = vunpack.c.h.s8.bf16 %v334
          %v611 = vunpack.c.l.s8.bf16 %v335
          %v612 = vunpack.c.l.s8.bf16 %v336
          %v613 = vunpack.c.h.s8.bf16 %v335
          %v614 = vunpack.c.h.s8.bf16 %v336
          %v615 = vunpack.c.l.s8.bf16 %v337
          %v616 = vunpack.c.l.s8.bf16 %v338
          %v617 = vunpack.c.h.s8.bf16 %v337
          %v618 = vunpack.c.h.s8.bf16 %v338
          %v619 = vunpack.c.l.s8.bf16 %v339
          %v620 = vunpack.c.l.s8.bf16 %v340
          %v621 = vunpack.c.h.s8.bf16 %v339
          %v622 = vunpack.c.h.s8.bf16 %v340
          %v623 = vunpack.c.l.s8.bf16 %v341
          %v624 = vunpack.c.l.s8.bf16 %v342
          %v625 = vunpack.c.h.s8.bf16 %v341
          %v626 = vunpack.c.h.s8.bf16 %v342
          %v627 = vunpack.c.l.s8.bf16 %v343
          %v628 = vunpack.c.l.s8.bf16 %v344
          %v629 = vunpack.c.h.s8.bf16 %v343
          %v630 = vunpack.c.h.s8.bf16 %v344
          %v631 = vunpack.c.l.s8.bf16 %v345
          %v632 = vunpack.c.l.s8.bf16 %v346
          %v633 = vunpack.c.h.s8.bf16 %v345
          %v634 = vunpack.c.h.s8.bf16 %v346
          %v635 = vunpack.c.l.s8.bf16 %v347
          %v636 = vunpack.c.l.s8.bf16 %v348
          %v637 = vunpack.c.h.s8.bf16 %v347
          %v638 = vunpack.c.h.s8.bf16 %v348
          %v639 = vunpack.c.l.s8.bf16 %v349
          %v640 = vunpack.c.l.s8.bf16 %v350
          %v641 = vunpack.c.h.s8.bf16 %v349
          %v642 = vunpack.c.h.s8.bf16 %v350
          %v643 = vunpack.c.l.s8.bf16 %v351
          %v644 = vunpack.c.l.s8.bf16 %v352
          %v645 = vunpack.c.h.s8.bf16 %v351
          %v646 = vunpack.c.h.s8.bf16 %v352
          %v647 = vunpack.c.l.s8.bf16 %v353
          %v648 = vunpack.c.l.s8.bf16 %v354
          %v649 = vunpack.c.h.s8.bf16 %v353
          %v650 = vunpack.c.h.s8.bf16 %v354
          %v651 = vunpack.c.l.s8.bf16 %v355
          %v652 = vunpack.c.l.s8.bf16 %v356
          %v653 = vunpack.c.h.s8.bf16 %v355
          %v654 = vunpack.c.h.s8.bf16 %v356
          %v655 = vunpack.c.l.s8.bf16 %v357
          %v656 = vunpack.c.l.s8.bf16 %v358
          %v657 = vunpack.c.h.s8.bf16 %v357
          %v658 = vunpack.c.h.s8.bf16 %v358
          %v659 = vunpack.c.l.s8.bf16 %v359
          %v660 = vunpack.c.l.s8.bf16 %v360
          %v661 = vunpack.c.h.s8.bf16 %v359
          %v662 = vunpack.c.h.s8.bf16 %v360
          %v663 = vunpack.c.l.s8.bf16 %v361
          %v664 = vunpack.c.l.s8.bf16 %v362
          %v665 = vunpack.c.h.s8.bf16 %v361
          %v666 = vunpack.c.h.s8.bf16 %v362
          %v667 = vunpack.c.l.s8.bf16 %v363
          %v668 = vunpack.c.l.s8.bf16 %v364
          %v669 = vunpack.c.h.s8.bf16 %v363
          %v670 = vunpack.c.h.s8.bf16 %v364
          %v671 = vunpack.c.l.s8.bf16 %v365
          %v672 = vunpack.c.l.s8.bf16 %v366
          %v673 = vunpack.c.h.s8.bf16 %v365
          %v674 = vunpack.c.h.s8.bf16 %v366
          %v675 = vunpack.c.l.s8.bf16 %v367
          %v676 = vunpack.c.l.s8.bf16 %v368
          %v677 = vunpack.c.h.s8.bf16 %v367
          %v678 = vunpack.c.h.s8.bf16 %v368
          %v679 = vunpack.c.l.s8.bf16 %v369
          %v680 = vunpack.c.l.s8.bf16 %v370
          %v681 = vunpack.c.h.s8.bf16 %v369
          %v682 = vunpack.c.h.s8.bf16 %v370
          %v683 = vunpack.c.l.s8.bf16 %v371
          %v684 = vunpack.c.l.s8.bf16 %v372
          %v685 = vunpack.c.h.s8.bf16 %v371
          %v686 = vunpack.c.h.s8.bf16 %v372
          %v687 = vunpack.c.l.s8.bf16 %v373
          %v688 = vunpack.c.l.s8.bf16 %v374
          %v689 = vunpack.c.h.s8.bf16 %v373
          %v690 = vunpack.c.h.s8.bf16 %v374
          %v691 = vunpack.c.l.s8.bf16 %v375
          %v692 = vunpack.c.l.s8.bf16 %v376
          %v693 = vunpack.c.h.s8.bf16 %v375
          %v694 = vunpack.c.h.s8.bf16 %v376
          %v695 = vunpack.c.l.s8.bf16 %v377
          %v696 = vunpack.c.l.s8.bf16 %v378
          %v697 = vunpack.c.h.s8.bf16 %v377
          %v698 = vunpack.c.h.s8.bf16 %v378
          %v699 = vunpack.c.l.s8.bf16 %v379
          %v700 = vunpack.c.l.s8.bf16 %v380
          %v701 = vunpack.c.h.s8.bf16 %v379
          %v702 = vunpack.c.h.s8.bf16 %v380
          %v703 = vunpack.c.l.s8.bf16 %v381
          %v704 = vunpack.c.l.s8.bf16 %v382
          %v705 = vunpack.c.h.s8.bf16 %v381
          %v706 = vunpack.c.h.s8.bf16 %v382
          %v707 = vunpack.c.l.s8.bf16 %v383
          %v708 = vunpack.c.l.s8.bf16 %v384
          %v709 = vunpack.c.h.s8.bf16 %v383
          %v710 = vunpack.c.h.s8.bf16 %v384
          %v711 = vunpack.c.l.s8.bf16 %v385
          %v712 = vunpack.c.l.s8.bf16 %v386
          %v713 = vunpack.c.h.s8.bf16 %v385
          %v714 = vunpack.c.h.s8.bf16 %v386
          %v715 = vunpack.c.l.s8.bf16 %v387
          %v716 = vunpack.c.l.s8.bf16 %v388
          %v717 = vunpack.c.h.s8.bf16 %v387
          %v718 = vunpack.c.h.s8.bf16 %v388
          %v719 = vunpack.c.l.s8.bf16 %v389
          %v720 = vunpack.c.l.s8.bf16 %v390
          %v721 = vunpack.c.h.s8.bf16 %v389
          %v722 = vunpack.c.h.s8.bf16 %v390
          %v723 = vunpack.c.l.s8.bf16 %v391
          %v724 = vunpack.c.l.s8.bf16 %v392
          %v725 = vunpack.c.h.s8.bf16 %v391
          %v726 = vunpack.c.h.s8.bf16 %v392
          %v727 = vunpack.c.l.s8.bf16 %v393
          %v728 = vunpack.c.l.s8.bf16 %v394
          %v729 = vunpack.c.h.s8.bf16 %v393
          %v730 = vunpack.c.h.s8.bf16 %v394
          %v731 = vunpack.c.l.s8.bf16 %v395
          %v732 = vunpack.c.l.s8.bf16 %v396
          %v733 = vunpack.c.h.s8.bf16 %v395
          %v734 = vunpack.c.h.s8.bf16 %v396
          %v735 = vunpack.c.l.s8.bf16 %v397
          %v736 = vunpack.c.l.s8.bf16 %v398
          %v737 = vunpack.c.h.s8.bf16 %v397
          %v738 = vunpack.c.h.s8.bf16 %v398
          %v739 = vunpack.c.l.s8.bf16 %v399
          %v740 = vunpack.c.l.s8.bf16 %v400
          %v741 = vunpack.c.h.s8.bf16 %v399
          %v742 = vunpack.c.h.s8.bf16 %v400
          %v743 = vunpack.c.l.s8.bf16 %v401
          %v744 = vunpack.c.l.s8.bf16 %v402
          %v745 = vunpack.c.h.s8.bf16 %v401
          %v746 = vunpack.c.h.s8.bf16 %v402
          %v747 = vunpack.c.l.s8.bf16 %v403
          %v748 = vunpack.c.l.s8.bf16 %v404
          %v749 = vunpack.c.h.s8.bf16 %v403
          %v750 = vunpack.c.h.s8.bf16 %v404
          %v751 = vunpack.c.l.s8.bf16 %v405
          %v752 = vunpack.c.l.s8.bf16 %v406
          %v753 = vunpack.c.h.s8.bf16 %v405
          %v754 = vunpack.c.h.s8.bf16 %v406
          %v755 = vunpack.c.l.s8.bf16 %v407
          %v756 = vunpack.c.l.s8.bf16 %v408
          %v757 = vunpack.c.h.s8.bf16 %v407
          %v758 = vunpack.c.h.s8.bf16 %v408
          %v759 = vunpack.c.l.s8.bf16 %v409
          %v760 = vunpack.c.l.s8.bf16 %v410
          %v761 = vunpack.c.h.s8.bf16 %v409
          %v762 = vunpack.c.h.s8.bf16 %v410
          %v763 = vunpack.c.l.s8.bf16 %v411
          %v764 = vunpack.c.l.s8.bf16 %v412
          %v765 = vunpack.c.h.s8.bf16 %v411
          %v766 = vunpack.c.h.s8.bf16 %v412
          %v767 = vunpack.c.l.s8.bf16 %v413
          %v768 = vunpack.c.l.s8.bf16 %v414
          %v769 = vunpack.c.h.s8.bf16 %v413
          %v770 = vunpack.c.h.s8.bf16 %v414
          %v771 = vunpack.c.l.s8.bf16 %v415
          %v772 = vunpack.c.l.s8.bf16 %v416
          %v773 = vunpack.c.h.s8.bf16 %v415
          %v774 = vunpack.c.h.s8.bf16 %v416
          %v775 = vunpack.c.l.s8.bf16 %v417
          %v776 = vunpack.c.l.s8.bf16 %v418
          %v777 = vunpack.c.h.s8.bf16 %v417
          %v778 = vunpack.c.h.s8.bf16 %v418
          %v779 = vunpack.c.l.s8.bf16 %v419
          %v780 = vunpack.c.l.s8.bf16 %v420
          %v781 = vunpack.c.h.s8.bf16 %v419
          %v782 = vunpack.c.h.s8.bf16 %v420
          %v783 = vunpack.c.l.s8.bf16 %v421
          %v784 = vunpack.c.l.s8.bf16 %v422
          %v785 = vunpack.c.h.s8.bf16 %v421
          %v786 = vunpack.c.h.s8.bf16 %v422
          %v787 = vunpack.c.l.s8.bf16 %v423
          %v788 = vunpack.c.l.s8.bf16 %v424
          %v789 = vunpack.c.h.s8.bf16 %v423
          %v790 = vunpack.c.h.s8.bf16 %v424
          %v791 = vunpack.c.l.s8.bf16 %v425
          %v792 = vunpack.c.l.s8.bf16 %v426
          %v793 = vunpack.c.h.s8.bf16 %v425
          %v794 = vunpack.c.h.s8.bf16 %v426
          %v795 = vunpack.c.l.s8.bf16 %v427
          %v796 = vunpack.c.l.s8.bf16 %v428
          %v797 = vunpack.c.h.s8.bf16 %v427
          %v798 = vunpack.c.h.s8.bf16 %v428
          %v799 = vunpack.c.l.s8.bf16 %v429
          %v800 = vunpack.c.l.s8.bf16 %v430
          %v801 = vunpack.c.h.s8.bf16 %v429
          %v802 = vunpack.c.h.s8.bf16 %v430
          %v803 = vunpack.c.l.s8.bf16 %v431
          %v804 = vunpack.c.l.s8.bf16 %v432
          %v805 = vunpack.c.h.s8.bf16 %v431
          %v806 = vunpack.c.h.s8.bf16 %v432
          %v807 = vunpack.c.l.s8.bf16 %v433
          %v808 = vunpack.c.l.s8.bf16 %v434
          %v809 = vunpack.c.h.s8.bf16 %v433
          %v810 = vunpack.c.h.s8.bf16 %v434
          %v811 = vunpack.c.l.s8.bf16 %v435
          %v812 = vunpack.c.l.s8.bf16 %v436
          %v813 = vunpack.c.h.s8.bf16 %v435
          %v814 = vunpack.c.h.s8.bf16 %v436
          %v815 = vunpack.c.l.s8.bf16 %v437
          %v816 = vunpack.c.l.s8.bf16 %v438
          %v817 = vunpack.c.h.s8.bf16 %v437
          %v818 = vunpack.c.h.s8.bf16 %v438
          %v819 = vunpack.c.l.s8.bf16 %v439
          %v820 = vunpack.c.l.s8.bf16 %v440
          %v821 = vunpack.c.h.s8.bf16 %v439
          %v822 = vunpack.c.h.s8.bf16 %v440
          %v823 = vunpack.c.l.s8.bf16 %v441
          %v824 = vunpack.c.l.s8.bf16 %v442
          %v825 = vunpack.c.h.s8.bf16 %v441
          %v826 = vunpack.c.h.s8.bf16 %v442
          %v827 = vunpack.c.l.s8.bf16 %v443
          %v828 = vunpack.c.l.s8.bf16 %v444
          %v829 = vunpack.c.h.s8.bf16 %v443
          %v830 = vunpack.c.h.s8.bf16 %v444
          %v831 = vunpack.c.l.s8.bf16 %v445
          %v832 = vunpack.c.l.s8.bf16 %v446
          %v833 = vunpack.c.h.s8.bf16 %v445
          %v834 = vunpack.c.h.s8.bf16 %v446
          %v835 = vunpack.c.l.s8.bf16 %v447
          %v836 = vunpack.c.l.s8.bf16 %v448
          %v837 = vunpack.c.h.s8.bf16 %v447
          %v838 = vunpack.c.h.s8.bf16 %v448
          %v839 = vunpack.c.l.s8.bf16 %v449
          %v840 = vunpack.c.l.s8.bf16 %v450
          %v841 = vunpack.c.h.s8.bf16 %v449
          %v842 = vunpack.c.h.s8.bf16 %v450
          %v843 = vunpack.c.l.s8.bf16 %v451
          %v844 = vunpack.c.l.s8.bf16 %v452
          %v845 = vunpack.c.h.s8.bf16 %v451
          %v846 = vunpack.c.h.s8.bf16 %v452
          %v847 = vunpack.c.l.s8.bf16 %v453
          %v848 = vunpack.c.l.s8.bf16 %v454
          %v849 = vunpack.c.h.s8.bf16 %v453
          %v850 = vunpack.c.h.s8.bf16 %v454
          %v851 = vunpack.c.l.s8.bf16 %v455
          %v852 = vunpack.c.l.s8.bf16 %v456
          %v853 = vunpack.c.h.s8.bf16 %v455
          %v854 = vunpack.c.h.s8.bf16 %v456
          %v855 = vunpack.c.l.s8.bf16 %v457
          %v856 = vunpack.c.l.s8.bf16 %v458
          %v857 = vunpack.c.h.s8.bf16 %v457
          %v858 = vunpack.c.h.s8.bf16 %v458
          %v859 = vunpack.c.l.s8.bf16 %v459
          %v860 = vunpack.c.l.s8.bf16 %v460
          %v861 = vunpack.c.h.s8.bf16 %v459
          %v862 = vunpack.c.h.s8.bf16 %v460
          %v863 = vunpack.c.l.s8.bf16 %v461
          %v864 = vunpack.c.l.s8.bf16 %v462
          %v865 = vunpack.c.h.s8.bf16 %v461
          %v866 = vunpack.c.h.s8.bf16 %v462
          %v867 = vunpack.c.l.s8.bf16 %v463
          %v868 = vunpack.c.l.s8.bf16 %v464
          %v869 = vunpack.c.h.s8.bf16 %v463
          %v870 = vunpack.c.h.s8.bf16 %v464
          %v871 = vunpack.c.l.s8.bf16 %v465
          %v872 = vunpack.c.l.s8.bf16 %v466
          %v873 = vunpack.c.h.s8.bf16 %v465
          %v874 = vunpack.c.h.s8.bf16 %v466
          %v875 = vunpack.c.l.s8.bf16 %v467
          %v876 = vunpack.c.l.s8.bf16 %v468
          %v877 = vunpack.c.h.s8.bf16 %v467
          %v878 = vunpack.c.h.s8.bf16 %v468
          %v879 = vunpack.c.l.s8.bf16 %v469
          %v880 = vunpack.c.l.s8.bf16 %v470
          %v881 = vunpack.c.h.s8.bf16 %v469
          %v882 = vunpack.c.h.s8.bf16 %v470
          %v883 = vunpack.c.l.s8.bf16 %v471
          %v884 = vunpack.c.l.s8.bf16 %v472
          %v885 = vunpack.c.h.s8.bf16 %v471
          %v886 = vunpack.c.h.s8.bf16 %v472
          %v887 = vunpack.c.l.s8.bf16 %v473
          %v888 = vunpack.c.l.s8.bf16 %v474
          %v889 = vunpack.c.h.s8.bf16 %v473
          %v890 = vunpack.c.h.s8.bf16 %v474
          %v891 = vunpack.c.l.s8.bf16 %v475
          %v892 = vunpack.c.l.s8.bf16 %v476
          %v893 = vunpack.c.h.s8.bf16 %v475
          %v894 = vunpack.c.h.s8.bf16 %v476
          %v895 = vunpack.c.l.s8.bf16 %v477
          %v896 = vunpack.c.l.s8.bf16 %v478
          %v897 = vunpack.c.h.s8.bf16 %v477
          %v898 = vunpack.c.h.s8.bf16 %v478
          %v899 = vunpack.c.l.s8.bf16 %v479
          %v900 = vunpack.c.l.s8.bf16 %v480
          %v901 = vunpack.c.h.s8.bf16 %v479
          %v902 = vunpack.c.h.s8.bf16 %v480
          %v903 = vunpack.c.l.s8.bf16 %v481
          %v904 = vunpack.c.l.s8.bf16 %v482
          %v905 = vunpack.c.h.s8.bf16 %v481
          %v906 = vunpack.c.h.s8.bf16 %v482
          %v907 = vunpack.c.l.s8.bf16 %v483
          %v908 = vunpack.c.l.s8.bf16 %v484
          %v909 = vunpack.c.h.s8.bf16 %v483
          %v910 = vunpack.c.h.s8.bf16 %v484
          %v911 = vunpack.c.l.s8.bf16 %v485
          %v912 = vunpack.c.l.s8.bf16 %v486
          %v913 = vunpack.c.h.s8.bf16 %v485
          %v914 = vunpack.c.h.s8.bf16 %v486
          %v915 = vunpack.c.l.s8.bf16 %v487
          %v916 = vunpack.c.l.s8.bf16 %v488
          %v917 = vunpack.c.h.s8.bf16 %v487
          %v918 = vunpack.c.h.s8.bf16 %v488
          %v919 = vunpack.c.l.s8.bf16 %v489
          %v920 = vunpack.c.l.s8.bf16 %v490
          %v921 = vunpack.c.h.s8.bf16 %v489
          %v922 = vunpack.c.h.s8.bf16 %v490
          %v923 = vunpack.c.l.s8.bf16 %v491
          %v924 = vunpack.c.l.s8.bf16 %v492
          %v925 = vunpack.c.h.s8.bf16 %v491
          %v926 = vunpack.c.h.s8.bf16 %v492
          %v927 = vunpack.c.l.s8.bf16 %v493
          %v928 = vunpack.c.l.s8.bf16 %v494
          %v929 = vunpack.c.h.s8.bf16 %v493
          %v930 = vunpack.c.h.s8.bf16 %v494
          %v931 = vunpack.c.l.s8.bf16 %v495
          %v932 = vunpack.c.l.s8.bf16 %v496
          %v933 = vunpack.c.h.s8.bf16 %v495
          %v934 = vunpack.c.h.s8.bf16 %v496
          %v935 = vunpack.c.l.s8.bf16 %v497
          %v936 = vunpack.c.l.s8.bf16 %v498
          %v937 = vunpack.c.h.s8.bf16 %v497
          %v938 = vunpack.c.h.s8.bf16 %v498
          %v939 = vunpack.c.l.s8.bf16 %v499
          %v940 = vunpack.c.l.s8.bf16 %v500
          %v941 = vunpack.c.h.s8.bf16 %v499
          %v942 = vunpack.c.h.s8.bf16 %v500
          %v943 = vunpack.c.l.s8.bf16 %v501
          %v944 = vunpack.c.l.s8.bf16 %v502
          %v945 = vunpack.c.h.s8.bf16 %v501
          %v946 = vunpack.c.h.s8.bf16 %v502
          %v947 = vunpack.c.l.s8.bf16 %v503
          %v948 = vunpack.c.l.s8.bf16 %v504
          %v949 = vunpack.c.h.s8.bf16 %v503
          %v950 = vunpack.c.h.s8.bf16 %v504
          %v951 = vunpack.c.l.s8.bf16 %v505
          %v952 = vunpack.c.l.s8.bf16 %v506
          %v953 = vunpack.c.h.s8.bf16 %v505
          %v954 = vunpack.c.h.s8.bf16 %v506
          %v955 = vunpack.c.l.s8.bf16 %v507
          %v956 = vunpack.c.l.s8.bf16 %v508
          %v957 = vunpack.c.h.s8.bf16 %v507
          %v958 = vunpack.c.h.s8.bf16 %v508
          %v959 = vunpack.c.l.s8.bf16 %v509
          %v960 = vunpack.c.l.s8.bf16 %v510
          %v961 = vunpack.c.h.s8.bf16 %v509
          %v962 = vunpack.c.h.s8.bf16 %v510
          %v963 = vunpack.c.l.s8.bf16 %v511
          %v964 = vunpack.c.l.s8.bf16 %v512
          %v965 = vunpack.c.h.s8.bf16 %v511
          %v966 = vunpack.c.h.s8.bf16 %v512
          %v967 = vunpack.c.l.s8.bf16 %v513
          %v968 = vunpack.c.l.s8.bf16 %v514
          %v969 = vunpack.c.h.s8.bf16 %v513
          %v970 = vunpack.c.h.s8.bf16 %v514
          %v971 = vunpack.c.l.s8.bf16 %v515
          %v972 = vunpack.c.l.s8.bf16 %v516
          %v973 = vunpack.c.h.s8.bf16 %v515
          %v974 = vunpack.c.h.s8.bf16 %v516
          %v975 = vunpack.c.l.s8.bf16 %v517
          %v976 = vunpack.c.l.s8.bf16 %v518
          %v977 = vunpack.c.h.s8.bf16 %v517
          %v978 = vunpack.c.h.s8.bf16 %v518
          %v979 = vunpack.c.l.s8.bf16 %v519
          %v980 = vunpack.c.l.s8.bf16 %v520
          %v981 = vunpack.c.h.s8.bf16 %v519
          %v982 = vunpack.c.h.s8.bf16 %v520
          %v983 = vunpack.c.l.s8.bf16 %v521
          %v984 = vunpack.c.l.s8.bf16 %v522
          %v985 = vunpack.c.h.s8.bf16 %v521
          %v986 = vunpack.c.h.s8.bf16 %v522
          %v987 = vunpack.c.l.s8.bf16 %v523
          %v988 = vunpack.c.l.s8.bf16 %v524
          %v989 = vunpack.c.h.s8.bf16 %v523
          %v990 = vunpack.c.h.s8.bf16 %v524
          %v991 = vunpack.c.l.s8.bf16 %v525
          %v992 = vunpack.c.l.s8.bf16 %v526
          %v993 = vunpack.c.h.s8.bf16 %v525
          %v994 = vunpack.c.h.s8.bf16 %v526
          %v995 = vunpack.c.l.s8.bf16 %v527
          %v996 = vunpack.c.l.s8.bf16 %v528
          %v997 = vunpack.c.h.s8.bf16 %v527
          %v998 = vunpack.c.h.s8.bf16 %v528
          %v999 = vunpack.c.l.s8.bf16 %v529
          %v1000 = vunpack.c.l.s8.bf16 %v530
          %v1001 = vunpack.c.h.s8.bf16 %v529
          %v1002 = vunpack.c.h.s8.bf16 %v530
          %v1003 = vunpack.c.l.s8.bf16 %v531
          %v1004 = vunpack.c.l.s8.bf16 %v532
          %v1005 = vunpack.c.h.s8.bf16 %v531
          %v1006 = vunpack.c.h.s8.bf16 %v532
          %v1007 = vunpack.c.l.s8.bf16 %v533
          %v1008 = vunpack.c.l.s8.bf16 %v534
          %v1009 = vunpack.c.h.s8.bf16 %v533
          %v1010 = vunpack.c.h.s8.bf16 %v534
          %v1011 = vunpack.c.l.s8.bf16 %v535
          %v1012 = vunpack.c.l.s8.bf16 %v536
          %v1013 = vunpack.c.h.s8.bf16 %v535
          %v1014 = vunpack.c.h.s8.bf16 %v536
          %v1015 = vunpack.c.l.s8.bf16 %v537
          %v1016 = vunpack.c.l.s8.bf16 %v538
          %v1017 = vunpack.c.h.s8.bf16 %v537
          %v1018 = vunpack.c.h.s8.bf16 %v538
          %v1019 = vunpack.c.l.s8.bf16 %v539
          %v1020 = vunpack.c.l.s8.bf16 %v540
          %v1021 = vunpack.c.h.s8.bf16 %v539
          %v1022 = vunpack.c.h.s8.bf16 %v540
          %v1023 = vunpack.c.l.s8.bf16 %v541
          %v1024 = vunpack.c.l.s8.bf16 %v542
          %v1025 = vunpack.c.h.s8.bf16 %v541
          %v1026 = vunpack.c.h.s8.bf16 %v542
          %v1027 = vunpack.c.l.s8.bf16 %v543
          %v1028 = vunpack.c.l.s8.bf16 %v544
          %v1029 = vunpack.c.h.s8.bf16 %v543
          %v1030 = vunpack.c.h.s8.bf16 %v544
          %v1031 = vunpack.c.l.s8.bf16 %v545
          %v1032 = vunpack.c.l.s8.bf16 %v546
          %v1033 = vunpack.c.h.s8.bf16 %v545
          %v1034 = vunpack.c.h.s8.bf16 %v546
          %v1035 = vunpack.c.l.s8.bf16 %v547
          %v1036 = vunpack.c.l.s8.bf16 %v548
          %v1037 = vunpack.c.h.s8.bf16 %v547
          %v1038 = vunpack.c.h.s8.bf16 %v548
          %v1039 = vunpack.c.l.s8.bf16 %v549
          %v1040 = vunpack.c.l.s8.bf16 %v550
          %v1041 = vunpack.c.h.s8.bf16 %v549
          %v1042 = vunpack.c.h.s8.bf16 %v550
          %v1043 = vunpack.c.l.s8.bf16 %v551
          %v1044 = vunpack.c.l.s8.bf16 %v552
          %v1045 = vunpack.c.h.s8.bf16 %v551
          %v1046 = vunpack.c.h.s8.bf16 %v552
          %v1047 = vunpack.c.l.s8.bf16 %v553
          %v1048 = vunpack.c.l.s8.bf16 %v554
          %v1049 = vunpack.c.h.s8.bf16 %v553
          %v1050 = vunpack.c.h.s8.bf16 %v554
          %v1051 = vunpack.c.l.s8.bf16 %v555
          %v1052 = vunpack.c.l.s8.bf16 %v556
          %v1053 = vunpack.c.h.s8.bf16 %v555
          %v1054 = vunpack.c.h.s8.bf16 %v556
          %v1055 = vunpack.c.l.s8.bf16 %v557
          %v1056 = vunpack.c.l.s8.bf16 %v558
          %v1057 = vunpack.c.h.s8.bf16 %v557
          %v1058 = vunpack.c.h.s8.bf16 %v558
          %v1059 = vunpack.c.l.s8.bf16 %v559
          %v1060 = vunpack.c.l.s8.bf16 %v560
          %v1061 = vunpack.c.h.s8.bf16 %v559
          %v1062 = vunpack.c.h.s8.bf16 %v560
          %v1063 = vunpack.c.l.s8.bf16 %v561
          %v1064 = vunpack.c.l.s8.bf16 %v562
          %v1065 = vunpack.c.h.s8.bf16 %v561
          %v1066 = vunpack.c.h.s8.bf16 %v562
          %v1067 = vunpack.c.l.s8.bf16 %v563
          %v1068 = vunpack.c.l.s8.bf16 %v564
          %v1069 = vunpack.c.h.s8.bf16 %v563
          %v1070 = vunpack.c.h.s8.bf16 %v564
          %v1071 = vunpack.c.l.s8.bf16 %v565
          %v1072 = vunpack.c.l.s8.bf16 %v566
          %v1073 = vunpack.c.h.s8.bf16 %v565
          %v1074 = vunpack.c.h.s8.bf16 %v566
          %v1075 = vunpack.c.l.s8.bf16 %v567
          %v1076 = vunpack.c.l.s8.bf16 %v568
          %v1077 = vunpack.c.h.s8.bf16 %v567
          %v1078 = vunpack.c.h.s8.bf16 %v568
          %v1079 = vunpack.c.l.s8.bf16 %v569
          %v1080 = vunpack.c.l.s8.bf16 %v570
          %v1081 = vunpack.c.h.s8.bf16 %v569
          %v1082 = vunpack.c.h.s8.bf16 %v570
          %s1083 = sshra.s32 %s309, 7
          %s1084 = sand.u32 %s309, 127
          %s1085 = scalar_lea.vmem %s275, %s1083
          %v1086 = vld [vmem:[%s1085] sm:$0xff]
          %v1087 = vld [vmem:[%s1085 + $0x8] sm:$0xff]
          %v1088 = vld [vmem:[%s1085 + $0x10] sm:$0xff]
          %v1089 = vld [vmem:[%s1085 + $0x18] sm:$0xff]
          %v1094 = vcombine.high %v1086, %v1086
          %v1096 = vunpack.c.l.s4 1966171168
          %v1097 = vunpack.c.0.s8 %v1096
          %v1098 = vlaneseq
          %v1099 = vshrl.u32 %v1098, 7
          %v1100 = vsub.s32 %v1097, %v1099
          %v1101 = vrot.slane %v1086, %v1100
          %v1103 = vunpack.c.l.s4 1966171168
          %v1104 = vunpack.c.0.s8 %v1103
          %v1105 = vlaneseq
          %v1106 = vshrl.u32 %v1105, 7
          %v1107 = vsub.s32 %v1104, %v1106
          %v1108 = vrot.slane %v1094, %v1107
          %v1109 = vcombine.high %v1101, %v1101
          %v1110 = vcombine.high %v1108, %v1108
          %v1112 = vunpack.c.l.s4 1966171168
          %v1113 = vunpack.c.0.s8 %v1112
          %v1114 = vlaneseq
          %v1115 = vshrl.u32 %v1114, 7
          %v1116 = vsub.s32 %v1113, %v1115
          %v1117 = vrot.slane %v1101, %v1116
          %v1119 = vunpack.c.l.s4 1966171168
          %v1120 = vunpack.c.0.s8 %v1119
          %v1121 = vlaneseq
          %v1122 = vshrl.u32 %v1121, 7
          %v1123 = vsub.s32 %v1120, %v1122
          %v1124 = vrot.slane %v1108, %v1123
          %v1126 = vunpack.c.l.s4 1966171168
          %v1127 = vunpack.c.0.s8 %v1126
          %v1128 = vlaneseq
          %v1129 = vshrl.u32 %v1128, 7
          %v1130 = vsub.s32 %v1127, %v1129
          %v1131 = vrot.slane %v1109, %v1130
          %v1133 = vunpack.c.l.s4 1966171168
          %v1134 = vunpack.c.0.s8 %v1133
          %v1135 = vlaneseq
          %v1136 = vshrl.u32 %v1135, 7
          %v1137 = vsub.s32 %v1134, %v1136
          %v1138 = vrot.slane %v1110, %v1137
          %v1139 = vcombine.high %v1117, %v1117
          %v1140 = vcombine.high %v1124, %v1124
          %v1141 = vcombine.high %v1131, %v1131
          %v1142 = vcombine.high %v1138, %v1138
          %v1143 = vcombine.high %v1087, %v1087
          %v1145 = vunpack.c.l.s4 1966171168
          %v1146 = vunpack.c.0.s8 %v1145
          %v1147 = vlaneseq
          %v1148 = vshrl.u32 %v1147, 7
          %v1149 = vsub.s32 %v1146, %v1148
          %v1150 = vrot.slane %v1087, %v1149
          %v1152 = vunpack.c.l.s4 1966171168
          %v1153 = vunpack.c.0.s8 %v1152
          %v1154 = vlaneseq
          %v1155 = vshrl.u32 %v1154, 7
          %v1156 = vsub.s32 %v1153, %v1155
          %v1157 = vrot.slane %v1143, %v1156
          %v1158 = vcombine.high %v1150, %v1150
          %v1159 = vcombine.high %v1157, %v1157
          %v1161 = vunpack.c.l.s4 1966171168
          %v1162 = vunpack.c.0.s8 %v1161
          %v1163 = vlaneseq
          %v1164 = vshrl.u32 %v1163, 7
          %v1165 = vsub.s32 %v1162, %v1164
          %v1166 = vrot.slane %v1150, %v1165
          %v1168 = vunpack.c.l.s4 1966171168
          %v1169 = vunpack.c.0.s8 %v1168
          %v1170 = vlaneseq
          %v1171 = vshrl.u32 %v1170, 7
          %v1172 = vsub.s32 %v1169, %v1171
          %v1173 = vrot.slane %v1157, %v1172
          %v1175 = vunpack.c.l.s4 1966171168
          %v1176 = vunpack.c.0.s8 %v1175
          %v1177 = vlaneseq
          %v1178 = vshrl.u32 %v1177, 7
          %v1179 = vsub.s32 %v1176, %v1178
          %v1180 = vrot.slane %v1158, %v1179
          %v1182 = vunpack.c.l.s4 1966171168
          %v1183 = vunpack.c.0.s8 %v1182
          %v1184 = vlaneseq
          %v1185 = vshrl.u32 %v1184, 7
          %v1186 = vsub.s32 %v1183, %v1185
          %v1187 = vrot.slane %v1159, %v1186
          %v1188 = vcombine.high %v1166, %v1166
          %v1189 = vcombine.high %v1173, %v1173
          %v1190 = vcombine.high %v1180, %v1180
          %v1191 = vcombine.high %v1187, %v1187
          %v1192 = vcombine.high %v1088, %v1088
          %v1194 = vunpack.c.l.s4 1966171168
          %v1195 = vunpack.c.0.s8 %v1194
          %v1196 = vlaneseq
          %v1197 = vshrl.u32 %v1196, 7
          %v1198 = vsub.s32 %v1195, %v1197
          %v1199 = vrot.slane %v1088, %v1198
          %v1201 = vunpack.c.l.s4 1966171168
          %v1202 = vunpack.c.0.s8 %v1201
          %v1203 = vlaneseq
          %v1204 = vshrl.u32 %v1203, 7
          %v1205 = vsub.s32 %v1202, %v1204
          %v1206 = vrot.slane %v1192, %v1205
          %v1207 = vcombine.high %v1199, %v1199
          %v1208 = vcombine.high %v1206, %v1206
          %v1210 = vunpack.c.l.s4 1966171168
          %v1211 = vunpack.c.0.s8 %v1210
          %v1212 = vlaneseq
          %v1213 = vshrl.u32 %v1212, 7
          %v1214 = vsub.s32 %v1211, %v1213
          %v1215 = vrot.slane %v1199, %v1214
          %v1217 = vunpack.c.l.s4 1966171168
          %v1218 = vunpack.c.0.s8 %v1217
          %v1219 = vlaneseq
          %v1220 = vshrl.u32 %v1219, 7
          %v1221 = vsub.s32 %v1218, %v1220
          %v1222 = vrot.slane %v1206, %v1221
          %v1224 = vunpack.c.l.s4 1966171168
          %v1225 = vunpack.c.0.s8 %v1224
          %v1226 = vlaneseq
          %v1227 = vshrl.u32 %v1226, 7
          %v1228 = vsub.s32 %v1225, %v1227
          %v1229 = vrot.slane %v1207, %v1228
          %v1231 = vunpack.c.l.s4 1966171168
          %v1232 = vunpack.c.0.s8 %v1231
          %v1233 = vlaneseq
          %v1234 = vshrl.u32 %v1233, 7
          %v1235 = vsub.s32 %v1232, %v1234
          %v1236 = vrot.slane %v1208, %v1235
          %v1237 = vcombine.high %v1215, %v1215
          %v1238 = vcombine.high %v1222, %v1222
          %v1239 = vcombine.high %v1229, %v1229
          %v1240 = vcombine.high %v1236, %v1236
          %v1241 = vcombine.high %v1089, %v1089
          %v1243 = vunpack.c.l.s4 1966171168
          %v1244 = vunpack.c.0.s8 %v1243
          %v1245 = vlaneseq
          %v1246 = vshrl.u32 %v1245, 7
          %v1247 = vsub.s32 %v1244, %v1246
          %v1248 = vrot.slane %v1089, %v1247
          %v1250 = vunpack.c.l.s4 1966171168
          %v1251 = vunpack.c.0.s8 %v1250
          %v1252 = vlaneseq
          %v1253 = vshrl.u32 %v1252, 7
          %v1254 = vsub.s32 %v1251, %v1253
          %v1255 = vrot.slane %v1241, %v1254
          %v1256 = vcombine.high %v1248, %v1248
          %v1257 = vcombine.high %v1255, %v1255
          %v1259 = vunpack.c.l.s4 1966171168
          %v1260 = vunpack.c.0.s8 %v1259
          %v1261 = vlaneseq
          %v1262 = vshrl.u32 %v1261, 7
          %v1263 = vsub.s32 %v1260, %v1262
          %v1264 = vrot.slane %v1248, %v1263
          %v1266 = vunpack.c.l.s4 1966171168
          %v1267 = vunpack.c.0.s8 %v1266
          %v1268 = vlaneseq
          %v1269 = vshrl.u32 %v1268, 7
          %v1270 = vsub.s32 %v1267, %v1269
          %v1271 = vrot.slane %v1255, %v1270
          %v1273 = vunpack.c.l.s4 1966171168
          %v1274 = vunpack.c.0.s8 %v1273
          %v1275 = vlaneseq
          %v1276 = vshrl.u32 %v1275, 7
          %v1277 = vsub.s32 %v1274, %v1276
          %v1278 = vrot.slane %v1256, %v1277
          %v1280 = vunpack.c.l.s4 1966171168
          %v1281 = vunpack.c.0.s8 %v1280
          %v1282 = vlaneseq
          %v1283 = vshrl.u32 %v1282, 7
          %v1284 = vsub.s32 %v1281, %v1283
          %v1285 = vrot.slane %v1257, %v1284
          %v1286 = vcombine.high %v1264, %v1264
          %v1287 = vcombine.high %v1271, %v1271
          %v1288 = vcombine.high %v1278, %v1278
          %v1289 = vcombine.high %v1285, %v1285
          %1322 = vmatprep.subr.bf16.mxu0 %v572
          %1323 = vmatpush1.bf16.msra.mxu0 %v571
          %1324 = vmatprep.subr.bf16.mxu0 %v574
          %1325 = vmatpush1.bf16.msra.mxu0 %v573
          %1326 = vmatprep.subr.bf16.mxu0 %v576
          %1327 = vmatpush1.bf16.msra.mxu0 %v575
          %1328 = vmatprep.subr.bf16.mxu0 %v578
          %1329 = vmatpush1.bf16.msra.mxu0 %v577
          %1330 = vmatprep.subr.bf16.mxu0 %v580
          %1331 = vmatpush1.bf16.msra.mxu0 %v579
          %1332 = vmatprep.subr.bf16.mxu0 %v582
          %1333 = vmatpush1.bf16.msra.mxu0 %v581
          %1334 = vmatprep.subr.bf16.mxu0 %v584
          %1335 = vmatpush1.bf16.msra.mxu0 %v583
          %1336 = vmatprep.subr.bf16.mxu0 %v586
          %1337 = vmatpush1.bf16.msra.mxu0 %v585
          %1338 = vmatprep.subr.bf16.mxu0 %v588
          %1339 = vmatpush1.bf16.msra.mxu0 %v587
          %1340 = vmatprep.subr.bf16.mxu0 %v590
          %1341 = vmatpush1.bf16.msra.mxu0 %v589
          %1342 = vmatprep.subr.bf16.mxu0 %v592
          %1343 = vmatpush1.bf16.msra.mxu0 %v591
          %1344 = vmatprep.subr.bf16.mxu0 %v594
          %1345 = vmatpush1.bf16.msra.mxu0 %v593
          %1346 = vmatprep.subr.bf16.mxu0 %v596
          %1347 = vmatpush1.bf16.msra.mxu0 %v595
          %1348 = vmatprep.subr.bf16.mxu0 %v598
          %1349 = vmatpush1.bf16.msra.mxu0 %v597
          %1350 = vmatprep.subr.bf16.mxu0 %v600
          %1351 = vmatpush1.bf16.msra.mxu0 %v599
          %1352 = vmatprep.subr.bf16.mxu0 %v602
          %1353 = vmatpush1.bf16.msra.mxu0 %v601
          %1354 = vmatprep.mubr.bf16.mxu0 %v1131
          %1355 = vmatmul.mubr.bf16.gmra.mrb[0].mxu0 %v1117
          %v1356 = vpop.f32.mrb[0].mxu0
          %v1357 = vadd.f32 0.0, %v1356
          %v1358 = vpop.f32.mrb[0].mxu0
          %v1359 = vadd.f32 0.0, %v1358
          %v1360 = vpop.f32.mrb[0].mxu0
          %v1361 = vpop.f32.mrb[0].mxu0
          %1362 = vdwg.mxu0
          %1363 = vmatprep.subr.bf16.mxu0 %v604
          %1364 = vmatpush1.bf16.msra.mxu0 %v603
          %1365 = vmatprep.subr.bf16.mxu0 %v606
          %1366 = vmatpush1.bf16.msra.mxu0 %v605
          %1367 = vmatprep.subr.bf16.mxu0 %v608
          %1368 = vmatpush1.bf16.msra.mxu0 %v607
          %1369 = vmatprep.subr.bf16.mxu0 %v610
          %1370 = vmatpush1.bf16.msra.mxu0 %v609
          %1371 = vmatprep.subr.bf16.mxu0 %v612
          %1372 = vmatpush1.bf16.msra.mxu0 %v611
          %1373 = vmatprep.subr.bf16.mxu0 %v614
          %1374 = vmatpush1.bf16.msra.mxu0 %v613
          %1375 = vmatprep.subr.bf16.mxu0 %v616
          %1376 = vmatpush1.bf16.msra.mxu0 %v615
          %1377 = vmatprep.subr.bf16.mxu0 %v618
          %1378 = vmatpush1.bf16.msra.mxu0 %v617
          %1379 = vmatprep.subr.bf16.mxu0 %v620
          %1380 = vmatpush1.bf16.msra.mxu0 %v619
          %1381 = vmatprep.subr.bf16.mxu0 %v622
          %1382 = vmatpush1.bf16.msra.mxu0 %v621
          %1383 = vmatprep.subr.bf16.mxu0 %v624
          %1384 = vmatpush1.bf16.msra.mxu0 %v623
          %1385 = vmatprep.subr.bf16.mxu0 %v626
          %1386 = vmatpush1.bf16.msra.mxu0 %v625
          %1387 = vmatprep.subr.bf16.mxu0 %v628
          %1388 = vmatpush1.bf16.msra.mxu0 %v627
          %1389 = vmatprep.subr.bf16.mxu0 %v630
          %1390 = vmatpush1.bf16.msra.mxu0 %v629
          %1391 = vmatprep.subr.bf16.mxu0 %v632
          %1392 = vmatpush1.bf16.msra.mxu0 %v631
          %1393 = vmatprep.subr.bf16.mxu0 %v634
          %1394 = vmatpush1.bf16.msra.mxu0 %v633
          %1395 = vmatprep.mubr.bf16.mxu0 %v1141
          %1396 = vmatmul.mubr.bf16.gmra.mrb[0].mxu0 %v1139
          %v1397 = vpop.f32.mrb[0].mxu0
          %v1398 = vadd.f32 %v1357, %v1397
          %v1399 = vpop.f32.mrb[0].mxu0
          %v1400 = vadd.f32 %v1359, %v1399
          %v1401 = vpop.f32.mrb[0].mxu0
          %v1402 = vpop.f32.mrb[0].mxu0
          %1403 = vdwg.mxu0
          %1404 = vmatprep.subr.bf16.mxu0 %v636
          %1405 = vmatpush1.bf16.msra.mxu0 %v635
          %1406 = vmatprep.subr.bf16.mxu0 %v638
          %1407 = vmatpush1.bf16.msra.mxu0 %v637
          %1408 = vmatprep.subr.bf16.mxu0 %v640
          %1409 = vmatpush1.bf16.msra.mxu0 %v639
          %1410 = vmatprep.subr.bf16.mxu0 %v642
          %1411 = vmatpush1.bf16.msra.mxu0 %v641
          %1412 = vmatprep.subr.bf16.mxu0 %v644
          %1413 = vmatpush1.bf16.msra.mxu0 %v643
          %1414 = vmatprep.subr.bf16.mxu0 %v646
          %1415 = vmatpush1.bf16.msra.mxu0 %v645
          %1416 = vmatprep.subr.bf16.mxu0 %v648
          %1417 = vmatpush1.bf16.msra.mxu0 %v647
          %1418 = vmatprep.subr.bf16.mxu0 %v650
          %1419 = vmatpush1.bf16.msra.mxu0 %v649
          %1420 = vmatprep.subr.bf16.mxu0 %v652
          %1421 = vmatpush1.bf16.msra.mxu0 %v651
          %1422 = vmatprep.subr.bf16.mxu0 %v654
          %1423 = vmatpush1.bf16.msra.mxu0 %v653
          %1424 = vmatprep.subr.bf16.mxu0 %v656
          %1425 = vmatpush1.bf16.msra.mxu0 %v655
          %1426 = vmatprep.subr.bf16.mxu0 %v658
          %1427 = vmatpush1.bf16.msra.mxu0 %v657
          %1428 = vmatprep.subr.bf16.mxu0 %v660
          %1429 = vmatpush1.bf16.msra.mxu0 %v659
          %1430 = vmatprep.subr.bf16.mxu0 %v662
          %1431 = vmatpush1.bf16.msra.mxu0 %v661
          %1432 = vmatprep.subr.bf16.mxu0 %v664
          %1433 = vmatpush1.bf16.msra.mxu0 %v663
          %1434 = vmatprep.subr.bf16.mxu0 %v666
          %1435 = vmatpush1.bf16.msra.mxu0 %v665
          %1436 = vmatprep.mubr.bf16.mxu0 %v1138
          %1437 = vmatmul.mubr.bf16.gmra.mrb[0].mxu0 %v1124
          %v1438 = vpop.f32.mrb[0].mxu0
          %v1439 = vadd.f32 %v1398, %v1438
          %v1440 = vpop.f32.mrb[0].mxu0
          %v1441 = vadd.f32 %v1400, %v1440
          %v1442 = vpop.f32.mrb[0].mxu0
          %v1443 = vpop.f32.mrb[0].mxu0
          %1444 = vdwg.mxu0
          %1445 = vmatprep.subr.bf16.mxu0 %v668
          %1446 = vmatpush1.bf16.msra.mxu0 %v667
          %1447 = vmatprep.subr.bf16.mxu0 %v670
          %1448 = vmatpush1.bf16.msra.mxu0 %v669
          %1449 = vmatprep.subr.bf16.mxu0 %v672
          %1450 = vmatpush1.bf16.msra.mxu0 %v671
          %1451 = vmatprep.subr.bf16.mxu0 %v674
          %1452 = vmatpush1.bf16.msra.mxu0 %v673
          %1453 = vmatprep.subr.bf16.mxu0 %v676
          %1454 = vmatpush1.bf16.msra.mxu0 %v675
          %1455 = vmatprep.subr.bf16.mxu0 %v678
          %1456 = vmatpush1.bf16.msra.mxu0 %v677
          %1457 = vmatprep.subr.bf16.mxu0 %v680
          %1458 = vmatpush1.bf16.msra.mxu0 %v679
          %1459 = vmatprep.subr.bf16.mxu0 %v682
          %1460 = vmatpush1.bf16.msra.mxu0 %v681
          %1461 = vmatprep.subr.bf16.mxu0 %v684
          %1462 = vmatpush1.bf16.msra.mxu0 %v683
          %1463 = vmatprep.subr.bf16.mxu0 %v686
          %1464 = vmatpush1.bf16.msra.mxu0 %v685
          %1465 = vmatprep.subr.bf16.mxu0 %v688
          %1466 = vmatpush1.bf16.msra.mxu0 %v687
          %1467 = vmatprep.subr.bf16.mxu0 %v690
          %1468 = vmatpush1.bf16.msra.mxu0 %v689
          %1469 = vmatprep.subr.bf16.mxu0 %v692
          %1470 = vmatpush1.bf16.msra.mxu0 %v691
          %1471 = vmatprep.subr.bf16.mxu0 %v694
          %1472 = vmatpush1.bf16.msra.mxu0 %v693
          %1473 = vmatprep.subr.bf16.mxu0 %v696
          %1474 = vmatpush1.bf16.msra.mxu0 %v695
          %1475 = vmatprep.subr.bf16.mxu0 %v698
          %1476 = vmatpush1.bf16.msra.mxu0 %v697
          %1477 = vmatprep.mubr.bf16.mxu0 %v1142
          %1478 = vmatmul.mubr.bf16.gmra.mrb[0].mxu0 %v1140
          %v1479 = vpop.f32.mrb[0].mxu0
          %v1480 = vadd.f32 %v1439, %v1479
          %v1481 = vpop.f32.mrb[0].mxu0
          %v1482 = vadd.f32 %v1441, %v1481
          %v1483 = vpop.f32.mrb[0].mxu0
          %v1484 = vpop.f32.mrb[0].mxu0
          %1485 = vdwg.mxu0
          %1486 = vmatprep.subr.bf16.mxu0 %v700
          %1487 = vmatpush1.bf16.msra.mxu0 %v699
          %1488 = vmatprep.subr.bf16.mxu0 %v702
          %1489 = vmatpush1.bf16.msra.mxu0 %v701
          %1490 = vmatprep.subr.bf16.mxu0 %v704
          %1491 = vmatpush1.bf16.msra.mxu0 %v703
          %1492 = vmatprep.subr.bf16.mxu0 %v706
          %1493 = vmatpush1.bf16.msra.mxu0 %v705
          %1494 = vmatprep.subr.bf16.mxu0 %v708
          %1495 = vmatpush1.bf16.msra.mxu0 %v707
          %1496 = vmatprep.subr.bf16.mxu0 %v710
          %1497 = vmatpush1.bf16.msra.mxu0 %v709
          %1498 = vmatprep.subr.bf16.mxu0 %v712
          %1499 = vmatpush1.bf16.msra.mxu0 %v711
          %1500 = vmatprep.subr.bf16.mxu0 %v714
          %1501 = vmatpush1.bf16.msra.mxu0 %v713
          %1502 = vmatprep.subr.bf16.mxu0 %v716
          %1503 = vmatpush1.bf16.msra.mxu0 %v715
          %1504 = vmatprep.subr.bf16.mxu0 %v718
          %1505 = vmatpush1.bf16.msra.mxu0 %v717
          %1506 = vmatprep.subr.bf16.mxu0 %v720
          %1507 = vmatpush1.bf16.msra.mxu0 %v719
          %1508 = vmatprep.subr.bf16.mxu0 %v722
          %1509 = vmatpush1.bf16.msra.mxu0 %v721
          %1510 = vmatprep.subr.bf16.mxu0 %v724
          %1511 = vmatpush1.bf16.msra.mxu0 %v723
          %1512 = vmatprep.subr.bf16.mxu0 %v726
          %1513 = vmatpush1.bf16.msra.mxu0 %v725
          %1514 = vmatprep.subr.bf16.mxu0 %v728
          %1515 = vmatpush1.bf16.msra.mxu0 %v727
          %1516 = vmatprep.subr.bf16.mxu0 %v730
          %1517 = vmatpush1.bf16.msra.mxu0 %v729
          %1518 = vmatprep.mubr.bf16.mxu0 %v1180
          %1519 = vmatmul.mubr.bf16.gmra.mrb[0].mxu0 %v1166
          %v1520 = vpop.f32.mrb[0].mxu0
          %v1521 = vadd.f32 %v1480, %v1520
          %v1522 = vpop.f32.mrb[0].mxu0
          %v1523 = vadd.f32 %v1482, %v1522
          %v1524 = vpop.f32.mrb[0].mxu0
          %v1525 = vpop.f32.mrb[0].mxu0
          %1526 = vdwg.mxu0
          %1527 = vmatprep.subr.bf16.mxu0 %v732
          %1528 = vmatpush1.bf16.msra.mxu0 %v731
          %1529 = vmatprep.subr.bf16.mxu0 %v734
          %1530 = vmatpush1.bf16.msra.mxu0 %v733
          %1531 = vmatprep.subr.bf16.mxu0 %v736
          %1532 = vmatpush1.bf16.msra.mxu0 %v735
          %1533 = vmatprep.subr.bf16.mxu0 %v738
          %1534 = vmatpush1.bf16.msra.mxu0 %v737
          %1535 = vmatprep.subr.bf16.mxu0 %v740
          %1536 = vmatpush1.bf16.msra.mxu0 %v739
          %1537 = vmatprep.subr.bf16.mxu0 %v742
          %1538 = vmatpush1.bf16.msra.mxu0 %v741
          %1539 = vmatprep.subr.bf16.mxu0 %v744
          %1540 = vmatpush1.bf16.msra.mxu0 %v743
          %1541 = vmatprep.subr.bf16.mxu0 %v746
          %1542 = vmatpush1.bf16.msra.mxu0 %v745
          %1543 = vmatprep.subr.bf16.mxu0 %v748
          %1544 = vmatpush1.bf16.msra.mxu0 %v747
          %1545 = vmatprep.subr.bf16.mxu0 %v750
          %1546 = vmatpush1.bf16.msra.mxu0 %v749
          %1547 = vmatprep.subr.bf16.mxu0 %v752
          %1548 = vmatpush1.bf16.msra.mxu0 %v751
          %1549 = vmatprep.subr.bf16.mxu0 %v754
          %1550 = vmatpush1.bf16.msra.mxu0 %v753
          %1551 = vmatprep.subr.bf16.mxu0 %v756
          %1552 = vmatpush1.bf16.msra.mxu0 %v755
          %1553 = vmatprep.subr.bf16.mxu0 %v758
          %1554 = vmatpush1.bf16.msra.mxu0 %v757
          %1555 = vmatprep.subr.bf16.mxu0 %v760
          %1556 = vmatpush1.bf16.msra.mxu0 %v759
          %1557 = vmatprep.subr.bf16.mxu0 %v762
          %1558 = vmatpush1.bf16.msra.mxu0 %v761
          %1559 = vmatprep.mubr.bf16.mxu0 %v1190
          %1560 = vmatmul.mubr.bf16.gmra.mrb[0].mxu0 %v1188
          %v1561 = vpop.f32.mrb[0].mxu0
          %v1562 = vadd.f32 %v1521, %v1561
          %v1563 = vpop.f32.mrb[0].mxu0
          %v1564 = vadd.f32 %v1523, %v1563
          %v1565 = vpop.f32.mrb[0].mxu0
          %v1566 = vpop.f32.mrb[0].mxu0
          %1567 = vdwg.mxu0
          %1568 = vmatprep.subr.bf16.mxu0 %v764
          %1569 = vmatpush1.bf16.msra.mxu0 %v763
          %1570 = vmatprep.subr.bf16.mxu0 %v766
          %1571 = vmatpush1.bf16.msra.mxu0 %v765
          %1572 = vmatprep.subr.bf16.mxu0 %v768
          %1573 = vmatpush1.bf16.msra.mxu0 %v767
          %1574 = vmatprep.subr.bf16.mxu0 %v770
          %1575 = vmatpush1.bf16.msra.mxu0 %v769
          %1576 = vmatprep.subr.bf16.mxu0 %v772
          %1577 = vmatpush1.bf16.msra.mxu0 %v771
          %1578 = vmatprep.subr.bf16.mxu0 %v774
          %1579 = vmatpush1.bf16.msra.mxu0 %v773
          %1580 = vmatprep.subr.bf16.mxu0 %v776
          %1581 = vmatpush1.bf16.msra.mxu0 %v775
          %1582 = vmatprep.subr.bf16.mxu0 %v778
          %1583 = vmatpush1.bf16.msra.mxu0 %v777
          %1584 = vmatprep.subr.bf16.mxu0 %v780
          %1585 = vmatpush1.bf16.msra.mxu0 %v779
          %1586 = vmatprep.subr.bf16.mxu0 %v782
          %1587 = vmatpush1.bf16.msra.mxu0 %v781
          %1588 = vmatprep.subr.bf16.mxu0 %v784
          %1589 = vmatpush1.bf16.msra.mxu0 %v783
          %1590 = vmatprep.subr.bf16.mxu0 %v786
          %1591 = vmatpush1.bf16.msra.mxu0 %v785
          %1592 = vmatprep.subr.bf16.mxu0 %v788
          %1593 = vmatpush1.bf16.msra.mxu0 %v787
          %1594 = vmatprep.subr.bf16.mxu0 %v790
          %1595 = vmatpush1.bf16.msra.mxu0 %v789
          %1596 = vmatprep.subr.bf16.mxu0 %v792
          %1597 = vmatpush1.bf16.msra.mxu0 %v791
          %1598 = vmatprep.subr.bf16.mxu0 %v794
          %1599 = vmatpush1.bf16.msra.mxu0 %v793
          %1600 = vmatprep.mubr.bf16.mxu0 %v1187
          %1601 = vmatmul.mubr.bf16.gmra.mrb[0].mxu0 %v1173
          %v1602 = vpop.f32.mrb[0].mxu0
          %v1603 = vadd.f32 %v1562, %v1602
          %v1604 = vpop.f32.mrb[0].mxu0
          %v1605 = vadd.f32 %v1564, %v1604
          %v1606 = vpop.f32.mrb[0].mxu0
          %v1607 = vpop.f32.mrb[0].mxu0
          %1608 = vdwg.mxu0
          %1609 = vmatprep.subr.bf16.mxu0 %v796
          %1610 = vmatpush1.bf16.msra.mxu0 %v795
          %1611 = vmatprep.subr.bf16.mxu0 %v798
          %1612 = vmatpush1.bf16.msra.mxu0 %v797
          %1613 = vmatprep.subr.bf16.mxu0 %v800
          %1614 = vmatpush1.bf16.msra.mxu0 %v799
          %1615 = vmatprep.subr.bf16.mxu0 %v802
          %1616 = vmatpush1.bf16.msra.mxu0 %v801
          %1617 = vmatprep.subr.bf16.mxu0 %v804
          %1618 = vmatpush1.bf16.msra.mxu0 %v803
          %1619 = vmatprep.subr.bf16.mxu0 %v806
          %1620 = vmatpush1.bf16.msra.mxu0 %v805
          %1621 = vmatprep.subr.bf16.mxu0 %v808
          %1622 = vmatpush1.bf16.msra.mxu0 %v807
          %1623 = vmatprep.subr.bf16.mxu0 %v810
          %1624 = vmatpush1.bf16.msra.mxu0 %v809
          %1625 = vmatprep.subr.bf16.mxu0 %v812
          %1626 = vmatpush1.bf16.msra.mxu0 %v811
          %1627 = vmatprep.subr.bf16.mxu0 %v814
          %1628 = vmatpush1.bf16.msra.mxu0 %v813
          %1629 = vmatprep.subr.bf16.mxu0 %v816
          %1630 = vmatpush1.bf16.msra.mxu0 %v815
          %1631 = vmatprep.subr.bf16.mxu0 %v818
          %1632 = vmatpush1.bf16.msra.mxu0 %v817
          %1633 = vmatprep.subr.bf16.mxu0 %v820
          %1634 = vmatpush1.bf16.msra.mxu0 %v819
          %1635 = vmatprep.subr.bf16.mxu0 %v822
          %1636 = vmatpush1.bf16.msra.mxu0 %v821
          %1637 = vmatprep.subr.bf16.mxu0 %v824
          %1638 = vmatpush1.bf16.msra.mxu0 %v823
          %1639 = vmatprep.subr.bf16.mxu0 %v826
          %1640 = vmatpush1.bf16.msra.mxu0 %v825
          %1641 = vmatprep.mubr.bf16.mxu0 %v1191
          %1642 = vmatmul.mubr.bf16.gmra.mrb[0].mxu0 %v1189
          %v1643 = vpop.f32.mrb[0].mxu0
          %v1644 = vadd.f32 %v1603, %v1643
          %v1645 = vpop.f32.mrb[0].mxu0
          %v1646 = vadd.f32 %v1605, %v1645
          %v1647 = vpop.f32.mrb[0].mxu0
          %v1648 = vpop.f32.mrb[0].mxu0
          %1649 = vdwg.mxu0
          %1650 = vmatprep.subr.bf16.mxu0 %v828
          %1651 = vmatpush1.bf16.msra.mxu0 %v827
          %1652 = vmatprep.subr.bf16.mxu0 %v830
          %1653 = vmatpush1.bf16.msra.mxu0 %v829
          %1654 = vmatprep.subr.bf16.mxu0 %v832
          %1655 = vmatpush1.bf16.msra.mxu0 %v831
          %1656 = vmatprep.subr.bf16.mxu0 %v834
          %1657 = vmatpush1.bf16.msra.mxu0 %v833
          %1658 = vmatprep.subr.bf16.mxu0 %v836
          %1659 = vmatpush1.bf16.msra.mxu0 %v835
          %1660 = vmatprep.subr.bf16.mxu0 %v838
          %1661 = vmatpush1.bf16.msra.mxu0 %v837
          %1662 = vmatprep.subr.bf16.mxu0 %v840
          %1663 = vmatpush1.bf16.msra.mxu0 %v839
          %1664 = vmatprep.subr.bf16.mxu0 %v842
          %1665 = vmatpush1.bf16.msra.mxu0 %v841
          %1666 = vmatprep.subr.bf16.mxu0 %v844
          %1667 = vmatpush1.bf16.msra.mxu0 %v843
          %1668 = vmatprep.subr.bf16.mxu0 %v846
          %1669 = vmatpush1.bf16.msra.mxu0 %v845
          %1670 = vmatprep.subr.bf16.mxu0 %v848
          %1671 = vmatpush1.bf16.msra.mxu0 %v847
          %1672 = vmatprep.subr.bf16.mxu0 %v850
          %1673 = vmatpush1.bf16.msra.mxu0 %v849
          %1674 = vmatprep.subr.bf16.mxu0 %v852
          %1675 = vmatpush1.bf16.msra.mxu0 %v851
          %1676 = vmatprep.subr.bf16.mxu0 %v854
          %1677 = vmatpush1.bf16.msra.mxu0 %v853
          %1678 = vmatprep.subr.bf16.mxu0 %v856
          %1679 = vmatpush1.bf16.msra.mxu0 %v855
          %1680 = vmatprep.subr.bf16.mxu0 %v858
          %1681 = vmatpush1.bf16.msra.mxu0 %v857
          %1682 = vmatprep.mubr.bf16.mxu0 %v1229
          %1683 = vmatmul.mubr.bf16.gmra.mrb[0].mxu0 %v1215
          %v1684 = vpop.f32.mrb[0].mxu0
          %v1685 = vadd.f32 %v1644, %v1684
          %v1686 = vpop.f32.mrb[0].mxu0
          %v1687 = vadd.f32 %v1646, %v1686
          %v1688 = vpop.f32.mrb[0].mxu0
          %v1689 = vpop.f32.mrb[0].mxu0
          %1690 = vdwg.mxu0
          %1691 = vmatprep.subr.bf16.mxu0 %v860
          %1692 = vmatpush1.bf16.msra.mxu0 %v859
          %1693 = vmatprep.subr.bf16.mxu0 %v862
          %1694 = vmatpush1.bf16.msra.mxu0 %v861
          %1695 = vmatprep.subr.bf16.mxu0 %v864
          %1696 = vmatpush1.bf16.msra.mxu0 %v863
          %1697 = vmatprep.subr.bf16.mxu0 %v866
          %1698 = vmatpush1.bf16.msra.mxu0 %v865
          %1699 = vmatprep.subr.bf16.mxu0 %v868
          %1700 = vmatpush1.bf16.msra.mxu0 %v867
          %1701 = vmatprep.subr.bf16.mxu0 %v870
          %1702 = vmatpush1.bf16.msra.mxu0 %v869
          %1703 = vmatprep.subr.bf16.mxu0 %v872
          %1704 = vmatpush1.bf16.msra.mxu0 %v871
          %1705 = vmatprep.subr.bf16.mxu0 %v874
          %1706 = vmatpush1.bf16.msra.mxu0 %v873
          %1707 = vmatprep.subr.bf16.mxu0 %v876
          %1708 = vmatpush1.bf16.msra.mxu0 %v875
          %1709 = vmatprep.subr.bf16.mxu0 %v878
          %1710 = vmatpush1.bf16.msra.mxu0 %v877
          %1711 = vmatprep.subr.bf16.mxu0 %v880
          %1712 = vmatpush1.bf16.msra.mxu0 %v879
          %1713 = vmatprep.subr.bf16.mxu0 %v882
          %1714 = vmatpush1.bf16.msra.mxu0 %v881
          %1715 = vmatprep.subr.bf16.mxu0 %v884
          %1716 = vmatpush1.bf16.msra.mxu0 %v883
          %1717 = vmatprep.subr.bf16.mxu0 %v886
          %1718 = vmatpush1.bf16.msra.mxu0 %v885
          %1719 = vmatprep.subr.bf16.mxu0 %v888
          %1720 = vmatpush1.bf16.msra.mxu0 %v887
          %1721 = vmatprep.subr.bf16.mxu0 %v890
          %1722 = vmatpush1.bf16.msra.mxu0 %v889
          %1723 = vmatprep.mubr.bf16.mxu0 %v1239
          %1724 = vmatmul.mubr.bf16.gmra.mrb[0].mxu0 %v1237
          %v1725 = vpop.f32.mrb[0].mxu0
          %v1726 = vadd.f32 %v1685, %v1725
          %v1727 = vpop.f32.mrb[0].mxu0
          %v1728 = vadd.f32 %v1687, %v1727
          %v1729 = vpop.f32.mrb[0].mxu0
          %v1730 = vpop.f32.mrb[0].mxu0
          %1731 = vdwg.mxu0
          %1732 = vmatprep.subr.bf16.mxu0 %v892
          %1733 = vmatpush1.bf16.msra.mxu0 %v891
          %1734 = vmatprep.subr.bf16.mxu0 %v894
          %1735 = vmatpush1.bf16.msra.mxu0 %v893
          %1736 = vmatprep.subr.bf16.mxu0 %v896
          %1737 = vmatpush1.bf16.msra.mxu0 %v895
          %1738 = vmatprep.subr.bf16.mxu0 %v898
          %1739 = vmatpush1.bf16.msra.mxu0 %v897
          %1740 = vmatprep.subr.bf16.mxu0 %v900
          %1741 = vmatpush1.bf16.msra.mxu0 %v899
          %1742 = vmatprep.subr.bf16.mxu0 %v902
          %1743 = vmatpush1.bf16.msra.mxu0 %v901
          %1744 = vmatprep.subr.bf16.mxu0 %v904
          %1745 = vmatpush1.bf16.msra.mxu0 %v903
          %1746 = vmatprep.subr.bf16.mxu0 %v906
          %1747 = vmatpush1.bf16.msra.mxu0 %v905
          %1748 = vmatprep.subr.bf16.mxu0 %v908
          %1749 = vmatpush1.bf16.msra.mxu0 %v907
          %1750 = vmatprep.subr.bf16.mxu0 %v910
          %1751 = vmatpush1.bf16.msra.mxu0 %v909
          %1752 = vmatprep.subr.bf16.mxu0 %v912
          %1753 = vmatpush1.bf16.msra.mxu0 %v911
          %1754 = vmatprep.subr.bf16.mxu0 %v914
          %1755 = vmatpush1.bf16.msra.mxu0 %v913
          %1756 = vmatprep.subr.bf16.mxu0 %v916
          %1757 = vmatpush1.bf16.msra.mxu0 %v915
          %1758 = vmatprep.subr.bf16.mxu0 %v918
          %1759 = vmatpush1.bf16.msra.mxu0 %v917
          %1760 = vmatprep.subr.bf16.mxu0 %v920
          %1761 = vmatpush1.bf16.msra.mxu0 %v919
          %1762 = vmatprep.subr.bf16.mxu0 %v922
          %1763 = vmatpush1.bf16.msra.mxu0 %v921
          %1764 = vmatprep.mubr.bf16.mxu0 %v1236
          %1765 = vmatmul.mubr.bf16.gmra.mrb[0].mxu0 %v1222
          %v1766 = vpop.f32.mrb[0].mxu0
          %v1767 = vadd.f32 %v1726, %v1766
          %v1768 = vpop.f32.mrb[0].mxu0
          %v1769 = vadd.f32 %v1728, %v1768
          %v1770 = vpop.f32.mrb[0].mxu0
          %v1771 = vpop.f32.mrb[0].mxu0
          %1772 = vdwg.mxu0
          %1773 = vmatprep.subr.bf16.mxu0 %v924
          %1774 = vmatpush1.bf16.msra.mxu0 %v923
          %1775 = vmatprep.subr.bf16.mxu0 %v926
          %1776 = vmatpush1.bf16.msra.mxu0 %v925
          %1777 = vmatprep.subr.bf16.mxu0 %v928
          %1778 = vmatpush1.bf16.msra.mxu0 %v927
          %1779 = vmatprep.subr.bf16.mxu0 %v930
          %1780 = vmatpush1.bf16.msra.mxu0 %v929
          %1781 = vmatprep.subr.bf16.mxu0 %v932
          %1782 = vmatpush1.bf16.msra.mxu0 %v931
          %1783 = vmatprep.subr.bf16.mxu0 %v934
          %1784 = vmatpush1.bf16.msra.mxu0 %v933
          %1785 = vmatprep.subr.bf16.mxu0 %v936
          %1786 = vmatpush1.bf16.msra.mxu0 %v935
          %1787 = vmatprep.subr.bf16.mxu0 %v938
          %1788 = vmatpush1.bf16.msra.mxu0 %v937
          %1789 = vmatprep.subr.bf16.mxu0 %v940
          %1790 = vmatpush1.bf16.msra.mxu0 %v939
          %1791 = vmatprep.subr.bf16.mxu0 %v942
          %1792 = vmatpush1.bf16.msra.mxu0 %v941
          %1793 = vmatprep.subr.bf16.mxu0 %v944
          %1794 = vmatpush1.bf16.msra.mxu0 %v943
          %1795 = vmatprep.subr.bf16.mxu0 %v946
          %1796 = vmatpush1.bf16.msra.mxu0 %v945
          %1797 = vmatprep.subr.bf16.mxu0 %v948
          %1798 = vmatpush1.bf16.msra.mxu0 %v947
          %1799 = vmatprep.subr.bf16.mxu0 %v950
          %1800 = vmatpush1.bf16.msra.mxu0 %v949
          %1801 = vmatprep.subr.bf16.mxu0 %v952
          %1802 = vmatpush1.bf16.msra.mxu0 %v951
          %1803 = vmatprep.subr.bf16.mxu0 %v954
          %1804 = vmatpush1.bf16.msra.mxu0 %v953
          %1805 = vmatprep.mubr.bf16.mxu0 %v1240
          %1806 = vmatmul.mubr.bf16.gmra.mrb[0].mxu0 %v1238
          %v1807 = vpop.f32.mrb[0].mxu0
          %v1808 = vadd.f32 %v1767, %v1807
          %v1809 = vpop.f32.mrb[0].mxu0
          %v1810 = vadd.f32 %v1769, %v1809
          %v1811 = vpop.f32.mrb[0].mxu0
          %v1812 = vpop.f32.mrb[0].mxu0
          %1813 = vdwg.mxu0
          %1814 = vmatprep.subr.bf16.mxu0 %v956
          %1815 = vmatpush1.bf16.msra.mxu0 %v955
          %1816 = vmatprep.subr.bf16.mxu0 %v958
          %1817 = vmatpush1.bf16.msra.mxu0 %v957
          %1818 = vmatprep.subr.bf16.mxu0 %v960
          %1819 = vmatpush1.bf16.msra.mxu0 %v959
          %1820 = vmatprep.subr.bf16.mxu0 %v962
          %1821 = vmatpush1.bf16.msra.mxu0 %v961
          %1822 = vmatprep.subr.bf16.mxu0 %v964
          %1823 = vmatpush1.bf16.msra.mxu0 %v963
          %1824 = vmatprep.subr.bf16.mxu0 %v966
          %1825 = vmatpush1.bf16.msra.mxu0 %v965
          %1826 = vmatprep.subr.bf16.mxu0 %v968
          %1827 = vmatpush1.bf16.msra.mxu0 %v967
          %1828 = vmatprep.subr.bf16.mxu0 %v970
          %1829 = vmatpush1.bf16.msra.mxu0 %v969
          %1830 = vmatprep.subr.bf16.mxu0 %v972
          %1831 = vmatpush1.bf16.msra.mxu0 %v971
          %1832 = vmatprep.subr.bf16.mxu0 %v974
          %1833 = vmatpush1.bf16.msra.mxu0 %v973
          %1834 = vmatprep.subr.bf16.mxu0 %v976
          %1835 = vmatpush1.bf16.msra.mxu0 %v975
          %1836 = vmatprep.subr.bf16.mxu0 %v978
          %1837 = vmatpush1.bf16.msra.mxu0 %v977
          %1838 = vmatprep.subr.bf16.mxu0 %v980
          %1839 = vmatpush1.bf16.msra.mxu0 %v979
          %1840 = vmatprep.subr.bf16.mxu0 %v982
          %1841 = vmatpush1.bf16.msra.mxu0 %v981
          %1842 = vmatprep.subr.bf16.mxu0 %v984
          %1843 = vmatpush1.bf16.msra.mxu0 %v983
          %1844 = vmatprep.subr.bf16.mxu0 %v986
          %1845 = vmatpush1.bf16.msra.mxu0 %v985
          %1846 = vmatprep.mubr.bf16.mxu0 %v1278
          %1847 = vmatmul.mubr.bf16.gmra.mrb[0].mxu0 %v1264
          %v1848 = vpop.f32.mrb[0].mxu0
          %v1849 = vadd.f32 %v1808, %v1848
          %v1850 = vpop.f32.mrb[0].mxu0
          %v1851 = vadd.f32 %v1810, %v1850
          %v1852 = vpop.f32.mrb[0].mxu0
          %v1853 = vpop.f32.mrb[0].mxu0
          %1854 = vdwg.mxu0
          %1855 = vmatprep.subr.bf16.mxu0 %v988
          %1856 = vmatpush1.bf16.msra.mxu0 %v987
          %1857 = vmatprep.subr.bf16.mxu0 %v990
          %1858 = vmatpush1.bf16.msra.mxu0 %v989
          %1859 = vmatprep.subr.bf16.mxu0 %v992
          %1860 = vmatpush1.bf16.msra.mxu0 %v991
          %1861 = vmatprep.subr.bf16.mxu0 %v994
          %1862 = vmatpush1.bf16.msra.mxu0 %v993
          %1863 = vmatprep.subr.bf16.mxu0 %v996
          %1864 = vmatpush1.bf16.msra.mxu0 %v995
          %1865 = vmatprep.subr.bf16.mxu0 %v998
          %1866 = vmatpush1.bf16.msra.mxu0 %v997
          %1867 = vmatprep.subr.bf16.mxu0 %v1000
          %1868 = vmatpush1.bf16.msra.mxu0 %v999
          %1869 = vmatprep.subr.bf16.mxu0 %v1002
          %1870 = vmatpush1.bf16.msra.mxu0 %v1001
          %1871 = vmatprep.subr.bf16.mxu0 %v1004
          %1872 = vmatpush1.bf16.msra.mxu0 %v1003
          %1873 = vmatprep.subr.bf16.mxu0 %v1006
          %1874 = vmatpush1.bf16.msra.mxu0 %v1005
          %1875 = vmatprep.subr.bf16.mxu0 %v1008
          %1876 = vmatpush1.bf16.msra.mxu0 %v1007
          %1877 = vmatprep.subr.bf16.mxu0 %v1010
          %1878 = vmatpush1.bf16.msra.mxu0 %v1009
          %1879 = vmatprep.subr.bf16.mxu0 %v1012
          %1880 = vmatpush1.bf16.msra.mxu0 %v1011
          %1881 = vmatprep.subr.bf16.mxu0 %v1014
          %1882 = vmatpush1.bf16.msra.mxu0 %v1013
          %1883 = vmatprep.subr.bf16.mxu0 %v1016
          %1884 = vmatpush1.bf16.msra.mxu0 %v1015
          %1885 = vmatprep.subr.bf16.mxu0 %v1018
          %1886 = vmatpush1.bf16.msra.mxu0 %v1017
          %1887 = vmatprep.mubr.bf16.mxu0 %v1288
          %1888 = vmatmul.mubr.bf16.gmra.mrb[0].mxu0 %v1286
          %v1889 = vpop.f32.mrb[0].mxu0
          %v1890 = vadd.f32 %v1849, %v1889
          %v1891 = vpop.f32.mrb[0].mxu0
          %v1892 = vadd.f32 %v1851, %v1891
          %v1893 = vpop.f32.mrb[0].mxu0
          %v1894 = vpop.f32.mrb[0].mxu0
          %1895 = vdwg.mxu0
          %1896 = vmatprep.subr.bf16.mxu0 %v1020
          %1897 = vmatpush1.bf16.msra.mxu0 %v1019
          %1898 = vmatprep.subr.bf16.mxu0 %v1022
          %1899 = vmatpush1.bf16.msra.mxu0 %v1021
          %1900 = vmatprep.subr.bf16.mxu0 %v1024
          %1901 = vmatpush1.bf16.msra.mxu0 %v1023
          %1902 = vmatprep.subr.bf16.mxu0 %v1026
          %1903 = vmatpush1.bf16.msra.mxu0 %v1025
          %1904 = vmatprep.subr.bf16.mxu0 %v1028
          %1905 = vmatpush1.bf16.msra.mxu0 %v1027
          %1906 = vmatprep.subr.bf16.mxu0 %v1030
          %1907 = vmatpush1.bf16.msra.mxu0 %v1029
          %1908 = vmatprep.subr.bf16.mxu0 %v1032
          %1909 = vmatpush1.bf16.msra.mxu0 %v1031
          %1910 = vmatprep.subr.bf16.mxu0 %v1034
          %1911 = vmatpush1.bf16.msra.mxu0 %v1033
          %1912 = vmatprep.subr.bf16.mxu0 %v1036
          %1913 = vmatpush1.bf16.msra.mxu0 %v1035
          %1914 = vmatprep.subr.bf16.mxu0 %v1038
          %1915 = vmatpush1.bf16.msra.mxu0 %v1037
          %1916 = vmatprep.subr.bf16.mxu0 %v1040
          %1917 = vmatpush1.bf16.msra.mxu0 %v1039
          %1918 = vmatprep.subr.bf16.mxu0 %v1042
          %1919 = vmatpush1.bf16.msra.mxu0 %v1041
          %1920 = vmatprep.subr.bf16.mxu0 %v1044
          %1921 = vmatpush1.bf16.msra.mxu0 %v1043
          %1922 = vmatprep.subr.bf16.mxu0 %v1046
          %1923 = vmatpush1.bf16.msra.mxu0 %v1045
          %1924 = vmatprep.subr.bf16.mxu0 %v1048
          %1925 = vmatpush1.bf16.msra.mxu0 %v1047
          %1926 = vmatprep.subr.bf16.mxu0 %v1050
          %1927 = vmatpush1.bf16.msra.mxu0 %v1049
          %1928 = vmatprep.mubr.bf16.mxu0 %v1285
          %1929 = vmatmul.mubr.bf16.gmra.mrb[0].mxu0 %v1271
          %v1930 = vpop.f32.mrb[0].mxu0
          %v1931 = vadd.f32 %v1890, %v1930
          %v1932 = vpop.f32.mrb[0].mxu0
          %v1933 = vadd.f32 %v1892, %v1932
          %v1934 = vpop.f32.mrb[0].mxu0
          %v1935 = vpop.f32.mrb[0].mxu0
          %1936 = vdwg.mxu0
          %1937 = vmatprep.subr.bf16.mxu0 %v1052
          %1938 = vmatpush1.bf16.msra.mxu0 %v1051
          %1939 = vmatprep.subr.bf16.mxu0 %v1054
          %1940 = vmatpush1.bf16.msra.mxu0 %v1053
          %1941 = vmatprep.subr.bf16.mxu0 %v1056
          %1942 = vmatpush1.bf16.msra.mxu0 %v1055
          %1943 = vmatprep.subr.bf16.mxu0 %v1058
          %1944 = vmatpush1.bf16.msra.mxu0 %v1057
          %1945 = vmatprep.subr.bf16.mxu0 %v1060
          %1946 = vmatpush1.bf16.msra.mxu0 %v1059
          %1947 = vmatprep.subr.bf16.mxu0 %v1062
          %1948 = vmatpush1.bf16.msra.mxu0 %v1061
          %1949 = vmatprep.subr.bf16.mxu0 %v1064
          %1950 = vmatpush1.bf16.msra.mxu0 %v1063
          %1951 = vmatprep.subr.bf16.mxu0 %v1066
          %1952 = vmatpush1.bf16.msra.mxu0 %v1065
          %1953 = vmatprep.subr.bf16.mxu0 %v1068
          %1954 = vmatpush1.bf16.msra.mxu0 %v1067
          %1955 = vmatprep.subr.bf16.mxu0 %v1070
          %1956 = vmatpush1.bf16.msra.mxu0 %v1069
          %1957 = vmatprep.subr.bf16.mxu0 %v1072
          %1958 = vmatpush1.bf16.msra.mxu0 %v1071
          %1959 = vmatprep.subr.bf16.mxu0 %v1074
          %1960 = vmatpush1.bf16.msra.mxu0 %v1073
          %1961 = vmatprep.subr.bf16.mxu0 %v1076
          %1962 = vmatpush1.bf16.msra.mxu0 %v1075
          %1963 = vmatprep.subr.bf16.mxu0 %v1078
          %1964 = vmatpush1.bf16.msra.mxu0 %v1077
          %1965 = vmatprep.subr.bf16.mxu0 %v1080
          %1966 = vmatpush1.bf16.msra.mxu0 %v1079
          %1967 = vmatprep.subr.bf16.mxu0 %v1082
          %1968 = vmatpush1.bf16.msra.mxu0 %v1081
          %1969 = vmatprep.mubr.bf16.mxu0 %v1289
          %1970 = vmatmul.mubr.bf16.gmra.mrb[0].mxu0 %v1287
          %v1971 = vpop.f32.mrb[0].mxu0
          %v1972 = vadd.f32 %v1931, %v1971
          %v1973 = vpop.f32.mrb[0].mxu0
          %v1974 = vadd.f32 %v1933, %v1973
          %v1975 = vpop.f32.mrb[0].mxu0
          %v1976 = vpop.f32.mrb[0].mxu0
          %1977 = vdwg.mxu0
          %v1978 = vadd.f32 %v307, %v1972
          %v1979 = vadd.f32 %v308, %v1974
        $region49: #{substance_detection_forward.6} parent=35 // loop_footer
          %s306 = sadd.s32 1, %s302
        $region50: #{substance_detection_forward.6} parent=35 // loop_footer_branch
          %301 = sbr.rel target = $region46
        $region51: #{substance_detection_forward.6} parent=35 // loop_exit
          _
        %v1982 = vcombine.low %v307, %v308
        %v1984 = vunpack.c.l.s4 1983009808
        %v1985 = vunpack.c.0.s8 %v1984
        %v1986 = vlaneseq
        %v1987 = vshrl.u32 %v1986, 7
        %v1988 = vsub.s32 %v1985, %v1987
        %v1989 = vrot.slane %v1982, %v1988
        %v1991 = vadd.f32 %v300, %v1989
        %1992 = vst [vmem:[#allocation2] sm:$0xf] %v1991
        %p1993 = scmp.eq.s32.totalorder %s23, 15
        // Predicated region
        $region52: #{substance_detection_forward.6} parent=35 // pred_check
          %p1994 = pneg %p1993
        $region53: #{substance_detection_forward.6} parent=35 // pred_check_branch
          %1996 = sbr.rel (%p1994) target = $region55
        $region54: #{substance_detection_forward.6} parent=35 // pred_region
          %v1997 = vld [vmem:[#allocation2] sm:$0xf]
          %v1998 = vld [vmem:[%s282] sm:$0x3]
          %v2000 = vlaneseq
          %v2001 = vshrl.u32 %v2000, 7
          %v2002 = vsub.s32 0, %v2001
          %v2003 = vrot.slane %v1998, %v2002
          %v2004 = vlaneseq
          %v2005 = vshrl.u32 %v2004, 7
          %v2006 = vsub.s32 1, %v2005
          %v2007 = vrot.slane %v1998, %v2006
          %v2008 = vcombine.low %v2003, %v2007
          %v2010 = vunpack.c.l.s4 1983009808
          %v2011 = vunpack.c.0.s8 %v2010
          %v2012 = vlaneseq
          %v2013 = vshrl.u32 %v2012, 7
          %v2014 = vsub.s32 %v2011, %v2013
          %v2015 = vrot.slane %v2008, %v2014
          %v2017 = vmul.f32 %v1997, %v2015
          %v2018 = vld [vmem:[%s287] sm:$0x3]
          %v2020 = vlaneseq
          %v2021 = vshrl.u32 %v2020, 7
          %v2022 = vsub.s32 0, %v2021
          %v2023 = vrot.slane %v2018, %v2022
          %v2024 = vlaneseq
          %v2025 = vshrl.u32 %v2024, 7
          %v2026 = vsub.s32 1, %v2025
          %v2027 = vrot.slane %v2018, %v2026
          %v2028 = vcombine.low %v2023, %v2027
          %v2030 = vunpack.c.l.s4 1983009808
          %v2031 = vunpack.c.0.s8 %v2030
          %v2032 = vlaneseq
          %v2033 = vshrl.u32 %v2032, 7
          %v2034 = vsub.s32 %v2031, %v2033
          %v2035 = vrot.slane %v2028, %v2034
          %v2037 = vadd.f32 %v2017, %v2035
          %v2038 = vmax.f32 %v2037, 0.0
          %2039 = vst [vmem:[%s293] sm:$0xf] %v2038
        $region55: #{substance_detection_forward.6} parent=35 // pred_fallthru
          _
        %s2040 = smul.u32 2, %s22
        %p2041 = scmp.lt.s32.totalorder %s2040, 3
        %s2042 = scalar_select %p2041, %s2040, 3
        %s2043 = smul.addr %s2042, 2
        %s2044 = scalar_lea.vmem %s4, %s2043
        // Predicated region
        $region56: #{substance_detection_forward.6} parent=35 // pred_check
          %p2045 = pneg %p154
        $region57: #{substance_detection_forward.6} parent=35 // pred_check_branch
          %2047 = sbr.rel (%p2045) target = $region59
        $region58: #{substance_detection_forward.6} parent=35 // pred_region
          %s2048 = smul.u32 2, %s22
        $region59: #{substance_detection_forward.6} parent=35 // pred_fallthru
          _
      $region36: #{substance_detection_forward.6} parent=5 // pred_fallthru
        _
      %p2049 = scmp.le.s32.totalorder 2, %s13
      // Predicated region
      $region60: #{substance_detection_forward.6} parent=5 // pred_check
        %p2050 = pneg %p2049
      $region61: #{substance_detection_forward.6} parent=5 // pred_check_branch
        %2052 = sbr.rel (%p2050) target = $region63
      $region62: #{substance_detection_forward.6} parent=5 // pred_region
        %s2053 = ssub.s32 %s13, 2
        // Predicated region
        $region64: #{substance_detection_forward.6} parent=62 // pred_check
          %p2054 = pneg %p160
        $region65: #{substance_detection_forward.6} parent=62 // pred_check_branch
          %2056 = sbr.rel (%p2054) target = $region67
        $region66: #{substance_detection_forward.6} parent=62 // pred_region
          %s2057 = smul.u32 2, %s24
          %p2058 = scmp.lt.s32.totalorder %s2057, 3
          %s2059 = scalar_select %p2058, %s2057, 3
          %s2060 = smul.addr %s2059, 2
          %s2061 = scalar_lea.vmem %s4, %s2060
        $region67: #{substance_detection_forward.6} parent=62 // pred_fallthru
          _
      $region63: #{substance_detection_forward.6} parent=5 // pred_fallthru
        _
    $region6: #{substance_detection_forward.6} parent=1 // loop_footer
      %s17 = sadd.s32 1, %s13
    $region7: #{substance_detection_forward.6} parent=1 // loop_footer_branch
      %12 = sbr.rel target = $region3
    $region8: #{substance_detection_forward.6} parent=1 // loop_exit
      _
    %2062 = vsyncpa [#allocation4], 1
    %s2063 = scalar_lea.sflag [#allocation4], 1
    %2064 = vsyncpa %s2063, 1

// kernel: substance_detection_forward.7
$region0: #{substance_detection_forward.7}
  #allocation0 [shape = 'u32[]', space=smem, size = 0x4, offset = 0x4, fixed_abs, tag = 'smem constant byte address 0x4 - core index']
  #allocation1 [shape = 'u32[144,128]{1,0:T(1,128)}', space=vmem, size = 0x12000, scoped, tag = 'internal scratch']
  %s0 = inlined_call_operand.vmem [shape: f32[2,512], index: 0, kind: input, shape index: {}]
  %s1 = inlined_call_operand.vmem [shape: f32[512,128], index: 1, kind: input, shape index: {}]
  %s2 = inlined_call_operand.vmem [shape: f32[1,128], index: 2, kind: input, shape index: {}]
  %s3 = inlined_call_operand.hbm [shape: f32[2,128], index: 3, kind: output, shape index: {}]
  %s4 = sld [smem:[#allocation0]]
  $region22: #{substance_detection_forward.7} parent=0
    _
  %s6 = ssub.s32 1, %s4
  %s7 = scalar_select 0, %s6, %s4
  $region1: #{substance_detection_forward.7} parent=0
    #allocation2 [shape = 'u8[1024]{0}', space=vmem, size = 0x400, scoped, tag = 'output window, operand 0, single buffered']
    #allocation3 [shape = 's32[1]{0}', space=sflag, size = 0x4, scoped, tag = 'scoped memory for substance_detection_forward.7']
    %8 = vsyncpa [#allocation3], 0
    // Predicated region
    $region2: #{substance_detection_forward.7} parent=1 // pred_check
      _
    $region3: #{substance_detection_forward.7} parent=1 // pred_check_branch
      %10 = sbr.rel (0) target = $region5
    $region4: #{substance_detection_forward.7} parent=1 // pred_region
      _
    $region5: #{substance_detection_forward.7} parent=1 // pred_fallthru
      _
    // Predicated region
    $region6: #{substance_detection_forward.7} parent=1 // pred_check
      _
    $region7: #{substance_detection_forward.7} parent=1 // pred_check_branch
      %12 = sbr.rel (0) target = $region9
    $region8: #{substance_detection_forward.7} parent=1 // pred_region
      _
    $region9: #{substance_detection_forward.7} parent=1 // pred_fallthru
      _
    // Predicated region
    $region10: #{substance_detection_forward.7} parent=1 // pred_check
      _
    $region11: #{substance_detection_forward.7} parent=1 // pred_check_branch
      %14 = sbr.rel (0) target = $region13
    $region12: #{substance_detection_forward.7} parent=1 // pred_region
      _
    $region13: #{substance_detection_forward.7} parent=1 // pred_fallthru
      _
    %v15 = vld [vmem:[%s0] sm:$0xff]
    %v16 = vld [vmem:[%s1] sm:$0xff]
    %v17 = vld [vmem:[%s1 + $0x8] sm:$0xff]
    %v18 = vld [vmem:[%s1 + $0x10] sm:$0xff]
    %v19 = vld [vmem:[%s1 + $0x18] sm:$0xff]
    %v20 = vld [vmem:[%s1 + $0x20] sm:$0xff]
    %v21 = vld [vmem:[%s1 + $0x28] sm:$0xff]
    %v22 = vld [vmem:[%s1 + $0x30] sm:$0xff]
    %v23 = vld [vmem:[%s1 + $0x38] sm:$0xff]
    %v24 = vld [vmem:[%s1 + $0x40] sm:$0xff]
    %v25 = vld [vmem:[%s1 + $0x48] sm:$0xff]
    %v26 = vld [vmem:[%s1 + $0x50] sm:$0xff]
    %v27 = vld [vmem:[%s1 + $0x58] sm:$0xff]
    %v28 = vld [vmem:[%s1 + $0x60] sm:$0xff]
    %v29 = vld [vmem:[%s1 + $0x68] sm:$0xff]
    %v30 = vld [vmem:[%s1 + $0x70] sm:$0xff]
    %v31 = vld [vmem:[%s1 + $0x78] sm:$0xff]
    %v32 = vld [vmem:[%s1 + $0x80] sm:$0xff]
    %v33 = vld [vmem:[%s1 + $0x88] sm:$0xff]
    %v34 = vld [vmem:[%s1 + $0x90] sm:$0xff]
    %v35 = vld [vmem:[%s1 + $0x98] sm:$0xff]
    %v36 = vld [vmem:[%s1 + $0xa0] sm:$0xff]
    %v37 = vld [vmem:[%s1 + $0xa8] sm:$0xff]
    %v38 = vld [vmem:[%s1 + $0xb0] sm:$0xff]
    %v39 = vld [vmem:[%s1 + $0xb8] sm:$0xff]
    %v40 = vld [vmem:[%s1 + $0xc0] sm:$0xff]
    %v41 = vld [vmem:[%s1 + $0xc8] sm:$0xff]
    %v42 = vld [vmem:[%s1 + $0xd0] sm:$0xff]
    %v43 = vld [vmem:[%s1 + $0xd8] sm:$0xff]
    %v44 = vld [vmem:[%s1 + $0xe0] sm:$0xff]
    %v45 = vld [vmem:[%s1 + $0xe8] sm:$0xff]
    %v46 = vld [vmem:[%s1 + $0xf0] sm:$0xff]
    %v47 = vld [vmem:[%s1 + $0xf8] sm:$0xff]
    %v48 = vld [vmem:[%s1 + $0x100] sm:$0xff]
    %v49 = vld [vmem:[%s1 + $0x108] sm:$0xff]
    %v50 = vld [vmem:[%s1 + $0x110] sm:$0xff]
    %v51 = vld [vmem:[%s1 + $0x118] sm:$0xff]
    %v52 = vld [vmem:[%s1 + $0x120] sm:$0xff]
    %v53 = vld [vmem:[%s1 + $0x128] sm:$0xff]
    %v54 = vld [vmem:[%s1 + $0x130] sm:$0xff]
    %v55 = vld [vmem:[%s1 + $0x138] sm:$0xff]
    %v56 = vld [vmem:[%s1 + $0x140] sm:$0xff]
    %v57 = vld [vmem:[%s1 + $0x148] sm:$0xff]
    %v58 = vld [vmem:[%s1 + $0x150] sm:$0xff]
    %v59 = vld [vmem:[%s1 + $0x158] sm:$0xff]
    %v60 = vld [vmem:[%s1 + $0x160] sm:$0xff]
    %v61 = vld [vmem:[%s1 + $0x168] sm:$0xff]
    %v62 = vld [vmem:[%s1 + $0x170] sm:$0xff]
    %v63 = vld [vmem:[%s1 + $0x178] sm:$0xff]
    %v64 = vld [vmem:[%s1 + $0x180] sm:$0xff]
    %v65 = vld [vmem:[%s1 + $0x188] sm:$0xff]
    %v66 = vld [vmem:[%s1 + $0x190] sm:$0xff]
    %v67 = vld [vmem:[%s1 + $0x198] sm:$0xff]
    %v68 = vld [vmem:[%s1 + $0x1a0] sm:$0xff]
    %v69 = vld [vmem:[%s1 + $0x1a8] sm:$0xff]
    %v70 = vld [vmem:[%s1 + $0x1b0] sm:$0xff]
    %v71 = vld [vmem:[%s1 + $0x1b8] sm:$0xff]
    %v72 = vld [vmem:[%s1 + $0x1c0] sm:$0xff]
    %v73 = vld [vmem:[%s1 + $0x1c8] sm:$0xff]
    %v74 = vld [vmem:[%s1 + $0x1d0] sm:$0xff]
    %v75 = vld [vmem:[%s1 + $0x1d8] sm:$0xff]
    %v76 = vld [vmem:[%s1 + $0x1e0] sm:$0xff]
    %v77 = vld [vmem:[%s1 + $0x1e8] sm:$0xff]
    %v78 = vld [vmem:[%s1 + $0x1f0] sm:$0xff]
    %v79 = vld [vmem:[%s1 + $0x1f8] sm:$0xff]
    %v80 = vld [vmem:[%s2] sm:$0x1]
    %v82 = vlaneseq
    %v83 = vshrl.u32 %v82, 7
    %v84 = vsub.s32 0, %v83
    %v85 = vrot.slane %v80, %v84
    %v88 = vcombine.high %v15, %v15
    %v90 = vunpack.c.l.s4 1983009808
    %v91 = vunpack.c.0.s8 %v90
    %v92 = vlaneseq
    %v93 = vshrl.u32 %v92, 7
    %v94 = vsub.s32 %v91, %v93
    %v95 = vrot.slane %v15, %v94
    %v97 = vunpack.c.l.s4 1983009808
    %v98 = vunpack.c.0.s8 %v97
    %v99 = vlaneseq
    %v100 = vshrl.u32 %v99, 7
    %v101 = vsub.s32 %v98, %v100
    %v102 = vrot.slane %v88, %v101
    %v103 = vcombine.high %v95, %v95
    %v104 = vcombine.high %v102, %v102
    %109 = vmatprep.subr.mxu0 0.0
    %110 = vmatpush1.msra.mxu0 %v16
    %111 = vmatprep.subr.mxu0 0.0
    %112 = vmatpush1.msra.mxu0 %v17
    %113 = vmatprep.subr.mxu0 0.0
    %114 = vmatpush1.msra.mxu0 %v18
    %115 = vmatprep.subr.mxu0 0.0
    %116 = vmatpush1.msra.mxu0 %v19
    %117 = vmatprep.subr.mxu0 0.0
    %118 = vmatpush1.msra.mxu0 %v20
    %119 = vmatprep.subr.mxu0 0.0
    %120 = vmatpush1.msra.mxu0 %v21
    %121 = vmatprep.subr.mxu0 0.0
    %122 = vmatpush1.msra.mxu0 %v22
    %123 = vmatprep.subr.mxu0 0.0
    %124 = vmatpush1.msra.mxu0 %v23
    %125 = vmatprep.subr.mxu0 0.0
    %126 = vmatpush1.msra.mxu0 %v24
    %127 = vmatprep.subr.mxu0 0.0
    %128 = vmatpush1.msra.mxu0 %v25
    %129 = vmatprep.subr.mxu0 0.0
    %130 = vmatpush1.msra.mxu0 %v26
    %131 = vmatprep.subr.mxu0 0.0
    %132 = vmatpush1.msra.mxu0 %v27
    %133 = vmatprep.subr.mxu0 0.0
    %134 = vmatpush1.msra.mxu0 %v28
    %135 = vmatprep.subr.mxu0 0.0
    %136 = vmatpush1.msra.mxu0 %v29
    %137 = vmatprep.subr.mxu0 0.0
    %138 = vmatpush1.msra.mxu0 %v30
    %139 = vmatprep.subr.mxu0 0.0
    %140 = vmatpush1.msra.mxu0 %v31
    %141 = vmatprep.subr.mxu0 0.0
    %142 = vmatpush1.msra.mxu0 %v32
    %143 = vmatprep.subr.mxu0 0.0
    %144 = vmatpush1.msra.mxu0 %v33
    %145 = vmatprep.subr.mxu0 0.0
    %146 = vmatpush1.msra.mxu0 %v34
    %147 = vmatprep.subr.mxu0 0.0
    %148 = vmatpush1.msra.mxu0 %v35
    %149 = vmatprep.subr.mxu0 0.0
    %150 = vmatpush1.msra.mxu0 %v36
    %151 = vmatprep.subr.mxu0 0.0
    %152 = vmatpush1.msra.mxu0 %v37
    %153 = vmatprep.subr.mxu0 0.0
    %154 = vmatpush1.msra.mxu0 %v38
    %155 = vmatprep.subr.mxu0 0.0
    %156 = vmatpush1.msra.mxu0 %v39
    %157 = vmatprep.subr.mxu0 0.0
    %158 = vmatpush1.msra.mxu0 %v40
    %159 = vmatprep.subr.mxu0 0.0
    %160 = vmatpush1.msra.mxu0 %v41
    %161 = vmatprep.subr.mxu0 0.0
    %162 = vmatpush1.msra.mxu0 %v42
    %163 = vmatprep.subr.mxu0 0.0
    %164 = vmatpush1.msra.mxu0 %v43
    %165 = vmatprep.subr.mxu0 0.0
    %166 = vmatpush1.msra.mxu0 %v44
    %167 = vmatprep.subr.mxu0 0.0
    %168 = vmatpush1.msra.mxu0 %v45
    %169 = vmatprep.subr.mxu0 0.0
    %170 = vmatpush1.msra.mxu0 %v46
    %171 = vmatprep.subr.mxu0 0.0
    %172 = vmatpush1.msra.mxu0 %v47
    %173 = vmatprep.mubr.f32.mxu0 %v103
    %174 = vmatmul.mubr.f32.gmra.mrb[0].mxu0 %v95
    %v175 = vpop.f32.mrb[0].mxu0
    %v176 = vadd.f32 %v85, %v175
    %v177 = vpop.f32.mrb[0].mxu0
    %178 = vdwg.mxu0
    %179 = vmatprep.subr.mxu0 0.0
    %180 = vmatpush1.msra.mxu0 %v48
    %181 = vmatprep.subr.mxu0 0.0
    %182 = vmatpush1.msra.mxu0 %v49
    %183 = vmatprep.subr.mxu0 0.0
    %184 = vmatpush1.msra.mxu0 %v50
    %185 = vmatprep.subr.mxu0 0.0
    %186 = vmatpush1.msra.mxu0 %v51
    %187 = vmatprep.subr.mxu0 0.0
    %188 = vmatpush1.msra.mxu0 %v52
    %189 = vmatprep.subr.mxu0 0.0
    %190 = vmatpush1.msra.mxu0 %v53
    %191 = vmatprep.subr.mxu0 0.0
    %192 = vmatpush1.msra.mxu0 %v54
    %193 = vmatprep.subr.mxu0 0.0
    %194 = vmatpush1.msra.mxu0 %v55
    %195 = vmatprep.subr.mxu0 0.0
    %196 = vmatpush1.msra.mxu0 %v56
    %197 = vmatprep.subr.mxu0 0.0
    %198 = vmatpush1.msra.mxu0 %v57
    %199 = vmatprep.subr.mxu0 0.0
    %200 = vmatpush1.msra.mxu0 %v58
    %201 = vmatprep.subr.mxu0 0.0
    %202 = vmatpush1.msra.mxu0 %v59
    %203 = vmatprep.subr.mxu0 0.0
    %204 = vmatpush1.msra.mxu0 %v60
    %205 = vmatprep.subr.mxu0 0.0
    %206 = vmatpush1.msra.mxu0 %v61
    %207 = vmatprep.subr.mxu0 0.0
    %208 = vmatpush1.msra.mxu0 %v62
    %209 = vmatprep.subr.mxu0 0.0
    %210 = vmatpush1.msra.mxu0 %v63
    %211 = vmatprep.subr.mxu0 0.0
    %212 = vmatpush1.msra.mxu0 %v64
    %213 = vmatprep.subr.mxu0 0.0
    %214 = vmatpush1.msra.mxu0 %v65
    %215 = vmatprep.subr.mxu0 0.0
    %216 = vmatpush1.msra.mxu0 %v66
    %217 = vmatprep.subr.mxu0 0.0
    %218 = vmatpush1.msra.mxu0 %v67
    %219 = vmatprep.subr.mxu0 0.0
    %220 = vmatpush1.msra.mxu0 %v68
    %221 = vmatprep.subr.mxu0 0.0
    %222 = vmatpush1.msra.mxu0 %v69
    %223 = vmatprep.subr.mxu0 0.0
    %224 = vmatpush1.msra.mxu0 %v70
    %225 = vmatprep.subr.mxu0 0.0
    %226 = vmatpush1.msra.mxu0 %v71
    %227 = vmatprep.subr.mxu0 0.0
    %228 = vmatpush1.msra.mxu0 %v72
    %229 = vmatprep.subr.mxu0 0.0
    %230 = vmatpush1.msra.mxu0 %v73
    %231 = vmatprep.subr.mxu0 0.0
    %232 = vmatpush1.msra.mxu0 %v74
    %233 = vmatprep.subr.mxu0 0.0
    %234 = vmatpush1.msra.mxu0 %v75
    %235 = vmatprep.subr.mxu0 0.0
    %236 = vmatpush1.msra.mxu0 %v76
    %237 = vmatprep.subr.mxu0 0.0
    %238 = vmatpush1.msra.mxu0 %v77
    %239 = vmatprep.subr.mxu0 0.0
    %240 = vmatpush1.msra.mxu0 %v78
    %241 = vmatprep.subr.mxu0 0.0
    %242 = vmatpush1.msra.mxu0 %v79
    %243 = vmatprep.mubr.f32.mxu0 %v104
    %244 = vmatmul.mubr.f32.gmra.mrb[0].mxu0 %v102
    %v245 = vpop.f32.mrb[0].mxu0
    %v246 = vadd.f32 %v176, %v245
    %v247 = vpop.f32.mrb[0].mxu0
    %248 = vdwg.mxu0
    %249 = vst [vmem:[#allocation2] sm:$0x3] %v246
    // Predicated region
    $region14: #{substance_detection_forward.7} parent=1 // pred_check
      _
    $region15: #{substance_detection_forward.7} parent=1 // pred_check_branch
      %251 = sbr.rel (0) target = $region17
    $region16: #{substance_detection_forward.7} parent=1 // pred_region
      %s253 = ssub.s32 32, 32
      %254 = vsyncadd [#allocation3], %s253
      %s256 = sshll.u32 [#allocation2], 4
      %s257 = int_to_ptr.vmem [resolvable:$true] %s256
      %259 = dma.vmem_to_hbm [thread:$0]  %s257, 32, %s3, [#allocation3]
    $region17: #{substance_detection_forward.7} parent=1 // pred_fallthru
      _
    // Predicated region
    $region18: #{substance_detection_forward.7} parent=1 // pred_check
      _
    $region19: #{substance_detection_forward.7} parent=1 // pred_check_branch
      %261 = sbr.rel (0) target = $region21
    $region20: #{substance_detection_forward.7} parent=1 // pred_region
      %262 = dma.done [#allocation3], 32
    $region21: #{substance_detection_forward.7} parent=1 // pred_fallthru
      _
    %263 = vsyncpa [#allocation3], 1

</llo_original>
